<compile_context>
chip_gen: v7x
topology: tpu7x:2x2x1
jax: 0.10.0
libtpu: 0.0.40
codegen_flags: <defaults>
</compile_context>

<pallas_src>
import functools

import jax
import jax.numpy as jnp
from jax.experimental import pallas as pl
from jax.experimental.pallas import tpu as pltpu

# Strict f32 parity with the PyTorch f32 LSTM (explicit, per perf review).
MATMUL_PRECISION = jax.lax.Precision.HIGHEST


def _lstm_fc_kernel(x_ref, wf_ref, pk_ref, wfc_ref, out_ref, *,
                    seq_len, hidden, batch_pad, input_size, out_size):
    """Staggered 2-layer LSTM recurrence (PyTorch gate order i,f,g,o) + FC.

    x_ref   : (T*Bp, I)   time-major rows (row t*Bp + b == x[b, t, :]); batch
                          rows B..Bp-1 are zero padding.
    wf_ref  : (H, 8H)     [whh0 | wih1], 0.5 folded into i/f/o gate columns.
    pk_ref  : (H+I+2, 4H) rows [whh1 (H) | wih0 (I) | b0 (1) | b1 (1)], folded.
    wfc_ref : (T*H+1, O)  rows [fc_w.T (T*H) | fc_b (1)].
    out_ref : (Bp, O)
    """
    T, Bp, H, I, O = seq_len, batch_pad, hidden, input_size, out_size
    prec = MATMUL_PRECISION

    whh1 = pk_ref[0:H, :]                               # (H, 4H)
    wih0 = pk_ref[H:H + I, :]                           # (I, 4H)
    b0 = pk_ref[H + I:H + I + 1, :]                     # (1, 4H)
    # Hoist the sublane broadcast of b1 out of the loop (no CSE inside).
    b1 = jnp.broadcast_to(pk_ref[H + I + 1:H + I + 2, :], (Bp, 4 * H))
    w_fused = wf_ref[...]                               # (H, 8H)
    wih1 = wf_ref[:, 4 * H:8 * H]                       # (H, 4H), epilogue only

    # ---- hoisted layer-0 input projection for all timesteps -----------------
    if I == 1:
        # K=1 contraction as a single VPU broadcast multiply (no MXU push).
        gx0 = x_ref[...] * wih0 + b0                    # (T*Bp, 4H)
    else:
        gx0 = jnp.dot(x_ref[...], wih0, preferred_element_type=jnp.float32,
                      precision=prec) + b0

    # Lane mask selecting the g-gate columns (hoisted out of the loop).
    lane = jax.lax.broadcasted_iota(jnp.int32, (Bp, 4 * H), 1)
    is_g = (lane >= 2 * H) & (lane < 3 * H)

    def cell(gates, c):
        # One full-width EUP pass: i/f/o lanes already carry gate/2 (0.5 was
        # folded into the weights), so sigmoid(gate) == 0.5*(tanh(gate/2)+1);
        # g lanes keep tanh(gate).
        y = jnp.tanh(gates)
        act = jnp.where(is_g, y, 0.5 * (y + 1.0))
        i = act[:, 0:H]
        f = act[:, H:2 * H]
        g = act[:, 2 * H:3 * H]
        o = act[:, 3 * H:4 * H]
        c_new = f * c + i * g
        h_new = o * jnp.tanh(c_new)
        return h_new, c_new

    zeros = jnp.zeros((Bp, H), jnp.float32)
    # t = 0, layer 0: h/c start at zero, so the recurrent term vanishes.
    h0, c0 = cell(gx0[0:Bp, :], zeros)
    h1, c1 = zeros, zeros
    acc = jnp.zeros((Bp, O), jnp.float32)

    # ---- staggered, fully-unrolled wavefront --------------------------------
    # Iteration t computes layer-0 step t and layer-1 step t-1; both consume
    # h0[t-1] via ONE fused MXU push. h1[t-2] @ whh1 is off the h0 chain.
    for t in range(1, T):
        fused = jnp.dot(h0, w_fused, preferred_element_type=jnp.float32,
                        precision=prec)                  # (Bp, 8H)
        g0 = gx0[t * Bp:(t + 1) * Bp, :] + fused[:, 0:4 * H]
        g1 = b1 + fused[:, 4 * H:8 * H]
        if t >= 2:  # h1[t-2] is zero on the first pass; skip the dead matmul
            g1 = g1 + jnp.dot(h1, whh1, preferred_element_type=jnp.float32,
                              precision=prec)
        h0, c0 = cell(g0, c0)
        h1, c1 = cell(g1, c1)
        # Per-step FC accumulation for h1[t-1] (off the recurrent chain).
        acc = acc + jnp.dot(h1, wfc_ref[(t - 1) * H:t * H, :],
                            preferred_element_type=jnp.float32, precision=prec)

    # ---- epilogue: layer-1 step T-1 -----------------------------------------
    g1 = (b1
          + jnp.dot(h0, wih1, preferred_element_type=jnp.float32, precision=prec)
          + jnp.dot(h1, whh1, preferred_element_type=jnp.float32, precision=prec))
    h1, c1 = cell(g1, c1)
    acc = acc + jnp.dot(h1, wfc_ref[(T - 1) * H:T * H, :],
                        preferred_element_type=jnp.float32, precision=prec)

    out_ref[...] = acc + wfc_ref[T * H:T * H + 1, :]     # + fc bias row


def lstm_forward(x, params):
    """x: (B, T, I) float32 -> (B, output_size) float32."""
    B, T, I = x.shape
    H = params["hidden"]
    O = params["output"]
    Bp = max(8, ((B + 7) // 8) * 8)          # sublane-tile aligned batch

    # 0.5 folded ONLY into the i/f/o gate columns (g columns untouched) so the
    # kernel evaluates all gate nonlinearities with a single tanh pass.
    gs = jnp.concatenate([jnp.full((2 * H,), 0.5, jnp.float32),
                          jnp.ones((H,), jnp.float32),
                          jnp.full((H,), 0.5, jnp.float32)])
    wih0 = params["w_ih_l0"].T * gs                          # (I, 4H)
    whh0 = params["w_hh_l0"].T * gs                          # (H, 4H)
    wih1 = params["w_ih_l1"].T * gs                          # (H, 4H)
    whh1 = params["w_hh_l1"].T * gs                          # (H, 4H)
    b0 = ((params["b_ih_l0"] + params["b_hh_l0"]) * gs).reshape(1, 4 * H)
    b1 = ((params["b_ih_l1"] + params["b_hh_l1"]) * gs).reshape(1, 4 * H)

    # Time-major, batch padded to Bp rows: row t*Bp + b holds x[b, t, :].
    x_t = jnp.transpose(x, (1, 0, 2))                        # (T, B, I)
    x_t = jnp.pad(x_t, ((0, 0), (0, Bp - B), (0, 0)))        # (T, Bp, I)
    x_flat = x_t.reshape(T * Bp, I)

    # Packed parameters: 4 input DMAs instead of 9.
    w_fused = jnp.concatenate([whh0, wih1], axis=1)          # (H, 8H)
    packed = jnp.concatenate([whh1, wih0, b0, b1], axis=0)   # (H+I+2, 4H)
    wfc = jnp.concatenate([params["fc_w"].T,
                           params["fc_b"].reshape(1, O)], axis=0)  # (T*H+1, O)

    kernel = functools.partial(_lstm_fc_kernel, seq_len=T, hidden=H,
                               batch_pad=Bp, input_size=I, out_size=O)
    vmem = pl.BlockSpec(memory_space=pltpu.MemorySpace.VMEM)
    out = pl.pallas_call(
        kernel,
        out_shape=jax.ShapeDtypeStruct((Bp, O), jnp.float32),
        in_specs=[vmem] * 4,
        out_specs=vmem,
    )(x_flat, w_fused, packed, wfc)
    return out[:B]


# ---------------------- pure-JAX reference (for checking) -------------------
def lstm_reference(x, params):
    B, T, I = x.shape
    H = params["hidden"]
    prec = MATMUL_PRECISION

    def run_layer(xs, wih, whh, bih, bhh):
        h = jnp.zeros((B, H), jnp.float32)
        c = jnp.zeros((B, H), jnp.float32)
        outs = []
        for t in range(T):
            gates = (jnp.dot(xs[:, t, :], wih.T, precision=prec) + bih
                     + jnp.dot(h, whh.T, precision=prec) + bhh)
            i = jax.nn.sigmoid(gates[:, 0 * H:1 * H])
            f = jax.nn.sigmoid(gates[:, 1 * H:2 * H])
            g = jnp.tanh(gates[:, 2 * H:3 * H])
            o = jax.nn.sigmoid(gates[:, 3 * H:4 * H])
            c = f * c + i * g
            h = o * jnp.tanh(c)
            outs.append(h)
        return jnp.stack(outs, axis=1)                        # (B, T, H)

    h1 = run_layer(x, params["w_ih_l0"], params["w_hh_l0"],
                   params["b_ih_l0"], params["b_hh_l0"])
    h2 = run_layer(h1, params["w_ih_l1"], params["w_hh_l1"],
                   params["b_ih_l1"], params["b_hh_l1"])
    flat = h2.reshape(B, T * H)
    return jnp.dot(flat, params["fc_w"].T, precision=prec) + params["fc_b"]


# --------------------------------- main --------------------------------------
def make_params(key, input_size, hidden, seq_len, output):
    k = 1.0 / jnp.sqrt(jnp.float32(hidden))
    keys = jax.random.split(key, 10)
    u = lambda kk, shape: jax.random.uniform(kk, shape, jnp.float32, -k, k)
    return {
        "hidden": hidden,
        "output": output,
        "w_ih_l0": u(keys[0], (4 * hidden, input_size)),
        "w_hh_l0": u(keys[1], (4 * hidden, hidden)),
        "b_ih_l0": u(keys[2], (4 * hidden,)),
        "b_hh_l0": u(keys[3], (4 * hidden,)),
        "w_ih_l1": u(keys[4], (4 * hidden, hidden)),
        "w_hh_l1": u(keys[5], (4 * hidden, hidden)),
        "b_ih_l1": u(keys[6], (4 * hidden,)),
        "b_hh_l1": u(keys[7], (4 * hidden,)),
        "fc_w": u(keys[8], (output, hidden * seq_len)),
        "fc_b": u(keys[9], (output,)),
    }


if __name__ == "__main__":
    # Small shapes consistent with the module (input_size=1, num_layers=2).
    batch, seq_len, input_size = 2, 8, 1
    hidden, output = 32, 48

    key = jax.random.PRNGKey(0)
    k_x, k_p = jax.random.split(key)
    x = jax.random.normal(k_x, (batch, seq_len, input_size), jnp.float32)
    params = make_params(k_p, input_size, hidden, seq_len, output)

    out = jax.block_until_ready(lstm_forward(x, params))
    ref = jax.block_until_ready(lstm_reference(x, params))

    assert out.shape == (batch, output), out.shape
    assert jnp.allclose(out, ref, atol=1e-4, rtol=1e-4), \
        float(jnp.max(jnp.abs(out - ref)))
    print("KERNEL_OK")
</pallas_src>

<mosaic_0001>
module attributes {stable_mosaic.version = 11 : i64} {
  func.func @_lstm_fc_kernel(%arg0: memref<64x1xf32, #tpu.memory_space<vmem>>, %arg1: memref<32x256xf32, #tpu.memory_space<vmem>>, %arg2: memref<35x128xf32, #tpu.memory_space<vmem>>, %arg3: memref<257x48xf32, #tpu.memory_space<vmem>>, %arg4: memref<8x48xf32, #tpu.memory_space<vmem>>) attributes {dimension_semantics = [], scalar_prefetch = 0 : i64, scratch_operands = 0 : i64, tpu.core_type = #tpu.core_type<tc>} {
    %c0 = arith.constant 0 : index
    %c0_0 = arith.constant 0 : index
    %0 = vector.load %arg2[%c0, %c0_0] : memref<35x128xf32, #tpu.memory_space<vmem>>, vector<32x128xf32>
    %c32 = arith.constant 32 : index
    %c0_1 = arith.constant 0 : index
    %1 = vector.load %arg2[%c32, %c0_1] : memref<35x128xf32, #tpu.memory_space<vmem>>, vector<1x128xf32>
    %c33 = arith.constant 33 : index
    %c0_2 = arith.constant 0 : index
    %2 = vector.load %arg2[%c33, %c0_2] : memref<35x128xf32, #tpu.memory_space<vmem>>, vector<1x128xf32>
    %c34 = arith.constant 34 : index
    %c0_3 = arith.constant 0 : index
    %3 = vector.load %arg2[%c34, %c0_3] : memref<35x128xf32, #tpu.memory_space<vmem>>, vector<1x128xf32>
    %4 = vector.shape_cast %3 : vector<1x128xf32> to vector<1x128xf32>
    %5 = vector.broadcast %4 : vector<1x128xf32> to vector<8x128xf32>
    %c0_4 = arith.constant 0 : index
    %c0_5 = arith.constant 0 : index
    %6 = vector.load %arg1[%c0_4, %c0_5] : memref<32x256xf32, #tpu.memory_space<vmem>>, vector<32x256xf32>
    %c0_6 = arith.constant 0 : index
    %c128 = arith.constant 128 : index
    %7 = vector.load %arg1[%c0_6, %c128] : memref<32x256xf32, #tpu.memory_space<vmem>>, vector<32x128xf32>
    %c0_7 = arith.constant 0 : index
    %c0_8 = arith.constant 0 : index
    %8 = vector.load %arg0[%c0_7, %c0_8] : memref<64x1xf32, #tpu.memory_space<vmem>>, vector<64x1xf32>
    %9 = vector.broadcast %8 : vector<64x1xf32> to vector<64x128xf32>
    %10 = vector.broadcast %1 : vector<1x128xf32> to vector<64x128xf32>
    %11 = arith.mulf %9, %10 : vector<64x128xf32>
    %12 = vector.broadcast %2 : vector<1x128xf32> to vector<64x128xf32>
    %13 = arith.addf %11, %12 : vector<64x128xf32>
    %14 = tpu.iota {dimensions = array<i32: 1>} : vector<8x128xi32>
    %c64_i32 = arith.constant 64 : i32
    %15 = vector.broadcast %c64_i32 : i32 to vector<8x128xi32>
    %16 = arith.cmpi sge, %14, %15 : vector<8x128xi32>
    %c96_i32 = arith.constant 96 : i32
    %17 = vector.broadcast %c96_i32 : i32 to vector<8x128xi32>
    %18 = arith.cmpi slt, %14, %17 : vector<8x128xi32>
    %19 = arith.andi %16, %18 : vector<8x128xi1>
    %cst = arith.constant 0.000000e+00 : f32
    %20 = vector.broadcast %cst : f32 to vector<8x32xf32>
    %21 = vector.extract_strided_slice %13 {offsets = [0, 0], sizes = [8, 128], strides = [1, 1]} : vector<64x128xf32> to vector<8x128xf32>
    %22 = math.tanh %21 : vector<8x128xf32>
    %cst_9 = arith.constant 1.000000e+00 : f32
    %23 = vector.broadcast %cst_9 : f32 to vector<8x128xf32>
    %24 = arith.addf %22, %23 : vector<8x128xf32>
    %cst_10 = arith.constant 5.000000e-01 : f32
    %25 = vector.broadcast %cst_10 : f32 to vector<8x128xf32>
    %26 = arith.mulf %25, %24 : vector<8x128xf32>
    %27 = arith.select %19, %22, %26 : vector<8x128xi1>, vector<8x128xf32>
    %28 = vector.extract_strided_slice %27 {offsets = [0, 0], sizes = [8, 32], strides = [1, 1]} : vector<8x128xf32> to vector<8x32xf32>
    %29 = vector.extract_strided_slice %27 {offsets = [0, 32], sizes = [8, 32], strides = [1, 1]} : vector<8x128xf32> to vector<8x32xf32>
    %30 = vector.extract_strided_slice %27 {offsets = [0, 64], sizes = [8, 32], strides = [1, 1]} : vector<8x128xf32> to vector<8x32xf32>
    %31 = vector.extract_strided_slice %27 {offsets = [0, 96], sizes = [8, 32], strides = [1, 1]} : vector<8x128xf32> to vector<8x32xf32>
    %32 = arith.mulf %29, %20 : vector<8x32xf32>
    %33 = arith.mulf %28, %30 : vector<8x32xf32>
    %34 = arith.addf %32, %33 : vector<8x32xf32>
    %35 = math.tanh %34 : vector<8x32xf32>
    %36 = arith.mulf %31, %35 : vector<8x32xf32>
    %cst_11 = arith.constant 0.000000e+00 : f32
    %37 = vector.broadcast %cst_11 : f32 to vector<8x48xf32>
    %cst_12 = arith.constant dense<0.000000e+00> : vector<8x256xf32>
    %38 = tpu.matmul %36, %6, %cst_12 {dimension_numbers = #tpu.dot_dimension_numbers<[1], [0], [0], [1], [0, 0, 1, 1], [], []>, precision = #tpu.contract_precision<fp32>} : vector<8x32xf32>, vector<32x256xf32>, vector<8x256xf32> -> vector<8x256xf32>
    %39 = vector.extract_strided_slice %13 {offsets = [8, 0], sizes = [8, 128], strides = [1, 1]} : vector<64x128xf32> to vector<8x128xf32>
    %40 = vector.extract_strided_slice %38 {offsets = [0, 0], sizes = [8, 128], strides = [1, 1]} : vector<8x256xf32> to vector<8x128xf32>
    %41 = arith.addf %39, %40 : vector<8x128xf32>
    %42 = vector.extract_strided_slice %38 {offsets = [0, 128], sizes = [8, 128], strides = [1, 1]} : vector<8x256xf32> to vector<8x128xf32>
    %43 = arith.addf %5, %42 : vector<8x128xf32>
    %44 = math.tanh %41 : vector<8x128xf32>
    %cst_13 = arith.constant 1.000000e+00 : f32
    %45 = vector.broadcast %cst_13 : f32 to vector<8x128xf32>
    %46 = arith.addf %44, %45 : vector<8x128xf32>
    %cst_14 = arith.constant 5.000000e-01 : f32
    %47 = vector.broadcast %cst_14 : f32 to vector<8x128xf32>
    %48 = arith.mulf %47, %46 : vector<8x128xf32>
    %49 = arith.select %19, %44, %48 : vector<8x128xi1>, vector<8x128xf32>
    %50 = vector.extract_strided_slice %49 {offsets = [0, 0], sizes = [8, 32], strides = [1, 1]} : vector<8x128xf32> to vector<8x32xf32>
    %51 = vector.extract_strided_slice %49 {offsets = [0, 32], sizes = [8, 32], strides = [1, 1]} : vector<8x128xf32> to vector<8x32xf32>
    %52 = vector.extract_strided_slice %49 {offsets = [0, 64], sizes = [8, 32], strides = [1, 1]} : vector<8x128xf32> to vector<8x32xf32>
    %53 = vector.extract_strided_slice %49 {offsets = [0, 96], sizes = [8, 32], strides = [1, 1]} : vector<8x128xf32> to vector<8x32xf32>
    %54 = arith.mulf %51, %34 : vector<8x32xf32>
    %55 = arith.mulf %50, %52 : vector<8x32xf32>
    %56 = arith.addf %54, %55 : vector<8x32xf32>
    %57 = math.tanh %56 : vector<8x32xf32>
    %58 = arith.mulf %53, %57 : vector<8x32xf32>
    %59 = math.tanh %43 : vector<8x128xf32>
    %cst_15 = arith.constant 1.000000e+00 : f32
    %60 = vector.broadcast %cst_15 : f32 to vector<8x128xf32>
    %61 = arith.addf %59, %60 : vector<8x128xf32>
    %cst_16 = arith.constant 5.000000e-01 : f32
    %62 = vector.broadcast %cst_16 : f32 to vector<8x128xf32>
    %63 = arith.mulf %62, %61 : vector<8x128xf32>
    %64 = arith.select %19, %59, %63 : vector<8x128xi1>, vector<8x128xf32>
    %65 = vector.extract_strided_slice %64 {offsets = [0, 0], sizes = [8, 32], strides = [1, 1]} : vector<8x128xf32> to vector<8x32xf32>
    %66 = vector.extract_strided_slice %64 {offsets = [0, 32], sizes = [8, 32], strides = [1, 1]} : vector<8x128xf32> to vector<8x32xf32>
    %67 = vector.extract_strided_slice %64 {offsets = [0, 64], sizes = [8, 32], strides = [1, 1]} : vector<8x128xf32> to vector<8x32xf32>
    %68 = vector.extract_strided_slice %64 {offsets = [0, 96], sizes = [8, 32], strides = [1, 1]} : vector<8x128xf32> to vector<8x32xf32>
    %69 = arith.mulf %66, %20 : vector<8x32xf32>
    %70 = arith.mulf %65, %67 : vector<8x32xf32>
    %71 = arith.addf %69, %70 : vector<8x32xf32>
    %72 = math.tanh %71 : vector<8x32xf32>
    %73 = arith.mulf %68, %72 : vector<8x32xf32>
    %c0_17 = arith.constant 0 : index
    %c0_18 = arith.constant 0 : index
    %74 = vector.load %arg3[%c0_17, %c0_18] : memref<257x48xf32, #tpu.memory_space<vmem>>, vector<32x48xf32>
    %cst_19 = arith.constant dense<0.000000e+00> : vector<8x48xf32>
    %75 = tpu.matmul %73, %74, %cst_19 {dimension_numbers = #tpu.dot_dimension_numbers<[1], [0], [0], [1], [0, 0, 1, 1], [], []>, precision = #tpu.contract_precision<fp32>} : vector<8x32xf32>, vector<32x48xf32>, vector<8x48xf32> -> vector<8x48xf32>
    %76 = arith.addf %37, %75 : vector<8x48xf32>
    %cst_20 = arith.constant dense<0.000000e+00> : vector<8x256xf32>
    %77 = tpu.matmul %58, %6, %cst_20 {dimension_numbers = #tpu.dot_dimension_numbers<[1], [0], [0], [1], [0, 0, 1, 1], [], []>, precision = #tpu.contract_precision<fp32>} : vector<8x32xf32>, vector<32x256xf32>, vector<8x256xf32> -> vector<8x256xf32>
    %78 = vector.extract_strided_slice %13 {offsets = [16, 0], sizes = [8, 128], strides = [1, 1]} : vector<64x128xf32> to vector<8x128xf32>
    %79 = vector.extract_strided_slice %77 {offsets = [0, 0], sizes = [8, 128], strides = [1, 1]} : vector<8x256xf32> to vector<8x128xf32>
    %80 = arith.addf %78, %79 : vector<8x128xf32>
    %81 = vector.extract_strided_slice %77 {offsets = [0, 128], sizes = [8, 128], strides = [1, 1]} : vector<8x256xf32> to vector<8x128xf32>
    %82 = arith.addf %5, %81 : vector<8x128xf32>
    %cst_21 = arith.constant dense<0.000000e+00> : vector<8x128xf32>
    %83 = tpu.matmul %73, %0, %cst_21 {dimension_numbers = #tpu.dot_dimension_numbers<[1], [0], [0], [1], [0, 0, 1, 1], [], []>, precision = #tpu.contract_precision<fp32>} : vector<8x32xf32>, vector<32x128xf32>, vector<8x128xf32> -> vector<8x128xf32>
    %84 = arith.addf %82, %83 : vector<8x128xf32>
    %85 = math.tanh %80 : vector<8x128xf32>
    %cst_22 = arith.constant 1.000000e+00 : f32
    %86 = vector.broadcast %cst_22 : f32 to vector<8x128xf32>
    %87 = arith.addf %85, %86 : vector<8x128xf32>
    %cst_23 = arith.constant 5.000000e-01 : f32
    %88 = vector.broadcast %cst_23 : f32 to vector<8x128xf32>
    %89 = arith.mulf %88, %87 : vector<8x128xf32>
    %90 = arith.select %19, %85, %89 : vector<8x128xi1>, vector<8x128xf32>
    %91 = vector.extract_strided_slice %90 {offsets = [0, 0], sizes = [8, 32], strides = [1, 1]} : vector<8x128xf32> to vector<8x32xf32>
    %92 = vector.extract_strided_slice %90 {offsets = [0, 32], sizes = [8, 32], strides = [1, 1]} : vector<8x128xf32> to vector<8x32xf32>
    %93 = vector.extract_strided_slice %90 {offsets = [0, 64], sizes = [8, 32], strides = [1, 1]} : vector<8x128xf32> to vector<8x32xf32>
    %94 = vector.extract_strided_slice %90 {offsets = [0, 96], sizes = [8, 32], strides = [1, 1]} : vector<8x128xf32> to vector<8x32xf32>
    %95 = arith.mulf %92, %56 : vector<8x32xf32>
    %96 = arith.mulf %91, %93 : vector<8x32xf32>
    %97 = arith.addf %95, %96 : vector<8x32xf32>
    %98 = math.tanh %97 : vector<8x32xf32>
    %99 = arith.mulf %94, %98 : vector<8x32xf32>
    %100 = math.tanh %84 : vector<8x128xf32>
    %cst_24 = arith.constant 1.000000e+00 : f32
    %101 = vector.broadcast %cst_24 : f32 to vector<8x128xf32>
    %102 = arith.addf %100, %101 : vector<8x128xf32>
    %cst_25 = arith.constant 5.000000e-01 : f32
    %103 = vector.broadcast %cst_25 : f32 to vector<8x128xf32>
    %104 = arith.mulf %103, %102 : vector<8x128xf32>
    %105 = arith.select %19, %100, %104 : vector<8x128xi1>, vector<8x128xf32>
    %106 = vector.extract_strided_slice %105 {offsets = [0, 0], sizes = [8, 32], strides = [1, 1]} : vector<8x128xf32> to vector<8x32xf32>
    %107 = vector.extract_strided_slice %105 {offsets = [0, 32], sizes = [8, 32], strides = [1, 1]} : vector<8x128xf32> to vector<8x32xf32>
    %108 = vector.extract_strided_slice %105 {offsets = [0, 64], sizes = [8, 32], strides = [1, 1]} : vector<8x128xf32> to vector<8x32xf32>
    %109 = vector.extract_strided_slice %105 {offsets = [0, 96], sizes = [8, 32], strides = [1, 1]} : vector<8x128xf32> to vector<8x32xf32>
    %110 = arith.mulf %107, %71 : vector<8x32xf32>
    %111 = arith.mulf %106, %108 : vector<8x32xf32>
    %112 = arith.addf %110, %111 : vector<8x32xf32>
    %113 = math.tanh %112 : vector<8x32xf32>
    %114 = arith.mulf %109, %113 : vector<8x32xf32>
    %c32_26 = arith.constant 32 : index
    %c0_27 = arith.constant 0 : index
    %115 = vector.load %arg3[%c32_26, %c0_27] : memref<257x48xf32, #tpu.memory_space<vmem>>, vector<32x48xf32>
    %cst_28 = arith.constant dense<0.000000e+00> : vector<8x48xf32>
    %116 = tpu.matmul %114, %115, %cst_28 {dimension_numbers = #tpu.dot_dimension_numbers<[1], [0], [0], [1], [0, 0, 1, 1], [], []>, precision = #tpu.contract_precision<fp32>} : vector<8x32xf32>, vector<32x48xf32>, vector<8x48xf32> -> vector<8x48xf32>
    %117 = arith.addf %76, %116 : vector<8x48xf32>
    %cst_29 = arith.constant dense<0.000000e+00> : vector<8x256xf32>
    %118 = tpu.matmul %99, %6, %cst_29 {dimension_numbers = #tpu.dot_dimension_numbers<[1], [0], [0], [1], [0, 0, 1, 1], [], []>, precision = #tpu.contract_precision<fp32>} : vector<8x32xf32>, vector<32x256xf32>, vector<8x256xf32> -> vector<8x256xf32>
    %119 = vector.extract_strided_slice %13 {offsets = [24, 0], sizes = [8, 128], strides = [1, 1]} : vector<64x128xf32> to vector<8x128xf32>
    %120 = vector.extract_strided_slice %118 {offsets = [0, 0], sizes = [8, 128], strides = [1, 1]} : vector<8x256xf32> to vector<8x128xf32>
    %121 = arith.addf %119, %120 : vector<8x128xf32>
    %122 = vector.extract_strided_slice %118 {offsets = [0, 128], sizes = [8, 128], strides = [1, 1]} : vector<8x256xf32> to vector<8x128xf32>
    %123 = arith.addf %5, %122 : vector<8x128xf32>
    %cst_30 = arith.constant dense<0.000000e+00> : vector<8x128xf32>
    %124 = tpu.matmul %114, %0, %cst_30 {dimension_numbers = #tpu.dot_dimension_numbers<[1], [0], [0], [1], [0, 0, 1, 1], [], []>, precision = #tpu.contract_precision<fp32>} : vector<8x32xf32>, vector<32x128xf32>, vector<8x128xf32> -> vector<8x128xf32>
    %125 = arith.addf %123, %124 : vector<8x128xf32>
    %126 = math.tanh %121 : vector<8x128xf32>
    %cst_31 = arith.constant 1.000000e+00 : f32
    %127 = vector.broadcast %cst_31 : f32 to vector<8x128xf32>
    %128 = arith.addf %126, %127 : vector<8x128xf32>
    %cst_32 = arith.constant 5.000000e-01 : f32
    %129 = vector.broadcast %cst_32 : f32 to vector<8x128xf32>
    %130 = arith.mulf %129, %128 : vector<8x128xf32>
    %131 = arith.select %19, %126, %130 : vector<8x128xi1>, vector<8x128xf32>
    %132 = vector.extract_strided_slice %131 {offsets = [0, 0], sizes = [8, 32], strides = [1, 1]} : vector<8x128xf32> to vector<8x32xf32>
    %133 = vector.extract_strided_slice %131 {offsets = [0, 32], sizes = [8, 32], strides = [1, 1]} : vector<8x128xf32> to vector<8x32xf32>
    %134 = vector.extract_strided_slice %131 {offsets = [0, 64], sizes = [8, 32], strides = [1, 1]} : vector<8x128xf32> to vector<8x32xf32>
    %135 = vector.extract_strided_slice %131 {offsets = [0, 96], sizes = [8, 32], strides = [1, 1]} : vector<8x128xf32> to vector<8x32xf32>
    %136 = arith.mulf %133, %97 : vector<8x32xf32>
    %137 = arith.mulf %132, %134 : vector<8x32xf32>
    %138 = arith.addf %136, %137 : vector<8x32xf32>
    %139 = math.tanh %138 : vector<8x32xf32>
    %140 = arith.mulf %135, %139 : vector<8x32xf32>
    %141 = math.tanh %125 : vector<8x128xf32>
    %cst_33 = arith.constant 1.000000e+00 : f32
    %142 = vector.broadcast %cst_33 : f32 to vector<8x128xf32>
    %143 = arith.addf %141, %142 : vector<8x128xf32>
    %cst_34 = arith.constant 5.000000e-01 : f32
    %144 = vector.broadcast %cst_34 : f32 to vector<8x128xf32>
    %145 = arith.mulf %144, %143 : vector<8x128xf32>
    %146 = arith.select %19, %141, %145 : vector<8x128xi1>, vector<8x128xf32>
    %147 = vector.extract_strided_slice %146 {offsets = [0, 0], sizes = [8, 32], strides = [1, 1]} : vector<8x128xf32> to vector<8x32xf32>
    %148 = vector.extract_strided_slice %146 {offsets = [0, 32], sizes = [8, 32], strides = [1, 1]} : vector<8x128xf32> to vector<8x32xf32>
    %149 = vector.extract_strided_slice %146 {offsets = [0, 64], sizes = [8, 32], strides = [1, 1]} : vector<8x128xf32> to vector<8x32xf32>
    %150 = vector.extract_strided_slice %146 {offsets = [0, 96], sizes = [8, 32], strides = [1, 1]} : vector<8x128xf32> to vector<8x32xf32>
    %151 = arith.mulf %148, %112 : vector<8x32xf32>
    %152 = arith.mulf %147, %149 : vector<8x32xf32>
    %153 = arith.addf %151, %152 : vector<8x32xf32>
    %154 = math.tanh %153 : vector<8x32xf32>
    %155 = arith.mulf %150, %154 : vector<8x32xf32>
    %c64 = arith.constant 64 : index
    %c0_35 = arith.constant 0 : index
    %156 = vector.load %arg3[%c64, %c0_35] : memref<257x48xf32, #tpu.memory_space<vmem>>, vector<32x48xf32>
    %cst_36 = arith.constant dense<0.000000e+00> : vector<8x48xf32>
    %157 = tpu.matmul %155, %156, %cst_36 {dimension_numbers = #tpu.dot_dimension_numbers<[1], [0], [0], [1], [0, 0, 1, 1], [], []>, precision = #tpu.contract_precision<fp32>} : vector<8x32xf32>, vector<32x48xf32>, vector<8x48xf32> -> vector<8x48xf32>
    %158 = arith.addf %117, %157 : vector<8x48xf32>
    %cst_37 = arith.constant dense<0.000000e+00> : vector<8x256xf32>
    %159 = tpu.matmul %140, %6, %cst_37 {dimension_numbers = #tpu.dot_dimension_numbers<[1], [0], [0], [1], [0, 0, 1, 1], [], []>, precision = #tpu.contract_precision<fp32>} : vector<8x32xf32>, vector<32x256xf32>, vector<8x256xf32> -> vector<8x256xf32>
    %160 = vector.extract_strided_slice %13 {offsets = [32, 0], sizes = [8, 128], strides = [1, 1]} : vector<64x128xf32> to vector<8x128xf32>
    %161 = vector.extract_strided_slice %159 {offsets = [0, 0], sizes = [8, 128], strides = [1, 1]} : vector<8x256xf32> to vector<8x128xf32>
    %162 = arith.addf %160, %161 : vector<8x128xf32>
    %163 = vector.extract_strided_slice %159 {offsets = [0, 128], sizes = [8, 128], strides = [1, 1]} : vector<8x256xf32> to vector<8x128xf32>
    %164 = arith.addf %5, %163 : vector<8x128xf32>
    %cst_38 = arith.constant dense<0.000000e+00> : vector<8x128xf32>
    %165 = tpu.matmul %155, %0, %cst_38 {dimension_numbers = #tpu.dot_dimension_numbers<[1], [0], [0], [1], [0, 0, 1, 1], [], []>, precision = #tpu.contract_precision<fp32>} : vector<8x32xf32>, vector<32x128xf32>, vector<8x128xf32> -> vector<8x128xf32>
    %166 = arith.addf %164, %165 : vector<8x128xf32>
    %167 = math.tanh %162 : vector<8x128xf32>
    %cst_39 = arith.constant 1.000000e+00 : f32
    %168 = vector.broadcast %cst_39 : f32 to vector<8x128xf32>
    %169 = arith.addf %167, %168 : vector<8x128xf32>
    %cst_40 = arith.constant 5.000000e-01 : f32
    %170 = vector.broadcast %cst_40 : f32 to vector<8x128xf32>
    %171 = arith.mulf %170, %169 : vector<8x128xf32>
    %172 = arith.select %19, %167, %171 : vector<8x128xi1>, vector<8x128xf32>
    %173 = vector.extract_strided_slice %172 {offsets = [0, 0], sizes = [8, 32], strides = [1, 1]} : vector<8x128xf32> to vector<8x32xf32>
    %174 = vector.extract_strided_slice %172 {offsets = [0, 32], sizes = [8, 32], strides = [1, 1]} : vector<8x128xf32> to vector<8x32xf32>
    %175 = vector.extract_strided_slice %172 {offsets = [0, 64], sizes = [8, 32], strides = [1, 1]} : vector<8x128xf32> to vector<8x32xf32>
    %176 = vector.extract_strided_slice %172 {offsets = [0, 96], sizes = [8, 32], strides = [1, 1]} : vector<8x128xf32> to vector<8x32xf32>
    %177 = arith.mulf %174, %138 : vector<8x32xf32>
    %178 = arith.mulf %173, %175 : vector<8x32xf32>
    %179 = arith.addf %177, %178 : vector<8x32xf32>
    %180 = math.tanh %179 : vector<8x32xf32>
    %181 = arith.mulf %176, %180 : vector<8x32xf32>
    %182 = math.tanh %166 : vector<8x128xf32>
    %cst_41 = arith.constant 1.000000e+00 : f32
    %183 = vector.broadcast %cst_41 : f32 to vector<8x128xf32>
    %184 = arith.addf %182, %183 : vector<8x128xf32>
    %cst_42 = arith.constant 5.000000e-01 : f32
    %185 = vector.broadcast %cst_42 : f32 to vector<8x128xf32>
    %186 = arith.mulf %185, %184 : vector<8x128xf32>
    %187 = arith.select %19, %182, %186 : vector<8x128xi1>, vector<8x128xf32>
    %188 = vector.extract_strided_slice %187 {offsets = [0, 0], sizes = [8, 32], strides = [1, 1]} : vector<8x128xf32> to vector<8x32xf32>
    %189 = vector.extract_strided_slice %187 {offsets = [0, 32], sizes = [8, 32], strides = [1, 1]} : vector<8x128xf32> to vector<8x32xf32>
    %190 = vector.extract_strided_slice %187 {offsets = [0, 64], sizes = [8, 32], strides = [1, 1]} : vector<8x128xf32> to vector<8x32xf32>
    %191 = vector.extract_strided_slice %187 {offsets = [0, 96], sizes = [8, 32], strides = [1, 1]} : vector<8x128xf32> to vector<8x32xf32>
    %192 = arith.mulf %189, %153 : vector<8x32xf32>
    %193 = arith.mulf %188, %190 : vector<8x32xf32>
    %194 = arith.addf %192, %193 : vector<8x32xf32>
    %195 = math.tanh %194 : vector<8x32xf32>
    %196 = arith.mulf %191, %195 : vector<8x32xf32>
    %c96 = arith.constant 96 : index
    %c0_43 = arith.constant 0 : index
    %197 = vector.load %arg3[%c96, %c0_43] : memref<257x48xf32, #tpu.memory_space<vmem>>, vector<32x48xf32>
    %cst_44 = arith.constant dense<0.000000e+00> : vector<8x48xf32>
    %198 = tpu.matmul %196, %197, %cst_44 {dimension_numbers = #tpu.dot_dimension_numbers<[1], [0], [0], [1], [0, 0, 1, 1], [], []>, precision = #tpu.contract_precision<fp32>} : vector<8x32xf32>, vector<32x48xf32>, vector<8x48xf32> -> vector<8x48xf32>
    %199 = arith.addf %158, %198 : vector<8x48xf32>
    %cst_45 = arith.constant dense<0.000000e+00> : vector<8x256xf32>
    %200 = tpu.matmul %181, %6, %cst_45 {dimension_numbers = #tpu.dot_dimension_numbers<[1], [0], [0], [1], [0, 0, 1, 1], [], []>, precision = #tpu.contract_precision<fp32>} : vector<8x32xf32>, vector<32x256xf32>, vector<8x256xf32> -> vector<8x256xf32>
    %201 = vector.extract_strided_slice %13 {offsets = [40, 0], sizes = [8, 128], strides = [1, 1]} : vector<64x128xf32> to vector<8x128xf32>
    %202 = vector.extract_strided_slice %200 {offsets = [0, 0], sizes = [8, 128], strides = [1, 1]} : vector<8x256xf32> to vector<8x128xf32>
    %203 = arith.addf %201, %202 : vector<8x128xf32>
    %204 = vector.extract_strided_slice %200 {offsets = [0, 128], sizes = [8, 128], strides = [1, 1]} : vector<8x256xf32> to vector<8x128xf32>
    %205 = arith.addf %5, %204 : vector<8x128xf32>
    %cst_46 = arith.constant dense<0.000000e+00> : vector<8x128xf32>
    %206 = tpu.matmul %196, %0, %cst_46 {dimension_numbers = #tpu.dot_dimension_numbers<[1], [0], [0], [1], [0, 0, 1, 1], [], []>, precision = #tpu.contract_precision<fp32>} : vector<8x32xf32>, vector<32x128xf32>, vector<8x128xf32> -> vector<8x128xf32>
    %207 = arith.addf %205, %206 : vector<8x128xf32>
    %208 = math.tanh %203 : vector<8x128xf32>
    %cst_47 = arith.constant 1.000000e+00 : f32
    %209 = vector.broadcast %cst_47 : f32 to vector<8x128xf32>
    %210 = arith.addf %208, %209 : vector<8x128xf32>
    %cst_48 = arith.constant 5.000000e-01 : f32
    %211 = vector.broadcast %cst_48 : f32 to vector<8x128xf32>
    %212 = arith.mulf %211, %210 : vector<8x128xf32>
    %213 = arith.select %19, %208, %212 : vector<8x128xi1>, vector<8x128xf32>
    %214 = vector.extract_strided_slice %213 {offsets = [0, 0], sizes = [8, 32], strides = [1, 1]} : vector<8x128xf32> to vector<8x32xf32>
    %215 = vector.extract_strided_slice %213 {offsets = [0, 32], sizes = [8, 32], strides = [1, 1]} : vector<8x128xf32> to vector<8x32xf32>
    %216 = vector.extract_strided_slice %213 {offsets = [0, 64], sizes = [8, 32], strides = [1, 1]} : vector<8x128xf32> to vector<8x32xf32>
    %217 = vector.extract_strided_slice %213 {offsets = [0, 96], sizes = [8, 32], strides = [1, 1]} : vector<8x128xf32> to vector<8x32xf32>
    %218 = arith.mulf %215, %179 : vector<8x32xf32>
    %219 = arith.mulf %214, %216 : vector<8x32xf32>
    %220 = arith.addf %218, %219 : vector<8x32xf32>
    %221 = math.tanh %220 : vector<8x32xf32>
    %222 = arith.mulf %217, %221 : vector<8x32xf32>
    %223 = math.tanh %207 : vector<8x128xf32>
    %cst_49 = arith.constant 1.000000e+00 : f32
    %224 = vector.broadcast %cst_49 : f32 to vector<8x128xf32>
    %225 = arith.addf %223, %224 : vector<8x128xf32>
    %cst_50 = arith.constant 5.000000e-01 : f32
    %226 = vector.broadcast %cst_50 : f32 to vector<8x128xf32>
    %227 = arith.mulf %226, %225 : vector<8x128xf32>
    %228 = arith.select %19, %223, %227 : vector<8x128xi1>, vector<8x128xf32>
    %229 = vector.extract_strided_slice %228 {offsets = [0, 0], sizes = [8, 32], strides = [1, 1]} : vector<8x128xf32> to vector<8x32xf32>
    %230 = vector.extract_strided_slice %228 {offsets = [0, 32], sizes = [8, 32], strides = [1, 1]} : vector<8x128xf32> to vector<8x32xf32>
    %231 = vector.extract_strided_slice %228 {offsets = [0, 64], sizes = [8, 32], strides = [1, 1]} : vector<8x128xf32> to vector<8x32xf32>
    %232 = vector.extract_strided_slice %228 {offsets = [0, 96], sizes = [8, 32], strides = [1, 1]} : vector<8x128xf32> to vector<8x32xf32>
    %233 = arith.mulf %230, %194 : vector<8x32xf32>
    %234 = arith.mulf %229, %231 : vector<8x32xf32>
    %235 = arith.addf %233, %234 : vector<8x32xf32>
    %236 = math.tanh %235 : vector<8x32xf32>
    %237 = arith.mulf %232, %236 : vector<8x32xf32>
    %c128_51 = arith.constant 128 : index
    %c0_52 = arith.constant 0 : index
    %238 = vector.load %arg3[%c128_51, %c0_52] : memref<257x48xf32, #tpu.memory_space<vmem>>, vector<32x48xf32>
    %cst_53 = arith.constant dense<0.000000e+00> : vector<8x48xf32>
    %239 = tpu.matmul %237, %238, %cst_53 {dimension_numbers = #tpu.dot_dimension_numbers<[1], [0], [0], [1], [0, 0, 1, 1], [], []>, precision = #tpu.contract_precision<fp32>} : vector<8x32xf32>, vector<32x48xf32>, vector<8x48xf32> -> vector<8x48xf32>
    %240 = arith.addf %199, %239 : vector<8x48xf32>
    %cst_54 = arith.constant dense<0.000000e+00> : vector<8x256xf32>
    %241 = tpu.matmul %222, %6, %cst_54 {dimension_numbers = #tpu.dot_dimension_numbers<[1], [0], [0], [1], [0, 0, 1, 1], [], []>, precision = #tpu.contract_precision<fp32>} : vector<8x32xf32>, vector<32x256xf32>, vector<8x256xf32> -> vector<8x256xf32>
    %242 = vector.extract_strided_slice %13 {offsets = [48, 0], sizes = [8, 128], strides = [1, 1]} : vector<64x128xf32> to vector<8x128xf32>
    %243 = vector.extract_strided_slice %241 {offsets = [0, 0], sizes = [8, 128], strides = [1, 1]} : vector<8x256xf32> to vector<8x128xf32>
    %244 = arith.addf %242, %243 : vector<8x128xf32>
    %245 = vector.extract_strided_slice %241 {offsets = [0, 128], sizes = [8, 128], strides = [1, 1]} : vector<8x256xf32> to vector<8x128xf32>
    %246 = arith.addf %5, %245 : vector<8x128xf32>
    %cst_55 = arith.constant dense<0.000000e+00> : vector<8x128xf32>
    %247 = tpu.matmul %237, %0, %cst_55 {dimension_numbers = #tpu.dot_dimension_numbers<[1], [0], [0], [1], [0, 0, 1, 1], [], []>, precision = #tpu.contract_precision<fp32>} : vector<8x32xf32>, vector<32x128xf32>, vector<8x128xf32> -> vector<8x128xf32>
    %248 = arith.addf %246, %247 : vector<8x128xf32>
    %249 = math.tanh %244 : vector<8x128xf32>
    %cst_56 = arith.constant 1.000000e+00 : f32
    %250 = vector.broadcast %cst_56 : f32 to vector<8x128xf32>
    %251 = arith.addf %249, %250 : vector<8x128xf32>
    %cst_57 = arith.constant 5.000000e-01 : f32
    %252 = vector.broadcast %cst_57 : f32 to vector<8x128xf32>
    %253 = arith.mulf %252, %251 : vector<8x128xf32>
    %254 = arith.select %19, %249, %253 : vector<8x128xi1>, vector<8x128xf32>
    %255 = vector.extract_strided_slice %254 {offsets = [0, 0], sizes = [8, 32], strides = [1, 1]} : vector<8x128xf32> to vector<8x32xf32>
    %256 = vector.extract_strided_slice %254 {offsets = [0, 32], sizes = [8, 32], strides = [1, 1]} : vector<8x128xf32> to vector<8x32xf32>
    %257 = vector.extract_strided_slice %254 {offsets = [0, 64], sizes = [8, 32], strides = [1, 1]} : vector<8x128xf32> to vector<8x32xf32>
    %258 = vector.extract_strided_slice %254 {offsets = [0, 96], sizes = [8, 32], strides = [1, 1]} : vector<8x128xf32> to vector<8x32xf32>
    %259 = arith.mulf %256, %220 : vector<8x32xf32>
    %260 = arith.mulf %255, %257 : vector<8x32xf32>
    %261 = arith.addf %259, %260 : vector<8x32xf32>
    %262 = math.tanh %261 : vector<8x32xf32>
    %263 = arith.mulf %258, %262 : vector<8x32xf32>
    %264 = math.tanh %248 : vector<8x128xf32>
    %cst_58 = arith.constant 1.000000e+00 : f32
    %265 = vector.broadcast %cst_58 : f32 to vector<8x128xf32>
    %266 = arith.addf %264, %265 : vector<8x128xf32>
    %cst_59 = arith.constant 5.000000e-01 : f32
    %267 = vector.broadcast %cst_59 : f32 to vector<8x128xf32>
    %268 = arith.mulf %267, %266 : vector<8x128xf32>
    %269 = arith.select %19, %264, %268 : vector<8x128xi1>, vector<8x128xf32>
    %270 = vector.extract_strided_slice %269 {offsets = [0, 0], sizes = [8, 32], strides = [1, 1]} : vector<8x128xf32> to vector<8x32xf32>
    %271 = vector.extract_strided_slice %269 {offsets = [0, 32], sizes = [8, 32], strides = [1, 1]} : vector<8x128xf32> to vector<8x32xf32>
    %272 = vector.extract_strided_slice %269 {offsets = [0, 64], sizes = [8, 32], strides = [1, 1]} : vector<8x128xf32> to vector<8x32xf32>
    %273 = vector.extract_strided_slice %269 {offsets = [0, 96], sizes = [8, 32], strides = [1, 1]} : vector<8x128xf32> to vector<8x32xf32>
    %274 = arith.mulf %271, %235 : vector<8x32xf32>
    %275 = arith.mulf %270, %272 : vector<8x32xf32>
    %276 = arith.addf %274, %275 : vector<8x32xf32>
    %277 = math.tanh %276 : vector<8x32xf32>
    %278 = arith.mulf %273, %277 : vector<8x32xf32>
    %c160 = arith.constant 160 : index
    %c0_60 = arith.constant 0 : index
    %279 = vector.load %arg3[%c160, %c0_60] : memref<257x48xf32, #tpu.memory_space<vmem>>, vector<32x48xf32>
    %cst_61 = arith.constant dense<0.000000e+00> : vector<8x48xf32>
    %280 = tpu.matmul %278, %279, %cst_61 {dimension_numbers = #tpu.dot_dimension_numbers<[1], [0], [0], [1], [0, 0, 1, 1], [], []>, precision = #tpu.contract_precision<fp32>} : vector<8x32xf32>, vector<32x48xf32>, vector<8x48xf32> -> vector<8x48xf32>
    %281 = arith.addf %240, %280 : vector<8x48xf32>
    %cst_62 = arith.constant dense<0.000000e+00> : vector<8x256xf32>
    %282 = tpu.matmul %263, %6, %cst_62 {dimension_numbers = #tpu.dot_dimension_numbers<[1], [0], [0], [1], [0, 0, 1, 1], [], []>, precision = #tpu.contract_precision<fp32>} : vector<8x32xf32>, vector<32x256xf32>, vector<8x256xf32> -> vector<8x256xf32>
    %283 = vector.extract_strided_slice %13 {offsets = [56, 0], sizes = [8, 128], strides = [1, 1]} : vector<64x128xf32> to vector<8x128xf32>
    %284 = vector.extract_strided_slice %282 {offsets = [0, 0], sizes = [8, 128], strides = [1, 1]} : vector<8x256xf32> to vector<8x128xf32>
    %285 = arith.addf %283, %284 : vector<8x128xf32>
    %286 = vector.extract_strided_slice %282 {offsets = [0, 128], sizes = [8, 128], strides = [1, 1]} : vector<8x256xf32> to vector<8x128xf32>
    %287 = arith.addf %5, %286 : vector<8x128xf32>
    %cst_63 = arith.constant dense<0.000000e+00> : vector<8x128xf32>
    %288 = tpu.matmul %278, %0, %cst_63 {dimension_numbers = #tpu.dot_dimension_numbers<[1], [0], [0], [1], [0, 0, 1, 1], [], []>, precision = #tpu.contract_precision<fp32>} : vector<8x32xf32>, vector<32x128xf32>, vector<8x128xf32> -> vector<8x128xf32>
    %289 = arith.addf %287, %288 : vector<8x128xf32>
    %290 = math.tanh %285 : vector<8x128xf32>
    %cst_64 = arith.constant 1.000000e+00 : f32
    %291 = vector.broadcast %cst_64 : f32 to vector<8x128xf32>
    %292 = arith.addf %290, %291 : vector<8x128xf32>
    %cst_65 = arith.constant 5.000000e-01 : f32
    %293 = vector.broadcast %cst_65 : f32 to vector<8x128xf32>
    %294 = arith.mulf %293, %292 : vector<8x128xf32>
    %295 = arith.select %19, %290, %294 : vector<8x128xi1>, vector<8x128xf32>
    %296 = vector.extract_strided_slice %295 {offsets = [0, 0], sizes = [8, 32], strides = [1, 1]} : vector<8x128xf32> to vector<8x32xf32>
    %297 = vector.extract_strided_slice %295 {offsets = [0, 32], sizes = [8, 32], strides = [1, 1]} : vector<8x128xf32> to vector<8x32xf32>
    %298 = vector.extract_strided_slice %295 {offsets = [0, 64], sizes = [8, 32], strides = [1, 1]} : vector<8x128xf32> to vector<8x32xf32>
    %299 = vector.extract_strided_slice %295 {offsets = [0, 96], sizes = [8, 32], strides = [1, 1]} : vector<8x128xf32> to vector<8x32xf32>
    %300 = arith.mulf %297, %261 : vector<8x32xf32>
    %301 = arith.mulf %296, %298 : vector<8x32xf32>
    %302 = arith.addf %300, %301 : vector<8x32xf32>
    %303 = math.tanh %302 : vector<8x32xf32>
    %304 = arith.mulf %299, %303 : vector<8x32xf32>
    %305 = math.tanh %289 : vector<8x128xf32>
    %cst_66 = arith.constant 1.000000e+00 : f32
    %306 = vector.broadcast %cst_66 : f32 to vector<8x128xf32>
    %307 = arith.addf %305, %306 : vector<8x128xf32>
    %cst_67 = arith.constant 5.000000e-01 : f32
    %308 = vector.broadcast %cst_67 : f32 to vector<8x128xf32>
    %309 = arith.mulf %308, %307 : vector<8x128xf32>
    %310 = arith.select %19, %305, %309 : vector<8x128xi1>, vector<8x128xf32>
    %311 = vector.extract_strided_slice %310 {offsets = [0, 0], sizes = [8, 32], strides = [1, 1]} : vector<8x128xf32> to vector<8x32xf32>
    %312 = vector.extract_strided_slice %310 {offsets = [0, 32], sizes = [8, 32], strides = [1, 1]} : vector<8x128xf32> to vector<8x32xf32>
    %313 = vector.extract_strided_slice %310 {offsets = [0, 64], sizes = [8, 32], strides = [1, 1]} : vector<8x128xf32> to vector<8x32xf32>
    %314 = vector.extract_strided_slice %310 {offsets = [0, 96], sizes = [8, 32], strides = [1, 1]} : vector<8x128xf32> to vector<8x32xf32>
    %315 = arith.mulf %312, %276 : vector<8x32xf32>
    %316 = arith.mulf %311, %313 : vector<8x32xf32>
    %317 = arith.addf %315, %316 : vector<8x32xf32>
    %318 = math.tanh %317 : vector<8x32xf32>
    %319 = arith.mulf %314, %318 : vector<8x32xf32>
    %c192 = arith.constant 192 : index
    %c0_68 = arith.constant 0 : index
    %320 = vector.load %arg3[%c192, %c0_68] : memref<257x48xf32, #tpu.memory_space<vmem>>, vector<32x48xf32>
    %cst_69 = arith.constant dense<0.000000e+00> : vector<8x48xf32>
    %321 = tpu.matmul %319, %320, %cst_69 {dimension_numbers = #tpu.dot_dimension_numbers<[1], [0], [0], [1], [0, 0, 1, 1], [], []>, precision = #tpu.contract_precision<fp32>} : vector<8x32xf32>, vector<32x48xf32>, vector<8x48xf32> -> vector<8x48xf32>
    %322 = arith.addf %281, %321 : vector<8x48xf32>
    %cst_70 = arith.constant dense<0.000000e+00> : vector<8x128xf32>
    %323 = tpu.matmul %304, %7, %cst_70 {dimension_numbers = #tpu.dot_dimension_numbers<[1], [0], [0], [1], [0, 0, 1, 1], [], []>, precision = #tpu.contract_precision<fp32>} : vector<8x32xf32>, vector<32x128xf32>, vector<8x128xf32> -> vector<8x128xf32>
    %324 = arith.addf %5, %323 : vector<8x128xf32>
    %cst_71 = arith.constant dense<0.000000e+00> : vector<8x128xf32>
    %325 = tpu.matmul %319, %0, %cst_71 {dimension_numbers = #tpu.dot_dimension_numbers<[1], [0], [0], [1], [0, 0, 1, 1], [], []>, precision = #tpu.contract_precision<fp32>} : vector<8x32xf32>, vector<32x128xf32>, vector<8x128xf32> -> vector<8x128xf32>
    %326 = arith.addf %324, %325 : vector<8x128xf32>
    %327 = math.tanh %326 : vector<8x128xf32>
    %cst_72 = arith.constant 1.000000e+00 : f32
    %328 = vector.broadcast %cst_72 : f32 to vector<8x128xf32>
    %329 = arith.addf %327, %328 : vector<8x128xf32>
    %cst_73 = arith.constant 5.000000e-01 : f32
    %330 = vector.broadcast %cst_73 : f32 to vector<8x128xf32>
    %331 = arith.mulf %330, %329 : vector<8x128xf32>
    %332 = arith.select %19, %327, %331 : vector<8x128xi1>, vector<8x128xf32>
    %333 = vector.extract_strided_slice %332 {offsets = [0, 0], sizes = [8, 32], strides = [1, 1]} : vector<8x128xf32> to vector<8x32xf32>
    %334 = vector.extract_strided_slice %332 {offsets = [0, 32], sizes = [8, 32], strides = [1, 1]} : vector<8x128xf32> to vector<8x32xf32>
    %335 = vector.extract_strided_slice %332 {offsets = [0, 64], sizes = [8, 32], strides = [1, 1]} : vector<8x128xf32> to vector<8x32xf32>
    %336 = vector.extract_strided_slice %332 {offsets = [0, 96], sizes = [8, 32], strides = [1, 1]} : vector<8x128xf32> to vector<8x32xf32>
    %337 = arith.mulf %334, %317 : vector<8x32xf32>
    %338 = arith.mulf %333, %335 : vector<8x32xf32>
    %339 = arith.addf %337, %338 : vector<8x32xf32>
    %340 = math.tanh %339 : vector<8x32xf32>
    %341 = arith.mulf %336, %340 : vector<8x32xf32>
    %c224 = arith.constant 224 : index
    %c0_74 = arith.constant 0 : index
    %342 = vector.load %arg3[%c224, %c0_74] : memref<257x48xf32, #tpu.memory_space<vmem>>, vector<32x48xf32>
    %cst_75 = arith.constant dense<0.000000e+00> : vector<8x48xf32>
    %343 = tpu.matmul %341, %342, %cst_75 {dimension_numbers = #tpu.dot_dimension_numbers<[1], [0], [0], [1], [0, 0, 1, 1], [], []>, precision = #tpu.contract_precision<fp32>} : vector<8x32xf32>, vector<32x48xf32>, vector<8x48xf32> -> vector<8x48xf32>
    %344 = arith.addf %322, %343 : vector<8x48xf32>
    %c256 = arith.constant 256 : index
    %c0_76 = arith.constant 0 : index
    %345 = vector.load %arg3[%c256, %c0_76] : memref<257x48xf32, #tpu.memory_space<vmem>>, vector<1x48xf32>
    %346 = vector.broadcast %345 : vector<1x48xf32> to vector<8x48xf32>
    %347 = arith.addf %344, %346 : vector<8x48xf32>
    %c0_77 = arith.constant 0 : index
    %c0_78 = arith.constant 0 : index
    %348 = vector.load %arg4[%c0_77, %c0_78] : memref<8x48xf32, #tpu.memory_space<vmem>>, vector<8x48xf32>
    tpu.vector_store %arg4[%c0_77, %c0_78], %347 {strides = array<i32>} : memref<8x48xf32, #tpu.memory_space<vmem>>, vector<8x48xf32>,
    return
  }
}

</mosaic_0001>

<llo_original>
// kernel: tpu_custom_call.1
$region0: #{tpu_custom_call.1}
  #allocation0 [shape = 'u32[]', space=smem, size = 0x4, offset = 0x4, fixed_abs, tag = 'smem constant byte address 0x4 - core index']
  #allocation1 [shape = 'u32[144,128]{1,0:T(1,128)}', space=vmem, size = 0x12000, scoped, tag = 'internal scratch']
  %s0 = inlined_call_operand.vmem [shape: f32[64,1], index: 0, kind: input, shape index: {}]
  %s1 = inlined_call_operand.vmem [shape: f32[32,256], index: 1, kind: input, shape index: {}]
  %s2 = inlined_call_operand.vmem [shape: f32[35,128], index: 2, kind: input, shape index: {}]
  %s3 = inlined_call_operand.vmem [shape: f32[257,48], index: 3, kind: input, shape index: {}]
  %s4 = inlined_call_operand.hbm [shape: f32[8,48], index: 4, kind: output, shape index: {}]
  %s5 = sld [smem:[#allocation0]]
  $region26: #{tpu_custom_call.1} parent=0
    _
  %s7 = ssub.s32 1, %s5
  %s8 = scalar_select 0, %s7, %s5
  $region1: #{tpu_custom_call.1} parent=0
    #allocation2 [shape = 'u8[4096]{0}', space=vmem, size = 0x1000, scoped, tag = 'output window, operand 0, single buffered']
    #allocation3 [shape = 's32[1]{0}', space=sflag, size = 0x4, scoped, tag = 'scoped memory for tpu_custom_call.1']
    %9 = vsyncpa [#allocation3], 0
    // Predicated region
    $region2: #{tpu_custom_call.1} parent=1 // pred_check
      _
    $region3: #{tpu_custom_call.1} parent=1 // pred_check_branch
      %11 = sbr.rel (0) target = $region5
    $region4: #{tpu_custom_call.1} parent=1 // pred_region
      _
    $region5: #{tpu_custom_call.1} parent=1 // pred_fallthru
      _
    // Predicated region
    $region6: #{tpu_custom_call.1} parent=1 // pred_check
      _
    $region7: #{tpu_custom_call.1} parent=1 // pred_check_branch
      %13 = sbr.rel (0) target = $region9
    $region8: #{tpu_custom_call.1} parent=1 // pred_region
      _
    $region9: #{tpu_custom_call.1} parent=1 // pred_fallthru
      _
    // Predicated region
    $region10: #{tpu_custom_call.1} parent=1 // pred_check
      _
    $region11: #{tpu_custom_call.1} parent=1 // pred_check_branch
      %15 = sbr.rel (0) target = $region13
    $region12: #{tpu_custom_call.1} parent=1 // pred_region
      _
    $region13: #{tpu_custom_call.1} parent=1 // pred_fallthru
      _
    // Predicated region
    $region14: #{tpu_custom_call.1} parent=1 // pred_check
      _
    $region15: #{tpu_custom_call.1} parent=1 // pred_check_branch
      %17 = sbr.rel (0) target = $region17
    $region16: #{tpu_custom_call.1} parent=1 // pred_region
      _
    $region17: #{tpu_custom_call.1} parent=1 // pred_fallthru
      _
    %v18 = vld [vmem:[%s2] sm:$0xff]
    %v19 = vld [vmem:[%s2 + $0x8] sm:$0xff]
    %v20 = vld [vmem:[%s2 + $0x10] sm:$0xff]
    %v21 = vld [vmem:[%s2 + $0x18] sm:$0xff]
    %v22 = vld [vmem:[%s2 + $0x20] sm:$0x1]
    %v23 = vld [vmem:[%s2 + $0x21] sm:$0x1]
    %v24 = vld [vmem:[%s2 + $0x22] sm:$0x1]
    %v25 = vlaneseq
    %v26 = vshrl.u32 %v25, 7
    %v27 = vsub.s32 0, %v26
    %v28 = vrot.slane %v24, %v27
    %v29 = vld [vmem:[%s1] sm:$0xff]
    %v30 = vld [vmem:[%s1 + $0x8] sm:$0xff]
    %v31 = vld [vmem:[%s1 + $0x10] sm:$0xff]
    %v32 = vld [vmem:[%s1 + $0x18] sm:$0xff]
    %v33 = vld [vmem:[%s1 + $0x20] sm:$0xff]
    %v34 = vld [vmem:[%s1 + $0x28] sm:$0xff]
    %v35 = vld [vmem:[%s1 + $0x30] sm:$0xff]
    %v36 = vld [vmem:[%s1 + $0x38] sm:$0xff]
    %v37 = vld [vmem:[%s0] sm:$0xff]
    %v38 = vld [vmem:[%s0 + $0x8] sm:$0xff]
    %v39 = vld [vmem:[%s0 + $0x10] sm:$0xff]
    %v40 = vld [vmem:[%s0 + $0x18] sm:$0xff]
    %v41 = vld [vmem:[%s0 + $0x20] sm:$0xff]
    %v42 = vld [vmem:[%s0 + $0x28] sm:$0xff]
    %v43 = vld [vmem:[%s0 + $0x30] sm:$0xff]
    %v44 = vld [vmem:[%s0 + $0x38] sm:$0xff]
    %46 = vset.pattern.permute.xlu0 0
    %47 = vperm.xlu0 %46, %v37
    %v48 = vpop.permute.xlu0 %47
    %51 = vset.pattern.permute.xlu0 0
    %52 = vperm.xlu0 %51, %v38
    %v53 = vpop.permute.xlu0 %52
    %56 = vset.pattern.permute.xlu0 0
    %57 = vperm.xlu0 %56, %v39
    %v58 = vpop.permute.xlu0 %57
    %61 = vset.pattern.permute.xlu0 0
    %62 = vperm.xlu0 %61, %v40
    %v63 = vpop.permute.xlu0 %62
    %66 = vset.pattern.permute.xlu0 0
    %67 = vperm.xlu0 %66, %v41
    %v68 = vpop.permute.xlu0 %67
    %71 = vset.pattern.permute.xlu0 0
    %72 = vperm.xlu0 %71, %v42
    %v73 = vpop.permute.xlu0 %72
    %76 = vset.pattern.permute.xlu0 0
    %77 = vperm.xlu0 %76, %v43
    %v78 = vpop.permute.xlu0 %77
    %81 = vset.pattern.permute.xlu0 0
    %82 = vperm.xlu0 %81, %v44
    %v83 = vpop.permute.xlu0 %82
    %v85 = vlaneseq
    %v86 = vshrl.u32 %v85, 7
    %v87 = vsub.s32 0, %v86
    %v88 = vrot.slane %v22, %v87
    %v89 = vmul.f32 %v48, %v88
    %v90 = vmul.f32 %v53, %v88
    %v91 = vmul.f32 %v58, %v88
    %v92 = vmul.f32 %v63, %v88
    %v93 = vmul.f32 %v68, %v88
    %v94 = vmul.f32 %v73, %v88
    %v95 = vmul.f32 %v78, %v88
    %v96 = vmul.f32 %v83, %v88
    %v97 = vlaneseq
    %v98 = vshrl.u32 %v97, 7
    %v99 = vsub.s32 0, %v98
    %v100 = vrot.slane %v23, %v99
    %v101 = vadd.f32 %v89, %v100
    %v102 = vadd.f32 %v90, %v100
    %v103 = vadd.f32 %v91, %v100
    %v104 = vadd.f32 %v92, %v100
    %v105 = vadd.f32 %v93, %v100
    %v106 = vadd.f32 %v94, %v100
    %v107 = vadd.f32 %v95, %v100
    %v108 = vadd.f32 %v96, %v100
    %v109 = vlaneseq
    %v110 = vand.u32 %v109, 127
    %vm111 = vcmp.ge.s32.totalorder %v110, 64
    %vm112 = vcmp.lt.s32.totalorder %v110, 96
    %vm113 = vmand %vm111, %vm112
    %v114 = vtanh.pop %v101
    %v115 = vadd.f32 %v114, 1.0
    %v116 = vmul.f32 %v115, 0.5
    %v117 = vsel %vm113, %v114, %v116
    %v118 = vmul.f32 %v117, 0.0
    %120 = vrot.lane.b32.xlu0 %v117, 64
    %v121 = vpop.permute.xlu0 %120
    %v123 = vmul.f32 %v117, %v121
    %125 = vrot.lane.b32.xlu0 %v123, 32
    %v126 = vpop.permute.xlu0 %125
    %v128 = vadd.f32 %v118, %v126
    %v129 = vtanh.pop %v128
    %131 = vrot.lane.b32.xlu0 %v129, 64
    %v132 = vpop.permute.xlu0 %131
    %v134 = vmul.f32 %v117, %v132
    %136 = vrot.lane.b32.xlu0 %v134, 32
    %v137 = vpop.permute.xlu0 %136
    %vm138 = vcmask 261120
    %v139 = vsel %vm138, %v137, 0
    %v141 = vand.u32 %v30, 4294901760
    %142 = vmatprep.subr.mxu0 %v141
    %v143 = vand.u32 %v29, 4294901760
    %144 = vmatpush1.msra.mxu0 %v143
    %v145 = vand.u32 %v32, 4294901760
    %146 = vmatprep.subr.mxu0 %v145
    %v147 = vand.u32 %v31, 4294901760
    %148 = vmatpush1.msra.mxu0 %v147
    %v149 = vand.u32 %v34, 4294901760
    %150 = vmatprep.subr.mxu0 %v149
    %v151 = vand.u32 %v33, 4294901760
    %152 = vmatpush1.msra.mxu0 %v151
    %v153 = vand.u32 %v36, 4294901760
    %154 = vmatprep.subr.mxu0 %v153
    %v155 = vand.u32 %v35, 4294901760
    %156 = vmatpush1.msra.mxu0 %v155
    %157 = vmatprep.subr.mxu0 0.0
    %158 = vmatpush1.msra.mxu0 0.0
    %159 = vmatprep.subr.mxu0 0.0
    %160 = vmatpush1.msra.mxu0 0.0
    %161 = vmatprep.subr.mxu0 0.0
    %162 = vmatpush1.msra.mxu0 0.0
    %163 = vmatprep.subr.mxu0 0.0
    %164 = vmatpush1.msra.mxu0 0.0
    %165 = vmatprep.subr.mxu0 0.0
    %166 = vmatpush1.msra.mxu0 0.0
    %167 = vmatprep.subr.mxu0 0.0
    %168 = vmatpush1.msra.mxu0 0.0
    %169 = vmatprep.subr.mxu0 0.0
    %170 = vmatpush1.msra.mxu0 0.0
    %171 = vmatprep.subr.mxu0 0.0
    %172 = vmatpush1.msra.mxu0 0.0
    %173 = vmatprep.subr.mxu0 0.0
    %174 = vmatpush1.msra.mxu0 0.0
    %175 = vmatprep.subr.mxu0 0.0
    %176 = vmatpush1.msra.mxu0 0.0
    %177 = vmatprep.subr.mxu0 0.0
    %178 = vmatpush1.msra.mxu0 0.0
    %179 = vmatprep.subr.mxu0 0.0
    %180 = vmatpush1.msra.mxu0 0.0
    %181 = vmatprep.subr.mxu0 0.0
    %182 = vmatpush1.msra.mxu0 0.0
    %183 = vmatprep.subr.mxu0 0.0
    %184 = vmatpush1.msra.mxu0 0.0
    %185 = vmatprep.subr.mxu0 0.0
    %186 = vmatpush1.msra.mxu0 0.0
    %187 = vmatprep.subr.mxu0 0.0
    %188 = vmatpush1.msra.mxu0 0.0
    %189 = vmatprep.subr.mxu0 0.0
    %190 = vmatpush1.msra.mxu0 0.0
    %191 = vmatprep.subr.mxu0 0.0
    %192 = vmatpush1.msra.mxu0 0.0
    %193 = vmatprep.subr.mxu0 0.0
    %194 = vmatpush1.msra.mxu0 0.0
    %195 = vmatprep.subr.mxu0 0.0
    %196 = vmatpush1.msra.mxu0 0.0
    %197 = vmatprep.subr.mxu0 0.0
    %198 = vmatpush1.msra.mxu0 0.0
    %199 = vmatprep.subr.mxu0 0.0
    %200 = vmatpush1.msra.mxu0 0.0
    %201 = vmatprep.subr.mxu0 0.0
    %202 = vmatpush1.msra.mxu0 0.0
    %203 = vmatprep.subr.mxu0 0.0
    %204 = vmatpush1.msra.mxu0 0.0
    %205 = vmatprep.subr.mxu0 0.0
    %206 = vmatpush1.msra.mxu0 0.0
    %207 = vmatprep.subr.mxu0 0.0
    %208 = vmatpush1.msra.mxu0 0.0
    %209 = vmatprep.subr.mxu0 0.0
    %210 = vmatpush1.msra.mxu0 0.0
    %211 = vmatprep.subr.mxu0 0.0
    %212 = vmatpush1.msra.mxu0 0.0
    %213 = vmatprep.mubr.f32.mxu0 0.0
    %v214 = vand.u32 %v139, 4294901760
    %v215 = vsub.f32 %v139, %v214
    %v216 = vand.u32 %v215, 4294901760
    %v217 = vsub.f32 %v215, %v216
    %v218 = vand.u32 %v217, 4294901760
    %219 = vmatmul.mubr.f32.gmra.mrb[0].mxu0 %v218
    %v220 = vpop.f32.mrb[0].mxu0
    %v221 = vadd.f32 0.0, %v220
    %v222 = vpop.f32.mrb[0].mxu0
    %v223 = vadd.f32 0.0, %v222
    %224 = vdwg.mxu0
    %v225 = vand.u32 %v30, 4294901760
    %v226 = vsub.f32 %v30, %v225
    %v227 = vand.u32 %v226, 4294901760
    %v228 = vsub.f32 %v226, %v227
    %v229 = vand.u32 %v228, 4294901760
    %230 = vmatprep.subr.mxu0 %v229
    %v231 = vand.u32 %v29, 4294901760
    %v232 = vsub.f32 %v29, %v231
    %v233 = vand.u32 %v232, 4294901760
    %v234 = vsub.f32 %v232, %v233
    %v235 = vand.u32 %v234, 4294901760
    %236 = vmatpush1.msra.mxu0 %v235
    %v237 = vand.u32 %v32, 4294901760
    %v238 = vsub.f32 %v32, %v237
    %v239 = vand.u32 %v238, 4294901760
    %v240 = vsub.f32 %v238, %v239
    %v241 = vand.u32 %v240, 4294901760
    %242 = vmatprep.subr.mxu0 %v241
    %v243 = vand.u32 %v31, 4294901760
    %v244 = vsub.f32 %v31, %v243
    %v245 = vand.u32 %v244, 4294901760
    %v246 = vsub.f32 %v244, %v245
    %v247 = vand.u32 %v246, 4294901760
    %248 = vmatpush1.msra.mxu0 %v247
    %v249 = vand.u32 %v34, 4294901760
    %v250 = vsub.f32 %v34, %v249
    %v251 = vand.u32 %v250, 4294901760
    %v252 = vsub.f32 %v250, %v251
    %v253 = vand.u32 %v252, 4294901760
    %254 = vmatprep.subr.mxu0 %v253
    %v255 = vand.u32 %v33, 4294901760
    %v256 = vsub.f32 %v33, %v255
    %v257 = vand.u32 %v256, 4294901760
    %v258 = vsub.f32 %v256, %v257
    %v259 = vand.u32 %v258, 4294901760
    %260 = vmatpush1.msra.mxu0 %v259
    %v261 = vand.u32 %v36, 4294901760
    %v262 = vsub.f32 %v36, %v261
    %v263 = vand.u32 %v262, 4294901760
    %v264 = vsub.f32 %v262, %v263
    %v265 = vand.u32 %v264, 4294901760
    %266 = vmatprep.subr.mxu0 %v265
    %v267 = vand.u32 %v35, 4294901760
    %v268 = vsub.f32 %v35, %v267
    %v269 = vand.u32 %v268, 4294901760
    %v270 = vsub.f32 %v268, %v269
    %v271 = vand.u32 %v270, 4294901760
    %272 = vmatpush1.msra.mxu0 %v271
    %273 = vmatprep.subr.mxu0 0.0
    %274 = vmatpush1.msra.mxu0 0.0
    %275 = vmatprep.subr.mxu0 0.0
    %276 = vmatpush1.msra.mxu0 0.0
    %277 = vmatprep.subr.mxu0 0.0
    %278 = vmatpush1.msra.mxu0 0.0
    %279 = vmatprep.subr.mxu0 0.0
    %280 = vmatpush1.msra.mxu0 0.0
    %281 = vmatprep.subr.mxu0 0.0
    %282 = vmatpush1.msra.mxu0 0.0
    %283 = vmatprep.subr.mxu0 0.0
    %284 = vmatpush1.msra.mxu0 0.0
    %285 = vmatprep.subr.mxu0 0.0
    %286 = vmatpush1.msra.mxu0 0.0
    %287 = vmatprep.subr.mxu0 0.0
    %288 = vmatpush1.msra.mxu0 0.0
    %289 = vmatprep.subr.mxu0 0.0
    %290 = vmatpush1.msra.mxu0 0.0
    %291 = vmatprep.subr.mxu0 0.0
    %292 = vmatpush1.msra.mxu0 0.0
    %293 = vmatprep.subr.mxu0 0.0
    %294 = vmatpush1.msra.mxu0 0.0
    %295 = vmatprep.subr.mxu0 0.0
    %296 = vmatpush1.msra.mxu0 0.0
    %297 = vmatprep.subr.mxu0 0.0
    %298 = vmatpush1.msra.mxu0 0.0
    %299 = vmatprep.subr.mxu0 0.0
    %300 = vmatpush1.msra.mxu0 0.0
    %301 = vmatprep.subr.mxu0 0.0
    %302 = vmatpush1.msra.mxu0 0.0
    %303 = vmatprep.subr.mxu0 0.0
    %304 = vmatpush1.msra.mxu0 0.0
    %305 = vmatprep.subr.mxu0 0.0
    %306 = vmatpush1.msra.mxu0 0.0
    %307 = vmatprep.subr.mxu0 0.0
    %308 = vmatpush1.msra.mxu0 0.0
    %309 = vmatprep.subr.mxu0 0.0
    %310 = vmatpush1.msra.mxu0 0.0
    %311 = vmatprep.subr.mxu0 0.0
    %312 = vmatpush1.msra.mxu0 0.0
    %313 = vmatprep.subr.mxu0 0.0
    %314 = vmatpush1.msra.mxu0 0.0
    %315 = vmatprep.subr.mxu0 0.0
    %316 = vmatpush1.msra.mxu0 0.0
    %317 = vmatprep.subr.mxu0 0.0
    %318 = vmatpush1.msra.mxu0 0.0
    %319 = vmatprep.subr.mxu0 0.0
    %320 = vmatpush1.msra.mxu0 0.0
    %321 = vmatprep.subr.mxu0 0.0
    %322 = vmatpush1.msra.mxu0 0.0
    %323 = vmatprep.subr.mxu0 0.0
    %324 = vmatpush1.msra.mxu0 0.0
    %325 = vmatprep.subr.mxu0 0.0
    %326 = vmatpush1.msra.mxu0 0.0
    %327 = vmatprep.subr.mxu0 0.0
    %328 = vmatpush1.msra.mxu0 0.0
    %329 = vmatprep.mubr.f32.mxu0 0.0
    %v330 = vand.u32 %v139, 4294901760
    %331 = vmatmul.mubr.f32.gmra.mrb[0].mxu0 %v330
    %v332 = vpop.f32.mrb[0].mxu0
    %v333 = vadd.f32 %v221, %v332
    %v334 = vpop.f32.mrb[0].mxu0
    %v335 = vadd.f32 %v223, %v334
    %336 = vdwg.mxu0
    %v337 = vand.u32 %v30, 4294901760
    %v338 = vsub.f32 %v30, %v337
    %339 = vmatprep.subr.mxu0 %v338
    %v340 = vand.u32 %v29, 4294901760
    %v341 = vsub.f32 %v29, %v340
    %342 = vmatpush1.msra.mxu0 %v341
    %v343 = vand.u32 %v32, 4294901760
    %v344 = vsub.f32 %v32, %v343
    %345 = vmatprep.subr.mxu0 %v344
    %v346 = vand.u32 %v31, 4294901760
    %v347 = vsub.f32 %v31, %v346
    %348 = vmatpush1.msra.mxu0 %v347
    %v349 = vand.u32 %v34, 4294901760
    %v350 = vsub.f32 %v34, %v349
    %351 = vmatprep.subr.mxu0 %v350
    %v352 = vand.u32 %v33, 4294901760
    %v353 = vsub.f32 %v33, %v352
    %354 = vmatpush1.msra.mxu0 %v353
    %v355 = vand.u32 %v36, 4294901760
    %v356 = vsub.f32 %v36, %v355
    %357 = vmatprep.subr.mxu0 %v356
    %v358 = vand.u32 %v35, 4294901760
    %v359 = vsub.f32 %v35, %v358
    %360 = vmatpush1.msra.mxu0 %v359
    %361 = vmatprep.subr.mxu0 0.0
    %362 = vmatpush1.msra.mxu0 0.0
    %363 = vmatprep.subr.mxu0 0.0
    %364 = vmatpush1.msra.mxu0 0.0
    %365 = vmatprep.subr.mxu0 0.0
    %366 = vmatpush1.msra.mxu0 0.0
    %367 = vmatprep.subr.mxu0 0.0
    %368 = vmatpush1.msra.mxu0 0.0
    %369 = vmatprep.subr.mxu0 0.0
    %370 = vmatpush1.msra.mxu0 0.0
    %371 = vmatprep.subr.mxu0 0.0
    %372 = vmatpush1.msra.mxu0 0.0
    %373 = vmatprep.subr.mxu0 0.0
    %374 = vmatpush1.msra.mxu0 0.0
    %375 = vmatprep.subr.mxu0 0.0
    %376 = vmatpush1.msra.mxu0 0.0
    %377 = vmatprep.subr.mxu0 0.0
    %378 = vmatpush1.msra.mxu0 0.0
    %379 = vmatprep.subr.mxu0 0.0
    %380 = vmatpush1.msra.mxu0 0.0
    %381 = vmatprep.subr.mxu0 0.0
    %382 = vmatpush1.msra.mxu0 0.0
    %383 = vmatprep.subr.mxu0 0.0
    %384 = vmatpush1.msra.mxu0 0.0
    %385 = vmatprep.subr.mxu0 0.0
    %386 = vmatpush1.msra.mxu0 0.0
    %387 = vmatprep.subr.mxu0 0.0
    %388 = vmatpush1.msra.mxu0 0.0
    %389 = vmatprep.subr.mxu0 0.0
    %390 = vmatpush1.msra.mxu0 0.0
    %391 = vmatprep.subr.mxu0 0.0
    %392 = vmatpush1.msra.mxu0 0.0
    %393 = vmatprep.subr.mxu0 0.0
    %394 = vmatpush1.msra.mxu0 0.0
    %395 = vmatprep.subr.mxu0 0.0
    %396 = vmatpush1.msra.mxu0 0.0
    %397 = vmatprep.subr.mxu0 0.0
    %398 = vmatpush1.msra.mxu0 0.0
    %399 = vmatprep.subr.mxu0 0.0
    %400 = vmatpush1.msra.mxu0 0.0
    %401 = vmatprep.subr.mxu0 0.0
    %402 = vmatpush1.msra.mxu0 0.0
    %403 = vmatprep.subr.mxu0 0.0
    %404 = vmatpush1.msra.mxu0 0.0
    %405 = vmatprep.subr.mxu0 0.0
    %406 = vmatpush1.msra.mxu0 0.0
    %407 = vmatprep.subr.mxu0 0.0
    %408 = vmatpush1.msra.mxu0 0.0
    %409 = vmatprep.subr.mxu0 0.0
    %410 = vmatpush1.msra.mxu0 0.0
    %411 = vmatprep.subr.mxu0 0.0
    %412 = vmatpush1.msra.mxu0 0.0
    %413 = vmatprep.subr.mxu0 0.0
    %414 = vmatpush1.msra.mxu0 0.0
    %415 = vmatprep.subr.mxu0 0.0
    %416 = vmatpush1.msra.mxu0 0.0
    %417 = vmatprep.mubr.f32.mxu0 0.0
    %v418 = vand.u32 %v139, 4294901760
    %v419 = vsub.f32 %v139, %v418
    %420 = vmatmul.mubr.f32.gmra.mrb[0].mxu0 %v419
    %v421 = vpop.f32.mrb[0].mxu0
    %v422 = vadd.f32 %v333, %v421
    %v423 = vpop.f32.mrb[0].mxu0
    %v424 = vadd.f32 %v335, %v423
    %425 = vdwg.mxu0
    %v426 = vand.u32 %v30, 4294901760
    %427 = vmatprep.subr.mxu0 %v426
    %v428 = vand.u32 %v29, 4294901760
    %429 = vmatpush1.msra.mxu0 %v428
    %v430 = vand.u32 %v32, 4294901760
    %431 = vmatprep.subr.mxu0 %v430
    %v432 = vand.u32 %v31, 4294901760
    %433 = vmatpush1.msra.mxu0 %v432
    %v434 = vand.u32 %v34, 4294901760
    %435 = vmatprep.subr.mxu0 %v434
    %v436 = vand.u32 %v33, 4294901760
    %437 = vmatpush1.msra.mxu0 %v436
    %v438 = vand.u32 %v36, 4294901760
    %439 = vmatprep.subr.mxu0 %v438
    %v440 = vand.u32 %v35, 4294901760
    %441 = vmatpush1.msra.mxu0 %v440
    %442 = vmatprep.subr.mxu0 0.0
    %443 = vmatpush1.msra.mxu0 0.0
    %444 = vmatprep.subr.mxu0 0.0
    %445 = vmatpush1.msra.mxu0 0.0
    %446 = vmatprep.subr.mxu0 0.0
    %447 = vmatpush1.msra.mxu0 0.0
    %448 = vmatprep.subr.mxu0 0.0
    %449 = vmatpush1.msra.mxu0 0.0
    %450 = vmatprep.subr.mxu0 0.0
    %451 = vmatpush1.msra.mxu0 0.0
    %452 = vmatprep.subr.mxu0 0.0
    %453 = vmatpush1.msra.mxu0 0.0
    %454 = vmatprep.subr.mxu0 0.0
    %455 = vmatpush1.msra.mxu0 0.0
    %456 = vmatprep.subr.mxu0 0.0
    %457 = vmatpush1.msra.mxu0 0.0
    %458 = vmatprep.subr.mxu0 0.0
    %459 = vmatpush1.msra.mxu0 0.0
    %460 = vmatprep.subr.mxu0 0.0
    %461 = vmatpush1.msra.mxu0 0.0
    %462 = vmatprep.subr.mxu0 0.0
    %463 = vmatpush1.msra.mxu0 0.0
    %464 = vmatprep.subr.mxu0 0.0
    %465 = vmatpush1.msra.mxu0 0.0
    %466 = vmatprep.subr.mxu0 0.0
    %467 = vmatpush1.msra.mxu0 0.0
    %468 = vmatprep.subr.mxu0 0.0
    %469 = vmatpush1.msra.mxu0 0.0
    %470 = vmatprep.subr.mxu0 0.0
    %471 = vmatpush1.msra.mxu0 0.0
    %472 = vmatprep.subr.mxu0 0.0
    %473 = vmatpush1.msra.mxu0 0.0
    %474 = vmatprep.subr.mxu0 0.0
    %475 = vmatpush1.msra.mxu0 0.0
    %476 = vmatprep.subr.mxu0 0.0
    %477 = vmatpush1.msra.mxu0 0.0
    %478 = vmatprep.subr.mxu0 0.0
    %479 = vmatpush1.msra.mxu0 0.0
    %480 = vmatprep.subr.mxu0 0.0
    %481 = vmatpush1.msra.mxu0 0.0
    %482 = vmatprep.subr.mxu0 0.0
    %483 = vmatpush1.msra.mxu0 0.0
    %484 = vmatprep.subr.mxu0 0.0
    %485 = vmatpush1.msra.mxu0 0.0
    %486 = vmatprep.subr.mxu0 0.0
    %487 = vmatpush1.msra.mxu0 0.0
    %488 = vmatprep.subr.mxu0 0.0
    %489 = vmatpush1.msra.mxu0 0.0
    %490 = vmatprep.subr.mxu0 0.0
    %491 = vmatpush1.msra.mxu0 0.0
    %492 = vmatprep.subr.mxu0 0.0
    %493 = vmatpush1.msra.mxu0 0.0
    %494 = vmatprep.subr.mxu0 0.0
    %495 = vmatpush1.msra.mxu0 0.0
    %496 = vmatprep.subr.mxu0 0.0
    %497 = vmatpush1.msra.mxu0 0.0
    %498 = vmatprep.mubr.f32.mxu0 0.0
    %v499 = vand.u32 %v139, 4294901760
    %v500 = vsub.f32 %v139, %v499
    %v501 = vand.u32 %v500, 4294901760
    %502 = vmatmul.mubr.f32.gmra.mrb[0].mxu0 %v501
    %v503 = vpop.f32.mrb[0].mxu0
    %v504 = vadd.f32 %v422, %v503
    %v505 = vpop.f32.mrb[0].mxu0
    %v506 = vadd.f32 %v424, %v505
    %507 = vdwg.mxu0
    %v508 = vand.u32 %v30, 4294901760
    %v509 = vsub.f32 %v30, %v508
    %v510 = vand.u32 %v509, 4294901760
    %511 = vmatprep.subr.mxu0 %v510
    %v512 = vand.u32 %v29, 4294901760
    %v513 = vsub.f32 %v29, %v512
    %v514 = vand.u32 %v513, 4294901760
    %515 = vmatpush1.msra.mxu0 %v514
    %v516 = vand.u32 %v32, 4294901760
    %v517 = vsub.f32 %v32, %v516
    %v518 = vand.u32 %v517, 4294901760
    %519 = vmatprep.subr.mxu0 %v518
    %v520 = vand.u32 %v31, 4294901760
    %v521 = vsub.f32 %v31, %v520
    %v522 = vand.u32 %v521, 4294901760
    %523 = vmatpush1.msra.mxu0 %v522
    %v524 = vand.u32 %v34, 4294901760
    %v525 = vsub.f32 %v34, %v524
    %v526 = vand.u32 %v525, 4294901760
    %527 = vmatprep.subr.mxu0 %v526
    %v528 = vand.u32 %v33, 4294901760
    %v529 = vsub.f32 %v33, %v528
    %v530 = vand.u32 %v529, 4294901760
    %531 = vmatpush1.msra.mxu0 %v530
    %v532 = vand.u32 %v36, 4294901760
    %v533 = vsub.f32 %v36, %v532
    %v534 = vand.u32 %v533, 4294901760
    %535 = vmatprep.subr.mxu0 %v534
    %v536 = vand.u32 %v35, 4294901760
    %v537 = vsub.f32 %v35, %v536
    %v538 = vand.u32 %v537, 4294901760
    %539 = vmatpush1.msra.mxu0 %v538
    %540 = vmatprep.subr.mxu0 0.0
    %541 = vmatpush1.msra.mxu0 0.0
    %542 = vmatprep.subr.mxu0 0.0
    %543 = vmatpush1.msra.mxu0 0.0
    %544 = vmatprep.subr.mxu0 0.0
    %545 = vmatpush1.msra.mxu0 0.0
    %546 = vmatprep.subr.mxu0 0.0
    %547 = vmatpush1.msra.mxu0 0.0
    %548 = vmatprep.subr.mxu0 0.0
    %549 = vmatpush1.msra.mxu0 0.0
    %550 = vmatprep.subr.mxu0 0.0
    %551 = vmatpush1.msra.mxu0 0.0
    %552 = vmatprep.subr.mxu0 0.0
    %553 = vmatpush1.msra.mxu0 0.0
    %554 = vmatprep.subr.mxu0 0.0
    %555 = vmatpush1.msra.mxu0 0.0
    %556 = vmatprep.subr.mxu0 0.0
    %557 = vmatpush1.msra.mxu0 0.0
    %558 = vmatprep.subr.mxu0 0.0
    %559 = vmatpush1.msra.mxu0 0.0
    %560 = vmatprep.subr.mxu0 0.0
    %561 = vmatpush1.msra.mxu0 0.0
    %562 = vmatprep.subr.mxu0 0.0
    %563 = vmatpush1.msra.mxu0 0.0
    %564 = vmatprep.subr.mxu0 0.0
    %565 = vmatpush1.msra.mxu0 0.0
    %566 = vmatprep.subr.mxu0 0.0
    %567 = vmatpush1.msra.mxu0 0.0
    %568 = vmatprep.subr.mxu0 0.0
    %569 = vmatpush1.msra.mxu0 0.0
    %570 = vmatprep.subr.mxu0 0.0
    %571 = vmatpush1.msra.mxu0 0.0
    %572 = vmatprep.subr.mxu0 0.0
    %573 = vmatpush1.msra.mxu0 0.0
    %574 = vmatprep.subr.mxu0 0.0
    %575 = vmatpush1.msra.mxu0 0.0
    %576 = vmatprep.subr.mxu0 0.0
    %577 = vmatpush1.msra.mxu0 0.0
    %578 = vmatprep.subr.mxu0 0.0
    %579 = vmatpush1.msra.mxu0 0.0
    %580 = vmatprep.subr.mxu0 0.0
    %581 = vmatpush1.msra.mxu0 0.0
    %582 = vmatprep.subr.mxu0 0.0
    %583 = vmatpush1.msra.mxu0 0.0
    %584 = vmatprep.subr.mxu0 0.0
    %585 = vmatpush1.msra.mxu0 0.0
    %586 = vmatprep.subr.mxu0 0.0
    %587 = vmatpush1.msra.mxu0 0.0
    %588 = vmatprep.subr.mxu0 0.0
    %589 = vmatpush1.msra.mxu0 0.0
    %590 = vmatprep.subr.mxu0 0.0
    %591 = vmatpush1.msra.mxu0 0.0
    %592 = vmatprep.subr.mxu0 0.0
    %593 = vmatpush1.msra.mxu0 0.0
    %594 = vmatprep.subr.mxu0 0.0
    %595 = vmatpush1.msra.mxu0 0.0
    %596 = vmatprep.mubr.f32.mxu0 0.0
    %v597 = vand.u32 %v139, 4294901760
    %598 = vmatmul.mubr.f32.gmra.mrb[0].mxu0 %v597
    %v599 = vpop.f32.mrb[0].mxu0
    %v600 = vadd.f32 %v504, %v599
    %v601 = vpop.f32.mrb[0].mxu0
    %v602 = vadd.f32 %v506, %v601
    %603 = vdwg.mxu0
    %v604 = vand.u32 %v30, 4294901760
    %605 = vmatprep.subr.mxu0 %v604
    %v606 = vand.u32 %v29, 4294901760
    %607 = vmatpush1.msra.mxu0 %v606
    %v608 = vand.u32 %v32, 4294901760
    %609 = vmatprep.subr.mxu0 %v608
    %v610 = vand.u32 %v31, 4294901760
    %611 = vmatpush1.msra.mxu0 %v610
    %v612 = vand.u32 %v34, 4294901760
    %613 = vmatprep.subr.mxu0 %v612
    %v614 = vand.u32 %v33, 4294901760
    %615 = vmatpush1.msra.mxu0 %v614
    %v616 = vand.u32 %v36, 4294901760
    %617 = vmatprep.subr.mxu0 %v616
    %v618 = vand.u32 %v35, 4294901760
    %619 = vmatpush1.msra.mxu0 %v618
    %620 = vmatprep.subr.mxu0 0.0
    %621 = vmatpush1.msra.mxu0 0.0
    %622 = vmatprep.subr.mxu0 0.0
    %623 = vmatpush1.msra.mxu0 0.0
    %624 = vmatprep.subr.mxu0 0.0
    %625 = vmatpush1.msra.mxu0 0.0
    %626 = vmatprep.subr.mxu0 0.0
    %627 = vmatpush1.msra.mxu0 0.0
    %628 = vmatprep.subr.mxu0 0.0
    %629 = vmatpush1.msra.mxu0 0.0
    %630 = vmatprep.subr.mxu0 0.0
    %631 = vmatpush1.msra.mxu0 0.0
    %632 = vmatprep.subr.mxu0 0.0
    %633 = vmatpush1.msra.mxu0 0.0
    %634 = vmatprep.subr.mxu0 0.0
    %635 = vmatpush1.msra.mxu0 0.0
    %636 = vmatprep.subr.mxu0 0.0
    %637 = vmatpush1.msra.mxu0 0.0
    %638 = vmatprep.subr.mxu0 0.0
    %639 = vmatpush1.msra.mxu0 0.0
    %640 = vmatprep.subr.mxu0 0.0
    %641 = vmatpush1.msra.mxu0 0.0
    %642 = vmatprep.subr.mxu0 0.0
    %643 = vmatpush1.msra.mxu0 0.0
    %644 = vmatprep.subr.mxu0 0.0
    %645 = vmatpush1.msra.mxu0 0.0
    %646 = vmatprep.subr.mxu0 0.0
    %647 = vmatpush1.msra.mxu0 0.0
    %648 = vmatprep.subr.mxu0 0.0
    %649 = vmatpush1.msra.mxu0 0.0
    %650 = vmatprep.subr.mxu0 0.0
    %651 = vmatpush1.msra.mxu0 0.0
    %652 = vmatprep.subr.mxu0 0.0
    %653 = vmatpush1.msra.mxu0 0.0
    %654 = vmatprep.subr.mxu0 0.0
    %655 = vmatpush1.msra.mxu0 0.0
    %656 = vmatprep.subr.mxu0 0.0
    %657 = vmatpush1.msra.mxu0 0.0
    %658 = vmatprep.subr.mxu0 0.0
    %659 = vmatpush1.msra.mxu0 0.0
    %660 = vmatprep.subr.mxu0 0.0
    %661 = vmatpush1.msra.mxu0 0.0
    %662 = vmatprep.subr.mxu0 0.0
    %663 = vmatpush1.msra.mxu0 0.0
    %664 = vmatprep.subr.mxu0 0.0
    %665 = vmatpush1.msra.mxu0 0.0
    %666 = vmatprep.subr.mxu0 0.0
    %667 = vmatpush1.msra.mxu0 0.0
    %668 = vmatprep.subr.mxu0 0.0
    %669 = vmatpush1.msra.mxu0 0.0
    %670 = vmatprep.subr.mxu0 0.0
    %671 = vmatpush1.msra.mxu0 0.0
    %672 = vmatprep.subr.mxu0 0.0
    %673 = vmatpush1.msra.mxu0 0.0
    %674 = vmatprep.subr.mxu0 0.0
    %675 = vmatpush1.msra.mxu0 0.0
    %676 = vmatprep.mubr.f32.mxu0 0.0
    %v677 = vand.u32 %v139, 4294901760
    %678 = vmatmul.mubr.f32.gmra.mrb[0].mxu0 %v677
    %v679 = vpop.f32.mrb[0].mxu0
    %v680 = vadd.f32 %v600, %v679
    %v681 = vpop.f32.mrb[0].mxu0
    %v682 = vadd.f32 %v602, %v681
    %683 = vdwg.mxu0
    %v684 = vadd.f32 %v102, %v680
    %v685 = vadd.f32 %v28, %v682
    %v686 = vtanh.pop %v684
    %v687 = vadd.f32 %v686, 1.0
    %v688 = vmul.f32 %v687, 0.5
    %v689 = vsel %vm113, %v686, %v688
    %v690 = vmul.f32 %v689, %v128
    %692 = vrot.lane.b32.xlu0 %v689, 64
    %v693 = vpop.permute.xlu0 %692
    %v695 = vmul.f32 %v689, %v693
    %697 = vrot.lane.b32.xlu0 %v695, 32
    %v698 = vpop.permute.xlu0 %697
    %v700 = vadd.f32 %v690, %v698
    %v701 = vtanh.pop %v700
    %703 = vrot.lane.b32.xlu0 %v701, 64
    %v704 = vpop.permute.xlu0 %703
    %v706 = vmul.f32 %v689, %v704
    %v707 = vtanh.pop %v685
    %v708 = vadd.f32 %v707, 1.0
    %v709 = vmul.f32 %v708, 0.5
    %v710 = vsel %vm113, %v707, %v709
    %v711 = vmul.f32 %v710, 0.0
    %713 = vrot.lane.b32.xlu0 %v710, 64
    %v714 = vpop.permute.xlu0 %713
    %v716 = vmul.f32 %v710, %v714
    %718 = vrot.lane.b32.xlu0 %v716, 32
    %v719 = vpop.permute.xlu0 %718
    %v721 = vadd.f32 %v711, %v719
    %v722 = vtanh.pop %v721
    %724 = vrot.lane.b32.xlu0 %v722, 64
    %v725 = vpop.permute.xlu0 %724
    %v727 = vmul.f32 %v710, %v725
    %v728 = vld [vmem:[%s3] sm:$0xff]
    %v729 = vld [vmem:[%s3 + $0x8] sm:$0xff]
    %v730 = vld [vmem:[%s3 + $0x10] sm:$0xff]
    %v731 = vld [vmem:[%s3 + $0x18] sm:$0xff]
    %733 = vrot.lane.b32.xlu0 %v706, 32
    %v734 = vpop.permute.xlu0 %733
    %v735 = vsel %vm138, %v734, 0
    %v737 = vand.u32 %v30, 4294901760
    %738 = vmatprep.subr.mxu0 %v737
    %v739 = vand.u32 %v29, 4294901760
    %740 = vmatpush1.msra.mxu0 %v739
    %v741 = vand.u32 %v32, 4294901760
    %742 = vmatprep.subr.mxu0 %v741
    %v743 = vand.u32 %v31, 4294901760
    %744 = vmatpush1.msra.mxu0 %v743
    %v745 = vand.u32 %v34, 4294901760
    %746 = vmatprep.subr.mxu0 %v745
    %v747 = vand.u32 %v33, 4294901760
    %748 = vmatpush1.msra.mxu0 %v747
    %v749 = vand.u32 %v36, 4294901760
    %750 = vmatprep.subr.mxu0 %v749
    %v751 = vand.u32 %v35, 4294901760
    %752 = vmatpush1.msra.mxu0 %v751
    %753 = vmatprep.subr.mxu0 0.0
    %754 = vmatpush1.msra.mxu0 0.0
    %755 = vmatprep.subr.mxu0 0.0
    %756 = vmatpush1.msra.mxu0 0.0
    %757 = vmatprep.subr.mxu0 0.0
    %758 = vmatpush1.msra.mxu0 0.0
    %759 = vmatprep.subr.mxu0 0.0
    %760 = vmatpush1.msra.mxu0 0.0
    %761 = vmatprep.subr.mxu0 0.0
    %762 = vmatpush1.msra.mxu0 0.0
    %763 = vmatprep.subr.mxu0 0.0
    %764 = vmatpush1.msra.mxu0 0.0
    %765 = vmatprep.subr.mxu0 0.0
    %766 = vmatpush1.msra.mxu0 0.0
    %767 = vmatprep.subr.mxu0 0.0
    %768 = vmatpush1.msra.mxu0 0.0
    %769 = vmatprep.subr.mxu0 0.0
    %770 = vmatpush1.msra.mxu0 0.0
    %771 = vmatprep.subr.mxu0 0.0
    %772 = vmatpush1.msra.mxu0 0.0
    %773 = vmatprep.subr.mxu0 0.0
    %774 = vmatpush1.msra.mxu0 0.0
    %775 = vmatprep.subr.mxu0 0.0
    %776 = vmatpush1.msra.mxu0 0.0
    %777 = vmatprep.subr.mxu0 0.0
    %778 = vmatpush1.msra.mxu0 0.0
    %779 = vmatprep.subr.mxu0 0.0
    %780 = vmatpush1.msra.mxu0 0.0
    %781 = vmatprep.subr.mxu0 0.0
    %782 = vmatpush1.msra.mxu0 0.0
    %783 = vmatprep.subr.mxu0 0.0
    %784 = vmatpush1.msra.mxu0 0.0
    %785 = vmatprep.subr.mxu0 0.0
    %786 = vmatpush1.msra.mxu0 0.0
    %787 = vmatprep.subr.mxu0 0.0
    %788 = vmatpush1.msra.mxu0 0.0
    %789 = vmatprep.subr.mxu0 0.0
    %790 = vmatpush1.msra.mxu0 0.0
    %791 = vmatprep.subr.mxu0 0.0
    %792 = vmatpush1.msra.mxu0 0.0
    %793 = vmatprep.subr.mxu0 0.0
    %794 = vmatpush1.msra.mxu0 0.0
    %795 = vmatprep.subr.mxu0 0.0
    %796 = vmatpush1.msra.mxu0 0.0
    %797 = vmatprep.subr.mxu0 0.0
    %798 = vmatpush1.msra.mxu0 0.0
    %799 = vmatprep.subr.mxu0 0.0
    %800 = vmatpush1.msra.mxu0 0.0
    %801 = vmatprep.subr.mxu0 0.0
    %802 = vmatpush1.msra.mxu0 0.0
    %803 = vmatprep.subr.mxu0 0.0
    %804 = vmatpush1.msra.mxu0 0.0
    %805 = vmatprep.subr.mxu0 0.0
    %806 = vmatpush1.msra.mxu0 0.0
    %807 = vmatprep.subr.mxu0 0.0
    %808 = vmatpush1.msra.mxu0 0.0
    %809 = vmatprep.mubr.f32.mxu0 0.0
    %v810 = vand.u32 %v735, 4294901760
    %v811 = vsub.f32 %v735, %v810
    %v812 = vand.u32 %v811, 4294901760
    %v813 = vsub.f32 %v811, %v812
    %v814 = vand.u32 %v813, 4294901760
    %815 = vmatmul.mubr.f32.gmra.mrb[0].mxu0 %v814
    %v816 = vpop.f32.mrb[0].mxu0
    %v817 = vadd.f32 0.0, %v816
    %v818 = vpop.f32.mrb[0].mxu0
    %v819 = vadd.f32 0.0, %v818
    %820 = vdwg.mxu0
    %v821 = vand.u32 %v30, 4294901760
    %v822 = vsub.f32 %v30, %v821
    %v823 = vand.u32 %v822, 4294901760
    %v824 = vsub.f32 %v822, %v823
    %v825 = vand.u32 %v824, 4294901760
    %826 = vmatprep.subr.mxu0 %v825
    %v827 = vand.u32 %v29, 4294901760
    %v828 = vsub.f32 %v29, %v827
    %v829 = vand.u32 %v828, 4294901760
    %v830 = vsub.f32 %v828, %v829
    %v831 = vand.u32 %v830, 4294901760
    %832 = vmatpush1.msra.mxu0 %v831
    %v833 = vand.u32 %v32, 4294901760
    %v834 = vsub.f32 %v32, %v833
    %v835 = vand.u32 %v834, 4294901760
    %v836 = vsub.f32 %v834, %v835
    %v837 = vand.u32 %v836, 4294901760
    %838 = vmatprep.subr.mxu0 %v837
    %v839 = vand.u32 %v31, 4294901760
    %v840 = vsub.f32 %v31, %v839
    %v841 = vand.u32 %v840, 4294901760
    %v842 = vsub.f32 %v840, %v841
    %v843 = vand.u32 %v842, 4294901760
    %844 = vmatpush1.msra.mxu0 %v843
    %v845 = vand.u32 %v34, 4294901760
    %v846 = vsub.f32 %v34, %v845
    %v847 = vand.u32 %v846, 4294901760
    %v848 = vsub.f32 %v846, %v847
    %v849 = vand.u32 %v848, 4294901760
    %850 = vmatprep.subr.mxu0 %v849
    %v851 = vand.u32 %v33, 4294901760
    %v852 = vsub.f32 %v33, %v851
    %v853 = vand.u32 %v852, 4294901760
    %v854 = vsub.f32 %v852, %v853
    %v855 = vand.u32 %v854, 4294901760
    %856 = vmatpush1.msra.mxu0 %v855
    %v857 = vand.u32 %v36, 4294901760
    %v858 = vsub.f32 %v36, %v857
    %v859 = vand.u32 %v858, 4294901760
    %v860 = vsub.f32 %v858, %v859
    %v861 = vand.u32 %v860, 4294901760
    %862 = vmatprep.subr.mxu0 %v861
    %v863 = vand.u32 %v35, 4294901760
    %v864 = vsub.f32 %v35, %v863
    %v865 = vand.u32 %v864, 4294901760
    %v866 = vsub.f32 %v864, %v865
    %v867 = vand.u32 %v866, 4294901760
    %868 = vmatpush1.msra.mxu0 %v867
    %869 = vmatprep.subr.mxu0 0.0
    %870 = vmatpush1.msra.mxu0 0.0
    %871 = vmatprep.subr.mxu0 0.0
    %872 = vmatpush1.msra.mxu0 0.0
    %873 = vmatprep.subr.mxu0 0.0
    %874 = vmatpush1.msra.mxu0 0.0
    %875 = vmatprep.subr.mxu0 0.0
    %876 = vmatpush1.msra.mxu0 0.0
    %877 = vmatprep.subr.mxu0 0.0
    %878 = vmatpush1.msra.mxu0 0.0
    %879 = vmatprep.subr.mxu0 0.0
    %880 = vmatpush1.msra.mxu0 0.0
    %881 = vmatprep.subr.mxu0 0.0
    %882 = vmatpush1.msra.mxu0 0.0
    %883 = vmatprep.subr.mxu0 0.0
    %884 = vmatpush1.msra.mxu0 0.0
    %885 = vmatprep.subr.mxu0 0.0
    %886 = vmatpush1.msra.mxu0 0.0
    %887 = vmatprep.subr.mxu0 0.0
    %888 = vmatpush1.msra.mxu0 0.0
    %889 = vmatprep.subr.mxu0 0.0
    %890 = vmatpush1.msra.mxu0 0.0
    %891 = vmatprep.subr.mxu0 0.0
    %892 = vmatpush1.msra.mxu0 0.0
    %893 = vmatprep.subr.mxu0 0.0
    %894 = vmatpush1.msra.mxu0 0.0
    %895 = vmatprep.subr.mxu0 0.0
    %896 = vmatpush1.msra.mxu0 0.0
    %897 = vmatprep.subr.mxu0 0.0
    %898 = vmatpush1.msra.mxu0 0.0
    %899 = vmatprep.subr.mxu0 0.0
    %900 = vmatpush1.msra.mxu0 0.0
    %901 = vmatprep.subr.mxu0 0.0
    %902 = vmatpush1.msra.mxu0 0.0
    %903 = vmatprep.subr.mxu0 0.0
    %904 = vmatpush1.msra.mxu0 0.0
    %905 = vmatprep.subr.mxu0 0.0
    %906 = vmatpush1.msra.mxu0 0.0
    %907 = vmatprep.subr.mxu0 0.0
    %908 = vmatpush1.msra.mxu0 0.0
    %909 = vmatprep.subr.mxu0 0.0
    %910 = vmatpush1.msra.mxu0 0.0
    %911 = vmatprep.subr.mxu0 0.0
    %912 = vmatpush1.msra.mxu0 0.0
    %913 = vmatprep.subr.mxu0 0.0
    %914 = vmatpush1.msra.mxu0 0.0
    %915 = vmatprep.subr.mxu0 0.0
    %916 = vmatpush1.msra.mxu0 0.0
    %917 = vmatprep.subr.mxu0 0.0
    %918 = vmatpush1.msra.mxu0 0.0
    %919 = vmatprep.subr.mxu0 0.0
    %920 = vmatpush1.msra.mxu0 0.0
    %921 = vmatprep.subr.mxu0 0.0
    %922 = vmatpush1.msra.mxu0 0.0
    %923 = vmatprep.subr.mxu0 0.0
    %924 = vmatpush1.msra.mxu0 0.0
    %925 = vmatprep.mubr.f32.mxu0 0.0
    %v926 = vand.u32 %v735, 4294901760
    %927 = vmatmul.mubr.f32.gmra.mrb[0].mxu0 %v926
    %v928 = vpop.f32.mrb[0].mxu0
    %v929 = vadd.f32 %v817, %v928
    %v930 = vpop.f32.mrb[0].mxu0
    %v931 = vadd.f32 %v819, %v930
    %932 = vdwg.mxu0
    %v933 = vand.u32 %v30, 4294901760
    %v934 = vsub.f32 %v30, %v933
    %935 = vmatprep.subr.mxu0 %v934
    %v936 = vand.u32 %v29, 4294901760
    %v937 = vsub.f32 %v29, %v936
    %938 = vmatpush1.msra.mxu0 %v937
    %v939 = vand.u32 %v32, 4294901760
    %v940 = vsub.f32 %v32, %v939
    %941 = vmatprep.subr.mxu0 %v940
    %v942 = vand.u32 %v31, 4294901760
    %v943 = vsub.f32 %v31, %v942
    %944 = vmatpush1.msra.mxu0 %v943
    %v945 = vand.u32 %v34, 4294901760
    %v946 = vsub.f32 %v34, %v945
    %947 = vmatprep.subr.mxu0 %v946
    %v948 = vand.u32 %v33, 4294901760
    %v949 = vsub.f32 %v33, %v948
    %950 = vmatpush1.msra.mxu0 %v949
    %v951 = vand.u32 %v36, 4294901760
    %v952 = vsub.f32 %v36, %v951
    %953 = vmatprep.subr.mxu0 %v952
    %v954 = vand.u32 %v35, 4294901760
    %v955 = vsub.f32 %v35, %v954
    %956 = vmatpush1.msra.mxu0 %v955
    %957 = vmatprep.subr.mxu0 0.0
    %958 = vmatpush1.msra.mxu0 0.0
    %959 = vmatprep.subr.mxu0 0.0
    %960 = vmatpush1.msra.mxu0 0.0
    %961 = vmatprep.subr.mxu0 0.0
    %962 = vmatpush1.msra.mxu0 0.0
    %963 = vmatprep.subr.mxu0 0.0
    %964 = vmatpush1.msra.mxu0 0.0
    %965 = vmatprep.subr.mxu0 0.0
    %966 = vmatpush1.msra.mxu0 0.0
    %967 = vmatprep.subr.mxu0 0.0
    %968 = vmatpush1.msra.mxu0 0.0
    %969 = vmatprep.subr.mxu0 0.0
    %970 = vmatpush1.msra.mxu0 0.0
    %971 = vmatprep.subr.mxu0 0.0
    %972 = vmatpush1.msra.mxu0 0.0
    %973 = vmatprep.subr.mxu0 0.0
    %974 = vmatpush1.msra.mxu0 0.0
    %975 = vmatprep.subr.mxu0 0.0
    %976 = vmatpush1.msra.mxu0 0.0
    %977 = vmatprep.subr.mxu0 0.0
    %978 = vmatpush1.msra.mxu0 0.0
    %979 = vmatprep.subr.mxu0 0.0
    %980 = vmatpush1.msra.mxu0 0.0
    %981 = vmatprep.subr.mxu0 0.0
    %982 = vmatpush1.msra.mxu0 0.0
    %983 = vmatprep.subr.mxu0 0.0
    %984 = vmatpush1.msra.mxu0 0.0
    %985 = vmatprep.subr.mxu0 0.0
    %986 = vmatpush1.msra.mxu0 0.0
    %987 = vmatprep.subr.mxu0 0.0
    %988 = vmatpush1.msra.mxu0 0.0
    %989 = vmatprep.subr.mxu0 0.0
    %990 = vmatpush1.msra.mxu0 0.0
    %991 = vmatprep.subr.mxu0 0.0
    %992 = vmatpush1.msra.mxu0 0.0
    %993 = vmatprep.subr.mxu0 0.0
    %994 = vmatpush1.msra.mxu0 0.0
    %995 = vmatprep.subr.mxu0 0.0
    %996 = vmatpush1.msra.mxu0 0.0
    %997 = vmatprep.subr.mxu0 0.0
    %998 = vmatpush1.msra.mxu0 0.0
    %999 = vmatprep.subr.mxu0 0.0
    %1000 = vmatpush1.msra.mxu0 0.0
    %1001 = vmatprep.subr.mxu0 0.0
    %1002 = vmatpush1.msra.mxu0 0.0
    %1003 = vmatprep.subr.mxu0 0.0
    %1004 = vmatpush1.msra.mxu0 0.0
    %1005 = vmatprep.subr.mxu0 0.0
    %1006 = vmatpush1.msra.mxu0 0.0
    %1007 = vmatprep.subr.mxu0 0.0
    %1008 = vmatpush1.msra.mxu0 0.0
    %1009 = vmatprep.subr.mxu0 0.0
    %1010 = vmatpush1.msra.mxu0 0.0
    %1011 = vmatprep.subr.mxu0 0.0
    %1012 = vmatpush1.msra.mxu0 0.0
    %1013 = vmatprep.mubr.f32.mxu0 0.0
    %v1014 = vand.u32 %v735, 4294901760
    %v1015 = vsub.f32 %v735, %v1014
    %1016 = vmatmul.mubr.f32.gmra.mrb[0].mxu0 %v1015
    %v1017 = vpop.f32.mrb[0].mxu0
    %v1018 = vadd.f32 %v929, %v1017
    %v1019 = vpop.f32.mrb[0].mxu0
    %v1020 = vadd.f32 %v931, %v1019
    %1021 = vdwg.mxu0
    %v1022 = vand.u32 %v30, 4294901760
    %1023 = vmatprep.subr.mxu0 %v1022
    %v1024 = vand.u32 %v29, 4294901760
    %1025 = vmatpush1.msra.mxu0 %v1024
    %v1026 = vand.u32 %v32, 4294901760
    %1027 = vmatprep.subr.mxu0 %v1026
    %v1028 = vand.u32 %v31, 4294901760
    %1029 = vmatpush1.msra.mxu0 %v1028
    %v1030 = vand.u32 %v34, 4294901760
    %1031 = vmatprep.subr.mxu0 %v1030
    %v1032 = vand.u32 %v33, 4294901760
    %1033 = vmatpush1.msra.mxu0 %v1032
    %v1034 = vand.u32 %v36, 4294901760
    %1035 = vmatprep.subr.mxu0 %v1034
    %v1036 = vand.u32 %v35, 4294901760
    %1037 = vmatpush1.msra.mxu0 %v1036
    %1038 = vmatprep.subr.mxu0 0.0
    %1039 = vmatpush1.msra.mxu0 0.0
    %1040 = vmatprep.subr.mxu0 0.0
    %1041 = vmatpush1.msra.mxu0 0.0
    %1042 = vmatprep.subr.mxu0 0.0
    %1043 = vmatpush1.msra.mxu0 0.0
    %1044 = vmatprep.subr.mxu0 0.0
    %1045 = vmatpush1.msra.mxu0 0.0
    %1046 = vmatprep.subr.mxu0 0.0
    %1047 = vmatpush1.msra.mxu0 0.0
    %1048 = vmatprep.subr.mxu0 0.0
    %1049 = vmatpush1.msra.mxu0 0.0
    %1050 = vmatprep.subr.mxu0 0.0
    %1051 = vmatpush1.msra.mxu0 0.0
    %1052 = vmatprep.subr.mxu0 0.0
    %1053 = vmatpush1.msra.mxu0 0.0
    %1054 = vmatprep.subr.mxu0 0.0
    %1055 = vmatpush1.msra.mxu0 0.0
    %1056 = vmatprep.subr.mxu0 0.0
    %1057 = vmatpush1.msra.mxu0 0.0
    %1058 = vmatprep.subr.mxu0 0.0
    %1059 = vmatpush1.msra.mxu0 0.0
    %1060 = vmatprep.subr.mxu0 0.0
    %1061 = vmatpush1.msra.mxu0 0.0
    %1062 = vmatprep.subr.mxu0 0.0
    %1063 = vmatpush1.msra.mxu0 0.0
    %1064 = vmatprep.subr.mxu0 0.0
    %1065 = vmatpush1.msra.mxu0 0.0
    %1066 = vmatprep.subr.mxu0 0.0
    %1067 = vmatpush1.msra.mxu0 0.0
    %1068 = vmatprep.subr.mxu0 0.0
    %1069 = vmatpush1.msra.mxu0 0.0
    %1070 = vmatprep.subr.mxu0 0.0
    %1071 = vmatpush1.msra.mxu0 0.0
    %1072 = vmatprep.subr.mxu0 0.0
    %1073 = vmatpush1.msra.mxu0 0.0
    %1074 = vmatprep.subr.mxu0 0.0
    %1075 = vmatpush1.msra.mxu0 0.0
    %1076 = vmatprep.subr.mxu0 0.0
    %1077 = vmatpush1.msra.mxu0 0.0
    %1078 = vmatprep.subr.mxu0 0.0
    %1079 = vmatpush1.msra.mxu0 0.0
    %1080 = vmatprep.subr.mxu0 0.0
    %1081 = vmatpush1.msra.mxu0 0.0
    %1082 = vmatprep.subr.mxu0 0.0
    %1083 = vmatpush1.msra.mxu0 0.0
    %1084 = vmatprep.subr.mxu0 0.0
    %1085 = vmatpush1.msra.mxu0 0.0
    %1086 = vmatprep.subr.mxu0 0.0
    %1087 = vmatpush1.msra.mxu0 0.0
    %1088 = vmatprep.subr.mxu0 0.0
    %1089 = vmatpush1.msra.mxu0 0.0
    %1090 = vmatprep.subr.mxu0 0.0
    %1091 = vmatpush1.msra.mxu0 0.0
    %1092 = vmatprep.subr.mxu0 0.0
    %1093 = vmatpush1.msra.mxu0 0.0
    %1094 = vmatprep.mubr.f32.mxu0 0.0
    %v1095 = vand.u32 %v735, 4294901760
    %v1096 = vsub.f32 %v735, %v1095
    %v1097 = vand.u32 %v1096, 4294901760
    %1098 = vmatmul.mubr.f32.gmra.mrb[0].mxu0 %v1097
    %v1099 = vpop.f32.mrb[0].mxu0
    %v1100 = vadd.f32 %v1018, %v1099
    %v1101 = vpop.f32.mrb[0].mxu0
    %v1102 = vadd.f32 %v1020, %v1101
    %1103 = vdwg.mxu0
    %v1104 = vand.u32 %v30, 4294901760
    %v1105 = vsub.f32 %v30, %v1104
    %v1106 = vand.u32 %v1105, 4294901760
    %1107 = vmatprep.subr.mxu0 %v1106
    %v1108 = vand.u32 %v29, 4294901760
    %v1109 = vsub.f32 %v29, %v1108
    %v1110 = vand.u32 %v1109, 4294901760
    %1111 = vmatpush1.msra.mxu0 %v1110
    %v1112 = vand.u32 %v32, 4294901760
    %v1113 = vsub.f32 %v32, %v1112
    %v1114 = vand.u32 %v1113, 4294901760
    %1115 = vmatprep.subr.mxu0 %v1114
    %v1116 = vand.u32 %v31, 4294901760
    %v1117 = vsub.f32 %v31, %v1116
    %v1118 = vand.u32 %v1117, 4294901760
    %1119 = vmatpush1.msra.mxu0 %v1118
    %v1120 = vand.u32 %v34, 4294901760
    %v1121 = vsub.f32 %v34, %v1120
    %v1122 = vand.u32 %v1121, 4294901760
    %1123 = vmatprep.subr.mxu0 %v1122
    %v1124 = vand.u32 %v33, 4294901760
    %v1125 = vsub.f32 %v33, %v1124
    %v1126 = vand.u32 %v1125, 4294901760
    %1127 = vmatpush1.msra.mxu0 %v1126
    %v1128 = vand.u32 %v36, 4294901760
    %v1129 = vsub.f32 %v36, %v1128
    %v1130 = vand.u32 %v1129, 4294901760
    %1131 = vmatprep.subr.mxu0 %v1130
    %v1132 = vand.u32 %v35, 4294901760
    %v1133 = vsub.f32 %v35, %v1132
    %v1134 = vand.u32 %v1133, 4294901760
    %1135 = vmatpush1.msra.mxu0 %v1134
    %1136 = vmatprep.subr.mxu0 0.0
    %1137 = vmatpush1.msra.mxu0 0.0
    %1138 = vmatprep.subr.mxu0 0.0
    %1139 = vmatpush1.msra.mxu0 0.0
    %1140 = vmatprep.subr.mxu0 0.0
    %1141 = vmatpush1.msra.mxu0 0.0
    %1142 = vmatprep.subr.mxu0 0.0
    %1143 = vmatpush1.msra.mxu0 0.0
    %1144 = vmatprep.subr.mxu0 0.0
    %1145 = vmatpush1.msra.mxu0 0.0
    %1146 = vmatprep.subr.mxu0 0.0
    %1147 = vmatpush1.msra.mxu0 0.0
    %1148 = vmatprep.subr.mxu0 0.0
    %1149 = vmatpush1.msra.mxu0 0.0
    %1150 = vmatprep.subr.mxu0 0.0
    %1151 = vmatpush1.msra.mxu0 0.0
    %1152 = vmatprep.subr.mxu0 0.0
    %1153 = vmatpush1.msra.mxu0 0.0
    %1154 = vmatprep.subr.mxu0 0.0
    %1155 = vmatpush1.msra.mxu0 0.0
    %1156 = vmatprep.subr.mxu0 0.0
    %1157 = vmatpush1.msra.mxu0 0.0
    %1158 = vmatprep.subr.mxu0 0.0
    %1159 = vmatpush1.msra.mxu0 0.0
    %1160 = vmatprep.subr.mxu0 0.0
    %1161 = vmatpush1.msra.mxu0 0.0
    %1162 = vmatprep.subr.mxu0 0.0
    %1163 = vmatpush1.msra.mxu0 0.0
    %1164 = vmatprep.subr.mxu0 0.0
    %1165 = vmatpush1.msra.mxu0 0.0
    %1166 = vmatprep.subr.mxu0 0.0
    %1167 = vmatpush1.msra.mxu0 0.0
    %1168 = vmatprep.subr.mxu0 0.0
    %1169 = vmatpush1.msra.mxu0 0.0
    %1170 = vmatprep.subr.mxu0 0.0
    %1171 = vmatpush1.msra.mxu0 0.0
    %1172 = vmatprep.subr.mxu0 0.0
    %1173 = vmatpush1.msra.mxu0 0.0
    %1174 = vmatprep.subr.mxu0 0.0
    %1175 = vmatpush1.msra.mxu0 0.0
    %1176 = vmatprep.subr.mxu0 0.0
    %1177 = vmatpush1.msra.mxu0 0.0
    %1178 = vmatprep.subr.mxu0 0.0
    %1179 = vmatpush1.msra.mxu0 0.0
    %1180 = vmatprep.subr.mxu0 0.0
    %1181 = vmatpush1.msra.mxu0 0.0
    %1182 = vmatprep.subr.mxu0 0.0
    %1183 = vmatpush1.msra.mxu0 0.0
    %1184 = vmatprep.subr.mxu0 0.0
    %1185 = vmatpush1.msra.mxu0 0.0
    %1186 = vmatprep.subr.mxu0 0.0
    %1187 = vmatpush1.msra.mxu0 0.0
    %1188 = vmatprep.subr.mxu0 0.0
    %1189 = vmatpush1.msra.mxu0 0.0
    %1190 = vmatprep.subr.mxu0 0.0
    %1191 = vmatpush1.msra.mxu0 0.0
    %1192 = vmatprep.mubr.f32.mxu0 0.0
    %v1193 = vand.u32 %v735, 4294901760
    %1194 = vmatmul.mubr.f32.gmra.mrb[0].mxu0 %v1193
    %v1195 = vpop.f32.mrb[0].mxu0
    %v1196 = vadd.f32 %v1100, %v1195
    %v1197 = vpop.f32.mrb[0].mxu0
    %v1198 = vadd.f32 %v1102, %v1197
    %1199 = vdwg.mxu0
    %v1200 = vand.u32 %v30, 4294901760
    %1201 = vmatprep.subr.mxu0 %v1200
    %v1202 = vand.u32 %v29, 4294901760
    %1203 = vmatpush1.msra.mxu0 %v1202
    %v1204 = vand.u32 %v32, 4294901760
    %1205 = vmatprep.subr.mxu0 %v1204
    %v1206 = vand.u32 %v31, 4294901760
    %1207 = vmatpush1.msra.mxu0 %v1206
    %v1208 = vand.u32 %v34, 4294901760
    %1209 = vmatprep.subr.mxu0 %v1208
    %v1210 = vand.u32 %v33, 4294901760
    %1211 = vmatpush1.msra.mxu0 %v1210
    %v1212 = vand.u32 %v36, 4294901760
    %1213 = vmatprep.subr.mxu0 %v1212
    %v1214 = vand.u32 %v35, 4294901760
    %1215 = vmatpush1.msra.mxu0 %v1214
    %1216 = vmatprep.subr.mxu0 0.0
    %1217 = vmatpush1.msra.mxu0 0.0
    %1218 = vmatprep.subr.mxu0 0.0
    %1219 = vmatpush1.msra.mxu0 0.0
    %1220 = vmatprep.subr.mxu0 0.0
    %1221 = vmatpush1.msra.mxu0 0.0
    %1222 = vmatprep.subr.mxu0 0.0
    %1223 = vmatpush1.msra.mxu0 0.0
    %1224 = vmatprep.subr.mxu0 0.0
    %1225 = vmatpush1.msra.mxu0 0.0
    %1226 = vmatprep.subr.mxu0 0.0
    %1227 = vmatpush1.msra.mxu0 0.0
    %1228 = vmatprep.subr.mxu0 0.0
    %1229 = vmatpush1.msra.mxu0 0.0
    %1230 = vmatprep.subr.mxu0 0.0
    %1231 = vmatpush1.msra.mxu0 0.0
    %1232 = vmatprep.subr.mxu0 0.0
    %1233 = vmatpush1.msra.mxu0 0.0
    %1234 = vmatprep.subr.mxu0 0.0
    %1235 = vmatpush1.msra.mxu0 0.0
    %1236 = vmatprep.subr.mxu0 0.0
    %1237 = vmatpush1.msra.mxu0 0.0
    %1238 = vmatprep.subr.mxu0 0.0
    %1239 = vmatpush1.msra.mxu0 0.0
    %1240 = vmatprep.subr.mxu0 0.0
    %1241 = vmatpush1.msra.mxu0 0.0
    %1242 = vmatprep.subr.mxu0 0.0
    %1243 = vmatpush1.msra.mxu0 0.0
    %1244 = vmatprep.subr.mxu0 0.0
    %1245 = vmatpush1.msra.mxu0 0.0
    %1246 = vmatprep.subr.mxu0 0.0
    %1247 = vmatpush1.msra.mxu0 0.0
    %1248 = vmatprep.subr.mxu0 0.0
    %1249 = vmatpush1.msra.mxu0 0.0
    %1250 = vmatprep.subr.mxu0 0.0
    %1251 = vmatpush1.msra.mxu0 0.0
    %1252 = vmatprep.subr.mxu0 0.0
    %1253 = vmatpush1.msra.mxu0 0.0
    %1254 = vmatprep.subr.mxu0 0.0
    %1255 = vmatpush1.msra.mxu0 0.0
    %1256 = vmatprep.subr.mxu0 0.0
    %1257 = vmatpush1.msra.mxu0 0.0
    %1258 = vmatprep.subr.mxu0 0.0
    %1259 = vmatpush1.msra.mxu0 0.0
    %1260 = vmatprep.subr.mxu0 0.0
    %1261 = vmatpush1.msra.mxu0 0.0
    %1262 = vmatprep.subr.mxu0 0.0
    %1263 = vmatpush1.msra.mxu0 0.0
    %1264 = vmatprep.subr.mxu0 0.0
    %1265 = vmatpush1.msra.mxu0 0.0
    %1266 = vmatprep.subr.mxu0 0.0
    %1267 = vmatpush1.msra.mxu0 0.0
    %1268 = vmatprep.subr.mxu0 0.0
    %1269 = vmatpush1.msra.mxu0 0.0
    %1270 = vmatprep.subr.mxu0 0.0
    %1271 = vmatpush1.msra.mxu0 0.0
    %1272 = vmatprep.mubr.f32.mxu0 0.0
    %v1273 = vand.u32 %v735, 4294901760
    %1274 = vmatmul.mubr.f32.gmra.mrb[0].mxu0 %v1273
    %v1275 = vpop.f32.mrb[0].mxu0
    %v1276 = vadd.f32 %v1196, %v1275
    %v1277 = vpop.f32.mrb[0].mxu0
    %v1278 = vadd.f32 %v1198, %v1277
    %1279 = vdwg.mxu0
    %v1280 = vadd.f32 %v103, %v1276
    %v1281 = vadd.f32 %v28, %v1278
    %1283 = vrot.lane.b32.xlu0 %v727, 32
    %v1284 = vpop.permute.xlu0 %1283
    %v1285 = vsel %vm138, %v1284, 0
    %1287 = vmatprep.subr.mxu0 0.0
    %v1288 = vand.u32 %v18, 4294901760
    %1289 = vmatpush1.msra.mxu0 %v1288
    %1290 = vmatprep.subr.mxu0 0.0
    %v1291 = vand.u32 %v19, 4294901760
    %1292 = vmatpush1.msra.mxu0 %v1291
    %1293 = vmatprep.subr.mxu0 0.0
    %v1294 = vand.u32 %v20, 4294901760
    %1295 = vmatpush1.msra.mxu0 %v1294
    %1296 = vmatprep.subr.mxu0 0.0
    %v1297 = vand.u32 %v21, 4294901760
    %1298 = vmatpush1.msra.mxu0 %v1297
    %1299 = vmatprep.subr.mxu0 0.0
    %1300 = vmatpush1.msra.mxu0 0.0
    %1301 = vmatprep.subr.mxu0 0.0
    %1302 = vmatpush1.msra.mxu0 0.0
    %1303 = vmatprep.subr.mxu0 0.0
    %1304 = vmatpush1.msra.mxu0 0.0
    %1305 = vmatprep.subr.mxu0 0.0
    %1306 = vmatpush1.msra.mxu0 0.0
    %1307 = vmatprep.subr.mxu0 0.0
    %1308 = vmatpush1.msra.mxu0 0.0
    %1309 = vmatprep.subr.mxu0 0.0
    %1310 = vmatpush1.msra.mxu0 0.0
    %1311 = vmatprep.subr.mxu0 0.0
    %1312 = vmatpush1.msra.mxu0 0.0
    %1313 = vmatprep.subr.mxu0 0.0
    %1314 = vmatpush1.msra.mxu0 0.0
    %1315 = vmatprep.subr.mxu0 0.0
    %1316 = vmatpush1.msra.mxu0 0.0
    %1317 = vmatprep.subr.mxu0 0.0
    %1318 = vmatpush1.msra.mxu0 0.0
    %1319 = vmatprep.subr.mxu0 0.0
    %1320 = vmatpush1.msra.mxu0 0.0
    %1321 = vmatprep.subr.mxu0 0.0
    %1322 = vmatpush1.msra.mxu0 0.0
    %1323 = vmatprep.subr.mxu0 0.0
    %1324 = vmatpush1.msra.mxu0 0.0
    %1325 = vmatprep.subr.mxu0 0.0
    %1326 = vmatpush1.msra.mxu0 0.0
    %1327 = vmatprep.subr.mxu0 0.0
    %1328 = vmatpush1.msra.mxu0 0.0
    %1329 = vmatprep.subr.mxu0 0.0
    %1330 = vmatpush1.msra.mxu0 0.0
    %1331 = vmatprep.subr.mxu0 0.0
    %1332 = vmatpush1.msra.mxu0 0.0
    %1333 = vmatprep.subr.mxu0 0.0
    %1334 = vmatpush1.msra.mxu0 0.0
    %1335 = vmatprep.subr.mxu0 0.0
    %1336 = vmatpush1.msra.mxu0 0.0
    %1337 = vmatprep.subr.mxu0 0.0
    %1338 = vmatpush1.msra.mxu0 0.0
    %1339 = vmatprep.subr.mxu0 0.0
    %1340 = vmatpush1.msra.mxu0 0.0
    %1341 = vmatprep.subr.mxu0 0.0
    %1342 = vmatpush1.msra.mxu0 0.0
    %1343 = vmatprep.subr.mxu0 0.0
    %1344 = vmatpush1.msra.mxu0 0.0
    %1345 = vmatprep.subr.mxu0 0.0
    %1346 = vmatpush1.msra.mxu0 0.0
    %1347 = vmatprep.subr.mxu0 0.0
    %1348 = vmatpush1.msra.mxu0 0.0
    %1349 = vmatprep.subr.mxu0 0.0
    %1350 = vmatpush1.msra.mxu0 0.0
    %1351 = vmatprep.subr.mxu0 0.0
    %1352 = vmatpush1.msra.mxu0 0.0
    %1353 = vmatprep.subr.mxu0 0.0
    %1354 = vmatpush1.msra.mxu0 0.0
    %1355 = vmatprep.mubr.f32.mxu0 0.0
    %v1356 = vand.u32 %v1285, 4294901760
    %v1357 = vsub.f32 %v1285, %v1356
    %v1358 = vand.u32 %v1357, 4294901760
    %v1359 = vsub.f32 %v1357, %v1358
    %v1360 = vand.u32 %v1359, 4294901760
    %1361 = vmatmul.mubr.f32.gmra.mrb[0].mxu0 %v1360
    %v1362 = vpop.f32.mrb[0].mxu0
    %v1363 = vadd.f32 0.0, %v1362
    %v1364 = vpop.f32.mrb[0].mxu0
    %1365 = vdwg.mxu0
    %1366 = vmatprep.subr.mxu0 0.0
    %v1367 = vand.u32 %v18, 4294901760
    %v1368 = vsub.f32 %v18, %v1367
    %v1369 = vand.u32 %v1368, 4294901760
    %v1370 = vsub.f32 %v1368, %v1369
    %v1371 = vand.u32 %v1370, 4294901760
    %1372 = vmatpush1.msra.mxu0 %v1371
    %1373 = vmatprep.subr.mxu0 0.0
    %v1374 = vand.u32 %v19, 4294901760
    %v1375 = vsub.f32 %v19, %v1374
    %v1376 = vand.u32 %v1375, 4294901760
    %v1377 = vsub.f32 %v1375, %v1376
    %v1378 = vand.u32 %v1377, 4294901760
    %1379 = vmatpush1.msra.mxu0 %v1378
    %1380 = vmatprep.subr.mxu0 0.0
    %v1381 = vand.u32 %v20, 4294901760
    %v1382 = vsub.f32 %v20, %v1381
    %v1383 = vand.u32 %v1382, 4294901760
    %v1384 = vsub.f32 %v1382, %v1383
    %v1385 = vand.u32 %v1384, 4294901760
    %1386 = vmatpush1.msra.mxu0 %v1385
    %1387 = vmatprep.subr.mxu0 0.0
    %v1388 = vand.u32 %v21, 4294901760
    %v1389 = vsub.f32 %v21, %v1388
    %v1390 = vand.u32 %v1389, 4294901760
    %v1391 = vsub.f32 %v1389, %v1390
    %v1392 = vand.u32 %v1391, 4294901760
    %1393 = vmatpush1.msra.mxu0 %v1392
    %1394 = vmatprep.subr.mxu0 0.0
    %1395 = vmatpush1.msra.mxu0 0.0
    %1396 = vmatprep.subr.mxu0 0.0
    %1397 = vmatpush1.msra.mxu0 0.0
    %1398 = vmatprep.subr.mxu0 0.0
    %1399 = vmatpush1.msra.mxu0 0.0
    %1400 = vmatprep.subr.mxu0 0.0
    %1401 = vmatpush1.msra.mxu0 0.0
    %1402 = vmatprep.subr.mxu0 0.0
    %1403 = vmatpush1.msra.mxu0 0.0
    %1404 = vmatprep.subr.mxu0 0.0
    %1405 = vmatpush1.msra.mxu0 0.0
    %1406 = vmatprep.subr.mxu0 0.0
    %1407 = vmatpush1.msra.mxu0 0.0
    %1408 = vmatprep.subr.mxu0 0.0
    %1409 = vmatpush1.msra.mxu0 0.0
    %1410 = vmatprep.subr.mxu0 0.0
    %1411 = vmatpush1.msra.mxu0 0.0
    %1412 = vmatprep.subr.mxu0 0.0
    %1413 = vmatpush1.msra.mxu0 0.0
    %1414 = vmatprep.subr.mxu0 0.0
    %1415 = vmatpush1.msra.mxu0 0.0
    %1416 = vmatprep.subr.mxu0 0.0
    %1417 = vmatpush1.msra.mxu0 0.0
    %1418 = vmatprep.subr.mxu0 0.0
    %1419 = vmatpush1.msra.mxu0 0.0
    %1420 = vmatprep.subr.mxu0 0.0
    %1421 = vmatpush1.msra.mxu0 0.0
    %1422 = vmatprep.subr.mxu0 0.0
    %1423 = vmatpush1.msra.mxu0 0.0
    %1424 = vmatprep.subr.mxu0 0.0
    %1425 = vmatpush1.msra.mxu0 0.0
    %1426 = vmatprep.subr.mxu0 0.0
    %1427 = vmatpush1.msra.mxu0 0.0
    %1428 = vmatprep.subr.mxu0 0.0
    %1429 = vmatpush1.msra.mxu0 0.0
    %1430 = vmatprep.subr.mxu0 0.0
    %1431 = vmatpush1.msra.mxu0 0.0
    %1432 = vmatprep.subr.mxu0 0.0
    %1433 = vmatpush1.msra.mxu0 0.0
    %1434 = vmatprep.subr.mxu0 0.0
    %1435 = vmatpush1.msra.mxu0 0.0
    %1436 = vmatprep.subr.mxu0 0.0
    %1437 = vmatpush1.msra.mxu0 0.0
    %1438 = vmatprep.subr.mxu0 0.0
    %1439 = vmatpush1.msra.mxu0 0.0
    %1440 = vmatprep.subr.mxu0 0.0
    %1441 = vmatpush1.msra.mxu0 0.0
    %1442 = vmatprep.subr.mxu0 0.0
    %1443 = vmatpush1.msra.mxu0 0.0
    %1444 = vmatprep.subr.mxu0 0.0
    %1445 = vmatpush1.msra.mxu0 0.0
    %1446 = vmatprep.subr.mxu0 0.0
    %1447 = vmatpush1.msra.mxu0 0.0
    %1448 = vmatprep.subr.mxu0 0.0
    %1449 = vmatpush1.msra.mxu0 0.0
    %1450 = vmatprep.mubr.f32.mxu0 0.0
    %v1451 = vand.u32 %v1285, 4294901760
    %1452 = vmatmul.mubr.f32.gmra.mrb[0].mxu0 %v1451
    %v1453 = vpop.f32.mrb[0].mxu0
    %v1454 = vadd.f32 %v1363, %v1453
    %v1455 = vpop.f32.mrb[0].mxu0
    %1456 = vdwg.mxu0
    %1457 = vmatprep.subr.mxu0 0.0
    %v1458 = vand.u32 %v18, 4294901760
    %v1459 = vsub.f32 %v18, %v1458
    %1460 = vmatpush1.msra.mxu0 %v1459
    %1461 = vmatprep.subr.mxu0 0.0
    %v1462 = vand.u32 %v19, 4294901760
    %v1463 = vsub.f32 %v19, %v1462
    %1464 = vmatpush1.msra.mxu0 %v1463
    %1465 = vmatprep.subr.mxu0 0.0
    %v1466 = vand.u32 %v20, 4294901760
    %v1467 = vsub.f32 %v20, %v1466
    %1468 = vmatpush1.msra.mxu0 %v1467
    %1469 = vmatprep.subr.mxu0 0.0
    %v1470 = vand.u32 %v21, 4294901760
    %v1471 = vsub.f32 %v21, %v1470
    %1472 = vmatpush1.msra.mxu0 %v1471
    %1473 = vmatprep.subr.mxu0 0.0
    %1474 = vmatpush1.msra.mxu0 0.0
    %1475 = vmatprep.subr.mxu0 0.0
    %1476 = vmatpush1.msra.mxu0 0.0
    %1477 = vmatprep.subr.mxu0 0.0
    %1478 = vmatpush1.msra.mxu0 0.0
    %1479 = vmatprep.subr.mxu0 0.0
    %1480 = vmatpush1.msra.mxu0 0.0
    %1481 = vmatprep.subr.mxu0 0.0
    %1482 = vmatpush1.msra.mxu0 0.0
    %1483 = vmatprep.subr.mxu0 0.0
    %1484 = vmatpush1.msra.mxu0 0.0
    %1485 = vmatprep.subr.mxu0 0.0
    %1486 = vmatpush1.msra.mxu0 0.0
    %1487 = vmatprep.subr.mxu0 0.0
    %1488 = vmatpush1.msra.mxu0 0.0
    %1489 = vmatprep.subr.mxu0 0.0
    %1490 = vmatpush1.msra.mxu0 0.0
    %1491 = vmatprep.subr.mxu0 0.0
    %1492 = vmatpush1.msra.mxu0 0.0
    %1493 = vmatprep.subr.mxu0 0.0
    %1494 = vmatpush1.msra.mxu0 0.0
    %1495 = vmatprep.subr.mxu0 0.0
    %1496 = vmatpush1.msra.mxu0 0.0
    %1497 = vmatprep.subr.mxu0 0.0
    %1498 = vmatpush1.msra.mxu0 0.0
    %1499 = vmatprep.subr.mxu0 0.0
    %1500 = vmatpush1.msra.mxu0 0.0
    %1501 = vmatprep.subr.mxu0 0.0
    %1502 = vmatpush1.msra.mxu0 0.0
    %1503 = vmatprep.subr.mxu0 0.0
    %1504 = vmatpush1.msra.mxu0 0.0
    %1505 = vmatprep.subr.mxu0 0.0
    %1506 = vmatpush1.msra.mxu0 0.0
    %1507 = vmatprep.subr.mxu0 0.0
    %1508 = vmatpush1.msra.mxu0 0.0
    %1509 = vmatprep.subr.mxu0 0.0
    %1510 = vmatpush1.msra.mxu0 0.0
    %1511 = vmatprep.subr.mxu0 0.0
    %1512 = vmatpush1.msra.mxu0 0.0
    %1513 = vmatprep.subr.mxu0 0.0
    %1514 = vmatpush1.msra.mxu0 0.0
    %1515 = vmatprep.subr.mxu0 0.0
    %1516 = vmatpush1.msra.mxu0 0.0
    %1517 = vmatprep.subr.mxu0 0.0
    %1518 = vmatpush1.msra.mxu0 0.0
    %1519 = vmatprep.subr.mxu0 0.0
    %1520 = vmatpush1.msra.mxu0 0.0
    %1521 = vmatprep.subr.mxu0 0.0
    %1522 = vmatpush1.msra.mxu0 0.0
    %1523 = vmatprep.subr.mxu0 0.0
    %1524 = vmatpush1.msra.mxu0 0.0
    %1525 = vmatprep.subr.mxu0 0.0
    %1526 = vmatpush1.msra.mxu0 0.0
    %1527 = vmatprep.subr.mxu0 0.0
    %1528 = vmatpush1.msra.mxu0 0.0
    %1529 = vmatprep.mubr.f32.mxu0 0.0
    %v1530 = vand.u32 %v1285, 4294901760
    %v1531 = vsub.f32 %v1285, %v1530
    %1532 = vmatmul.mubr.f32.gmra.mrb[0].mxu0 %v1531
    %v1533 = vpop.f32.mrb[0].mxu0
    %v1534 = vadd.f32 %v1454, %v1533
    %v1535 = vpop.f32.mrb[0].mxu0
    %1536 = vdwg.mxu0
    %1537 = vmatprep.subr.mxu0 0.0
    %v1538 = vand.u32 %v18, 4294901760
    %1539 = vmatpush1.msra.mxu0 %v1538
    %1540 = vmatprep.subr.mxu0 0.0
    %v1541 = vand.u32 %v19, 4294901760
    %1542 = vmatpush1.msra.mxu0 %v1541
    %1543 = vmatprep.subr.mxu0 0.0
    %v1544 = vand.u32 %v20, 4294901760
    %1545 = vmatpush1.msra.mxu0 %v1544
    %1546 = vmatprep.subr.mxu0 0.0
    %v1547 = vand.u32 %v21, 4294901760
    %1548 = vmatpush1.msra.mxu0 %v1547
    %1549 = vmatprep.subr.mxu0 0.0
    %1550 = vmatpush1.msra.mxu0 0.0
    %1551 = vmatprep.subr.mxu0 0.0
    %1552 = vmatpush1.msra.mxu0 0.0
    %1553 = vmatprep.subr.mxu0 0.0
    %1554 = vmatpush1.msra.mxu0 0.0
    %1555 = vmatprep.subr.mxu0 0.0
    %1556 = vmatpush1.msra.mxu0 0.0
    %1557 = vmatprep.subr.mxu0 0.0
    %1558 = vmatpush1.msra.mxu0 0.0
    %1559 = vmatprep.subr.mxu0 0.0
    %1560 = vmatpush1.msra.mxu0 0.0
    %1561 = vmatprep.subr.mxu0 0.0
    %1562 = vmatpush1.msra.mxu0 0.0
    %1563 = vmatprep.subr.mxu0 0.0
    %1564 = vmatpush1.msra.mxu0 0.0
    %1565 = vmatprep.subr.mxu0 0.0
    %1566 = vmatpush1.msra.mxu0 0.0
    %1567 = vmatprep.subr.mxu0 0.0
    %1568 = vmatpush1.msra.mxu0 0.0
    %1569 = vmatprep.subr.mxu0 0.0
    %1570 = vmatpush1.msra.mxu0 0.0
    %1571 = vmatprep.subr.mxu0 0.0
    %1572 = vmatpush1.msra.mxu0 0.0
    %1573 = vmatprep.subr.mxu0 0.0
    %1574 = vmatpush1.msra.mxu0 0.0
    %1575 = vmatprep.subr.mxu0 0.0
    %1576 = vmatpush1.msra.mxu0 0.0
    %1577 = vmatprep.subr.mxu0 0.0
    %1578 = vmatpush1.msra.mxu0 0.0
    %1579 = vmatprep.subr.mxu0 0.0
    %1580 = vmatpush1.msra.mxu0 0.0
    %1581 = vmatprep.subr.mxu0 0.0
    %1582 = vmatpush1.msra.mxu0 0.0
    %1583 = vmatprep.subr.mxu0 0.0
    %1584 = vmatpush1.msra.mxu0 0.0
    %1585 = vmatprep.subr.mxu0 0.0
    %1586 = vmatpush1.msra.mxu0 0.0
    %1587 = vmatprep.subr.mxu0 0.0
    %1588 = vmatpush1.msra.mxu0 0.0
    %1589 = vmatprep.subr.mxu0 0.0
    %1590 = vmatpush1.msra.mxu0 0.0
    %1591 = vmatprep.subr.mxu0 0.0
    %1592 = vmatpush1.msra.mxu0 0.0
    %1593 = vmatprep.subr.mxu0 0.0
    %1594 = vmatpush1.msra.mxu0 0.0
    %1595 = vmatprep.subr.mxu0 0.0
    %1596 = vmatpush1.msra.mxu0 0.0
    %1597 = vmatprep.subr.mxu0 0.0
    %1598 = vmatpush1.msra.mxu0 0.0
    %1599 = vmatprep.subr.mxu0 0.0
    %1600 = vmatpush1.msra.mxu0 0.0
    %1601 = vmatprep.subr.mxu0 0.0
    %1602 = vmatpush1.msra.mxu0 0.0
    %1603 = vmatprep.subr.mxu0 0.0
    %1604 = vmatpush1.msra.mxu0 0.0
    %1605 = vmatprep.mubr.f32.mxu0 0.0
    %v1606 = vand.u32 %v1285, 4294901760
    %v1607 = vsub.f32 %v1285, %v1606
    %v1608 = vand.u32 %v1607, 4294901760
    %1609 = vmatmul.mubr.f32.gmra.mrb[0].mxu0 %v1608
    %v1610 = vpop.f32.mrb[0].mxu0
    %v1611 = vadd.f32 %v1534, %v1610
    %v1612 = vpop.f32.mrb[0].mxu0
    %1613 = vdwg.mxu0
    %1614 = vmatprep.subr.mxu0 0.0
    %v1615 = vand.u32 %v18, 4294901760
    %v1616 = vsub.f32 %v18, %v1615
    %v1617 = vand.u32 %v1616, 4294901760
    %1618 = vmatpush1.msra.mxu0 %v1617
    %1619 = vmatprep.subr.mxu0 0.0
    %v1620 = vand.u32 %v19, 4294901760
    %v1621 = vsub.f32 %v19, %v1620
    %v1622 = vand.u32 %v1621, 4294901760
    %1623 = vmatpush1.msra.mxu0 %v1622
    %1624 = vmatprep.subr.mxu0 0.0
    %v1625 = vand.u32 %v20, 4294901760
    %v1626 = vsub.f32 %v20, %v1625
    %v1627 = vand.u32 %v1626, 4294901760
    %1628 = vmatpush1.msra.mxu0 %v1627
    %1629 = vmatprep.subr.mxu0 0.0
    %v1630 = vand.u32 %v21, 4294901760
    %v1631 = vsub.f32 %v21, %v1630
    %v1632 = vand.u32 %v1631, 4294901760
    %1633 = vmatpush1.msra.mxu0 %v1632
    %1634 = vmatprep.subr.mxu0 0.0
    %1635 = vmatpush1.msra.mxu0 0.0
    %1636 = vmatprep.subr.mxu0 0.0
    %1637 = vmatpush1.msra.mxu0 0.0
    %1638 = vmatprep.subr.mxu0 0.0
    %1639 = vmatpush1.msra.mxu0 0.0
    %1640 = vmatprep.subr.mxu0 0.0
    %1641 = vmatpush1.msra.mxu0 0.0
    %1642 = vmatprep.subr.mxu0 0.0
    %1643 = vmatpush1.msra.mxu0 0.0
    %1644 = vmatprep.subr.mxu0 0.0
    %1645 = vmatpush1.msra.mxu0 0.0
    %1646 = vmatprep.subr.mxu0 0.0
    %1647 = vmatpush1.msra.mxu0 0.0
    %1648 = vmatprep.subr.mxu0 0.0
    %1649 = vmatpush1.msra.mxu0 0.0
    %1650 = vmatprep.subr.mxu0 0.0
    %1651 = vmatpush1.msra.mxu0 0.0
    %1652 = vmatprep.subr.mxu0 0.0
    %1653 = vmatpush1.msra.mxu0 0.0
    %1654 = vmatprep.subr.mxu0 0.0
    %1655 = vmatpush1.msra.mxu0 0.0
    %1656 = vmatprep.subr.mxu0 0.0
    %1657 = vmatpush1.msra.mxu0 0.0
    %1658 = vmatprep.subr.mxu0 0.0
    %1659 = vmatpush1.msra.mxu0 0.0
    %1660 = vmatprep.subr.mxu0 0.0
    %1661 = vmatpush1.msra.mxu0 0.0
    %1662 = vmatprep.subr.mxu0 0.0
    %1663 = vmatpush1.msra.mxu0 0.0
    %1664 = vmatprep.subr.mxu0 0.0
    %1665 = vmatpush1.msra.mxu0 0.0
    %1666 = vmatprep.subr.mxu0 0.0
    %1667 = vmatpush1.msra.mxu0 0.0
    %1668 = vmatprep.subr.mxu0 0.0
    %1669 = vmatpush1.msra.mxu0 0.0
    %1670 = vmatprep.subr.mxu0 0.0
    %1671 = vmatpush1.msra.mxu0 0.0
    %1672 = vmatprep.subr.mxu0 0.0
    %1673 = vmatpush1.msra.mxu0 0.0
    %1674 = vmatprep.subr.mxu0 0.0
    %1675 = vmatpush1.msra.mxu0 0.0
    %1676 = vmatprep.subr.mxu0 0.0
    %1677 = vmatpush1.msra.mxu0 0.0
    %1678 = vmatprep.subr.mxu0 0.0
    %1679 = vmatpush1.msra.mxu0 0.0
    %1680 = vmatprep.subr.mxu0 0.0
    %1681 = vmatpush1.msra.mxu0 0.0
    %1682 = vmatprep.subr.mxu0 0.0
    %1683 = vmatpush1.msra.mxu0 0.0
    %1684 = vmatprep.subr.mxu0 0.0
    %1685 = vmatpush1.msra.mxu0 0.0
    %1686 = vmatprep.subr.mxu0 0.0
    %1687 = vmatpush1.msra.mxu0 0.0
    %1688 = vmatprep.subr.mxu0 0.0
    %1689 = vmatpush1.msra.mxu0 0.0
    %1690 = vmatprep.mubr.f32.mxu0 0.0
    %v1691 = vand.u32 %v1285, 4294901760
    %1692 = vmatmul.mubr.f32.gmra.mrb[0].mxu0 %v1691
    %v1693 = vpop.f32.mrb[0].mxu0
    %v1694 = vadd.f32 %v1611, %v1693
    %v1695 = vpop.f32.mrb[0].mxu0
    %1696 = vdwg.mxu0
    %1697 = vmatprep.subr.mxu0 0.0
    %v1698 = vand.u32 %v18, 4294901760
    %1699 = vmatpush1.msra.mxu0 %v1698
    %1700 = vmatprep.subr.mxu0 0.0
    %v1701 = vand.u32 %v19, 4294901760
    %1702 = vmatpush1.msra.mxu0 %v1701
    %1703 = vmatprep.subr.mxu0 0.0
    %v1704 = vand.u32 %v20, 4294901760
    %1705 = vmatpush1.msra.mxu0 %v1704
    %1706 = vmatprep.subr.mxu0 0.0
    %v1707 = vand.u32 %v21, 4294901760
    %1708 = vmatpush1.msra.mxu0 %v1707
    %1709 = vmatprep.subr.mxu0 0.0
    %1710 = vmatpush1.msra.mxu0 0.0
    %1711 = vmatprep.subr.mxu0 0.0
    %1712 = vmatpush1.msra.mxu0 0.0
    %1713 = vmatprep.subr.mxu0 0.0
    %1714 = vmatpush1.msra.mxu0 0.0
    %1715 = vmatprep.subr.mxu0 0.0
    %1716 = vmatpush1.msra.mxu0 0.0
    %1717 = vmatprep.subr.mxu0 0.0
    %1718 = vmatpush1.msra.mxu0 0.0
    %1719 = vmatprep.subr.mxu0 0.0
    %1720 = vmatpush1.msra.mxu0 0.0
    %1721 = vmatprep.subr.mxu0 0.0
    %1722 = vmatpush1.msra.mxu0 0.0
    %1723 = vmatprep.subr.mxu0 0.0
    %1724 = vmatpush1.msra.mxu0 0.0
    %1725 = vmatprep.subr.mxu0 0.0
    %1726 = vmatpush1.msra.mxu0 0.0
    %1727 = vmatprep.subr.mxu0 0.0
    %1728 = vmatpush1.msra.mxu0 0.0
    %1729 = vmatprep.subr.mxu0 0.0
    %1730 = vmatpush1.msra.mxu0 0.0
    %1731 = vmatprep.subr.mxu0 0.0
    %1732 = vmatpush1.msra.mxu0 0.0
    %1733 = vmatprep.subr.mxu0 0.0
    %1734 = vmatpush1.msra.mxu0 0.0
    %1735 = vmatprep.subr.mxu0 0.0
    %1736 = vmatpush1.msra.mxu0 0.0
    %1737 = vmatprep.subr.mxu0 0.0
    %1738 = vmatpush1.msra.mxu0 0.0
    %1739 = vmatprep.subr.mxu0 0.0
    %1740 = vmatpush1.msra.mxu0 0.0
    %1741 = vmatprep.subr.mxu0 0.0
    %1742 = vmatpush1.msra.mxu0 0.0
    %1743 = vmatprep.subr.mxu0 0.0
    %1744 = vmatpush1.msra.mxu0 0.0
    %1745 = vmatprep.subr.mxu0 0.0
    %1746 = vmatpush1.msra.mxu0 0.0
    %1747 = vmatprep.subr.mxu0 0.0
    %1748 = vmatpush1.msra.mxu0 0.0
    %1749 = vmatprep.subr.mxu0 0.0
    %1750 = vmatpush1.msra.mxu0 0.0
    %1751 = vmatprep.subr.mxu0 0.0
    %1752 = vmatpush1.msra.mxu0 0.0
    %1753 = vmatprep.subr.mxu0 0.0
    %1754 = vmatpush1.msra.mxu0 0.0
    %1755 = vmatprep.subr.mxu0 0.0
    %1756 = vmatpush1.msra.mxu0 0.0
    %1757 = vmatprep.subr.mxu0 0.0
    %1758 = vmatpush1.msra.mxu0 0.0
    %1759 = vmatprep.subr.mxu0 0.0
    %1760 = vmatpush1.msra.mxu0 0.0
    %1761 = vmatprep.subr.mxu0 0.0
    %1762 = vmatpush1.msra.mxu0 0.0
    %1763 = vmatprep.subr.mxu0 0.0
    %1764 = vmatpush1.msra.mxu0 0.0
    %1765 = vmatprep.mubr.f32.mxu0 0.0
    %v1766 = vand.u32 %v1285, 4294901760
    %1767 = vmatmul.mubr.f32.gmra.mrb[0].mxu0 %v1766
    %v1768 = vpop.f32.mrb[0].mxu0
    %v1769 = vadd.f32 %v1694, %v1768
    %v1770 = vpop.f32.mrb[0].mxu0
    %1771 = vdwg.mxu0
    %v1772 = vadd.f32 %v1281, %v1769
    %v1773 = vtanh.pop %v1280
    %v1774 = vadd.f32 %v1773, 1.0
    %v1775 = vmul.f32 %v1774, 0.5
    %v1776 = vsel %vm113, %v1773, %v1775
    %v1777 = vmul.f32 %v1776, %v700
    %1779 = vrot.lane.b32.xlu0 %v1776, 64
    %v1780 = vpop.permute.xlu0 %1779
    %v1782 = vmul.f32 %v1776, %v1780
    %1784 = vrot.lane.b32.xlu0 %v1782, 32
    %v1785 = vpop.permute.xlu0 %1784
    %v1787 = vadd.f32 %v1777, %v1785
    %v1788 = vtanh.pop %v1787
    %1790 = vrot.lane.b32.xlu0 %v1788, 64
    %v1791 = vpop.permute.xlu0 %1790
    %v1793 = vmul.f32 %v1776, %v1791
    %v1794 = vtanh.pop %v1772
    %v1795 = vadd.f32 %v1794, 1.0
    %v1796 = vmul.f32 %v1795, 0.5
    %v1797 = vsel %vm113, %v1794, %v1796
    %v1798 = vmul.f32 %v1797, %v721
    %1800 = vrot.lane.b32.xlu0 %v1797, 64
    %v1801 = vpop.permute.xlu0 %1800
    %v1803 = vmul.f32 %v1797, %v1801
    %1805 = vrot.lane.b32.xlu0 %v1803, 32
    %v1806 = vpop.permute.xlu0 %1805
    %v1808 = vadd.f32 %v1798, %v1806
    %v1809 = vtanh.pop %v1808
    %1811 = vrot.lane.b32.xlu0 %v1809, 64
    %v1812 = vpop.permute.xlu0 %1811
    %v1814 = vmul.f32 %v1797, %v1812
    %v1815 = vld [vmem:[%s3 + $0x20] sm:$0xff]
    %v1816 = vld [vmem:[%s3 + $0x28] sm:$0xff]
    %v1817 = vld [vmem:[%s3 + $0x30] sm:$0xff]
    %v1818 = vld [vmem:[%s3 + $0x38] sm:$0xff]
    %1820 = vrot.lane.b32.xlu0 %v1814, 32
    %v1821 = vpop.permute.xlu0 %1820
    %v1822 = vsel %vm138, %v1821, 0
    %1824 = vmatprep.subr.mxu0 0.0
    %v1825 = vand.u32 %v1815, 4294901760
    %1826 = vmatpush1.msra.mxu0 %v1825
    %1827 = vmatprep.subr.mxu0 0.0
    %v1828 = vand.u32 %v1816, 4294901760
    %1829 = vmatpush1.msra.mxu0 %v1828
    %1830 = vmatprep.subr.mxu0 0.0
    %v1831 = vand.u32 %v1817, 4294901760
    %1832 = vmatpush1.msra.mxu0 %v1831
    %1833 = vmatprep.subr.mxu0 0.0
    %v1834 = vand.u32 %v1818, 4294901760
    %1835 = vmatpush1.msra.mxu0 %v1834
    %1836 = vmatprep.subr.mxu0 0.0
    %1837 = vmatpush1.msra.mxu0 0.0
    %1838 = vmatprep.subr.mxu0 0.0
    %1839 = vmatpush1.msra.mxu0 0.0
    %1840 = vmatprep.subr.mxu0 0.0
    %1841 = vmatpush1.msra.mxu0 0.0
    %1842 = vmatprep.subr.mxu0 0.0
    %1843 = vmatpush1.msra.mxu0 0.0
    %1844 = vmatprep.subr.mxu0 0.0
    %1845 = vmatpush1.msra.mxu0 0.0
    %1846 = vmatprep.subr.mxu0 0.0
    %1847 = vmatpush1.msra.mxu0 0.0
    %1848 = vmatprep.subr.mxu0 0.0
    %1849 = vmatpush1.msra.mxu0 0.0
    %1850 = vmatprep.subr.mxu0 0.0
    %1851 = vmatpush1.msra.mxu0 0.0
    %1852 = vmatprep.subr.mxu0 0.0
    %1853 = vmatpush1.msra.mxu0 0.0
    %1854 = vmatprep.subr.mxu0 0.0
    %1855 = vmatpush1.msra.mxu0 0.0
    %1856 = vmatprep.subr.mxu0 0.0
    %1857 = vmatpush1.msra.mxu0 0.0
    %1858 = vmatprep.subr.mxu0 0.0
    %1859 = vmatpush1.msra.mxu0 0.0
    %1860 = vmatprep.subr.mxu0 0.0
    %1861 = vmatpush1.msra.mxu0 0.0
    %1862 = vmatprep.subr.mxu0 0.0
    %1863 = vmatpush1.msra.mxu0 0.0
    %1864 = vmatprep.subr.mxu0 0.0
    %1865 = vmatpush1.msra.mxu0 0.0
    %1866 = vmatprep.subr.mxu0 0.0
    %1867 = vmatpush1.msra.mxu0 0.0
    %1868 = vmatprep.subr.mxu0 0.0
    %1869 = vmatpush1.msra.mxu0 0.0
    %1870 = vmatprep.subr.mxu0 0.0
    %1871 = vmatpush1.msra.mxu0 0.0
    %1872 = vmatprep.subr.mxu0 0.0
    %1873 = vmatpush1.msra.mxu0 0.0
    %1874 = vmatprep.subr.mxu0 0.0
    %1875 = vmatpush1.msra.mxu0 0.0
    %1876 = vmatprep.subr.mxu0 0.0
    %1877 = vmatpush1.msra.mxu0 0.0
    %1878 = vmatprep.subr.mxu0 0.0
    %1879 = vmatpush1.msra.mxu0 0.0
    %1880 = vmatprep.subr.mxu0 0.0
    %1881 = vmatpush1.msra.mxu0 0.0
    %1882 = vmatprep.subr.mxu0 0.0
    %1883 = vmatpush1.msra.mxu0 0.0
    %1884 = vmatprep.subr.mxu0 0.0
    %1885 = vmatpush1.msra.mxu0 0.0
    %1886 = vmatprep.subr.mxu0 0.0
    %1887 = vmatpush1.msra.mxu0 0.0
    %1888 = vmatprep.subr.mxu0 0.0
    %1889 = vmatpush1.msra.mxu0 0.0
    %1890 = vmatprep.subr.mxu0 0.0
    %1891 = vmatpush1.msra.mxu0 0.0
    %1892 = vmatprep.mubr.f32.mxu0 0.0
    %v1893 = vand.u32 %v1822, 4294901760
    %v1894 = vsub.f32 %v1822, %v1893
    %v1895 = vand.u32 %v1894, 4294901760
    %v1896 = vsub.f32 %v1894, %v1895
    %v1897 = vand.u32 %v1896, 4294901760
    %1898 = vmatmul.mubr.f32.gmra.mrb[0].mxu0 %v1897
    %v1899 = vpop.f32.mrb[0].mxu0
    %v1900 = vadd.f32 0.0, %v1899
    %v1901 = vpop.f32.mrb[0].mxu0
    %1902 = vdwg.mxu0
    %1903 = vmatprep.subr.mxu0 0.0
    %v1904 = vand.u32 %v1815, 4294901760
    %v1905 = vsub.f32 %v1815, %v1904
    %v1906 = vand.u32 %v1905, 4294901760
    %v1907 = vsub.f32 %v1905, %v1906
    %v1908 = vand.u32 %v1907, 4294901760
    %1909 = vmatpush1.msra.mxu0 %v1908
    %1910 = vmatprep.subr.mxu0 0.0
    %v1911 = vand.u32 %v1816, 4294901760
    %v1912 = vsub.f32 %v1816, %v1911
    %v1913 = vand.u32 %v1912, 4294901760
    %v1914 = vsub.f32 %v1912, %v1913
    %v1915 = vand.u32 %v1914, 4294901760
    %1916 = vmatpush1.msra.mxu0 %v1915
    %1917 = vmatprep.subr.mxu0 0.0
    %v1918 = vand.u32 %v1817, 4294901760
    %v1919 = vsub.f32 %v1817, %v1918
    %v1920 = vand.u32 %v1919, 4294901760
    %v1921 = vsub.f32 %v1919, %v1920
    %v1922 = vand.u32 %v1921, 4294901760
    %1923 = vmatpush1.msra.mxu0 %v1922
    %1924 = vmatprep.subr.mxu0 0.0
    %v1925 = vand.u32 %v1818, 4294901760
    %v1926 = vsub.f32 %v1818, %v1925
    %v1927 = vand.u32 %v1926, 4294901760
    %v1928 = vsub.f32 %v1926, %v1927
    %v1929 = vand.u32 %v1928, 4294901760
    %1930 = vmatpush1.msra.mxu0 %v1929
    %1931 = vmatprep.subr.mxu0 0.0
    %1932 = vmatpush1.msra.mxu0 0.0
    %1933 = vmatprep.subr.mxu0 0.0
    %1934 = vmatpush1.msra.mxu0 0.0
    %1935 = vmatprep.subr.mxu0 0.0
    %1936 = vmatpush1.msra.mxu0 0.0
    %1937 = vmatprep.subr.mxu0 0.0
    %1938 = vmatpush1.msra.mxu0 0.0
    %1939 = vmatprep.subr.mxu0 0.0
    %1940 = vmatpush1.msra.mxu0 0.0
    %1941 = vmatprep.subr.mxu0 0.0
    %1942 = vmatpush1.msra.mxu0 0.0
    %1943 = vmatprep.subr.mxu0 0.0
    %1944 = vmatpush1.msra.mxu0 0.0
    %1945 = vmatprep.subr.mxu0 0.0
    %1946 = vmatpush1.msra.mxu0 0.0
    %1947 = vmatprep.subr.mxu0 0.0
    %1948 = vmatpush1.msra.mxu0 0.0
    %1949 = vmatprep.subr.mxu0 0.0
    %1950 = vmatpush1.msra.mxu0 0.0
    %1951 = vmatprep.subr.mxu0 0.0
    %1952 = vmatpush1.msra.mxu0 0.0
    %1953 = vmatprep.subr.mxu0 0.0
    %1954 = vmatpush1.msra.mxu0 0.0
    %1955 = vmatprep.subr.mxu0 0.0
    %1956 = vmatpush1.msra.mxu0 0.0
    %1957 = vmatprep.subr.mxu0 0.0
    %1958 = vmatpush1.msra.mxu0 0.0
    %1959 = vmatprep.subr.mxu0 0.0
    %1960 = vmatpush1.msra.mxu0 0.0
    %1961 = vmatprep.subr.mxu0 0.0
    %1962 = vmatpush1.msra.mxu0 0.0
    %1963 = vmatprep.subr.mxu0 0.0
    %1964 = vmatpush1.msra.mxu0 0.0
    %1965 = vmatprep.subr.mxu0 0.0
    %1966 = vmatpush1.msra.mxu0 0.0
    %1967 = vmatprep.subr.mxu0 0.0
    %1968 = vmatpush1.msra.mxu0 0.0
    %1969 = vmatprep.subr.mxu0 0.0
    %1970 = vmatpush1.msra.mxu0 0.0
    %1971 = vmatprep.subr.mxu0 0.0
    %1972 = vmatpush1.msra.mxu0 0.0
    %1973 = vmatprep.subr.mxu0 0.0
    %1974 = vmatpush1.msra.mxu0 0.0
    %1975 = vmatprep.subr.mxu0 0.0
    %1976 = vmatpush1.msra.mxu0 0.0
    %1977 = vmatprep.subr.mxu0 0.0
    %1978 = vmatpush1.msra.mxu0 0.0
    %1979 = vmatprep.subr.mxu0 0.0
    %1980 = vmatpush1.msra.mxu0 0.0
    %1981 = vmatprep.subr.mxu0 0.0
    %1982 = vmatpush1.msra.mxu0 0.0
    %1983 = vmatprep.subr.mxu0 0.0
    %1984 = vmatpush1.msra.mxu0 0.0
    %1985 = vmatprep.subr.mxu0 0.0
    %1986 = vmatpush1.msra.mxu0 0.0
    %1987 = vmatprep.mubr.f32.mxu0 0.0
    %v1988 = vand.u32 %v1822, 4294901760
    %1989 = vmatmul.mubr.f32.gmra.mrb[0].mxu0 %v1988
    %v1990 = vpop.f32.mrb[0].mxu0
    %v1991 = vadd.f32 %v1900, %v1990
    %v1992 = vpop.f32.mrb[0].mxu0
    %1993 = vdwg.mxu0
    %1994 = vmatprep.subr.mxu0 0.0
    %v1995 = vand.u32 %v1815, 4294901760
    %v1996 = vsub.f32 %v1815, %v1995
    %1997 = vmatpush1.msra.mxu0 %v1996
    %1998 = vmatprep.subr.mxu0 0.0
    %v1999 = vand.u32 %v1816, 4294901760
    %v2000 = vsub.f32 %v1816, %v1999
    %2001 = vmatpush1.msra.mxu0 %v2000
    %2002 = vmatprep.subr.mxu0 0.0
    %v2003 = vand.u32 %v1817, 4294901760
    %v2004 = vsub.f32 %v1817, %v2003
    %2005 = vmatpush1.msra.mxu0 %v2004
    %2006 = vmatprep.subr.mxu0 0.0
    %v2007 = vand.u32 %v1818, 4294901760
    %v2008 = vsub.f32 %v1818, %v2007
    %2009 = vmatpush1.msra.mxu0 %v2008
    %2010 = vmatprep.subr.mxu0 0.0
    %2011 = vmatpush1.msra.mxu0 0.0
    %2012 = vmatprep.subr.mxu0 0.0
    %2013 = vmatpush1.msra.mxu0 0.0
    %2014 = vmatprep.subr.mxu0 0.0
    %2015 = vmatpush1.msra.mxu0 0.0
    %2016 = vmatprep.subr.mxu0 0.0
    %2017 = vmatpush1.msra.mxu0 0.0
    %2018 = vmatprep.subr.mxu0 0.0
    %2019 = vmatpush1.msra.mxu0 0.0
    %2020 = vmatprep.subr.mxu0 0.0
    %2021 = vmatpush1.msra.mxu0 0.0
    %2022 = vmatprep.subr.mxu0 0.0
    %2023 = vmatpush1.msra.mxu0 0.0
    %2024 = vmatprep.subr.mxu0 0.0
    %2025 = vmatpush1.msra.mxu0 0.0
    %2026 = vmatprep.subr.mxu0 0.0
    %2027 = vmatpush1.msra.mxu0 0.0
    %2028 = vmatprep.subr.mxu0 0.0
    %2029 = vmatpush1.msra.mxu0 0.0
    %2030 = vmatprep.subr.mxu0 0.0
    %2031 = vmatpush1.msra.mxu0 0.0
    %2032 = vmatprep.subr.mxu0 0.0
    %2033 = vmatpush1.msra.mxu0 0.0
    %2034 = vmatprep.subr.mxu0 0.0
    %2035 = vmatpush1.msra.mxu0 0.0
    %2036 = vmatprep.subr.mxu0 0.0
    %2037 = vmatpush1.msra.mxu0 0.0
    %2038 = vmatprep.subr.mxu0 0.0
    %2039 = vmatpush1.msra.mxu0 0.0
    %2040 = vmatprep.subr.mxu0 0.0
    %2041 = vmatpush1.msra.mxu0 0.0
    %2042 = vmatprep.subr.mxu0 0.0
    %2043 = vmatpush1.msra.mxu0 0.0
    %2044 = vmatprep.subr.mxu0 0.0
    %2045 = vmatpush1.msra.mxu0 0.0
    %2046 = vmatprep.subr.mxu0 0.0
    %2047 = vmatpush1.msra.mxu0 0.0
    %2048 = vmatprep.subr.mxu0 0.0
    %2049 = vmatpush1.msra.mxu0 0.0
    %2050 = vmatprep.subr.mxu0 0.0
    %2051 = vmatpush1.msra.mxu0 0.0
    %2052 = vmatprep.subr.mxu0 0.0
    %2053 = vmatpush1.msra.mxu0 0.0
    %2054 = vmatprep.subr.mxu0 0.0
    %2055 = vmatpush1.msra.mxu0 0.0
    %2056 = vmatprep.subr.mxu0 0.0
    %2057 = vmatpush1.msra.mxu0 0.0
    %2058 = vmatprep.subr.mxu0 0.0
    %2059 = vmatpush1.msra.mxu0 0.0
    %2060 = vmatprep.subr.mxu0 0.0
    %2061 = vmatpush1.msra.mxu0 0.0
    %2062 = vmatprep.subr.mxu0 0.0
    %2063 = vmatpush1.msra.mxu0 0.0
    %2064 = vmatprep.subr.mxu0 0.0
    %2065 = vmatpush1.msra.mxu0 0.0
    %2066 = vmatprep.mubr.f32.mxu0 0.0
    %v2067 = vand.u32 %v1822, 4294901760
    %v2068 = vsub.f32 %v1822, %v2067
    %2069 = vmatmul.mubr.f32.gmra.mrb[0].mxu0 %v2068
    %v2070 = vpop.f32.mrb[0].mxu0
    %v2071 = vadd.f32 %v1991, %v2070
    %v2072 = vpop.f32.mrb[0].mxu0
    %2073 = vdwg.mxu0
    %2074 = vmatprep.subr.mxu0 0.0
    %v2075 = vand.u32 %v1815, 4294901760
    %2076 = vmatpush1.msra.mxu0 %v2075
    %2077 = vmatprep.subr.mxu0 0.0
    %v2078 = vand.u32 %v1816, 4294901760
    %2079 = vmatpush1.msra.mxu0 %v2078
    %2080 = vmatprep.subr.mxu0 0.0
    %v2081 = vand.u32 %v1817, 4294901760
    %2082 = vmatpush1.msra.mxu0 %v2081
    %2083 = vmatprep.subr.mxu0 0.0
    %v2084 = vand.u32 %v1818, 4294901760
    %2085 = vmatpush1.msra.mxu0 %v2084
    %2086 = vmatprep.subr.mxu0 0.0
    %2087 = vmatpush1.msra.mxu0 0.0
    %2088 = vmatprep.subr.mxu0 0.0
    %2089 = vmatpush1.msra.mxu0 0.0
    %2090 = vmatprep.subr.mxu0 0.0
    %2091 = vmatpush1.msra.mxu0 0.0
    %2092 = vmatprep.subr.mxu0 0.0
    %2093 = vmatpush1.msra.mxu0 0.0
    %2094 = vmatprep.subr.mxu0 0.0
    %2095 = vmatpush1.msra.mxu0 0.0
    %2096 = vmatprep.subr.mxu0 0.0
    %2097 = vmatpush1.msra.mxu0 0.0
    %2098 = vmatprep.subr.mxu0 0.0
    %2099 = vmatpush1.msra.mxu0 0.0
    %2100 = vmatprep.subr.mxu0 0.0
    %2101 = vmatpush1.msra.mxu0 0.0
    %2102 = vmatprep.subr.mxu0 0.0
    %2103 = vmatpush1.msra.mxu0 0.0
    %2104 = vmatprep.subr.mxu0 0.0
    %2105 = vmatpush1.msra.mxu0 0.0
    %2106 = vmatprep.subr.mxu0 0.0
    %2107 = vmatpush1.msra.mxu0 0.0
    %2108 = vmatprep.subr.mxu0 0.0
    %2109 = vmatpush1.msra.mxu0 0.0
    %2110 = vmatprep.subr.mxu0 0.0
    %2111 = vmatpush1.msra.mxu0 0.0
    %2112 = vmatprep.subr.mxu0 0.0
    %2113 = vmatpush1.msra.mxu0 0.0
    %2114 = vmatprep.subr.mxu0 0.0
    %2115 = vmatpush1.msra.mxu0 0.0
    %2116 = vmatprep.subr.mxu0 0.0
    %2117 = vmatpush1.msra.mxu0 0.0
    %2118 = vmatprep.subr.mxu0 0.0
    %2119 = vmatpush1.msra.mxu0 0.0
    %2120 = vmatprep.subr.mxu0 0.0
    %2121 = vmatpush1.msra.mxu0 0.0
    %2122 = vmatprep.subr.mxu0 0.0
    %2123 = vmatpush1.msra.mxu0 0.0
    %2124 = vmatprep.subr.mxu0 0.0
    %2125 = vmatpush1.msra.mxu0 0.0
    %2126 = vmatprep.subr.mxu0 0.0
    %2127 = vmatpush1.msra.mxu0 0.0
    %2128 = vmatprep.subr.mxu0 0.0
    %2129 = vmatpush1.msra.mxu0 0.0
    %2130 = vmatprep.subr.mxu0 0.0
    %2131 = vmatpush1.msra.mxu0 0.0
    %2132 = vmatprep.subr.mxu0 0.0
    %2133 = vmatpush1.msra.mxu0 0.0
    %2134 = vmatprep.subr.mxu0 0.0
    %2135 = vmatpush1.msra.mxu0 0.0
    %2136 = vmatprep.subr.mxu0 0.0
    %2137 = vmatpush1.msra.mxu0 0.0
    %2138 = vmatprep.subr.mxu0 0.0
    %2139 = vmatpush1.msra.mxu0 0.0
    %2140 = vmatprep.subr.mxu0 0.0
    %2141 = vmatpush1.msra.mxu0 0.0
    %2142 = vmatprep.mubr.f32.mxu0 0.0
    %v2143 = vand.u32 %v1822, 4294901760
    %v2144 = vsub.f32 %v1822, %v2143
    %v2145 = vand.u32 %v2144, 4294901760
    %2146 = vmatmul.mubr.f32.gmra.mrb[0].mxu0 %v2145
    %v2147 = vpop.f32.mrb[0].mxu0
    %v2148 = vadd.f32 %v2071, %v2147
    %v2149 = vpop.f32.mrb[0].mxu0
    %2150 = vdwg.mxu0
    %2151 = vmatprep.subr.mxu0 0.0
    %v2152 = vand.u32 %v1815, 4294901760
    %v2153 = vsub.f32 %v1815, %v2152
    %v2154 = vand.u32 %v2153, 4294901760
    %2155 = vmatpush1.msra.mxu0 %v2154
    %2156 = vmatprep.subr.mxu0 0.0
    %v2157 = vand.u32 %v1816, 4294901760
    %v2158 = vsub.f32 %v1816, %v2157
    %v2159 = vand.u32 %v2158, 4294901760
    %2160 = vmatpush1.msra.mxu0 %v2159
    %2161 = vmatprep.subr.mxu0 0.0
    %v2162 = vand.u32 %v1817, 4294901760
    %v2163 = vsub.f32 %v1817, %v2162
    %v2164 = vand.u32 %v2163, 4294901760
    %2165 = vmatpush1.msra.mxu0 %v2164
    %2166 = vmatprep.subr.mxu0 0.0
    %v2167 = vand.u32 %v1818, 4294901760
    %v2168 = vsub.f32 %v1818, %v2167
    %v2169 = vand.u32 %v2168, 4294901760
    %2170 = vmatpush1.msra.mxu0 %v2169
    %2171 = vmatprep.subr.mxu0 0.0
    %2172 = vmatpush1.msra.mxu0 0.0
    %2173 = vmatprep.subr.mxu0 0.0
    %2174 = vmatpush1.msra.mxu0 0.0
    %2175 = vmatprep.subr.mxu0 0.0
    %2176 = vmatpush1.msra.mxu0 0.0
    %2177 = vmatprep.subr.mxu0 0.0
    %2178 = vmatpush1.msra.mxu0 0.0
    %2179 = vmatprep.subr.mxu0 0.0
    %2180 = vmatpush1.msra.mxu0 0.0
    %2181 = vmatprep.subr.mxu0 0.0
    %2182 = vmatpush1.msra.mxu0 0.0
    %2183 = vmatprep.subr.mxu0 0.0
    %2184 = vmatpush1.msra.mxu0 0.0
    %2185 = vmatprep.subr.mxu0 0.0
    %2186 = vmatpush1.msra.mxu0 0.0
    %2187 = vmatprep.subr.mxu0 0.0
    %2188 = vmatpush1.msra.mxu0 0.0
    %2189 = vmatprep.subr.mxu0 0.0
    %2190 = vmatpush1.msra.mxu0 0.0
    %2191 = vmatprep.subr.mxu0 0.0
    %2192 = vmatpush1.msra.mxu0 0.0
    %2193 = vmatprep.subr.mxu0 0.0
    %2194 = vmatpush1.msra.mxu0 0.0
    %2195 = vmatprep.subr.mxu0 0.0
    %2196 = vmatpush1.msra.mxu0 0.0
    %2197 = vmatprep.subr.mxu0 0.0
    %2198 = vmatpush1.msra.mxu0 0.0
    %2199 = vmatprep.subr.mxu0 0.0
    %2200 = vmatpush1.msra.mxu0 0.0
    %2201 = vmatprep.subr.mxu0 0.0
    %2202 = vmatpush1.msra.mxu0 0.0
    %2203 = vmatprep.subr.mxu0 0.0
    %2204 = vmatpush1.msra.mxu0 0.0
    %2205 = vmatprep.subr.mxu0 0.0
    %2206 = vmatpush1.msra.mxu0 0.0
    %2207 = vmatprep.subr.mxu0 0.0
    %2208 = vmatpush1.msra.mxu0 0.0
    %2209 = vmatprep.subr.mxu0 0.0
    %2210 = vmatpush1.msra.mxu0 0.0
    %2211 = vmatprep.subr.mxu0 0.0
    %2212 = vmatpush1.msra.mxu0 0.0
    %2213 = vmatprep.subr.mxu0 0.0
    %2214 = vmatpush1.msra.mxu0 0.0
    %2215 = vmatprep.subr.mxu0 0.0
    %2216 = vmatpush1.msra.mxu0 0.0
    %2217 = vmatprep.subr.mxu0 0.0
    %2218 = vmatpush1.msra.mxu0 0.0
    %2219 = vmatprep.subr.mxu0 0.0
    %2220 = vmatpush1.msra.mxu0 0.0
    %2221 = vmatprep.subr.mxu0 0.0
    %2222 = vmatpush1.msra.mxu0 0.0
    %2223 = vmatprep.subr.mxu0 0.0
    %2224 = vmatpush1.msra.mxu0 0.0
    %2225 = vmatprep.subr.mxu0 0.0
    %2226 = vmatpush1.msra.mxu0 0.0
    %2227 = vmatprep.mubr.f32.mxu0 0.0
    %v2228 = vand.u32 %v1822, 4294901760
    %2229 = vmatmul.mubr.f32.gmra.mrb[0].mxu0 %v2228
    %v2230 = vpop.f32.mrb[0].mxu0
    %v2231 = vadd.f32 %v2148, %v2230
    %v2232 = vpop.f32.mrb[0].mxu0
    %2233 = vdwg.mxu0
    %2234 = vmatprep.subr.mxu0 0.0
    %v2235 = vand.u32 %v1815, 4294901760
    %2236 = vmatpush1.msra.mxu0 %v2235
    %2237 = vmatprep.subr.mxu0 0.0
    %v2238 = vand.u32 %v1816, 4294901760
    %2239 = vmatpush1.msra.mxu0 %v2238
    %2240 = vmatprep.subr.mxu0 0.0
    %v2241 = vand.u32 %v1817, 4294901760
    %2242 = vmatpush1.msra.mxu0 %v2241
    %2243 = vmatprep.subr.mxu0 0.0
    %v2244 = vand.u32 %v1818, 4294901760
    %2245 = vmatpush1.msra.mxu0 %v2244
    %2246 = vmatprep.subr.mxu0 0.0
    %2247 = vmatpush1.msra.mxu0 0.0
    %2248 = vmatprep.subr.mxu0 0.0
    %2249 = vmatpush1.msra.mxu0 0.0
    %2250 = vmatprep.subr.mxu0 0.0
    %2251 = vmatpush1.msra.mxu0 0.0
    %2252 = vmatprep.subr.mxu0 0.0
    %2253 = vmatpush1.msra.mxu0 0.0
    %2254 = vmatprep.subr.mxu0 0.0
    %2255 = vmatpush1.msra.mxu0 0.0
    %2256 = vmatprep.subr.mxu0 0.0
    %2257 = vmatpush1.msra.mxu0 0.0
    %2258 = vmatprep.subr.mxu0 0.0
    %2259 = vmatpush1.msra.mxu0 0.0
    %2260 = vmatprep.subr.mxu0 0.0
    %2261 = vmatpush1.msra.mxu0 0.0
    %2262 = vmatprep.subr.mxu0 0.0
    %2263 = vmatpush1.msra.mxu0 0.0
    %2264 = vmatprep.subr.mxu0 0.0
    %2265 = vmatpush1.msra.mxu0 0.0
    %2266 = vmatprep.subr.mxu0 0.0
    %2267 = vmatpush1.msra.mxu0 0.0
    %2268 = vmatprep.subr.mxu0 0.0
    %2269 = vmatpush1.msra.mxu0 0.0
    %2270 = vmatprep.subr.mxu0 0.0
    %2271 = vmatpush1.msra.mxu0 0.0
    %2272 = vmatprep.subr.mxu0 0.0
    %2273 = vmatpush1.msra.mxu0 0.0
    %2274 = vmatprep.subr.mxu0 0.0
    %2275 = vmatpush1.msra.mxu0 0.0
    %2276 = vmatprep.subr.mxu0 0.0
    %2277 = vmatpush1.msra.mxu0 0.0
    %2278 = vmatprep.subr.mxu0 0.0
    %2279 = vmatpush1.msra.mxu0 0.0
    %2280 = vmatprep.subr.mxu0 0.0
    %2281 = vmatpush1.msra.mxu0 0.0
    %2282 = vmatprep.subr.mxu0 0.0
    %2283 = vmatpush1.msra.mxu0 0.0
    %2284 = vmatprep.subr.mxu0 0.0
    %2285 = vmatpush1.msra.mxu0 0.0
    %2286 = vmatprep.subr.mxu0 0.0
    %2287 = vmatpush1.msra.mxu0 0.0
    %2288 = vmatprep.subr.mxu0 0.0
    %2289 = vmatpush1.msra.mxu0 0.0
    %2290 = vmatprep.subr.mxu0 0.0
    %2291 = vmatpush1.msra.mxu0 0.0
    %2292 = vmatprep.subr.mxu0 0.0
    %2293 = vmatpush1.msra.mxu0 0.0
    %2294 = vmatprep.subr.mxu0 0.0
    %2295 = vmatpush1.msra.mxu0 0.0
    %2296 = vmatprep.subr.mxu0 0.0
    %2297 = vmatpush1.msra.mxu0 0.0
    %2298 = vmatprep.subr.mxu0 0.0
    %2299 = vmatpush1.msra.mxu0 0.0
    %2300 = vmatprep.subr.mxu0 0.0
    %2301 = vmatpush1.msra.mxu0 0.0
    %2302 = vmatprep.mubr.f32.mxu0 0.0
    %v2303 = vand.u32 %v1822, 4294901760
    %2304 = vmatmul.mubr.f32.gmra.mrb[0].mxu0 %v2303
    %v2305 = vpop.f32.mrb[0].mxu0
    %v2306 = vadd.f32 %v2231, %v2305
    %v2307 = vpop.f32.mrb[0].mxu0
    %2308 = vdwg.mxu0
    %2309 = vmatprep.subr.mxu0 0.0
    %v2310 = vand.u32 %v728, 4294901760
    %2311 = vmatpush1.msra.mxu0 %v2310
    %2312 = vmatprep.subr.mxu0 0.0
    %v2313 = vand.u32 %v729, 4294901760
    %2314 = vmatpush1.msra.mxu0 %v2313
    %2315 = vmatprep.subr.mxu0 0.0
    %v2316 = vand.u32 %v730, 4294901760
    %2317 = vmatpush1.msra.mxu0 %v2316
    %2318 = vmatprep.subr.mxu0 0.0
    %v2319 = vand.u32 %v731, 4294901760
    %2320 = vmatpush1.msra.mxu0 %v2319
    %2321 = vmatprep.subr.mxu0 0.0
    %2322 = vmatpush1.msra.mxu0 0.0
    %2323 = vmatprep.subr.mxu0 0.0
    %2324 = vmatpush1.msra.mxu0 0.0
    %2325 = vmatprep.subr.mxu0 0.0
    %2326 = vmatpush1.msra.mxu0 0.0
    %2327 = vmatprep.subr.mxu0 0.0
    %2328 = vmatpush1.msra.mxu0 0.0
    %2329 = vmatprep.subr.mxu0 0.0
    %2330 = vmatpush1.msra.mxu0 0.0
    %2331 = vmatprep.subr.mxu0 0.0
    %2332 = vmatpush1.msra.mxu0 0.0
    %2333 = vmatprep.subr.mxu0 0.0
    %2334 = vmatpush1.msra.mxu0 0.0
    %2335 = vmatprep.subr.mxu0 0.0
    %2336 = vmatpush1.msra.mxu0 0.0
    %2337 = vmatprep.subr.mxu0 0.0
    %2338 = vmatpush1.msra.mxu0 0.0
    %2339 = vmatprep.subr.mxu0 0.0
    %2340 = vmatpush1.msra.mxu0 0.0
    %2341 = vmatprep.subr.mxu0 0.0
    %2342 = vmatpush1.msra.mxu0 0.0
    %2343 = vmatprep.subr.mxu0 0.0
    %2344 = vmatpush1.msra.mxu0 0.0
    %2345 = vmatprep.subr.mxu0 0.0
    %2346 = vmatpush1.msra.mxu0 0.0
    %2347 = vmatprep.subr.mxu0 0.0
    %2348 = vmatpush1.msra.mxu0 0.0
    %2349 = vmatprep.subr.mxu0 0.0
    %2350 = vmatpush1.msra.mxu0 0.0
    %2351 = vmatprep.subr.mxu0 0.0
    %2352 = vmatpush1.msra.mxu0 0.0
    %2353 = vmatprep.subr.mxu0 0.0
    %2354 = vmatpush1.msra.mxu0 0.0
    %2355 = vmatprep.subr.mxu0 0.0
    %2356 = vmatpush1.msra.mxu0 0.0
    %2357 = vmatprep.subr.mxu0 0.0
    %2358 = vmatpush1.msra.mxu0 0.0
    %2359 = vmatprep.subr.mxu0 0.0
    %2360 = vmatpush1.msra.mxu0 0.0
    %2361 = vmatprep.subr.mxu0 0.0
    %2362 = vmatpush1.msra.mxu0 0.0
    %2363 = vmatprep.subr.mxu0 0.0
    %2364 = vmatpush1.msra.mxu0 0.0
    %2365 = vmatprep.subr.mxu0 0.0
    %2366 = vmatpush1.msra.mxu0 0.0
    %2367 = vmatprep.subr.mxu0 0.0
    %2368 = vmatpush1.msra.mxu0 0.0
    %2369 = vmatprep.subr.mxu0 0.0
    %2370 = vmatpush1.msra.mxu0 0.0
    %2371 = vmatprep.subr.mxu0 0.0
    %2372 = vmatpush1.msra.mxu0 0.0
    %2373 = vmatprep.subr.mxu0 0.0
    %2374 = vmatpush1.msra.mxu0 0.0
    %2375 = vmatprep.subr.mxu0 0.0
    %2376 = vmatpush1.msra.mxu0 0.0
    %2377 = vmatprep.mubr.f32.mxu0 0.0
    %v2378 = vand.u32 %v1285, 4294901760
    %v2379 = vsub.f32 %v1285, %v2378
    %v2380 = vand.u32 %v2379, 4294901760
    %v2381 = vsub.f32 %v2379, %v2380
    %v2382 = vand.u32 %v2381, 4294901760
    %2383 = vmatmul.mubr.f32.gmra.mrb[0].mxu0 %v2382
    %v2384 = vpop.f32.mrb[0].mxu0
    %v2385 = vadd.f32 %v2306, %v2384
    %v2386 = vpop.f32.mrb[0].mxu0
    %2387 = vdwg.mxu0
    %2388 = vmatprep.subr.mxu0 0.0
    %v2389 = vand.u32 %v728, 4294901760
    %v2390 = vsub.f32 %v728, %v2389
    %v2391 = vand.u32 %v2390, 4294901760
    %v2392 = vsub.f32 %v2390, %v2391
    %v2393 = vand.u32 %v2392, 4294901760
    %2394 = vmatpush1.msra.mxu0 %v2393
    %2395 = vmatprep.subr.mxu0 0.0
    %v2396 = vand.u32 %v729, 4294901760
    %v2397 = vsub.f32 %v729, %v2396
    %v2398 = vand.u32 %v2397, 4294901760
    %v2399 = vsub.f32 %v2397, %v2398
    %v2400 = vand.u32 %v2399, 4294901760
    %2401 = vmatpush1.msra.mxu0 %v2400
    %2402 = vmatprep.subr.mxu0 0.0
    %v2403 = vand.u32 %v730, 4294901760
    %v2404 = vsub.f32 %v730, %v2403
    %v2405 = vand.u32 %v2404, 4294901760
    %v2406 = vsub.f32 %v2404, %v2405
    %v2407 = vand.u32 %v2406, 4294901760
    %2408 = vmatpush1.msra.mxu0 %v2407
    %2409 = vmatprep.subr.mxu0 0.0
    %v2410 = vand.u32 %v731, 4294901760
    %v2411 = vsub.f32 %v731, %v2410
    %v2412 = vand.u32 %v2411, 4294901760
    %v2413 = vsub.f32 %v2411, %v2412
    %v2414 = vand.u32 %v2413, 4294901760
    %2415 = vmatpush1.msra.mxu0 %v2414
    %2416 = vmatprep.subr.mxu0 0.0
    %2417 = vmatpush1.msra.mxu0 0.0
    %2418 = vmatprep.subr.mxu0 0.0
    %2419 = vmatpush1.msra.mxu0 0.0
    %2420 = vmatprep.subr.mxu0 0.0
    %2421 = vmatpush1.msra.mxu0 0.0
    %2422 = vmatprep.subr.mxu0 0.0
    %2423 = vmatpush1.msra.mxu0 0.0
    %2424 = vmatprep.subr.mxu0 0.0
    %2425 = vmatpush1.msra.mxu0 0.0
    %2426 = vmatprep.subr.mxu0 0.0
    %2427 = vmatpush1.msra.mxu0 0.0
    %2428 = vmatprep.subr.mxu0 0.0
    %2429 = vmatpush1.msra.mxu0 0.0
    %2430 = vmatprep.subr.mxu0 0.0
    %2431 = vmatpush1.msra.mxu0 0.0
    %2432 = vmatprep.subr.mxu0 0.0
    %2433 = vmatpush1.msra.mxu0 0.0
    %2434 = vmatprep.subr.mxu0 0.0
    %2435 = vmatpush1.msra.mxu0 0.0
    %2436 = vmatprep.subr.mxu0 0.0
    %2437 = vmatpush1.msra.mxu0 0.0
    %2438 = vmatprep.subr.mxu0 0.0
    %2439 = vmatpush1.msra.mxu0 0.0
    %2440 = vmatprep.subr.mxu0 0.0
    %2441 = vmatpush1.msra.mxu0 0.0
    %2442 = vmatprep.subr.mxu0 0.0
    %2443 = vmatpush1.msra.mxu0 0.0
    %2444 = vmatprep.subr.mxu0 0.0
    %2445 = vmatpush1.msra.mxu0 0.0
    %2446 = vmatprep.subr.mxu0 0.0
    %2447 = vmatpush1.msra.mxu0 0.0
    %2448 = vmatprep.subr.mxu0 0.0
    %2449 = vmatpush1.msra.mxu0 0.0
    %2450 = vmatprep.subr.mxu0 0.0
    %2451 = vmatpush1.msra.mxu0 0.0
    %2452 = vmatprep.subr.mxu0 0.0
    %2453 = vmatpush1.msra.mxu0 0.0
    %2454 = vmatprep.subr.mxu0 0.0
    %2455 = vmatpush1.msra.mxu0 0.0
    %2456 = vmatprep.subr.mxu0 0.0
    %2457 = vmatpush1.msra.mxu0 0.0
    %2458 = vmatprep.subr.mxu0 0.0
    %2459 = vmatpush1.msra.mxu0 0.0
    %2460 = vmatprep.subr.mxu0 0.0
    %2461 = vmatpush1.msra.mxu0 0.0
    %2462 = vmatprep.subr.mxu0 0.0
    %2463 = vmatpush1.msra.mxu0 0.0
    %2464 = vmatprep.subr.mxu0 0.0
    %2465 = vmatpush1.msra.mxu0 0.0
    %2466 = vmatprep.subr.mxu0 0.0
    %2467 = vmatpush1.msra.mxu0 0.0
    %2468 = vmatprep.subr.mxu0 0.0
    %2469 = vmatpush1.msra.mxu0 0.0
    %2470 = vmatprep.subr.mxu0 0.0
    %2471 = vmatpush1.msra.mxu0 0.0
    %2472 = vmatprep.mubr.f32.mxu0 0.0
    %v2473 = vand.u32 %v1285, 4294901760
    %2474 = vmatmul.mubr.f32.gmra.mrb[0].mxu0 %v2473
    %v2475 = vpop.f32.mrb[0].mxu0
    %v2476 = vadd.f32 %v2385, %v2475
    %v2477 = vpop.f32.mrb[0].mxu0
    %2478 = vdwg.mxu0
    %2479 = vmatprep.subr.mxu0 0.0
    %v2480 = vand.u32 %v728, 4294901760
    %v2481 = vsub.f32 %v728, %v2480
    %2482 = vmatpush1.msra.mxu0 %v2481
    %2483 = vmatprep.subr.mxu0 0.0
    %v2484 = vand.u32 %v729, 4294901760
    %v2485 = vsub.f32 %v729, %v2484
    %2486 = vmatpush1.msra.mxu0 %v2485
    %2487 = vmatprep.subr.mxu0 0.0
    %v2488 = vand.u32 %v730, 4294901760
    %v2489 = vsub.f32 %v730, %v2488
    %2490 = vmatpush1.msra.mxu0 %v2489
    %2491 = vmatprep.subr.mxu0 0.0
    %v2492 = vand.u32 %v731, 4294901760
    %v2493 = vsub.f32 %v731, %v2492
    %2494 = vmatpush1.msra.mxu0 %v2493
    %2495 = vmatprep.subr.mxu0 0.0
    %2496 = vmatpush1.msra.mxu0 0.0
    %2497 = vmatprep.subr.mxu0 0.0
    %2498 = vmatpush1.msra.mxu0 0.0
    %2499 = vmatprep.subr.mxu0 0.0
    %2500 = vmatpush1.msra.mxu0 0.0
    %2501 = vmatprep.subr.mxu0 0.0
    %2502 = vmatpush1.msra.mxu0 0.0
    %2503 = vmatprep.subr.mxu0 0.0
    %2504 = vmatpush1.msra.mxu0 0.0
    %2505 = vmatprep.subr.mxu0 0.0
    %2506 = vmatpush1.msra.mxu0 0.0
    %2507 = vmatprep.subr.mxu0 0.0
    %2508 = vmatpush1.msra.mxu0 0.0
    %2509 = vmatprep.subr.mxu0 0.0
    %2510 = vmatpush1.msra.mxu0 0.0
    %2511 = vmatprep.subr.mxu0 0.0
    %2512 = vmatpush1.msra.mxu0 0.0
    %2513 = vmatprep.subr.mxu0 0.0
    %2514 = vmatpush1.msra.mxu0 0.0
    %2515 = vmatprep.subr.mxu0 0.0
    %2516 = vmatpush1.msra.mxu0 0.0
    %2517 = vmatprep.subr.mxu0 0.0
    %2518 = vmatpush1.msra.mxu0 0.0
    %2519 = vmatprep.subr.mxu0 0.0
    %2520 = vmatpush1.msra.mxu0 0.0
    %2521 = vmatprep.subr.mxu0 0.0
    %2522 = vmatpush1.msra.mxu0 0.0
    %2523 = vmatprep.subr.mxu0 0.0
    %2524 = vmatpush1.msra.mxu0 0.0
    %2525 = vmatprep.subr.mxu0 0.0
    %2526 = vmatpush1.msra.mxu0 0.0
    %2527 = vmatprep.subr.mxu0 0.0
    %2528 = vmatpush1.msra.mxu0 0.0
    %2529 = vmatprep.subr.mxu0 0.0
    %2530 = vmatpush1.msra.mxu0 0.0
    %2531 = vmatprep.subr.mxu0 0.0
    %2532 = vmatpush1.msra.mxu0 0.0
    %2533 = vmatprep.subr.mxu0 0.0
    %2534 = vmatpush1.msra.mxu0 0.0
    %2535 = vmatprep.subr.mxu0 0.0
    %2536 = vmatpush1.msra.mxu0 0.0
    %2537 = vmatprep.subr.mxu0 0.0
    %2538 = vmatpush1.msra.mxu0 0.0
    %2539 = vmatprep.subr.mxu0 0.0
    %2540 = vmatpush1.msra.mxu0 0.0
    %2541 = vmatprep.subr.mxu0 0.0
    %2542 = vmatpush1.msra.mxu0 0.0
    %2543 = vmatprep.subr.mxu0 0.0
    %2544 = vmatpush1.msra.mxu0 0.0
    %2545 = vmatprep.subr.mxu0 0.0
    %2546 = vmatpush1.msra.mxu0 0.0
    %2547 = vmatprep.subr.mxu0 0.0
    %2548 = vmatpush1.msra.mxu0 0.0
    %2549 = vmatprep.subr.mxu0 0.0
    %2550 = vmatpush1.msra.mxu0 0.0
    %2551 = vmatprep.mubr.f32.mxu0 0.0
    %v2552 = vand.u32 %v1285, 4294901760
    %v2553 = vsub.f32 %v1285, %v2552
    %2554 = vmatmul.mubr.f32.gmra.mrb[0].mxu0 %v2553
    %v2555 = vpop.f32.mrb[0].mxu0
    %v2556 = vadd.f32 %v2476, %v2555
    %v2557 = vpop.f32.mrb[0].mxu0
    %2558 = vdwg.mxu0
    %2559 = vmatprep.subr.mxu0 0.0
    %v2560 = vand.u32 %v728, 4294901760
    %2561 = vmatpush1.msra.mxu0 %v2560
    %2562 = vmatprep.subr.mxu0 0.0
    %v2563 = vand.u32 %v729, 4294901760
    %2564 = vmatpush1.msra.mxu0 %v2563
    %2565 = vmatprep.subr.mxu0 0.0
    %v2566 = vand.u32 %v730, 4294901760
    %2567 = vmatpush1.msra.mxu0 %v2566
    %2568 = vmatprep.subr.mxu0 0.0
    %v2569 = vand.u32 %v731, 4294901760
    %2570 = vmatpush1.msra.mxu0 %v2569
    %2571 = vmatprep.subr.mxu0 0.0
    %2572 = vmatpush1.msra.mxu0 0.0
    %2573 = vmatprep.subr.mxu0 0.0
    %2574 = vmatpush1.msra.mxu0 0.0
    %2575 = vmatprep.subr.mxu0 0.0
    %2576 = vmatpush1.msra.mxu0 0.0
    %2577 = vmatprep.subr.mxu0 0.0
    %2578 = vmatpush1.msra.mxu0 0.0
    %2579 = vmatprep.subr.mxu0 0.0
    %2580 = vmatpush1.msra.mxu0 0.0
    %2581 = vmatprep.subr.mxu0 0.0
    %2582 = vmatpush1.msra.mxu0 0.0
    %2583 = vmatprep.subr.mxu0 0.0
    %2584 = vmatpush1.msra.mxu0 0.0
    %2585 = vmatprep.subr.mxu0 0.0
    %2586 = vmatpush1.msra.mxu0 0.0
    %2587 = vmatprep.subr.mxu0 0.0
    %2588 = vmatpush1.msra.mxu0 0.0
    %2589 = vmatprep.subr.mxu0 0.0
    %2590 = vmatpush1.msra.mxu0 0.0
    %2591 = vmatprep.subr.mxu0 0.0
    %2592 = vmatpush1.msra.mxu0 0.0
    %2593 = vmatprep.subr.mxu0 0.0
    %2594 = vmatpush1.msra.mxu0 0.0
    %2595 = vmatprep.subr.mxu0 0.0
    %2596 = vmatpush1.msra.mxu0 0.0
    %2597 = vmatprep.subr.mxu0 0.0
    %2598 = vmatpush1.msra.mxu0 0.0
    %2599 = vmatprep.subr.mxu0 0.0
    %2600 = vmatpush1.msra.mxu0 0.0
    %2601 = vmatprep.subr.mxu0 0.0
    %2602 = vmatpush1.msra.mxu0 0.0
    %2603 = vmatprep.subr.mxu0 0.0
    %2604 = vmatpush1.msra.mxu0 0.0
    %2605 = vmatprep.subr.mxu0 0.0
    %2606 = vmatpush1.msra.mxu0 0.0
    %2607 = vmatprep.subr.mxu0 0.0
    %2608 = vmatpush1.msra.mxu0 0.0
    %2609 = vmatprep.subr.mxu0 0.0
    %2610 = vmatpush1.msra.mxu0 0.0
    %2611 = vmatprep.subr.mxu0 0.0
    %2612 = vmatpush1.msra.mxu0 0.0
    %2613 = vmatprep.subr.mxu0 0.0
    %2614 = vmatpush1.msra.mxu0 0.0
    %2615 = vmatprep.subr.mxu0 0.0
    %2616 = vmatpush1.msra.mxu0 0.0
    %2617 = vmatprep.subr.mxu0 0.0
    %2618 = vmatpush1.msra.mxu0 0.0
    %2619 = vmatprep.subr.mxu0 0.0
    %2620 = vmatpush1.msra.mxu0 0.0
    %2621 = vmatprep.subr.mxu0 0.0
    %2622 = vmatpush1.msra.mxu0 0.0
    %2623 = vmatprep.subr.mxu0 0.0
    %2624 = vmatpush1.msra.mxu0 0.0
    %2625 = vmatprep.subr.mxu0 0.0
    %2626 = vmatpush1.msra.mxu0 0.0
    %2627 = vmatprep.mubr.f32.mxu0 0.0
    %v2628 = vand.u32 %v1285, 4294901760
    %v2629 = vsub.f32 %v1285, %v2628
    %v2630 = vand.u32 %v2629, 4294901760
    %2631 = vmatmul.mubr.f32.gmra.mrb[0].mxu0 %v2630
    %v2632 = vpop.f32.mrb[0].mxu0
    %v2633 = vadd.f32 %v2556, %v2632
    %v2634 = vpop.f32.mrb[0].mxu0
    %2635 = vdwg.mxu0
    %2636 = vmatprep.subr.mxu0 0.0
    %v2637 = vand.u32 %v728, 4294901760
    %v2638 = vsub.f32 %v728, %v2637
    %v2639 = vand.u32 %v2638, 4294901760
    %2640 = vmatpush1.msra.mxu0 %v2639
    %2641 = vmatprep.subr.mxu0 0.0
    %v2642 = vand.u32 %v729, 4294901760
    %v2643 = vsub.f32 %v729, %v2642
    %v2644 = vand.u32 %v2643, 4294901760
    %2645 = vmatpush1.msra.mxu0 %v2644
    %2646 = vmatprep.subr.mxu0 0.0
    %v2647 = vand.u32 %v730, 4294901760
    %v2648 = vsub.f32 %v730, %v2647
    %v2649 = vand.u32 %v2648, 4294901760
    %2650 = vmatpush1.msra.mxu0 %v2649
    %2651 = vmatprep.subr.mxu0 0.0
    %v2652 = vand.u32 %v731, 4294901760
    %v2653 = vsub.f32 %v731, %v2652
    %v2654 = vand.u32 %v2653, 4294901760
    %2655 = vmatpush1.msra.mxu0 %v2654
    %2656 = vmatprep.subr.mxu0 0.0
    %2657 = vmatpush1.msra.mxu0 0.0
    %2658 = vmatprep.subr.mxu0 0.0
    %2659 = vmatpush1.msra.mxu0 0.0
    %2660 = vmatprep.subr.mxu0 0.0
    %2661 = vmatpush1.msra.mxu0 0.0
    %2662 = vmatprep.subr.mxu0 0.0
    %2663 = vmatpush1.msra.mxu0 0.0
    %2664 = vmatprep.subr.mxu0 0.0
    %2665 = vmatpush1.msra.mxu0 0.0
    %2666 = vmatprep.subr.mxu0 0.0
    %2667 = vmatpush1.msra.mxu0 0.0
    %2668 = vmatprep.subr.mxu0 0.0
    %2669 = vmatpush1.msra.mxu0 0.0
    %2670 = vmatprep.subr.mxu0 0.0
    %2671 = vmatpush1.msra.mxu0 0.0
    %2672 = vmatprep.subr.mxu0 0.0
    %2673 = vmatpush1.msra.mxu0 0.0
    %2674 = vmatprep.subr.mxu0 0.0
    %2675 = vmatpush1.msra.mxu0 0.0
    %2676 = vmatprep.subr.mxu0 0.0
    %2677 = vmatpush1.msra.mxu0 0.0
    %2678 = vmatprep.subr.mxu0 0.0
    %2679 = vmatpush1.msra.mxu0 0.0
    %2680 = vmatprep.subr.mxu0 0.0
    %2681 = vmatpush1.msra.mxu0 0.0
    %2682 = vmatprep.subr.mxu0 0.0
    %2683 = vmatpush1.msra.mxu0 0.0
    %2684 = vmatprep.subr.mxu0 0.0
    %2685 = vmatpush1.msra.mxu0 0.0
    %2686 = vmatprep.subr.mxu0 0.0
    %2687 = vmatpush1.msra.mxu0 0.0
    %2688 = vmatprep.subr.mxu0 0.0
    %2689 = vmatpush1.msra.mxu0 0.0
    %2690 = vmatprep.subr.mxu0 0.0
    %2691 = vmatpush1.msra.mxu0 0.0
    %2692 = vmatprep.subr.mxu0 0.0
    %2693 = vmatpush1.msra.mxu0 0.0
    %2694 = vmatprep.subr.mxu0 0.0
    %2695 = vmatpush1.msra.mxu0 0.0
    %2696 = vmatprep.subr.mxu0 0.0
    %2697 = vmatpush1.msra.mxu0 0.0
    %2698 = vmatprep.subr.mxu0 0.0
    %2699 = vmatpush1.msra.mxu0 0.0
    %2700 = vmatprep.subr.mxu0 0.0
    %2701 = vmatpush1.msra.mxu0 0.0
    %2702 = vmatprep.subr.mxu0 0.0
    %2703 = vmatpush1.msra.mxu0 0.0
    %2704 = vmatprep.subr.mxu0 0.0
    %2705 = vmatpush1.msra.mxu0 0.0
    %2706 = vmatprep.subr.mxu0 0.0
    %2707 = vmatpush1.msra.mxu0 0.0
    %2708 = vmatprep.subr.mxu0 0.0
    %2709 = vmatpush1.msra.mxu0 0.0
    %2710 = vmatprep.subr.mxu0 0.0
    %2711 = vmatpush1.msra.mxu0 0.0
    %2712 = vmatprep.mubr.f32.mxu0 0.0
    %v2713 = vand.u32 %v1285, 4294901760
    %2714 = vmatmul.mubr.f32.gmra.mrb[0].mxu0 %v2713
    %v2715 = vpop.f32.mrb[0].mxu0
    %v2716 = vadd.f32 %v2633, %v2715
    %v2717 = vpop.f32.mrb[0].mxu0
    %2718 = vdwg.mxu0
    %2719 = vmatprep.subr.mxu0 0.0
    %v2720 = vand.u32 %v728, 4294901760
    %2721 = vmatpush1.msra.mxu0 %v2720
    %2722 = vmatprep.subr.mxu0 0.0
    %v2723 = vand.u32 %v729, 4294901760
    %2724 = vmatpush1.msra.mxu0 %v2723
    %2725 = vmatprep.subr.mxu0 0.0
    %v2726 = vand.u32 %v730, 4294901760
    %2727 = vmatpush1.msra.mxu0 %v2726
    %2728 = vmatprep.subr.mxu0 0.0
    %v2729 = vand.u32 %v731, 4294901760
    %2730 = vmatpush1.msra.mxu0 %v2729
    %2731 = vmatprep.subr.mxu0 0.0
    %2732 = vmatpush1.msra.mxu0 0.0
    %2733 = vmatprep.subr.mxu0 0.0
    %2734 = vmatpush1.msra.mxu0 0.0
    %2735 = vmatprep.subr.mxu0 0.0
    %2736 = vmatpush1.msra.mxu0 0.0
    %2737 = vmatprep.subr.mxu0 0.0
    %2738 = vmatpush1.msra.mxu0 0.0
    %2739 = vmatprep.subr.mxu0 0.0
    %2740 = vmatpush1.msra.mxu0 0.0
    %2741 = vmatprep.subr.mxu0 0.0
    %2742 = vmatpush1.msra.mxu0 0.0
    %2743 = vmatprep.subr.mxu0 0.0
    %2744 = vmatpush1.msra.mxu0 0.0
    %2745 = vmatprep.subr.mxu0 0.0
    %2746 = vmatpush1.msra.mxu0 0.0
    %2747 = vmatprep.subr.mxu0 0.0
    %2748 = vmatpush1.msra.mxu0 0.0
    %2749 = vmatprep.subr.mxu0 0.0
    %2750 = vmatpush1.msra.mxu0 0.0
    %2751 = vmatprep.subr.mxu0 0.0
    %2752 = vmatpush1.msra.mxu0 0.0
    %2753 = vmatprep.subr.mxu0 0.0
    %2754 = vmatpush1.msra.mxu0 0.0
    %2755 = vmatprep.subr.mxu0 0.0
    %2756 = vmatpush1.msra.mxu0 0.0
    %2757 = vmatprep.subr.mxu0 0.0
    %2758 = vmatpush1.msra.mxu0 0.0
    %2759 = vmatprep.subr.mxu0 0.0
    %2760 = vmatpush1.msra.mxu0 0.0
    %2761 = vmatprep.subr.mxu0 0.0
    %2762 = vmatpush1.msra.mxu0 0.0
    %2763 = vmatprep.subr.mxu0 0.0
    %2764 = vmatpush1.msra.mxu0 0.0
    %2765 = vmatprep.subr.mxu0 0.0
    %2766 = vmatpush1.msra.mxu0 0.0
    %2767 = vmatprep.subr.mxu0 0.0
    %2768 = vmatpush1.msra.mxu0 0.0
    %2769 = vmatprep.subr.mxu0 0.0
    %2770 = vmatpush1.msra.mxu0 0.0
    %2771 = vmatprep.subr.mxu0 0.0
    %2772 = vmatpush1.msra.mxu0 0.0
    %2773 = vmatprep.subr.mxu0 0.0
    %2774 = vmatpush1.msra.mxu0 0.0
    %2775 = vmatprep.subr.mxu0 0.0
    %2776 = vmatpush1.msra.mxu0 0.0
    %2777 = vmatprep.subr.mxu0 0.0
    %2778 = vmatpush1.msra.mxu0 0.0
    %2779 = vmatprep.subr.mxu0 0.0
    %2780 = vmatpush1.msra.mxu0 0.0
    %2781 = vmatprep.subr.mxu0 0.0
    %2782 = vmatpush1.msra.mxu0 0.0
    %2783 = vmatprep.subr.mxu0 0.0
    %2784 = vmatpush1.msra.mxu0 0.0
    %2785 = vmatprep.subr.mxu0 0.0
    %2786 = vmatpush1.msra.mxu0 0.0
    %2787 = vmatprep.mubr.f32.mxu0 0.0
    %v2788 = vand.u32 %v1285, 4294901760
    %2789 = vmatmul.mubr.f32.gmra.mrb[0].mxu0 %v2788
    %v2790 = vpop.f32.mrb[0].mxu0
    %v2791 = vadd.f32 %v2716, %v2790
    %v2792 = vpop.f32.mrb[0].mxu0
    %2793 = vdwg.mxu0
    %2795 = vrot.lane.b32.xlu0 %v1793, 32
    %v2796 = vpop.permute.xlu0 %2795
    %v2797 = vsel %vm138, %v2796, 0
    %v2799 = vand.u32 %v30, 4294901760
    %2800 = vmatprep.subr.mxu0 %v2799
    %v2801 = vand.u32 %v29, 4294901760
    %2802 = vmatpush1.msra.mxu0 %v2801
    %v2803 = vand.u32 %v32, 4294901760
    %2804 = vmatprep.subr.mxu0 %v2803
    %v2805 = vand.u32 %v31, 4294901760
    %2806 = vmatpush1.msra.mxu0 %v2805
    %v2807 = vand.u32 %v34, 4294901760
    %2808 = vmatprep.subr.mxu0 %v2807
    %v2809 = vand.u32 %v33, 4294901760
    %2810 = vmatpush1.msra.mxu0 %v2809
    %v2811 = vand.u32 %v36, 4294901760
    %2812 = vmatprep.subr.mxu0 %v2811
    %v2813 = vand.u32 %v35, 4294901760
    %2814 = vmatpush1.msra.mxu0 %v2813
    %2815 = vmatprep.subr.mxu0 0.0
    %2816 = vmatpush1.msra.mxu0 0.0
    %2817 = vmatprep.subr.mxu0 0.0
    %2818 = vmatpush1.msra.mxu0 0.0
    %2819 = vmatprep.subr.mxu0 0.0
    %2820 = vmatpush1.msra.mxu0 0.0
    %2821 = vmatprep.subr.mxu0 0.0
    %2822 = vmatpush1.msra.mxu0 0.0
    %2823 = vmatprep.subr.mxu0 0.0
    %2824 = vmatpush1.msra.mxu0 0.0
    %2825 = vmatprep.subr.mxu0 0.0
    %2826 = vmatpush1.msra.mxu0 0.0
    %2827 = vmatprep.subr.mxu0 0.0
    %2828 = vmatpush1.msra.mxu0 0.0
    %2829 = vmatprep.subr.mxu0 0.0
    %2830 = vmatpush1.msra.mxu0 0.0
    %2831 = vmatprep.subr.mxu0 0.0
    %2832 = vmatpush1.msra.mxu0 0.0
    %2833 = vmatprep.subr.mxu0 0.0
    %2834 = vmatpush1.msra.mxu0 0.0
    %2835 = vmatprep.subr.mxu0 0.0
    %2836 = vmatpush1.msra.mxu0 0.0
    %2837 = vmatprep.subr.mxu0 0.0
    %2838 = vmatpush1.msra.mxu0 0.0
    %2839 = vmatprep.subr.mxu0 0.0
    %2840 = vmatpush1.msra.mxu0 0.0
    %2841 = vmatprep.subr.mxu0 0.0
    %2842 = vmatpush1.msra.mxu0 0.0
    %2843 = vmatprep.subr.mxu0 0.0
    %2844 = vmatpush1.msra.mxu0 0.0
    %2845 = vmatprep.subr.mxu0 0.0
    %2846 = vmatpush1.msra.mxu0 0.0
    %2847 = vmatprep.subr.mxu0 0.0
    %2848 = vmatpush1.msra.mxu0 0.0
    %2849 = vmatprep.subr.mxu0 0.0
    %2850 = vmatpush1.msra.mxu0 0.0
    %2851 = vmatprep.subr.mxu0 0.0
    %2852 = vmatpush1.msra.mxu0 0.0
    %2853 = vmatprep.subr.mxu0 0.0
    %2854 = vmatpush1.msra.mxu0 0.0
    %2855 = vmatprep.subr.mxu0 0.0
    %2856 = vmatpush1.msra.mxu0 0.0
    %2857 = vmatprep.subr.mxu0 0.0
    %2858 = vmatpush1.msra.mxu0 0.0
    %2859 = vmatprep.subr.mxu0 0.0
    %2860 = vmatpush1.msra.mxu0 0.0
    %2861 = vmatprep.subr.mxu0 0.0
    %2862 = vmatpush1.msra.mxu0 0.0
    %2863 = vmatprep.subr.mxu0 0.0
    %2864 = vmatpush1.msra.mxu0 0.0
    %2865 = vmatprep.subr.mxu0 0.0
    %2866 = vmatpush1.msra.mxu0 0.0
    %2867 = vmatprep.subr.mxu0 0.0
    %2868 = vmatpush1.msra.mxu0 0.0
    %2869 = vmatprep.subr.mxu0 0.0
    %2870 = vmatpush1.msra.mxu0 0.0
    %2871 = vmatprep.mubr.f32.mxu0 0.0
    %v2872 = vand.u32 %v2797, 4294901760
    %v2873 = vsub.f32 %v2797, %v2872
    %v2874 = vand.u32 %v2873, 4294901760
    %v2875 = vsub.f32 %v2873, %v2874
    %v2876 = vand.u32 %v2875, 4294901760
    %2877 = vmatmul.mubr.f32.gmra.mrb[0].mxu0 %v2876
    %v2878 = vpop.f32.mrb[0].mxu0
    %v2879 = vadd.f32 0.0, %v2878
    %v2880 = vpop.f32.mrb[0].mxu0
    %v2881 = vadd.f32 0.0, %v2880
    %2882 = vdwg.mxu0
    %v2883 = vand.u32 %v30, 4294901760
    %v2884 = vsub.f32 %v30, %v2883
    %v2885 = vand.u32 %v2884, 4294901760
    %v2886 = vsub.f32 %v2884, %v2885
    %v2887 = vand.u32 %v2886, 4294901760
    %2888 = vmatprep.subr.mxu0 %v2887
    %v2889 = vand.u32 %v29, 4294901760
    %v2890 = vsub.f32 %v29, %v2889
    %v2891 = vand.u32 %v2890, 4294901760
    %v2892 = vsub.f32 %v2890, %v2891
    %v2893 = vand.u32 %v2892, 4294901760
    %2894 = vmatpush1.msra.mxu0 %v2893
    %v2895 = vand.u32 %v32, 4294901760
    %v2896 = vsub.f32 %v32, %v2895
    %v2897 = vand.u32 %v2896, 4294901760
    %v2898 = vsub.f32 %v2896, %v2897
    %v2899 = vand.u32 %v2898, 4294901760
    %2900 = vmatprep.subr.mxu0 %v2899
    %v2901 = vand.u32 %v31, 4294901760
    %v2902 = vsub.f32 %v31, %v2901
    %v2903 = vand.u32 %v2902, 4294901760
    %v2904 = vsub.f32 %v2902, %v2903
    %v2905 = vand.u32 %v2904, 4294901760
    %2906 = vmatpush1.msra.mxu0 %v2905
    %v2907 = vand.u32 %v34, 4294901760
    %v2908 = vsub.f32 %v34, %v2907
    %v2909 = vand.u32 %v2908, 4294901760
    %v2910 = vsub.f32 %v2908, %v2909
    %v2911 = vand.u32 %v2910, 4294901760
    %2912 = vmatprep.subr.mxu0 %v2911
    %v2913 = vand.u32 %v33, 4294901760
    %v2914 = vsub.f32 %v33, %v2913
    %v2915 = vand.u32 %v2914, 4294901760
    %v2916 = vsub.f32 %v2914, %v2915
    %v2917 = vand.u32 %v2916, 4294901760
    %2918 = vmatpush1.msra.mxu0 %v2917
    %v2919 = vand.u32 %v36, 4294901760
    %v2920 = vsub.f32 %v36, %v2919
    %v2921 = vand.u32 %v2920, 4294901760
    %v2922 = vsub.f32 %v2920, %v2921
    %v2923 = vand.u32 %v2922, 4294901760
    %2924 = vmatprep.subr.mxu0 %v2923
    %v2925 = vand.u32 %v35, 4294901760
    %v2926 = vsub.f32 %v35, %v2925
    %v2927 = vand.u32 %v2926, 4294901760
    %v2928 = vsub.f32 %v2926, %v2927
    %v2929 = vand.u32 %v2928, 4294901760
    %2930 = vmatpush1.msra.mxu0 %v2929
    %2931 = vmatprep.subr.mxu0 0.0
    %2932 = vmatpush1.msra.mxu0 0.0
    %2933 = vmatprep.subr.mxu0 0.0
    %2934 = vmatpush1.msra.mxu0 0.0
    %2935 = vmatprep.subr.mxu0 0.0
    %2936 = vmatpush1.msra.mxu0 0.0
    %2937 = vmatprep.subr.mxu0 0.0
    %2938 = vmatpush1.msra.mxu0 0.0
    %2939 = vmatprep.subr.mxu0 0.0
    %2940 = vmatpush1.msra.mxu0 0.0
    %2941 = vmatprep.subr.mxu0 0.0
    %2942 = vmatpush1.msra.mxu0 0.0
    %2943 = vmatprep.subr.mxu0 0.0
    %2944 = vmatpush1.msra.mxu0 0.0
    %2945 = vmatprep.subr.mxu0 0.0
    %2946 = vmatpush1.msra.mxu0 0.0
    %2947 = vmatprep.subr.mxu0 0.0
    %2948 = vmatpush1.msra.mxu0 0.0
    %2949 = vmatprep.subr.mxu0 0.0
    %2950 = vmatpush1.msra.mxu0 0.0
    %2951 = vmatprep.subr.mxu0 0.0
    %2952 = vmatpush1.msra.mxu0 0.0
    %2953 = vmatprep.subr.mxu0 0.0
    %2954 = vmatpush1.msra.mxu0 0.0
    %2955 = vmatprep.subr.mxu0 0.0
    %2956 = vmatpush1.msra.mxu0 0.0
    %2957 = vmatprep.subr.mxu0 0.0
    %2958 = vmatpush1.msra.mxu0 0.0
    %2959 = vmatprep.subr.mxu0 0.0
    %2960 = vmatpush1.msra.mxu0 0.0
    %2961 = vmatprep.subr.mxu0 0.0
    %2962 = vmatpush1.msra.mxu0 0.0
    %2963 = vmatprep.subr.mxu0 0.0
    %2964 = vmatpush1.msra.mxu0 0.0
    %2965 = vmatprep.subr.mxu0 0.0
    %2966 = vmatpush1.msra.mxu0 0.0
    %2967 = vmatprep.subr.mxu0 0.0
    %2968 = vmatpush1.msra.mxu0 0.0
    %2969 = vmatprep.subr.mxu0 0.0
    %2970 = vmatpush1.msra.mxu0 0.0
    %2971 = vmatprep.subr.mxu0 0.0
    %2972 = vmatpush1.msra.mxu0 0.0
    %2973 = vmatprep.subr.mxu0 0.0
    %2974 = vmatpush1.msra.mxu0 0.0
    %2975 = vmatprep.subr.mxu0 0.0
    %2976 = vmatpush1.msra.mxu0 0.0
    %2977 = vmatprep.subr.mxu0 0.0
    %2978 = vmatpush1.msra.mxu0 0.0
    %2979 = vmatprep.subr.mxu0 0.0
    %2980 = vmatpush1.msra.mxu0 0.0
    %2981 = vmatprep.subr.mxu0 0.0
    %2982 = vmatpush1.msra.mxu0 0.0
    %2983 = vmatprep.subr.mxu0 0.0
    %2984 = vmatpush1.msra.mxu0 0.0
    %2985 = vmatprep.subr.mxu0 0.0
    %2986 = vmatpush1.msra.mxu0 0.0
    %2987 = vmatprep.mubr.f32.mxu0 0.0
    %v2988 = vand.u32 %v2797, 4294901760
    %2989 = vmatmul.mubr.f32.gmra.mrb[0].mxu0 %v2988
    %v2990 = vpop.f32.mrb[0].mxu0
    %v2991 = vadd.f32 %v2879, %v2990
    %v2992 = vpop.f32.mrb[0].mxu0
    %v2993 = vadd.f32 %v2881, %v2992
    %2994 = vdwg.mxu0
    %v2995 = vand.u32 %v30, 4294901760
    %v2996 = vsub.f32 %v30, %v2995
    %2997 = vmatprep.subr.mxu0 %v2996
    %v2998 = vand.u32 %v29, 4294901760
    %v2999 = vsub.f32 %v29, %v2998
    %3000 = vmatpush1.msra.mxu0 %v2999
    %v3001 = vand.u32 %v32, 4294901760
    %v3002 = vsub.f32 %v32, %v3001
    %3003 = vmatprep.subr.mxu0 %v3002
    %v3004 = vand.u32 %v31, 4294901760
    %v3005 = vsub.f32 %v31, %v3004
    %3006 = vmatpush1.msra.mxu0 %v3005
    %v3007 = vand.u32 %v34, 4294901760
    %v3008 = vsub.f32 %v34, %v3007
    %3009 = vmatprep.subr.mxu0 %v3008
    %v3010 = vand.u32 %v33, 4294901760
    %v3011 = vsub.f32 %v33, %v3010
    %3012 = vmatpush1.msra.mxu0 %v3011
    %v3013 = vand.u32 %v36, 4294901760
    %v3014 = vsub.f32 %v36, %v3013
    %3015 = vmatprep.subr.mxu0 %v3014
    %v3016 = vand.u32 %v35, 4294901760
    %v3017 = vsub.f32 %v35, %v3016
    %3018 = vmatpush1.msra.mxu0 %v3017
    %3019 = vmatprep.subr.mxu0 0.0
    %3020 = vmatpush1.msra.mxu0 0.0
    %3021 = vmatprep.subr.mxu0 0.0
    %3022 = vmatpush1.msra.mxu0 0.0
    %3023 = vmatprep.subr.mxu0 0.0
    %3024 = vmatpush1.msra.mxu0 0.0
    %3025 = vmatprep.subr.mxu0 0.0
    %3026 = vmatpush1.msra.mxu0 0.0
    %3027 = vmatprep.subr.mxu0 0.0
    %3028 = vmatpush1.msra.mxu0 0.0
    %3029 = vmatprep.subr.mxu0 0.0
    %3030 = vmatpush1.msra.mxu0 0.0
    %3031 = vmatprep.subr.mxu0 0.0
    %3032 = vmatpush1.msra.mxu0 0.0
    %3033 = vmatprep.subr.mxu0 0.0
    %3034 = vmatpush1.msra.mxu0 0.0
    %3035 = vmatprep.subr.mxu0 0.0
    %3036 = vmatpush1.msra.mxu0 0.0
    %3037 = vmatprep.subr.mxu0 0.0
    %3038 = vmatpush1.msra.mxu0 0.0
    %3039 = vmatprep.subr.mxu0 0.0
    %3040 = vmatpush1.msra.mxu0 0.0
    %3041 = vmatprep.subr.mxu0 0.0
    %3042 = vmatpush1.msra.mxu0 0.0
    %3043 = vmatprep.subr.mxu0 0.0
    %3044 = vmatpush1.msra.mxu0 0.0
    %3045 = vmatprep.subr.mxu0 0.0
    %3046 = vmatpush1.msra.mxu0 0.0
    %3047 = vmatprep.subr.mxu0 0.0
    %3048 = vmatpush1.msra.mxu0 0.0
    %3049 = vmatprep.subr.mxu0 0.0
    %3050 = vmatpush1.msra.mxu0 0.0
    %3051 = vmatprep.subr.mxu0 0.0
    %3052 = vmatpush1.msra.mxu0 0.0
    %3053 = vmatprep.subr.mxu0 0.0
    %3054 = vmatpush1.msra.mxu0 0.0
    %3055 = vmatprep.subr.mxu0 0.0
    %3056 = vmatpush1.msra.mxu0 0.0
    %3057 = vmatprep.subr.mxu0 0.0
    %3058 = vmatpush1.msra.mxu0 0.0
    %3059 = vmatprep.subr.mxu0 0.0
    %3060 = vmatpush1.msra.mxu0 0.0
    %3061 = vmatprep.subr.mxu0 0.0
    %3062 = vmatpush1.msra.mxu0 0.0
    %3063 = vmatprep.subr.mxu0 0.0
    %3064 = vmatpush1.msra.mxu0 0.0
    %3065 = vmatprep.subr.mxu0 0.0
    %3066 = vmatpush1.msra.mxu0 0.0
    %3067 = vmatprep.subr.mxu0 0.0
    %3068 = vmatpush1.msra.mxu0 0.0
    %3069 = vmatprep.subr.mxu0 0.0
    %3070 = vmatpush1.msra.mxu0 0.0
    %3071 = vmatprep.subr.mxu0 0.0
    %3072 = vmatpush1.msra.mxu0 0.0
    %3073 = vmatprep.subr.mxu0 0.0
    %3074 = vmatpush1.msra.mxu0 0.0
    %3075 = vmatprep.mubr.f32.mxu0 0.0
    %v3076 = vand.u32 %v2797, 4294901760
    %v3077 = vsub.f32 %v2797, %v3076
    %3078 = vmatmul.mubr.f32.gmra.mrb[0].mxu0 %v3077
    %v3079 = vpop.f32.mrb[0].mxu0
    %v3080 = vadd.f32 %v2991, %v3079
    %v3081 = vpop.f32.mrb[0].mxu0
    %v3082 = vadd.f32 %v2993, %v3081
    %3083 = vdwg.mxu0
    %v3084 = vand.u32 %v30, 4294901760
    %3085 = vmatprep.subr.mxu0 %v3084
    %v3086 = vand.u32 %v29, 4294901760
    %3087 = vmatpush1.msra.mxu0 %v3086
    %v3088 = vand.u32 %v32, 4294901760
    %3089 = vmatprep.subr.mxu0 %v3088
    %v3090 = vand.u32 %v31, 4294901760
    %3091 = vmatpush1.msra.mxu0 %v3090
    %v3092 = vand.u32 %v34, 4294901760
    %3093 = vmatprep.subr.mxu0 %v3092
    %v3094 = vand.u32 %v33, 4294901760
    %3095 = vmatpush1.msra.mxu0 %v3094
    %v3096 = vand.u32 %v36, 4294901760
    %3097 = vmatprep.subr.mxu0 %v3096
    %v3098 = vand.u32 %v35, 4294901760
    %3099 = vmatpush1.msra.mxu0 %v3098
    %3100 = vmatprep.subr.mxu0 0.0
    %3101 = vmatpush1.msra.mxu0 0.0
    %3102 = vmatprep.subr.mxu0 0.0
    %3103 = vmatpush1.msra.mxu0 0.0
    %3104 = vmatprep.subr.mxu0 0.0
    %3105 = vmatpush1.msra.mxu0 0.0
    %3106 = vmatprep.subr.mxu0 0.0
    %3107 = vmatpush1.msra.mxu0 0.0
    %3108 = vmatprep.subr.mxu0 0.0
    %3109 = vmatpush1.msra.mxu0 0.0
    %3110 = vmatprep.subr.mxu0 0.0
    %3111 = vmatpush1.msra.mxu0 0.0
    %3112 = vmatprep.subr.mxu0 0.0
    %3113 = vmatpush1.msra.mxu0 0.0
    %3114 = vmatprep.subr.mxu0 0.0
    %3115 = vmatpush1.msra.mxu0 0.0
    %3116 = vmatprep.subr.mxu0 0.0
    %3117 = vmatpush1.msra.mxu0 0.0
    %3118 = vmatprep.subr.mxu0 0.0
    %3119 = vmatpush1.msra.mxu0 0.0
    %3120 = vmatprep.subr.mxu0 0.0
    %3121 = vmatpush1.msra.mxu0 0.0
    %3122 = vmatprep.subr.mxu0 0.0
    %3123 = vmatpush1.msra.mxu0 0.0
    %3124 = vmatprep.subr.mxu0 0.0
    %3125 = vmatpush1.msra.mxu0 0.0
    %3126 = vmatprep.subr.mxu0 0.0
    %3127 = vmatpush1.msra.mxu0 0.0
    %3128 = vmatprep.subr.mxu0 0.0
    %3129 = vmatpush1.msra.mxu0 0.0
    %3130 = vmatprep.subr.mxu0 0.0
    %3131 = vmatpush1.msra.mxu0 0.0
    %3132 = vmatprep.subr.mxu0 0.0
    %3133 = vmatpush1.msra.mxu0 0.0
    %3134 = vmatprep.subr.mxu0 0.0
    %3135 = vmatpush1.msra.mxu0 0.0
    %3136 = vmatprep.subr.mxu0 0.0
    %3137 = vmatpush1.msra.mxu0 0.0
    %3138 = vmatprep.subr.mxu0 0.0
    %3139 = vmatpush1.msra.mxu0 0.0
    %3140 = vmatprep.subr.mxu0 0.0
    %3141 = vmatpush1.msra.mxu0 0.0
    %3142 = vmatprep.subr.mxu0 0.0
    %3143 = vmatpush1.msra.mxu0 0.0
    %3144 = vmatprep.subr.mxu0 0.0
    %3145 = vmatpush1.msra.mxu0 0.0
    %3146 = vmatprep.subr.mxu0 0.0
    %3147 = vmatpush1.msra.mxu0 0.0
    %3148 = vmatprep.subr.mxu0 0.0
    %3149 = vmatpush1.msra.mxu0 0.0
    %3150 = vmatprep.subr.mxu0 0.0
    %3151 = vmatpush1.msra.mxu0 0.0
    %3152 = vmatprep.subr.mxu0 0.0
    %3153 = vmatpush1.msra.mxu0 0.0
    %3154 = vmatprep.subr.mxu0 0.0
    %3155 = vmatpush1.msra.mxu0 0.0
    %3156 = vmatprep.mubr.f32.mxu0 0.0
    %v3157 = vand.u32 %v2797, 4294901760
    %v3158 = vsub.f32 %v2797, %v3157
    %v3159 = vand.u32 %v3158, 4294901760
    %3160 = vmatmul.mubr.f32.gmra.mrb[0].mxu0 %v3159
    %v3161 = vpop.f32.mrb[0].mxu0
    %v3162 = vadd.f32 %v3080, %v3161
    %v3163 = vpop.f32.mrb[0].mxu0
    %v3164 = vadd.f32 %v3082, %v3163
    %3165 = vdwg.mxu0
    %v3166 = vand.u32 %v30, 4294901760
    %v3167 = vsub.f32 %v30, %v3166
    %v3168 = vand.u32 %v3167, 4294901760
    %3169 = vmatprep.subr.mxu0 %v3168
    %v3170 = vand.u32 %v29, 4294901760
    %v3171 = vsub.f32 %v29, %v3170
    %v3172 = vand.u32 %v3171, 4294901760
    %3173 = vmatpush1.msra.mxu0 %v3172
    %v3174 = vand.u32 %v32, 4294901760
    %v3175 = vsub.f32 %v32, %v3174
    %v3176 = vand.u32 %v3175, 4294901760
    %3177 = vmatprep.subr.mxu0 %v3176
    %v3178 = vand.u32 %v31, 4294901760
    %v3179 = vsub.f32 %v31, %v3178
    %v3180 = vand.u32 %v3179, 4294901760
    %3181 = vmatpush1.msra.mxu0 %v3180
    %v3182 = vand.u32 %v34, 4294901760
    %v3183 = vsub.f32 %v34, %v3182
    %v3184 = vand.u32 %v3183, 4294901760
    %3185 = vmatprep.subr.mxu0 %v3184
    %v3186 = vand.u32 %v33, 4294901760
    %v3187 = vsub.f32 %v33, %v3186
    %v3188 = vand.u32 %v3187, 4294901760
    %3189 = vmatpush1.msra.mxu0 %v3188
    %v3190 = vand.u32 %v36, 4294901760
    %v3191 = vsub.f32 %v36, %v3190
    %v3192 = vand.u32 %v3191, 4294901760
    %3193 = vmatprep.subr.mxu0 %v3192
    %v3194 = vand.u32 %v35, 4294901760
    %v3195 = vsub.f32 %v35, %v3194
    %v3196 = vand.u32 %v3195, 4294901760
    %3197 = vmatpush1.msra.mxu0 %v3196
    %3198 = vmatprep.subr.mxu0 0.0
    %3199 = vmatpush1.msra.mxu0 0.0
    %3200 = vmatprep.subr.mxu0 0.0
    %3201 = vmatpush1.msra.mxu0 0.0
    %3202 = vmatprep.subr.mxu0 0.0
    %3203 = vmatpush1.msra.mxu0 0.0
    %3204 = vmatprep.subr.mxu0 0.0
    %3205 = vmatpush1.msra.mxu0 0.0
    %3206 = vmatprep.subr.mxu0 0.0
    %3207 = vmatpush1.msra.mxu0 0.0
    %3208 = vmatprep.subr.mxu0 0.0
    %3209 = vmatpush1.msra.mxu0 0.0
    %3210 = vmatprep.subr.mxu0 0.0
    %3211 = vmatpush1.msra.mxu0 0.0
    %3212 = vmatprep.subr.mxu0 0.0
    %3213 = vmatpush1.msra.mxu0 0.0
    %3214 = vmatprep.subr.mxu0 0.0
    %3215 = vmatpush1.msra.mxu0 0.0
    %3216 = vmatprep.subr.mxu0 0.0
    %3217 = vmatpush1.msra.mxu0 0.0
    %3218 = vmatprep.subr.mxu0 0.0
    %3219 = vmatpush1.msra.mxu0 0.0
    %3220 = vmatprep.subr.mxu0 0.0
    %3221 = vmatpush1.msra.mxu0 0.0
    %3222 = vmatprep.subr.mxu0 0.0
    %3223 = vmatpush1.msra.mxu0 0.0
    %3224 = vmatprep.subr.mxu0 0.0
    %3225 = vmatpush1.msra.mxu0 0.0
    %3226 = vmatprep.subr.mxu0 0.0
    %3227 = vmatpush1.msra.mxu0 0.0
    %3228 = vmatprep.subr.mxu0 0.0
    %3229 = vmatpush1.msra.mxu0 0.0
    %3230 = vmatprep.subr.mxu0 0.0
    %3231 = vmatpush1.msra.mxu0 0.0
    %3232 = vmatprep.subr.mxu0 0.0
    %3233 = vmatpush1.msra.mxu0 0.0
    %3234 = vmatprep.subr.mxu0 0.0
    %3235 = vmatpush1.msra.mxu0 0.0
    %3236 = vmatprep.subr.mxu0 0.0
    %3237 = vmatpush1.msra.mxu0 0.0
    %3238 = vmatprep.subr.mxu0 0.0
    %3239 = vmatpush1.msra.mxu0 0.0
    %3240 = vmatprep.subr.mxu0 0.0
    %3241 = vmatpush1.msra.mxu0 0.0
    %3242 = vmatprep.subr.mxu0 0.0
    %3243 = vmatpush1.msra.mxu0 0.0
    %3244 = vmatprep.subr.mxu0 0.0
    %3245 = vmatpush1.msra.mxu0 0.0
    %3246 = vmatprep.subr.mxu0 0.0
    %3247 = vmatpush1.msra.mxu0 0.0
    %3248 = vmatprep.subr.mxu0 0.0
    %3249 = vmatpush1.msra.mxu0 0.0
    %3250 = vmatprep.subr.mxu0 0.0
    %3251 = vmatpush1.msra.mxu0 0.0
    %3252 = vmatprep.subr.mxu0 0.0
    %3253 = vmatpush1.msra.mxu0 0.0
    %3254 = vmatprep.mubr.f32.mxu0 0.0
    %v3255 = vand.u32 %v2797, 4294901760
    %3256 = vmatmul.mubr.f32.gmra.mrb[0].mxu0 %v3255
    %v3257 = vpop.f32.mrb[0].mxu0
    %v3258 = vadd.f32 %v3162, %v3257
    %v3259 = vpop.f32.mrb[0].mxu0
    %v3260 = vadd.f32 %v3164, %v3259
    %3261 = vdwg.mxu0
    %v3262 = vand.u32 %v30, 4294901760
    %3263 = vmatprep.subr.mxu0 %v3262
    %v3264 = vand.u32 %v29, 4294901760
    %3265 = vmatpush1.msra.mxu0 %v3264
    %v3266 = vand.u32 %v32, 4294901760
    %3267 = vmatprep.subr.mxu0 %v3266
    %v3268 = vand.u32 %v31, 4294901760
    %3269 = vmatpush1.msra.mxu0 %v3268
    %v3270 = vand.u32 %v34, 4294901760
    %3271 = vmatprep.subr.mxu0 %v3270
    %v3272 = vand.u32 %v33, 4294901760
    %3273 = vmatpush1.msra.mxu0 %v3272
    %v3274 = vand.u32 %v36, 4294901760
    %3275 = vmatprep.subr.mxu0 %v3274
    %v3276 = vand.u32 %v35, 4294901760
    %3277 = vmatpush1.msra.mxu0 %v3276
    %3278 = vmatprep.subr.mxu0 0.0
    %3279 = vmatpush1.msra.mxu0 0.0
    %3280 = vmatprep.subr.mxu0 0.0
    %3281 = vmatpush1.msra.mxu0 0.0
    %3282 = vmatprep.subr.mxu0 0.0
    %3283 = vmatpush1.msra.mxu0 0.0
    %3284 = vmatprep.subr.mxu0 0.0
    %3285 = vmatpush1.msra.mxu0 0.0
    %3286 = vmatprep.subr.mxu0 0.0
    %3287 = vmatpush1.msra.mxu0 0.0
    %3288 = vmatprep.subr.mxu0 0.0
    %3289 = vmatpush1.msra.mxu0 0.0
    %3290 = vmatprep.subr.mxu0 0.0
    %3291 = vmatpush1.msra.mxu0 0.0
    %3292 = vmatprep.subr.mxu0 0.0
    %3293 = vmatpush1.msra.mxu0 0.0
    %3294 = vmatprep.subr.mxu0 0.0
    %3295 = vmatpush1.msra.mxu0 0.0
    %3296 = vmatprep.subr.mxu0 0.0
    %3297 = vmatpush1.msra.mxu0 0.0
    %3298 = vmatprep.subr.mxu0 0.0
    %3299 = vmatpush1.msra.mxu0 0.0
    %3300 = vmatprep.subr.mxu0 0.0
    %3301 = vmatpush1.msra.mxu0 0.0
    %3302 = vmatprep.subr.mxu0 0.0
    %3303 = vmatpush1.msra.mxu0 0.0
    %3304 = vmatprep.subr.mxu0 0.0
    %3305 = vmatpush1.msra.mxu0 0.0
    %3306 = vmatprep.subr.mxu0 0.0
    %3307 = vmatpush1.msra.mxu0 0.0
    %3308 = vmatprep.subr.mxu0 0.0
    %3309 = vmatpush1.msra.mxu0 0.0
    %3310 = vmatprep.subr.mxu0 0.0
    %3311 = vmatpush1.msra.mxu0 0.0
    %3312 = vmatprep.subr.mxu0 0.0
    %3313 = vmatpush1.msra.mxu0 0.0
    %3314 = vmatprep.subr.mxu0 0.0
    %3315 = vmatpush1.msra.mxu0 0.0
    %3316 = vmatprep.subr.mxu0 0.0
    %3317 = vmatpush1.msra.mxu0 0.0
    %3318 = vmatprep.subr.mxu0 0.0
    %3319 = vmatpush1.msra.mxu0 0.0
    %3320 = vmatprep.subr.mxu0 0.0
    %3321 = vmatpush1.msra.mxu0 0.0
    %3322 = vmatprep.subr.mxu0 0.0
    %3323 = vmatpush1.msra.mxu0 0.0
    %3324 = vmatprep.subr.mxu0 0.0
    %3325 = vmatpush1.msra.mxu0 0.0
    %3326 = vmatprep.subr.mxu0 0.0
    %3327 = vmatpush1.msra.mxu0 0.0
    %3328 = vmatprep.subr.mxu0 0.0
    %3329 = vmatpush1.msra.mxu0 0.0
    %3330 = vmatprep.subr.mxu0 0.0
    %3331 = vmatpush1.msra.mxu0 0.0
    %3332 = vmatprep.subr.mxu0 0.0
    %3333 = vmatpush1.msra.mxu0 0.0
    %3334 = vmatprep.mubr.f32.mxu0 0.0
    %v3335 = vand.u32 %v2797, 4294901760
    %3336 = vmatmul.mubr.f32.gmra.mrb[0].mxu0 %v3335
    %v3337 = vpop.f32.mrb[0].mxu0
    %v3338 = vadd.f32 %v3258, %v3337
    %v3339 = vpop.f32.mrb[0].mxu0
    %v3340 = vadd.f32 %v3260, %v3339
    %3341 = vdwg.mxu0
    %v3342 = vadd.f32 %v104, %v3338
    %v3343 = vadd.f32 %v28, %v3340
    %3344 = vmatprep.subr.mxu0 0.0
    %v3345 = vand.u32 %v18, 4294901760
    %3346 = vmatpush1.msra.mxu0 %v3345
    %3347 = vmatprep.subr.mxu0 0.0
    %v3348 = vand.u32 %v19, 4294901760
    %3349 = vmatpush1.msra.mxu0 %v3348
    %3350 = vmatprep.subr.mxu0 0.0
    %v3351 = vand.u32 %v20, 4294901760
    %3352 = vmatpush1.msra.mxu0 %v3351
    %3353 = vmatprep.subr.mxu0 0.0
    %v3354 = vand.u32 %v21, 4294901760
    %3355 = vmatpush1.msra.mxu0 %v3354
    %3356 = vmatprep.subr.mxu0 0.0
    %3357 = vmatpush1.msra.mxu0 0.0
    %3358 = vmatprep.subr.mxu0 0.0
    %3359 = vmatpush1.msra.mxu0 0.0
    %3360 = vmatprep.subr.mxu0 0.0
    %3361 = vmatpush1.msra.mxu0 0.0
    %3362 = vmatprep.subr.mxu0 0.0
    %3363 = vmatpush1.msra.mxu0 0.0
    %3364 = vmatprep.subr.mxu0 0.0
    %3365 = vmatpush1.msra.mxu0 0.0
    %3366 = vmatprep.subr.mxu0 0.0
    %3367 = vmatpush1.msra.mxu0 0.0
    %3368 = vmatprep.subr.mxu0 0.0
    %3369 = vmatpush1.msra.mxu0 0.0
    %3370 = vmatprep.subr.mxu0 0.0
    %3371 = vmatpush1.msra.mxu0 0.0
    %3372 = vmatprep.subr.mxu0 0.0
    %3373 = vmatpush1.msra.mxu0 0.0
    %3374 = vmatprep.subr.mxu0 0.0
    %3375 = vmatpush1.msra.mxu0 0.0
    %3376 = vmatprep.subr.mxu0 0.0
    %3377 = vmatpush1.msra.mxu0 0.0
    %3378 = vmatprep.subr.mxu0 0.0
    %3379 = vmatpush1.msra.mxu0 0.0
    %3380 = vmatprep.subr.mxu0 0.0
    %3381 = vmatpush1.msra.mxu0 0.0
    %3382 = vmatprep.subr.mxu0 0.0
    %3383 = vmatpush1.msra.mxu0 0.0
    %3384 = vmatprep.subr.mxu0 0.0
    %3385 = vmatpush1.msra.mxu0 0.0
    %3386 = vmatprep.subr.mxu0 0.0
    %3387 = vmatpush1.msra.mxu0 0.0
    %3388 = vmatprep.subr.mxu0 0.0
    %3389 = vmatpush1.msra.mxu0 0.0
    %3390 = vmatprep.subr.mxu0 0.0
    %3391 = vmatpush1.msra.mxu0 0.0
    %3392 = vmatprep.subr.mxu0 0.0
    %3393 = vmatpush1.msra.mxu0 0.0
    %3394 = vmatprep.subr.mxu0 0.0
    %3395 = vmatpush1.msra.mxu0 0.0
    %3396 = vmatprep.subr.mxu0 0.0
    %3397 = vmatpush1.msra.mxu0 0.0
    %3398 = vmatprep.subr.mxu0 0.0
    %3399 = vmatpush1.msra.mxu0 0.0
    %3400 = vmatprep.subr.mxu0 0.0
    %3401 = vmatpush1.msra.mxu0 0.0
    %3402 = vmatprep.subr.mxu0 0.0
    %3403 = vmatpush1.msra.mxu0 0.0
    %3404 = vmatprep.subr.mxu0 0.0
    %3405 = vmatpush1.msra.mxu0 0.0
    %3406 = vmatprep.subr.mxu0 0.0
    %3407 = vmatpush1.msra.mxu0 0.0
    %3408 = vmatprep.subr.mxu0 0.0
    %3409 = vmatpush1.msra.mxu0 0.0
    %3410 = vmatprep.subr.mxu0 0.0
    %3411 = vmatpush1.msra.mxu0 0.0
    %3412 = vmatprep.mubr.f32.mxu0 0.0
    %v3413 = vand.u32 %v1822, 4294901760
    %v3414 = vsub.f32 %v1822, %v3413
    %v3415 = vand.u32 %v3414, 4294901760
    %v3416 = vsub.f32 %v3414, %v3415
    %v3417 = vand.u32 %v3416, 4294901760
    %3418 = vmatmul.mubr.f32.gmra.mrb[0].mxu0 %v3417
    %v3419 = vpop.f32.mrb[0].mxu0
    %v3420 = vadd.f32 0.0, %v3419
    %v3421 = vpop.f32.mrb[0].mxu0
    %3422 = vdwg.mxu0
    %3423 = vmatprep.subr.mxu0 0.0
    %v3424 = vand.u32 %v18, 4294901760
    %v3425 = vsub.f32 %v18, %v3424
    %v3426 = vand.u32 %v3425, 4294901760
    %v3427 = vsub.f32 %v3425, %v3426
    %v3428 = vand.u32 %v3427, 4294901760
    %3429 = vmatpush1.msra.mxu0 %v3428
    %3430 = vmatprep.subr.mxu0 0.0
    %v3431 = vand.u32 %v19, 4294901760
    %v3432 = vsub.f32 %v19, %v3431
    %v3433 = vand.u32 %v3432, 4294901760
    %v3434 = vsub.f32 %v3432, %v3433
    %v3435 = vand.u32 %v3434, 4294901760
    %3436 = vmatpush1.msra.mxu0 %v3435
    %3437 = vmatprep.subr.mxu0 0.0
    %v3438 = vand.u32 %v20, 4294901760
    %v3439 = vsub.f32 %v20, %v3438
    %v3440 = vand.u32 %v3439, 4294901760
    %v3441 = vsub.f32 %v3439, %v3440
    %v3442 = vand.u32 %v3441, 4294901760
    %3443 = vmatpush1.msra.mxu0 %v3442
    %3444 = vmatprep.subr.mxu0 0.0
    %v3445 = vand.u32 %v21, 4294901760
    %v3446 = vsub.f32 %v21, %v3445
    %v3447 = vand.u32 %v3446, 4294901760
    %v3448 = vsub.f32 %v3446, %v3447
    %v3449 = vand.u32 %v3448, 4294901760
    %3450 = vmatpush1.msra.mxu0 %v3449
    %3451 = vmatprep.subr.mxu0 0.0
    %3452 = vmatpush1.msra.mxu0 0.0
    %3453 = vmatprep.subr.mxu0 0.0
    %3454 = vmatpush1.msra.mxu0 0.0
    %3455 = vmatprep.subr.mxu0 0.0
    %3456 = vmatpush1.msra.mxu0 0.0
    %3457 = vmatprep.subr.mxu0 0.0
    %3458 = vmatpush1.msra.mxu0 0.0
    %3459 = vmatprep.subr.mxu0 0.0
    %3460 = vmatpush1.msra.mxu0 0.0
    %3461 = vmatprep.subr.mxu0 0.0
    %3462 = vmatpush1.msra.mxu0 0.0
    %3463 = vmatprep.subr.mxu0 0.0
    %3464 = vmatpush1.msra.mxu0 0.0
    %3465 = vmatprep.subr.mxu0 0.0
    %3466 = vmatpush1.msra.mxu0 0.0
    %3467 = vmatprep.subr.mxu0 0.0
    %3468 = vmatpush1.msra.mxu0 0.0
    %3469 = vmatprep.subr.mxu0 0.0
    %3470 = vmatpush1.msra.mxu0 0.0
    %3471 = vmatprep.subr.mxu0 0.0
    %3472 = vmatpush1.msra.mxu0 0.0
    %3473 = vmatprep.subr.mxu0 0.0
    %3474 = vmatpush1.msra.mxu0 0.0
    %3475 = vmatprep.subr.mxu0 0.0
    %3476 = vmatpush1.msra.mxu0 0.0
    %3477 = vmatprep.subr.mxu0 0.0
    %3478 = vmatpush1.msra.mxu0 0.0
    %3479 = vmatprep.subr.mxu0 0.0
    %3480 = vmatpush1.msra.mxu0 0.0
    %3481 = vmatprep.subr.mxu0 0.0
    %3482 = vmatpush1.msra.mxu0 0.0
    %3483 = vmatprep.subr.mxu0 0.0
    %3484 = vmatpush1.msra.mxu0 0.0
    %3485 = vmatprep.subr.mxu0 0.0
    %3486 = vmatpush1.msra.mxu0 0.0
    %3487 = vmatprep.subr.mxu0 0.0
    %3488 = vmatpush1.msra.mxu0 0.0
    %3489 = vmatprep.subr.mxu0 0.0
    %3490 = vmatpush1.msra.mxu0 0.0
    %3491 = vmatprep.subr.mxu0 0.0
    %3492 = vmatpush1.msra.mxu0 0.0
    %3493 = vmatprep.subr.mxu0 0.0
    %3494 = vmatpush1.msra.mxu0 0.0
    %3495 = vmatprep.subr.mxu0 0.0
    %3496 = vmatpush1.msra.mxu0 0.0
    %3497 = vmatprep.subr.mxu0 0.0
    %3498 = vmatpush1.msra.mxu0 0.0
    %3499 = vmatprep.subr.mxu0 0.0
    %3500 = vmatpush1.msra.mxu0 0.0
    %3501 = vmatprep.subr.mxu0 0.0
    %3502 = vmatpush1.msra.mxu0 0.0
    %3503 = vmatprep.subr.mxu0 0.0
    %3504 = vmatpush1.msra.mxu0 0.0
    %3505 = vmatprep.subr.mxu0 0.0
    %3506 = vmatpush1.msra.mxu0 0.0
    %3507 = vmatprep.mubr.f32.mxu0 0.0
    %v3508 = vand.u32 %v1822, 4294901760
    %3509 = vmatmul.mubr.f32.gmra.mrb[0].mxu0 %v3508
    %v3510 = vpop.f32.mrb[0].mxu0
    %v3511 = vadd.f32 %v3420, %v3510
    %v3512 = vpop.f32.mrb[0].mxu0
    %3513 = vdwg.mxu0
    %3514 = vmatprep.subr.mxu0 0.0
    %v3515 = vand.u32 %v18, 4294901760
    %v3516 = vsub.f32 %v18, %v3515
    %3517 = vmatpush1.msra.mxu0 %v3516
    %3518 = vmatprep.subr.mxu0 0.0
    %v3519 = vand.u32 %v19, 4294901760
    %v3520 = vsub.f32 %v19, %v3519
    %3521 = vmatpush1.msra.mxu0 %v3520
    %3522 = vmatprep.subr.mxu0 0.0
    %v3523 = vand.u32 %v20, 4294901760
    %v3524 = vsub.f32 %v20, %v3523
    %3525 = vmatpush1.msra.mxu0 %v3524
    %3526 = vmatprep.subr.mxu0 0.0
    %v3527 = vand.u32 %v21, 4294901760
    %v3528 = vsub.f32 %v21, %v3527
    %3529 = vmatpush1.msra.mxu0 %v3528
    %3530 = vmatprep.subr.mxu0 0.0
    %3531 = vmatpush1.msra.mxu0 0.0
    %3532 = vmatprep.subr.mxu0 0.0
    %3533 = vmatpush1.msra.mxu0 0.0
    %3534 = vmatprep.subr.mxu0 0.0
    %3535 = vmatpush1.msra.mxu0 0.0
    %3536 = vmatprep.subr.mxu0 0.0
    %3537 = vmatpush1.msra.mxu0 0.0
    %3538 = vmatprep.subr.mxu0 0.0
    %3539 = vmatpush1.msra.mxu0 0.0
    %3540 = vmatprep.subr.mxu0 0.0
    %3541 = vmatpush1.msra.mxu0 0.0
    %3542 = vmatprep.subr.mxu0 0.0
    %3543 = vmatpush1.msra.mxu0 0.0
    %3544 = vmatprep.subr.mxu0 0.0
    %3545 = vmatpush1.msra.mxu0 0.0
    %3546 = vmatprep.subr.mxu0 0.0
    %3547 = vmatpush1.msra.mxu0 0.0
    %3548 = vmatprep.subr.mxu0 0.0
    %3549 = vmatpush1.msra.mxu0 0.0
    %3550 = vmatprep.subr.mxu0 0.0
    %3551 = vmatpush1.msra.mxu0 0.0
    %3552 = vmatprep.subr.mxu0 0.0
    %3553 = vmatpush1.msra.mxu0 0.0
    %3554 = vmatprep.subr.mxu0 0.0
    %3555 = vmatpush1.msra.mxu0 0.0
    %3556 = vmatprep.subr.mxu0 0.0
    %3557 = vmatpush1.msra.mxu0 0.0
    %3558 = vmatprep.subr.mxu0 0.0
    %3559 = vmatpush1.msra.mxu0 0.0
    %3560 = vmatprep.subr.mxu0 0.0
    %3561 = vmatpush1.msra.mxu0 0.0
    %3562 = vmatprep.subr.mxu0 0.0
    %3563 = vmatpush1.msra.mxu0 0.0
    %3564 = vmatprep.subr.mxu0 0.0
    %3565 = vmatpush1.msra.mxu0 0.0
    %3566 = vmatprep.subr.mxu0 0.0
    %3567 = vmatpush1.msra.mxu0 0.0
    %3568 = vmatprep.subr.mxu0 0.0
    %3569 = vmatpush1.msra.mxu0 0.0
    %3570 = vmatprep.subr.mxu0 0.0
    %3571 = vmatpush1.msra.mxu0 0.0
    %3572 = vmatprep.subr.mxu0 0.0
    %3573 = vmatpush1.msra.mxu0 0.0
    %3574 = vmatprep.subr.mxu0 0.0
    %3575 = vmatpush1.msra.mxu0 0.0
    %3576 = vmatprep.subr.mxu0 0.0
    %3577 = vmatpush1.msra.mxu0 0.0
    %3578 = vmatprep.subr.mxu0 0.0
    %3579 = vmatpush1.msra.mxu0 0.0
    %3580 = vmatprep.subr.mxu0 0.0
    %3581 = vmatpush1.msra.mxu0 0.0
    %3582 = vmatprep.subr.mxu0 0.0
    %3583 = vmatpush1.msra.mxu0 0.0
    %3584 = vmatprep.subr.mxu0 0.0
    %3585 = vmatpush1.msra.mxu0 0.0
    %3586 = vmatprep.mubr.f32.mxu0 0.0
    %v3587 = vand.u32 %v1822, 4294901760
    %v3588 = vsub.f32 %v1822, %v3587
    %3589 = vmatmul.mubr.f32.gmra.mrb[0].mxu0 %v3588
    %v3590 = vpop.f32.mrb[0].mxu0
    %v3591 = vadd.f32 %v3511, %v3590
    %v3592 = vpop.f32.mrb[0].mxu0
    %3593 = vdwg.mxu0
    %3594 = vmatprep.subr.mxu0 0.0
    %v3595 = vand.u32 %v18, 4294901760
    %3596 = vmatpush1.msra.mxu0 %v3595
    %3597 = vmatprep.subr.mxu0 0.0
    %v3598 = vand.u32 %v19, 4294901760
    %3599 = vmatpush1.msra.mxu0 %v3598
    %3600 = vmatprep.subr.mxu0 0.0
    %v3601 = vand.u32 %v20, 4294901760
    %3602 = vmatpush1.msra.mxu0 %v3601
    %3603 = vmatprep.subr.mxu0 0.0
    %v3604 = vand.u32 %v21, 4294901760
    %3605 = vmatpush1.msra.mxu0 %v3604
    %3606 = vmatprep.subr.mxu0 0.0
    %3607 = vmatpush1.msra.mxu0 0.0
    %3608 = vmatprep.subr.mxu0 0.0
    %3609 = vmatpush1.msra.mxu0 0.0
    %3610 = vmatprep.subr.mxu0 0.0
    %3611 = vmatpush1.msra.mxu0 0.0
    %3612 = vmatprep.subr.mxu0 0.0
    %3613 = vmatpush1.msra.mxu0 0.0
    %3614 = vmatprep.subr.mxu0 0.0
    %3615 = vmatpush1.msra.mxu0 0.0
    %3616 = vmatprep.subr.mxu0 0.0
    %3617 = vmatpush1.msra.mxu0 0.0
    %3618 = vmatprep.subr.mxu0 0.0
    %3619 = vmatpush1.msra.mxu0 0.0
    %3620 = vmatprep.subr.mxu0 0.0
    %3621 = vmatpush1.msra.mxu0 0.0
    %3622 = vmatprep.subr.mxu0 0.0
    %3623 = vmatpush1.msra.mxu0 0.0
    %3624 = vmatprep.subr.mxu0 0.0
    %3625 = vmatpush1.msra.mxu0 0.0
    %3626 = vmatprep.subr.mxu0 0.0
    %3627 = vmatpush1.msra.mxu0 0.0
    %3628 = vmatprep.subr.mxu0 0.0
    %3629 = vmatpush1.msra.mxu0 0.0
    %3630 = vmatprep.subr.mxu0 0.0
    %3631 = vmatpush1.msra.mxu0 0.0
    %3632 = vmatprep.subr.mxu0 0.0
    %3633 = vmatpush1.msra.mxu0 0.0
    %3634 = vmatprep.subr.mxu0 0.0
    %3635 = vmatpush1.msra.mxu0 0.0
    %3636 = vmatprep.subr.mxu0 0.0
    %3637 = vmatpush1.msra.mxu0 0.0
    %3638 = vmatprep.subr.mxu0 0.0
    %3639 = vmatpush1.msra.mxu0 0.0
    %3640 = vmatprep.subr.mxu0 0.0
    %3641 = vmatpush1.msra.mxu0 0.0
    %3642 = vmatprep.subr.mxu0 0.0
    %3643 = vmatpush1.msra.mxu0 0.0
    %3644 = vmatprep.subr.mxu0 0.0
    %3645 = vmatpush1.msra.mxu0 0.0
    %3646 = vmatprep.subr.mxu0 0.0
    %3647 = vmatpush1.msra.mxu0 0.0
    %3648 = vmatprep.subr.mxu0 0.0
    %3649 = vmatpush1.msra.mxu0 0.0
    %3650 = vmatprep.subr.mxu0 0.0
    %3651 = vmatpush1.msra.mxu0 0.0
    %3652 = vmatprep.subr.mxu0 0.0
    %3653 = vmatpush1.msra.mxu0 0.0
    %3654 = vmatprep.subr.mxu0 0.0
    %3655 = vmatpush1.msra.mxu0 0.0
    %3656 = vmatprep.subr.mxu0 0.0
    %3657 = vmatpush1.msra.mxu0 0.0
    %3658 = vmatprep.subr.mxu0 0.0
    %3659 = vmatpush1.msra.mxu0 0.0
    %3660 = vmatprep.subr.mxu0 0.0
    %3661 = vmatpush1.msra.mxu0 0.0
    %3662 = vmatprep.mubr.f32.mxu0 0.0
    %v3663 = vand.u32 %v1822, 4294901760
    %v3664 = vsub.f32 %v1822, %v3663
    %v3665 = vand.u32 %v3664, 4294901760
    %3666 = vmatmul.mubr.f32.gmra.mrb[0].mxu0 %v3665
    %v3667 = vpop.f32.mrb[0].mxu0
    %v3668 = vadd.f32 %v3591, %v3667
    %v3669 = vpop.f32.mrb[0].mxu0
    %3670 = vdwg.mxu0
    %3671 = vmatprep.subr.mxu0 0.0
    %v3672 = vand.u32 %v18, 4294901760
    %v3673 = vsub.f32 %v18, %v3672
    %v3674 = vand.u32 %v3673, 4294901760
    %3675 = vmatpush1.msra.mxu0 %v3674
    %3676 = vmatprep.subr.mxu0 0.0
    %v3677 = vand.u32 %v19, 4294901760
    %v3678 = vsub.f32 %v19, %v3677
    %v3679 = vand.u32 %v3678, 4294901760
    %3680 = vmatpush1.msra.mxu0 %v3679
    %3681 = vmatprep.subr.mxu0 0.0
    %v3682 = vand.u32 %v20, 4294901760
    %v3683 = vsub.f32 %v20, %v3682
    %v3684 = vand.u32 %v3683, 4294901760
    %3685 = vmatpush1.msra.mxu0 %v3684
    %3686 = vmatprep.subr.mxu0 0.0
    %v3687 = vand.u32 %v21, 4294901760
    %v3688 = vsub.f32 %v21, %v3687
    %v3689 = vand.u32 %v3688, 4294901760
    %3690 = vmatpush1.msra.mxu0 %v3689
    %3691 = vmatprep.subr.mxu0 0.0
    %3692 = vmatpush1.msra.mxu0 0.0
    %3693 = vmatprep.subr.mxu0 0.0
    %3694 = vmatpush1.msra.mxu0 0.0
    %3695 = vmatprep.subr.mxu0 0.0
    %3696 = vmatpush1.msra.mxu0 0.0
    %3697 = vmatprep.subr.mxu0 0.0
    %3698 = vmatpush1.msra.mxu0 0.0
    %3699 = vmatprep.subr.mxu0 0.0
    %3700 = vmatpush1.msra.mxu0 0.0
    %3701 = vmatprep.subr.mxu0 0.0
    %3702 = vmatpush1.msra.mxu0 0.0
    %3703 = vmatprep.subr.mxu0 0.0
    %3704 = vmatpush1.msra.mxu0 0.0
    %3705 = vmatprep.subr.mxu0 0.0
    %3706 = vmatpush1.msra.mxu0 0.0
    %3707 = vmatprep.subr.mxu0 0.0
    %3708 = vmatpush1.msra.mxu0 0.0
    %3709 = vmatprep.subr.mxu0 0.0
    %3710 = vmatpush1.msra.mxu0 0.0
    %3711 = vmatprep.subr.mxu0 0.0
    %3712 = vmatpush1.msra.mxu0 0.0
    %3713 = vmatprep.subr.mxu0 0.0
    %3714 = vmatpush1.msra.mxu0 0.0
    %3715 = vmatprep.subr.mxu0 0.0
    %3716 = vmatpush1.msra.mxu0 0.0
    %3717 = vmatprep.subr.mxu0 0.0
    %3718 = vmatpush1.msra.mxu0 0.0
    %3719 = vmatprep.subr.mxu0 0.0
    %3720 = vmatpush1.msra.mxu0 0.0
    %3721 = vmatprep.subr.mxu0 0.0
    %3722 = vmatpush1.msra.mxu0 0.0
    %3723 = vmatprep.subr.mxu0 0.0
    %3724 = vmatpush1.msra.mxu0 0.0
    %3725 = vmatprep.subr.mxu0 0.0
    %3726 = vmatpush1.msra.mxu0 0.0
    %3727 = vmatprep.subr.mxu0 0.0
    %3728 = vmatpush1.msra.mxu0 0.0
    %3729 = vmatprep.subr.mxu0 0.0
    %3730 = vmatpush1.msra.mxu0 0.0
    %3731 = vmatprep.subr.mxu0 0.0
    %3732 = vmatpush1.msra.mxu0 0.0
    %3733 = vmatprep.subr.mxu0 0.0
    %3734 = vmatpush1.msra.mxu0 0.0
    %3735 = vmatprep.subr.mxu0 0.0
    %3736 = vmatpush1.msra.mxu0 0.0
    %3737 = vmatprep.subr.mxu0 0.0
    %3738 = vmatpush1.msra.mxu0 0.0
    %3739 = vmatprep.subr.mxu0 0.0
    %3740 = vmatpush1.msra.mxu0 0.0
    %3741 = vmatprep.subr.mxu0 0.0
    %3742 = vmatpush1.msra.mxu0 0.0
    %3743 = vmatprep.subr.mxu0 0.0
    %3744 = vmatpush1.msra.mxu0 0.0
    %3745 = vmatprep.subr.mxu0 0.0
    %3746 = vmatpush1.msra.mxu0 0.0
    %3747 = vmatprep.mubr.f32.mxu0 0.0
    %v3748 = vand.u32 %v1822, 4294901760
    %3749 = vmatmul.mubr.f32.gmra.mrb[0].mxu0 %v3748
    %v3750 = vpop.f32.mrb[0].mxu0
    %v3751 = vadd.f32 %v3668, %v3750
    %v3752 = vpop.f32.mrb[0].mxu0
    %3753 = vdwg.mxu0
    %3754 = vmatprep.subr.mxu0 0.0
    %v3755 = vand.u32 %v18, 4294901760
    %3756 = vmatpush1.msra.mxu0 %v3755
    %3757 = vmatprep.subr.mxu0 0.0
    %v3758 = vand.u32 %v19, 4294901760
    %3759 = vmatpush1.msra.mxu0 %v3758
    %3760 = vmatprep.subr.mxu0 0.0
    %v3761 = vand.u32 %v20, 4294901760
    %3762 = vmatpush1.msra.mxu0 %v3761
    %3763 = vmatprep.subr.mxu0 0.0
    %v3764 = vand.u32 %v21, 4294901760
    %3765 = vmatpush1.msra.mxu0 %v3764
    %3766 = vmatprep.subr.mxu0 0.0
    %3767 = vmatpush1.msra.mxu0 0.0
    %3768 = vmatprep.subr.mxu0 0.0
    %3769 = vmatpush1.msra.mxu0 0.0
    %3770 = vmatprep.subr.mxu0 0.0
    %3771 = vmatpush1.msra.mxu0 0.0
    %3772 = vmatprep.subr.mxu0 0.0
    %3773 = vmatpush1.msra.mxu0 0.0
    %3774 = vmatprep.subr.mxu0 0.0
    %3775 = vmatpush1.msra.mxu0 0.0
    %3776 = vmatprep.subr.mxu0 0.0
    %3777 = vmatpush1.msra.mxu0 0.0
    %3778 = vmatprep.subr.mxu0 0.0
    %3779 = vmatpush1.msra.mxu0 0.0
    %3780 = vmatprep.subr.mxu0 0.0
    %3781 = vmatpush1.msra.mxu0 0.0
    %3782 = vmatprep.subr.mxu0 0.0
    %3783 = vmatpush1.msra.mxu0 0.0
    %3784 = vmatprep.subr.mxu0 0.0
    %3785 = vmatpush1.msra.mxu0 0.0
    %3786 = vmatprep.subr.mxu0 0.0
    %3787 = vmatpush1.msra.mxu0 0.0
    %3788 = vmatprep.subr.mxu0 0.0
    %3789 = vmatpush1.msra.mxu0 0.0
    %3790 = vmatprep.subr.mxu0 0.0
    %3791 = vmatpush1.msra.mxu0 0.0
    %3792 = vmatprep.subr.mxu0 0.0
    %3793 = vmatpush1.msra.mxu0 0.0
    %3794 = vmatprep.subr.mxu0 0.0
    %3795 = vmatpush1.msra.mxu0 0.0
    %3796 = vmatprep.subr.mxu0 0.0
    %3797 = vmatpush1.msra.mxu0 0.0
    %3798 = vmatprep.subr.mxu0 0.0
    %3799 = vmatpush1.msra.mxu0 0.0
    %3800 = vmatprep.subr.mxu0 0.0
    %3801 = vmatpush1.msra.mxu0 0.0
    %3802 = vmatprep.subr.mxu0 0.0
    %3803 = vmatpush1.msra.mxu0 0.0
    %3804 = vmatprep.subr.mxu0 0.0
    %3805 = vmatpush1.msra.mxu0 0.0
    %3806 = vmatprep.subr.mxu0 0.0
    %3807 = vmatpush1.msra.mxu0 0.0
    %3808 = vmatprep.subr.mxu0 0.0
    %3809 = vmatpush1.msra.mxu0 0.0
    %3810 = vmatprep.subr.mxu0 0.0
    %3811 = vmatpush1.msra.mxu0 0.0
    %3812 = vmatprep.subr.mxu0 0.0
    %3813 = vmatpush1.msra.mxu0 0.0
    %3814 = vmatprep.subr.mxu0 0.0
    %3815 = vmatpush1.msra.mxu0 0.0
    %3816 = vmatprep.subr.mxu0 0.0
    %3817 = vmatpush1.msra.mxu0 0.0
    %3818 = vmatprep.subr.mxu0 0.0
    %3819 = vmatpush1.msra.mxu0 0.0
    %3820 = vmatprep.subr.mxu0 0.0
    %3821 = vmatpush1.msra.mxu0 0.0
    %3822 = vmatprep.mubr.f32.mxu0 0.0
    %v3823 = vand.u32 %v1822, 4294901760
    %3824 = vmatmul.mubr.f32.gmra.mrb[0].mxu0 %v3823
    %v3825 = vpop.f32.mrb[0].mxu0
    %v3826 = vadd.f32 %v3751, %v3825
    %v3827 = vpop.f32.mrb[0].mxu0
    %3828 = vdwg.mxu0
    %v3829 = vadd.f32 %v3343, %v3826
    %v3830 = vtanh.pop %v3342
    %v3831 = vadd.f32 %v3830, 1.0
    %v3832 = vmul.f32 %v3831, 0.5
    %v3833 = vsel %vm113, %v3830, %v3832
    %v3834 = vmul.f32 %v3833, %v1787
    %3836 = vrot.lane.b32.xlu0 %v3833, 64
    %v3837 = vpop.permute.xlu0 %3836
    %v3839 = vmul.f32 %v3833, %v3837
    %3841 = vrot.lane.b32.xlu0 %v3839, 32
    %v3842 = vpop.permute.xlu0 %3841
    %v3844 = vadd.f32 %v3834, %v3842
    %v3845 = vtanh.pop %v3844
    %3847 = vrot.lane.b32.xlu0 %v3845, 64
    %v3848 = vpop.permute.xlu0 %3847
    %v3850 = vmul.f32 %v3833, %v3848
    %v3851 = vtanh.pop %v3829
    %v3852 = vadd.f32 %v3851, 1.0
    %v3853 = vmul.f32 %v3852, 0.5
    %v3854 = vsel %vm113, %v3851, %v3853
    %v3855 = vmul.f32 %v3854, %v1808
    %3857 = vrot.lane.b32.xlu0 %v3854, 64
    %v3858 = vpop.permute.xlu0 %3857
    %v3860 = vmul.f32 %v3854, %v3858
    %3862 = vrot.lane.b32.xlu0 %v3860, 32
    %v3863 = vpop.permute.xlu0 %3862
    %v3865 = vadd.f32 %v3855, %v3863
    %v3866 = vtanh.pop %v3865
    %3868 = vrot.lane.b32.xlu0 %v3866, 64
    %v3869 = vpop.permute.xlu0 %3868
    %v3871 = vmul.f32 %v3854, %v3869
    %v3872 = vld [vmem:[%s3 + $0x40] sm:$0xff]
    %v3873 = vld [vmem:[%s3 + $0x48] sm:$0xff]
    %v3874 = vld [vmem:[%s3 + $0x50] sm:$0xff]
    %v3875 = vld [vmem:[%s3 + $0x58] sm:$0xff]
    %3877 = vrot.lane.b32.xlu0 %v3871, 32
    %v3878 = vpop.permute.xlu0 %3877
    %v3879 = vsel %vm138, %v3878, 0
    %3881 = vmatprep.subr.mxu0 0.0
    %v3882 = vand.u32 %v3872, 4294901760
    %3883 = vmatpush1.msra.mxu0 %v3882
    %3884 = vmatprep.subr.mxu0 0.0
    %v3885 = vand.u32 %v3873, 4294901760
    %3886 = vmatpush1.msra.mxu0 %v3885
    %3887 = vmatprep.subr.mxu0 0.0
    %v3888 = vand.u32 %v3874, 4294901760
    %3889 = vmatpush1.msra.mxu0 %v3888
    %3890 = vmatprep.subr.mxu0 0.0
    %v3891 = vand.u32 %v3875, 4294901760
    %3892 = vmatpush1.msra.mxu0 %v3891
    %3893 = vmatprep.subr.mxu0 0.0
    %3894 = vmatpush1.msra.mxu0 0.0
    %3895 = vmatprep.subr.mxu0 0.0
    %3896 = vmatpush1.msra.mxu0 0.0
    %3897 = vmatprep.subr.mxu0 0.0
    %3898 = vmatpush1.msra.mxu0 0.0
    %3899 = vmatprep.subr.mxu0 0.0
    %3900 = vmatpush1.msra.mxu0 0.0
    %3901 = vmatprep.subr.mxu0 0.0
    %3902 = vmatpush1.msra.mxu0 0.0
    %3903 = vmatprep.subr.mxu0 0.0
    %3904 = vmatpush1.msra.mxu0 0.0
    %3905 = vmatprep.subr.mxu0 0.0
    %3906 = vmatpush1.msra.mxu0 0.0
    %3907 = vmatprep.subr.mxu0 0.0
    %3908 = vmatpush1.msra.mxu0 0.0
    %3909 = vmatprep.subr.mxu0 0.0
    %3910 = vmatpush1.msra.mxu0 0.0
    %3911 = vmatprep.subr.mxu0 0.0
    %3912 = vmatpush1.msra.mxu0 0.0
    %3913 = vmatprep.subr.mxu0 0.0
    %3914 = vmatpush1.msra.mxu0 0.0
    %3915 = vmatprep.subr.mxu0 0.0
    %3916 = vmatpush1.msra.mxu0 0.0
    %3917 = vmatprep.subr.mxu0 0.0
    %3918 = vmatpush1.msra.mxu0 0.0
    %3919 = vmatprep.subr.mxu0 0.0
    %3920 = vmatpush1.msra.mxu0 0.0
    %3921 = vmatprep.subr.mxu0 0.0
    %3922 = vmatpush1.msra.mxu0 0.0
    %3923 = vmatprep.subr.mxu0 0.0
    %3924 = vmatpush1.msra.mxu0 0.0
    %3925 = vmatprep.subr.mxu0 0.0
    %3926 = vmatpush1.msra.mxu0 0.0
    %3927 = vmatprep.subr.mxu0 0.0
    %3928 = vmatpush1.msra.mxu0 0.0
    %3929 = vmatprep.subr.mxu0 0.0
    %3930 = vmatpush1.msra.mxu0 0.0
    %3931 = vmatprep.subr.mxu0 0.0
    %3932 = vmatpush1.msra.mxu0 0.0
    %3933 = vmatprep.subr.mxu0 0.0
    %3934 = vmatpush1.msra.mxu0 0.0
    %3935 = vmatprep.subr.mxu0 0.0
    %3936 = vmatpush1.msra.mxu0 0.0
    %3937 = vmatprep.subr.mxu0 0.0
    %3938 = vmatpush1.msra.mxu0 0.0
    %3939 = vmatprep.subr.mxu0 0.0
    %3940 = vmatpush1.msra.mxu0 0.0
    %3941 = vmatprep.subr.mxu0 0.0
    %3942 = vmatpush1.msra.mxu0 0.0
    %3943 = vmatprep.subr.mxu0 0.0
    %3944 = vmatpush1.msra.mxu0 0.0
    %3945 = vmatprep.subr.mxu0 0.0
    %3946 = vmatpush1.msra.mxu0 0.0
    %3947 = vmatprep.subr.mxu0 0.0
    %3948 = vmatpush1.msra.mxu0 0.0
    %3949 = vmatprep.mubr.f32.mxu0 0.0
    %v3950 = vand.u32 %v3879, 4294901760
    %v3951 = vsub.f32 %v3879, %v3950
    %v3952 = vand.u32 %v3951, 4294901760
    %v3953 = vsub.f32 %v3951, %v3952
    %v3954 = vand.u32 %v3953, 4294901760
    %3955 = vmatmul.mubr.f32.gmra.mrb[0].mxu0 %v3954
    %v3956 = vpop.f32.mrb[0].mxu0
    %v3957 = vadd.f32 0.0, %v3956
    %v3958 = vpop.f32.mrb[0].mxu0
    %3959 = vdwg.mxu0
    %3960 = vmatprep.subr.mxu0 0.0
    %v3961 = vand.u32 %v3872, 4294901760
    %v3962 = vsub.f32 %v3872, %v3961
    %v3963 = vand.u32 %v3962, 4294901760
    %v3964 = vsub.f32 %v3962, %v3963
    %v3965 = vand.u32 %v3964, 4294901760
    %3966 = vmatpush1.msra.mxu0 %v3965
    %3967 = vmatprep.subr.mxu0 0.0
    %v3968 = vand.u32 %v3873, 4294901760
    %v3969 = vsub.f32 %v3873, %v3968
    %v3970 = vand.u32 %v3969, 4294901760
    %v3971 = vsub.f32 %v3969, %v3970
    %v3972 = vand.u32 %v3971, 4294901760
    %3973 = vmatpush1.msra.mxu0 %v3972
    %3974 = vmatprep.subr.mxu0 0.0
    %v3975 = vand.u32 %v3874, 4294901760
    %v3976 = vsub.f32 %v3874, %v3975
    %v3977 = vand.u32 %v3976, 4294901760
    %v3978 = vsub.f32 %v3976, %v3977
    %v3979 = vand.u32 %v3978, 4294901760
    %3980 = vmatpush1.msra.mxu0 %v3979
    %3981 = vmatprep.subr.mxu0 0.0
    %v3982 = vand.u32 %v3875, 4294901760
    %v3983 = vsub.f32 %v3875, %v3982
    %v3984 = vand.u32 %v3983, 4294901760
    %v3985 = vsub.f32 %v3983, %v3984
    %v3986 = vand.u32 %v3985, 4294901760
    %3987 = vmatpush1.msra.mxu0 %v3986
    %3988 = vmatprep.subr.mxu0 0.0
    %3989 = vmatpush1.msra.mxu0 0.0
    %3990 = vmatprep.subr.mxu0 0.0
    %3991 = vmatpush1.msra.mxu0 0.0
    %3992 = vmatprep.subr.mxu0 0.0
    %3993 = vmatpush1.msra.mxu0 0.0
    %3994 = vmatprep.subr.mxu0 0.0
    %3995 = vmatpush1.msra.mxu0 0.0
    %3996 = vmatprep.subr.mxu0 0.0
    %3997 = vmatpush1.msra.mxu0 0.0
    %3998 = vmatprep.subr.mxu0 0.0
    %3999 = vmatpush1.msra.mxu0 0.0
    %4000 = vmatprep.subr.mxu0 0.0
    %4001 = vmatpush1.msra.mxu0 0.0
    %4002 = vmatprep.subr.mxu0 0.0
    %4003 = vmatpush1.msra.mxu0 0.0
    %4004 = vmatprep.subr.mxu0 0.0
    %4005 = vmatpush1.msra.mxu0 0.0
    %4006 = vmatprep.subr.mxu0 0.0
    %4007 = vmatpush1.msra.mxu0 0.0
    %4008 = vmatprep.subr.mxu0 0.0
    %4009 = vmatpush1.msra.mxu0 0.0
    %4010 = vmatprep.subr.mxu0 0.0
    %4011 = vmatpush1.msra.mxu0 0.0
    %4012 = vmatprep.subr.mxu0 0.0
    %4013 = vmatpush1.msra.mxu0 0.0
    %4014 = vmatprep.subr.mxu0 0.0
    %4015 = vmatpush1.msra.mxu0 0.0
    %4016 = vmatprep.subr.mxu0 0.0
    %4017 = vmatpush1.msra.mxu0 0.0
    %4018 = vmatprep.subr.mxu0 0.0
    %4019 = vmatpush1.msra.mxu0 0.0
    %4020 = vmatprep.subr.mxu0 0.0
    %4021 = vmatpush1.msra.mxu0 0.0
    %4022 = vmatprep.subr.mxu0 0.0
    %4023 = vmatpush1.msra.mxu0 0.0
    %4024 = vmatprep.subr.mxu0 0.0
    %4025 = vmatpush1.msra.mxu0 0.0
    %4026 = vmatprep.subr.mxu0 0.0
    %4027 = vmatpush1.msra.mxu0 0.0
    %4028 = vmatprep.subr.mxu0 0.0
    %4029 = vmatpush1.msra.mxu0 0.0
    %4030 = vmatprep.subr.mxu0 0.0
    %4031 = vmatpush1.msra.mxu0 0.0
    %4032 = vmatprep.subr.mxu0 0.0
    %4033 = vmatpush1.msra.mxu0 0.0
    %4034 = vmatprep.subr.mxu0 0.0
    %4035 = vmatpush1.msra.mxu0 0.0
    %4036 = vmatprep.subr.mxu0 0.0
    %4037 = vmatpush1.msra.mxu0 0.0
    %4038 = vmatprep.subr.mxu0 0.0
    %4039 = vmatpush1.msra.mxu0 0.0
    %4040 = vmatprep.subr.mxu0 0.0
    %4041 = vmatpush1.msra.mxu0 0.0
    %4042 = vmatprep.subr.mxu0 0.0
    %4043 = vmatpush1.msra.mxu0 0.0
    %4044 = vmatprep.mubr.f32.mxu0 0.0
    %v4045 = vand.u32 %v3879, 4294901760
    %4046 = vmatmul.mubr.f32.gmra.mrb[0].mxu0 %v4045
    %v4047 = vpop.f32.mrb[0].mxu0
    %v4048 = vadd.f32 %v3957, %v4047
    %v4049 = vpop.f32.mrb[0].mxu0
    %4050 = vdwg.mxu0
    %4051 = vmatprep.subr.mxu0 0.0
    %v4052 = vand.u32 %v3872, 4294901760
    %v4053 = vsub.f32 %v3872, %v4052
    %4054 = vmatpush1.msra.mxu0 %v4053
    %4055 = vmatprep.subr.mxu0 0.0
    %v4056 = vand.u32 %v3873, 4294901760
    %v4057 = vsub.f32 %v3873, %v4056
    %4058 = vmatpush1.msra.mxu0 %v4057
    %4059 = vmatprep.subr.mxu0 0.0
    %v4060 = vand.u32 %v3874, 4294901760
    %v4061 = vsub.f32 %v3874, %v4060
    %4062 = vmatpush1.msra.mxu0 %v4061
    %4063 = vmatprep.subr.mxu0 0.0
    %v4064 = vand.u32 %v3875, 4294901760
    %v4065 = vsub.f32 %v3875, %v4064
    %4066 = vmatpush1.msra.mxu0 %v4065
    %4067 = vmatprep.subr.mxu0 0.0
    %4068 = vmatpush1.msra.mxu0 0.0
    %4069 = vmatprep.subr.mxu0 0.0
    %4070 = vmatpush1.msra.mxu0 0.0
    %4071 = vmatprep.subr.mxu0 0.0
    %4072 = vmatpush1.msra.mxu0 0.0
    %4073 = vmatprep.subr.mxu0 0.0
    %4074 = vmatpush1.msra.mxu0 0.0
    %4075 = vmatprep.subr.mxu0 0.0
    %4076 = vmatpush1.msra.mxu0 0.0
    %4077 = vmatprep.subr.mxu0 0.0
    %4078 = vmatpush1.msra.mxu0 0.0
    %4079 = vmatprep.subr.mxu0 0.0
    %4080 = vmatpush1.msra.mxu0 0.0
    %4081 = vmatprep.subr.mxu0 0.0
    %4082 = vmatpush1.msra.mxu0 0.0
    %4083 = vmatprep.subr.mxu0 0.0
    %4084 = vmatpush1.msra.mxu0 0.0
    %4085 = vmatprep.subr.mxu0 0.0
    %4086 = vmatpush1.msra.mxu0 0.0
    %4087 = vmatprep.subr.mxu0 0.0
    %4088 = vmatpush1.msra.mxu0 0.0
    %4089 = vmatprep.subr.mxu0 0.0
    %4090 = vmatpush1.msra.mxu0 0.0
    %4091 = vmatprep.subr.mxu0 0.0
    %4092 = vmatpush1.msra.mxu0 0.0
    %4093 = vmatprep.subr.mxu0 0.0
    %4094 = vmatpush1.msra.mxu0 0.0
    %4095 = vmatprep.subr.mxu0 0.0
    %4096 = vmatpush1.msra.mxu0 0.0
    %4097 = vmatprep.subr.mxu0 0.0
    %4098 = vmatpush1.msra.mxu0 0.0
    %4099 = vmatprep.subr.mxu0 0.0
    %4100 = vmatpush1.msra.mxu0 0.0
    %4101 = vmatprep.subr.mxu0 0.0
    %4102 = vmatpush1.msra.mxu0 0.0
    %4103 = vmatprep.subr.mxu0 0.0
    %4104 = vmatpush1.msra.mxu0 0.0
    %4105 = vmatprep.subr.mxu0 0.0
    %4106 = vmatpush1.msra.mxu0 0.0
    %4107 = vmatprep.subr.mxu0 0.0
    %4108 = vmatpush1.msra.mxu0 0.0
    %4109 = vmatprep.subr.mxu0 0.0
    %4110 = vmatpush1.msra.mxu0 0.0
    %4111 = vmatprep.subr.mxu0 0.0
    %4112 = vmatpush1.msra.mxu0 0.0
    %4113 = vmatprep.subr.mxu0 0.0
    %4114 = vmatpush1.msra.mxu0 0.0
    %4115 = vmatprep.subr.mxu0 0.0
    %4116 = vmatpush1.msra.mxu0 0.0
    %4117 = vmatprep.subr.mxu0 0.0
    %4118 = vmatpush1.msra.mxu0 0.0
    %4119 = vmatprep.subr.mxu0 0.0
    %4120 = vmatpush1.msra.mxu0 0.0
    %4121 = vmatprep.subr.mxu0 0.0
    %4122 = vmatpush1.msra.mxu0 0.0
    %4123 = vmatprep.mubr.f32.mxu0 0.0
    %v4124 = vand.u32 %v3879, 4294901760
    %v4125 = vsub.f32 %v3879, %v4124
    %4126 = vmatmul.mubr.f32.gmra.mrb[0].mxu0 %v4125
    %v4127 = vpop.f32.mrb[0].mxu0
    %v4128 = vadd.f32 %v4048, %v4127
    %v4129 = vpop.f32.mrb[0].mxu0
    %4130 = vdwg.mxu0
    %4131 = vmatprep.subr.mxu0 0.0
    %v4132 = vand.u32 %v3872, 4294901760
    %4133 = vmatpush1.msra.mxu0 %v4132
    %4134 = vmatprep.subr.mxu0 0.0
    %v4135 = vand.u32 %v3873, 4294901760
    %4136 = vmatpush1.msra.mxu0 %v4135
    %4137 = vmatprep.subr.mxu0 0.0
    %v4138 = vand.u32 %v3874, 4294901760
    %4139 = vmatpush1.msra.mxu0 %v4138
    %4140 = vmatprep.subr.mxu0 0.0
    %v4141 = vand.u32 %v3875, 4294901760
    %4142 = vmatpush1.msra.mxu0 %v4141
    %4143 = vmatprep.subr.mxu0 0.0
    %4144 = vmatpush1.msra.mxu0 0.0
    %4145 = vmatprep.subr.mxu0 0.0
    %4146 = vmatpush1.msra.mxu0 0.0
    %4147 = vmatprep.subr.mxu0 0.0
    %4148 = vmatpush1.msra.mxu0 0.0
    %4149 = vmatprep.subr.mxu0 0.0
    %4150 = vmatpush1.msra.mxu0 0.0
    %4151 = vmatprep.subr.mxu0 0.0
    %4152 = vmatpush1.msra.mxu0 0.0
    %4153 = vmatprep.subr.mxu0 0.0
    %4154 = vmatpush1.msra.mxu0 0.0
    %4155 = vmatprep.subr.mxu0 0.0
    %4156 = vmatpush1.msra.mxu0 0.0
    %4157 = vmatprep.subr.mxu0 0.0
    %4158 = vmatpush1.msra.mxu0 0.0
    %4159 = vmatprep.subr.mxu0 0.0
    %4160 = vmatpush1.msra.mxu0 0.0
    %4161 = vmatprep.subr.mxu0 0.0
    %4162 = vmatpush1.msra.mxu0 0.0
    %4163 = vmatprep.subr.mxu0 0.0
    %4164 = vmatpush1.msra.mxu0 0.0
    %4165 = vmatprep.subr.mxu0 0.0
    %4166 = vmatpush1.msra.mxu0 0.0
    %4167 = vmatprep.subr.mxu0 0.0
    %4168 = vmatpush1.msra.mxu0 0.0
    %4169 = vmatprep.subr.mxu0 0.0
    %4170 = vmatpush1.msra.mxu0 0.0
    %4171 = vmatprep.subr.mxu0 0.0
    %4172 = vmatpush1.msra.mxu0 0.0
    %4173 = vmatprep.subr.mxu0 0.0
    %4174 = vmatpush1.msra.mxu0 0.0
    %4175 = vmatprep.subr.mxu0 0.0
    %4176 = vmatpush1.msra.mxu0 0.0
    %4177 = vmatprep.subr.mxu0 0.0
    %4178 = vmatpush1.msra.mxu0 0.0
    %4179 = vmatprep.subr.mxu0 0.0
    %4180 = vmatpush1.msra.mxu0 0.0
    %4181 = vmatprep.subr.mxu0 0.0
    %4182 = vmatpush1.msra.mxu0 0.0
    %4183 = vmatprep.subr.mxu0 0.0
    %4184 = vmatpush1.msra.mxu0 0.0
    %4185 = vmatprep.subr.mxu0 0.0
    %4186 = vmatpush1.msra.mxu0 0.0
    %4187 = vmatprep.subr.mxu0 0.0
    %4188 = vmatpush1.msra.mxu0 0.0
    %4189 = vmatprep.subr.mxu0 0.0
    %4190 = vmatpush1.msra.mxu0 0.0
    %4191 = vmatprep.subr.mxu0 0.0
    %4192 = vmatpush1.msra.mxu0 0.0
    %4193 = vmatprep.subr.mxu0 0.0
    %4194 = vmatpush1.msra.mxu0 0.0
    %4195 = vmatprep.subr.mxu0 0.0
    %4196 = vmatpush1.msra.mxu0 0.0
    %4197 = vmatprep.subr.mxu0 0.0
    %4198 = vmatpush1.msra.mxu0 0.0
    %4199 = vmatprep.mubr.f32.mxu0 0.0
    %v4200 = vand.u32 %v3879, 4294901760
    %v4201 = vsub.f32 %v3879, %v4200
    %v4202 = vand.u32 %v4201, 4294901760
    %4203 = vmatmul.mubr.f32.gmra.mrb[0].mxu0 %v4202
    %v4204 = vpop.f32.mrb[0].mxu0
    %v4205 = vadd.f32 %v4128, %v4204
    %v4206 = vpop.f32.mrb[0].mxu0
    %4207 = vdwg.mxu0
    %4208 = vmatprep.subr.mxu0 0.0
    %v4209 = vand.u32 %v3872, 4294901760
    %v4210 = vsub.f32 %v3872, %v4209
    %v4211 = vand.u32 %v4210, 4294901760
    %4212 = vmatpush1.msra.mxu0 %v4211
    %4213 = vmatprep.subr.mxu0 0.0
    %v4214 = vand.u32 %v3873, 4294901760
    %v4215 = vsub.f32 %v3873, %v4214
    %v4216 = vand.u32 %v4215, 4294901760
    %4217 = vmatpush1.msra.mxu0 %v4216
    %4218 = vmatprep.subr.mxu0 0.0
    %v4219 = vand.u32 %v3874, 4294901760
    %v4220 = vsub.f32 %v3874, %v4219
    %v4221 = vand.u32 %v4220, 4294901760
    %4222 = vmatpush1.msra.mxu0 %v4221
    %4223 = vmatprep.subr.mxu0 0.0
    %v4224 = vand.u32 %v3875, 4294901760
    %v4225 = vsub.f32 %v3875, %v4224
    %v4226 = vand.u32 %v4225, 4294901760
    %4227 = vmatpush1.msra.mxu0 %v4226
    %4228 = vmatprep.subr.mxu0 0.0
    %4229 = vmatpush1.msra.mxu0 0.0
    %4230 = vmatprep.subr.mxu0 0.0
    %4231 = vmatpush1.msra.mxu0 0.0
    %4232 = vmatprep.subr.mxu0 0.0
    %4233 = vmatpush1.msra.mxu0 0.0
    %4234 = vmatprep.subr.mxu0 0.0
    %4235 = vmatpush1.msra.mxu0 0.0
    %4236 = vmatprep.subr.mxu0 0.0
    %4237 = vmatpush1.msra.mxu0 0.0
    %4238 = vmatprep.subr.mxu0 0.0
    %4239 = vmatpush1.msra.mxu0 0.0
    %4240 = vmatprep.subr.mxu0 0.0
    %4241 = vmatpush1.msra.mxu0 0.0
    %4242 = vmatprep.subr.mxu0 0.0
    %4243 = vmatpush1.msra.mxu0 0.0
    %4244 = vmatprep.subr.mxu0 0.0
    %4245 = vmatpush1.msra.mxu0 0.0
    %4246 = vmatprep.subr.mxu0 0.0
    %4247 = vmatpush1.msra.mxu0 0.0
    %4248 = vmatprep.subr.mxu0 0.0
    %4249 = vmatpush1.msra.mxu0 0.0
    %4250 = vmatprep.subr.mxu0 0.0
    %4251 = vmatpush1.msra.mxu0 0.0
    %4252 = vmatprep.subr.mxu0 0.0
    %4253 = vmatpush1.msra.mxu0 0.0
    %4254 = vmatprep.subr.mxu0 0.0
    %4255 = vmatpush1.msra.mxu0 0.0
    %4256 = vmatprep.subr.mxu0 0.0
    %4257 = vmatpush1.msra.mxu0 0.0
    %4258 = vmatprep.subr.mxu0 0.0
    %4259 = vmatpush1.msra.mxu0 0.0
    %4260 = vmatprep.subr.mxu0 0.0
    %4261 = vmatpush1.msra.mxu0 0.0
    %4262 = vmatprep.subr.mxu0 0.0
    %4263 = vmatpush1.msra.mxu0 0.0
    %4264 = vmatprep.subr.mxu0 0.0
    %4265 = vmatpush1.msra.mxu0 0.0
    %4266 = vmatprep.subr.mxu0 0.0
    %4267 = vmatpush1.msra.mxu0 0.0
    %4268 = vmatprep.subr.mxu0 0.0
    %4269 = vmatpush1.msra.mxu0 0.0
    %4270 = vmatprep.subr.mxu0 0.0
    %4271 = vmatpush1.msra.mxu0 0.0
    %4272 = vmatprep.subr.mxu0 0.0
    %4273 = vmatpush1.msra.mxu0 0.0
    %4274 = vmatprep.subr.mxu0 0.0
    %4275 = vmatpush1.msra.mxu0 0.0
    %4276 = vmatprep.subr.mxu0 0.0
    %4277 = vmatpush1.msra.mxu0 0.0
    %4278 = vmatprep.subr.mxu0 0.0
    %4279 = vmatpush1.msra.mxu0 0.0
    %4280 = vmatprep.subr.mxu0 0.0
    %4281 = vmatpush1.msra.mxu0 0.0
    %4282 = vmatprep.subr.mxu0 0.0
    %4283 = vmatpush1.msra.mxu0 0.0
    %4284 = vmatprep.mubr.f32.mxu0 0.0
    %v4285 = vand.u32 %v3879, 4294901760
    %4286 = vmatmul.mubr.f32.gmra.mrb[0].mxu0 %v4285
    %v4287 = vpop.f32.mrb[0].mxu0
    %v4288 = vadd.f32 %v4205, %v4287
    %v4289 = vpop.f32.mrb[0].mxu0
    %4290 = vdwg.mxu0
    %4291 = vmatprep.subr.mxu0 0.0
    %v4292 = vand.u32 %v3872, 4294901760
    %4293 = vmatpush1.msra.mxu0 %v4292
    %4294 = vmatprep.subr.mxu0 0.0
    %v4295 = vand.u32 %v3873, 4294901760
    %4296 = vmatpush1.msra.mxu0 %v4295
    %4297 = vmatprep.subr.mxu0 0.0
    %v4298 = vand.u32 %v3874, 4294901760
    %4299 = vmatpush1.msra.mxu0 %v4298
    %4300 = vmatprep.subr.mxu0 0.0
    %v4301 = vand.u32 %v3875, 4294901760
    %4302 = vmatpush1.msra.mxu0 %v4301
    %4303 = vmatprep.subr.mxu0 0.0
    %4304 = vmatpush1.msra.mxu0 0.0
    %4305 = vmatprep.subr.mxu0 0.0
    %4306 = vmatpush1.msra.mxu0 0.0
    %4307 = vmatprep.subr.mxu0 0.0
    %4308 = vmatpush1.msra.mxu0 0.0
    %4309 = vmatprep.subr.mxu0 0.0
    %4310 = vmatpush1.msra.mxu0 0.0
    %4311 = vmatprep.subr.mxu0 0.0
    %4312 = vmatpush1.msra.mxu0 0.0
    %4313 = vmatprep.subr.mxu0 0.0
    %4314 = vmatpush1.msra.mxu0 0.0
    %4315 = vmatprep.subr.mxu0 0.0
    %4316 = vmatpush1.msra.mxu0 0.0
    %4317 = vmatprep.subr.mxu0 0.0
    %4318 = vmatpush1.msra.mxu0 0.0
    %4319 = vmatprep.subr.mxu0 0.0
    %4320 = vmatpush1.msra.mxu0 0.0
    %4321 = vmatprep.subr.mxu0 0.0
    %4322 = vmatpush1.msra.mxu0 0.0
    %4323 = vmatprep.subr.mxu0 0.0
    %4324 = vmatpush1.msra.mxu0 0.0
    %4325 = vmatprep.subr.mxu0 0.0
    %4326 = vmatpush1.msra.mxu0 0.0
    %4327 = vmatprep.subr.mxu0 0.0
    %4328 = vmatpush1.msra.mxu0 0.0
    %4329 = vmatprep.subr.mxu0 0.0
    %4330 = vmatpush1.msra.mxu0 0.0
    %4331 = vmatprep.subr.mxu0 0.0
    %4332 = vmatpush1.msra.mxu0 0.0
    %4333 = vmatprep.subr.mxu0 0.0
    %4334 = vmatpush1.msra.mxu0 0.0
    %4335 = vmatprep.subr.mxu0 0.0
    %4336 = vmatpush1.msra.mxu0 0.0
    %4337 = vmatprep.subr.mxu0 0.0
    %4338 = vmatpush1.msra.mxu0 0.0
    %4339 = vmatprep.subr.mxu0 0.0
    %4340 = vmatpush1.msra.mxu0 0.0
    %4341 = vmatprep.subr.mxu0 0.0
    %4342 = vmatpush1.msra.mxu0 0.0
    %4343 = vmatprep.subr.mxu0 0.0
    %4344 = vmatpush1.msra.mxu0 0.0
    %4345 = vmatprep.subr.mxu0 0.0
    %4346 = vmatpush1.msra.mxu0 0.0
    %4347 = vmatprep.subr.mxu0 0.0
    %4348 = vmatpush1.msra.mxu0 0.0
    %4349 = vmatprep.subr.mxu0 0.0
    %4350 = vmatpush1.msra.mxu0 0.0
    %4351 = vmatprep.subr.mxu0 0.0
    %4352 = vmatpush1.msra.mxu0 0.0
    %4353 = vmatprep.subr.mxu0 0.0
    %4354 = vmatpush1.msra.mxu0 0.0
    %4355 = vmatprep.subr.mxu0 0.0
    %4356 = vmatpush1.msra.mxu0 0.0
    %4357 = vmatprep.subr.mxu0 0.0
    %4358 = vmatpush1.msra.mxu0 0.0
    %4359 = vmatprep.mubr.f32.mxu0 0.0
    %v4360 = vand.u32 %v3879, 4294901760
    %4361 = vmatmul.mubr.f32.gmra.mrb[0].mxu0 %v4360
    %v4362 = vpop.f32.mrb[0].mxu0
    %v4363 = vadd.f32 %v4288, %v4362
    %v4364 = vpop.f32.mrb[0].mxu0
    %4365 = vdwg.mxu0
    %v4366 = vadd.f32 %v2791, %v4363
    %4368 = vrot.lane.b32.xlu0 %v3850, 32
    %v4369 = vpop.permute.xlu0 %4368
    %v4370 = vsel %vm138, %v4369, 0
    %v4372 = vand.u32 %v30, 4294901760
    %4373 = vmatprep.subr.mxu0 %v4372
    %v4374 = vand.u32 %v29, 4294901760
    %4375 = vmatpush1.msra.mxu0 %v4374
    %v4376 = vand.u32 %v32, 4294901760
    %4377 = vmatprep.subr.mxu0 %v4376
    %v4378 = vand.u32 %v31, 4294901760
    %4379 = vmatpush1.msra.mxu0 %v4378
    %v4380 = vand.u32 %v34, 4294901760
    %4381 = vmatprep.subr.mxu0 %v4380
    %v4382 = vand.u32 %v33, 4294901760
    %4383 = vmatpush1.msra.mxu0 %v4382
    %v4384 = vand.u32 %v36, 4294901760
    %4385 = vmatprep.subr.mxu0 %v4384
    %v4386 = vand.u32 %v35, 4294901760
    %4387 = vmatpush1.msra.mxu0 %v4386
    %4388 = vmatprep.subr.mxu0 0.0
    %4389 = vmatpush1.msra.mxu0 0.0
    %4390 = vmatprep.subr.mxu0 0.0
    %4391 = vmatpush1.msra.mxu0 0.0
    %4392 = vmatprep.subr.mxu0 0.0
    %4393 = vmatpush1.msra.mxu0 0.0
    %4394 = vmatprep.subr.mxu0 0.0
    %4395 = vmatpush1.msra.mxu0 0.0
    %4396 = vmatprep.subr.mxu0 0.0
    %4397 = vmatpush1.msra.mxu0 0.0
    %4398 = vmatprep.subr.mxu0 0.0
    %4399 = vmatpush1.msra.mxu0 0.0
    %4400 = vmatprep.subr.mxu0 0.0
    %4401 = vmatpush1.msra.mxu0 0.0
    %4402 = vmatprep.subr.mxu0 0.0
    %4403 = vmatpush1.msra.mxu0 0.0
    %4404 = vmatprep.subr.mxu0 0.0
    %4405 = vmatpush1.msra.mxu0 0.0
    %4406 = vmatprep.subr.mxu0 0.0
    %4407 = vmatpush1.msra.mxu0 0.0
    %4408 = vmatprep.subr.mxu0 0.0
    %4409 = vmatpush1.msra.mxu0 0.0
    %4410 = vmatprep.subr.mxu0 0.0
    %4411 = vmatpush1.msra.mxu0 0.0
    %4412 = vmatprep.subr.mxu0 0.0
    %4413 = vmatpush1.msra.mxu0 0.0
    %4414 = vmatprep.subr.mxu0 0.0
    %4415 = vmatpush1.msra.mxu0 0.0
    %4416 = vmatprep.subr.mxu0 0.0
    %4417 = vmatpush1.msra.mxu0 0.0
    %4418 = vmatprep.subr.mxu0 0.0
    %4419 = vmatpush1.msra.mxu0 0.0
    %4420 = vmatprep.subr.mxu0 0.0
    %4421 = vmatpush1.msra.mxu0 0.0
    %4422 = vmatprep.subr.mxu0 0.0
    %4423 = vmatpush1.msra.mxu0 0.0
    %4424 = vmatprep.subr.mxu0 0.0
    %4425 = vmatpush1.msra.mxu0 0.0
    %4426 = vmatprep.subr.mxu0 0.0
    %4427 = vmatpush1.msra.mxu0 0.0
    %4428 = vmatprep.subr.mxu0 0.0
    %4429 = vmatpush1.msra.mxu0 0.0
    %4430 = vmatprep.subr.mxu0 0.0
    %4431 = vmatpush1.msra.mxu0 0.0
    %4432 = vmatprep.subr.mxu0 0.0
    %4433 = vmatpush1.msra.mxu0 0.0
    %4434 = vmatprep.subr.mxu0 0.0
    %4435 = vmatpush1.msra.mxu0 0.0
    %4436 = vmatprep.subr.mxu0 0.0
    %4437 = vmatpush1.msra.mxu0 0.0
    %4438 = vmatprep.subr.mxu0 0.0
    %4439 = vmatpush1.msra.mxu0 0.0
    %4440 = vmatprep.subr.mxu0 0.0
    %4441 = vmatpush1.msra.mxu0 0.0
    %4442 = vmatprep.subr.mxu0 0.0
    %4443 = vmatpush1.msra.mxu0 0.0
    %4444 = vmatprep.mubr.f32.mxu0 0.0
    %v4445 = vand.u32 %v4370, 4294901760
    %v4446 = vsub.f32 %v4370, %v4445
    %v4447 = vand.u32 %v4446, 4294901760
    %v4448 = vsub.f32 %v4446, %v4447
    %v4449 = vand.u32 %v4448, 4294901760
    %4450 = vmatmul.mubr.f32.gmra.mrb[0].mxu0 %v4449
    %v4451 = vpop.f32.mrb[0].mxu0
    %v4452 = vadd.f32 0.0, %v4451
    %v4453 = vpop.f32.mrb[0].mxu0
    %v4454 = vadd.f32 0.0, %v4453
    %4455 = vdwg.mxu0
    %v4456 = vand.u32 %v30, 4294901760
    %v4457 = vsub.f32 %v30, %v4456
    %v4458 = vand.u32 %v4457, 4294901760
    %v4459 = vsub.f32 %v4457, %v4458
    %v4460 = vand.u32 %v4459, 4294901760
    %4461 = vmatprep.subr.mxu0 %v4460
    %v4462 = vand.u32 %v29, 4294901760
    %v4463 = vsub.f32 %v29, %v4462
    %v4464 = vand.u32 %v4463, 4294901760
    %v4465 = vsub.f32 %v4463, %v4464
    %v4466 = vand.u32 %v4465, 4294901760
    %4467 = vmatpush1.msra.mxu0 %v4466
    %v4468 = vand.u32 %v32, 4294901760
    %v4469 = vsub.f32 %v32, %v4468
    %v4470 = vand.u32 %v4469, 4294901760
    %v4471 = vsub.f32 %v4469, %v4470
    %v4472 = vand.u32 %v4471, 4294901760
    %4473 = vmatprep.subr.mxu0 %v4472
    %v4474 = vand.u32 %v31, 4294901760
    %v4475 = vsub.f32 %v31, %v4474
    %v4476 = vand.u32 %v4475, 4294901760
    %v4477 = vsub.f32 %v4475, %v4476
    %v4478 = vand.u32 %v4477, 4294901760
    %4479 = vmatpush1.msra.mxu0 %v4478
    %v4480 = vand.u32 %v34, 4294901760
    %v4481 = vsub.f32 %v34, %v4480
    %v4482 = vand.u32 %v4481, 4294901760
    %v4483 = vsub.f32 %v4481, %v4482
    %v4484 = vand.u32 %v4483, 4294901760
    %4485 = vmatprep.subr.mxu0 %v4484
    %v4486 = vand.u32 %v33, 4294901760
    %v4487 = vsub.f32 %v33, %v4486
    %v4488 = vand.u32 %v4487, 4294901760
    %v4489 = vsub.f32 %v4487, %v4488
    %v4490 = vand.u32 %v4489, 4294901760
    %4491 = vmatpush1.msra.mxu0 %v4490
    %v4492 = vand.u32 %v36, 4294901760
    %v4493 = vsub.f32 %v36, %v4492
    %v4494 = vand.u32 %v4493, 4294901760
    %v4495 = vsub.f32 %v4493, %v4494
    %v4496 = vand.u32 %v4495, 4294901760
    %4497 = vmatprep.subr.mxu0 %v4496
    %v4498 = vand.u32 %v35, 4294901760
    %v4499 = vsub.f32 %v35, %v4498
    %v4500 = vand.u32 %v4499, 4294901760
    %v4501 = vsub.f32 %v4499, %v4500
    %v4502 = vand.u32 %v4501, 4294901760
    %4503 = vmatpush1.msra.mxu0 %v4502
    %4504 = vmatprep.subr.mxu0 0.0
    %4505 = vmatpush1.msra.mxu0 0.0
    %4506 = vmatprep.subr.mxu0 0.0
    %4507 = vmatpush1.msra.mxu0 0.0
    %4508 = vmatprep.subr.mxu0 0.0
    %4509 = vmatpush1.msra.mxu0 0.0
    %4510 = vmatprep.subr.mxu0 0.0
    %4511 = vmatpush1.msra.mxu0 0.0
    %4512 = vmatprep.subr.mxu0 0.0
    %4513 = vmatpush1.msra.mxu0 0.0
    %4514 = vmatprep.subr.mxu0 0.0
    %4515 = vmatpush1.msra.mxu0 0.0
    %4516 = vmatprep.subr.mxu0 0.0
    %4517 = vmatpush1.msra.mxu0 0.0
    %4518 = vmatprep.subr.mxu0 0.0
    %4519 = vmatpush1.msra.mxu0 0.0
    %4520 = vmatprep.subr.mxu0 0.0
    %4521 = vmatpush1.msra.mxu0 0.0
    %4522 = vmatprep.subr.mxu0 0.0
    %4523 = vmatpush1.msra.mxu0 0.0
    %4524 = vmatprep.subr.mxu0 0.0
    %4525 = vmatpush1.msra.mxu0 0.0
    %4526 = vmatprep.subr.mxu0 0.0
    %4527 = vmatpush1.msra.mxu0 0.0
    %4528 = vmatprep.subr.mxu0 0.0
    %4529 = vmatpush1.msra.mxu0 0.0
    %4530 = vmatprep.subr.mxu0 0.0
    %4531 = vmatpush1.msra.mxu0 0.0
    %4532 = vmatprep.subr.mxu0 0.0
    %4533 = vmatpush1.msra.mxu0 0.0
    %4534 = vmatprep.subr.mxu0 0.0
    %4535 = vmatpush1.msra.mxu0 0.0
    %4536 = vmatprep.subr.mxu0 0.0
    %4537 = vmatpush1.msra.mxu0 0.0
    %4538 = vmatprep.subr.mxu0 0.0
    %4539 = vmatpush1.msra.mxu0 0.0
    %4540 = vmatprep.subr.mxu0 0.0
    %4541 = vmatpush1.msra.mxu0 0.0
    %4542 = vmatprep.subr.mxu0 0.0
    %4543 = vmatpush1.msra.mxu0 0.0
    %4544 = vmatprep.subr.mxu0 0.0
    %4545 = vmatpush1.msra.mxu0 0.0
    %4546 = vmatprep.subr.mxu0 0.0
    %4547 = vmatpush1.msra.mxu0 0.0
    %4548 = vmatprep.subr.mxu0 0.0
    %4549 = vmatpush1.msra.mxu0 0.0
    %4550 = vmatprep.subr.mxu0 0.0
    %4551 = vmatpush1.msra.mxu0 0.0
    %4552 = vmatprep.subr.mxu0 0.0
    %4553 = vmatpush1.msra.mxu0 0.0
    %4554 = vmatprep.subr.mxu0 0.0
    %4555 = vmatpush1.msra.mxu0 0.0
    %4556 = vmatprep.subr.mxu0 0.0
    %4557 = vmatpush1.msra.mxu0 0.0
    %4558 = vmatprep.subr.mxu0 0.0
    %4559 = vmatpush1.msra.mxu0 0.0
    %4560 = vmatprep.mubr.f32.mxu0 0.0
    %v4561 = vand.u32 %v4370, 4294901760
    %4562 = vmatmul.mubr.f32.gmra.mrb[0].mxu0 %v4561
    %v4563 = vpop.f32.mrb[0].mxu0
    %v4564 = vadd.f32 %v4452, %v4563
    %v4565 = vpop.f32.mrb[0].mxu0
    %v4566 = vadd.f32 %v4454, %v4565
    %4567 = vdwg.mxu0
    %v4568 = vand.u32 %v30, 4294901760
    %v4569 = vsub.f32 %v30, %v4568
    %4570 = vmatprep.subr.mxu0 %v4569
    %v4571 = vand.u32 %v29, 4294901760
    %v4572 = vsub.f32 %v29, %v4571
    %4573 = vmatpush1.msra.mxu0 %v4572
    %v4574 = vand.u32 %v32, 4294901760
    %v4575 = vsub.f32 %v32, %v4574
    %4576 = vmatprep.subr.mxu0 %v4575
    %v4577 = vand.u32 %v31, 4294901760
    %v4578 = vsub.f32 %v31, %v4577
    %4579 = vmatpush1.msra.mxu0 %v4578
    %v4580 = vand.u32 %v34, 4294901760
    %v4581 = vsub.f32 %v34, %v4580
    %4582 = vmatprep.subr.mxu0 %v4581
    %v4583 = vand.u32 %v33, 4294901760
    %v4584 = vsub.f32 %v33, %v4583
    %4585 = vmatpush1.msra.mxu0 %v4584
    %v4586 = vand.u32 %v36, 4294901760
    %v4587 = vsub.f32 %v36, %v4586
    %4588 = vmatprep.subr.mxu0 %v4587
    %v4589 = vand.u32 %v35, 4294901760
    %v4590 = vsub.f32 %v35, %v4589
    %4591 = vmatpush1.msra.mxu0 %v4590
    %4592 = vmatprep.subr.mxu0 0.0
    %4593 = vmatpush1.msra.mxu0 0.0
    %4594 = vmatprep.subr.mxu0 0.0
    %4595 = vmatpush1.msra.mxu0 0.0
    %4596 = vmatprep.subr.mxu0 0.0
    %4597 = vmatpush1.msra.mxu0 0.0
    %4598 = vmatprep.subr.mxu0 0.0
    %4599 = vmatpush1.msra.mxu0 0.0
    %4600 = vmatprep.subr.mxu0 0.0
    %4601 = vmatpush1.msra.mxu0 0.0
    %4602 = vmatprep.subr.mxu0 0.0
    %4603 = vmatpush1.msra.mxu0 0.0
    %4604 = vmatprep.subr.mxu0 0.0
    %4605 = vmatpush1.msra.mxu0 0.0
    %4606 = vmatprep.subr.mxu0 0.0
    %4607 = vmatpush1.msra.mxu0 0.0
    %4608 = vmatprep.subr.mxu0 0.0
    %4609 = vmatpush1.msra.mxu0 0.0
    %4610 = vmatprep.subr.mxu0 0.0
    %4611 = vmatpush1.msra.mxu0 0.0
    %4612 = vmatprep.subr.mxu0 0.0
    %4613 = vmatpush1.msra.mxu0 0.0
    %4614 = vmatprep.subr.mxu0 0.0
    %4615 = vmatpush1.msra.mxu0 0.0
    %4616 = vmatprep.subr.mxu0 0.0
    %4617 = vmatpush1.msra.mxu0 0.0
    %4618 = vmatprep.subr.mxu0 0.0
    %4619 = vmatpush1.msra.mxu0 0.0
    %4620 = vmatprep.subr.mxu0 0.0
    %4621 = vmatpush1.msra.mxu0 0.0
    %4622 = vmatprep.subr.mxu0 0.0
    %4623 = vmatpush1.msra.mxu0 0.0
    %4624 = vmatprep.subr.mxu0 0.0
    %4625 = vmatpush1.msra.mxu0 0.0
    %4626 = vmatprep.subr.mxu0 0.0
    %4627 = vmatpush1.msra.mxu0 0.0
    %4628 = vmatprep.subr.mxu0 0.0
    %4629 = vmatpush1.msra.mxu0 0.0
    %4630 = vmatprep.subr.mxu0 0.0
    %4631 = vmatpush1.msra.mxu0 0.0
    %4632 = vmatprep.subr.mxu0 0.0
    %4633 = vmatpush1.msra.mxu0 0.0
    %4634 = vmatprep.subr.mxu0 0.0
    %4635 = vmatpush1.msra.mxu0 0.0
    %4636 = vmatprep.subr.mxu0 0.0
    %4637 = vmatpush1.msra.mxu0 0.0
    %4638 = vmatprep.subr.mxu0 0.0
    %4639 = vmatpush1.msra.mxu0 0.0
    %4640 = vmatprep.subr.mxu0 0.0
    %4641 = vmatpush1.msra.mxu0 0.0
    %4642 = vmatprep.subr.mxu0 0.0
    %4643 = vmatpush1.msra.mxu0 0.0
    %4644 = vmatprep.subr.mxu0 0.0
    %4645 = vmatpush1.msra.mxu0 0.0
    %4646 = vmatprep.subr.mxu0 0.0
    %4647 = vmatpush1.msra.mxu0 0.0
    %4648 = vmatprep.mubr.f32.mxu0 0.0
    %v4649 = vand.u32 %v4370, 4294901760
    %v4650 = vsub.f32 %v4370, %v4649
    %4651 = vmatmul.mubr.f32.gmra.mrb[0].mxu0 %v4650
    %v4652 = vpop.f32.mrb[0].mxu0
    %v4653 = vadd.f32 %v4564, %v4652
    %v4654 = vpop.f32.mrb[0].mxu0
    %v4655 = vadd.f32 %v4566, %v4654
    %4656 = vdwg.mxu0
    %v4657 = vand.u32 %v30, 4294901760
    %4658 = vmatprep.subr.mxu0 %v4657
    %v4659 = vand.u32 %v29, 4294901760
    %4660 = vmatpush1.msra.mxu0 %v4659
    %v4661 = vand.u32 %v32, 4294901760
    %4662 = vmatprep.subr.mxu0 %v4661
    %v4663 = vand.u32 %v31, 4294901760
    %4664 = vmatpush1.msra.mxu0 %v4663
    %v4665 = vand.u32 %v34, 4294901760
    %4666 = vmatprep.subr.mxu0 %v4665
    %v4667 = vand.u32 %v33, 4294901760
    %4668 = vmatpush1.msra.mxu0 %v4667
    %v4669 = vand.u32 %v36, 4294901760
    %4670 = vmatprep.subr.mxu0 %v4669
    %v4671 = vand.u32 %v35, 4294901760
    %4672 = vmatpush1.msra.mxu0 %v4671
    %4673 = vmatprep.subr.mxu0 0.0
    %4674 = vmatpush1.msra.mxu0 0.0
    %4675 = vmatprep.subr.mxu0 0.0
    %4676 = vmatpush1.msra.mxu0 0.0
    %4677 = vmatprep.subr.mxu0 0.0
    %4678 = vmatpush1.msra.mxu0 0.0
    %4679 = vmatprep.subr.mxu0 0.0
    %4680 = vmatpush1.msra.mxu0 0.0
    %4681 = vmatprep.subr.mxu0 0.0
    %4682 = vmatpush1.msra.mxu0 0.0
    %4683 = vmatprep.subr.mxu0 0.0
    %4684 = vmatpush1.msra.mxu0 0.0
    %4685 = vmatprep.subr.mxu0 0.0
    %4686 = vmatpush1.msra.mxu0 0.0
    %4687 = vmatprep.subr.mxu0 0.0
    %4688 = vmatpush1.msra.mxu0 0.0
    %4689 = vmatprep.subr.mxu0 0.0
    %4690 = vmatpush1.msra.mxu0 0.0
    %4691 = vmatprep.subr.mxu0 0.0
    %4692 = vmatpush1.msra.mxu0 0.0
    %4693 = vmatprep.subr.mxu0 0.0
    %4694 = vmatpush1.msra.mxu0 0.0
    %4695 = vmatprep.subr.mxu0 0.0
    %4696 = vmatpush1.msra.mxu0 0.0
    %4697 = vmatprep.subr.mxu0 0.0
    %4698 = vmatpush1.msra.mxu0 0.0
    %4699 = vmatprep.subr.mxu0 0.0
    %4700 = vmatpush1.msra.mxu0 0.0
    %4701 = vmatprep.subr.mxu0 0.0
    %4702 = vmatpush1.msra.mxu0 0.0
    %4703 = vmatprep.subr.mxu0 0.0
    %4704 = vmatpush1.msra.mxu0 0.0
    %4705 = vmatprep.subr.mxu0 0.0
    %4706 = vmatpush1.msra.mxu0 0.0
    %4707 = vmatprep.subr.mxu0 0.0
    %4708 = vmatpush1.msra.mxu0 0.0
    %4709 = vmatprep.subr.mxu0 0.0
    %4710 = vmatpush1.msra.mxu0 0.0
    %4711 = vmatprep.subr.mxu0 0.0
    %4712 = vmatpush1.msra.mxu0 0.0
    %4713 = vmatprep.subr.mxu0 0.0
    %4714 = vmatpush1.msra.mxu0 0.0
    %4715 = vmatprep.subr.mxu0 0.0
    %4716 = vmatpush1.msra.mxu0 0.0
    %4717 = vmatprep.subr.mxu0 0.0
    %4718 = vmatpush1.msra.mxu0 0.0
    %4719 = vmatprep.subr.mxu0 0.0
    %4720 = vmatpush1.msra.mxu0 0.0
    %4721 = vmatprep.subr.mxu0 0.0
    %4722 = vmatpush1.msra.mxu0 0.0
    %4723 = vmatprep.subr.mxu0 0.0
    %4724 = vmatpush1.msra.mxu0 0.0
    %4725 = vmatprep.subr.mxu0 0.0
    %4726 = vmatpush1.msra.mxu0 0.0
    %4727 = vmatprep.subr.mxu0 0.0
    %4728 = vmatpush1.msra.mxu0 0.0
    %4729 = vmatprep.mubr.f32.mxu0 0.0
    %v4730 = vand.u32 %v4370, 4294901760
    %v4731 = vsub.f32 %v4370, %v4730
    %v4732 = vand.u32 %v4731, 4294901760
    %4733 = vmatmul.mubr.f32.gmra.mrb[0].mxu0 %v4732
    %v4734 = vpop.f32.mrb[0].mxu0
    %v4735 = vadd.f32 %v4653, %v4734
    %v4736 = vpop.f32.mrb[0].mxu0
    %v4737 = vadd.f32 %v4655, %v4736
    %4738 = vdwg.mxu0
    %v4739 = vand.u32 %v30, 4294901760
    %v4740 = vsub.f32 %v30, %v4739
    %v4741 = vand.u32 %v4740, 4294901760
    %4742 = vmatprep.subr.mxu0 %v4741
    %v4743 = vand.u32 %v29, 4294901760
    %v4744 = vsub.f32 %v29, %v4743
    %v4745 = vand.u32 %v4744, 4294901760
    %4746 = vmatpush1.msra.mxu0 %v4745
    %v4747 = vand.u32 %v32, 4294901760
    %v4748 = vsub.f32 %v32, %v4747
    %v4749 = vand.u32 %v4748, 4294901760
    %4750 = vmatprep.subr.mxu0 %v4749
    %v4751 = vand.u32 %v31, 4294901760
    %v4752 = vsub.f32 %v31, %v4751
    %v4753 = vand.u32 %v4752, 4294901760
    %4754 = vmatpush1.msra.mxu0 %v4753
    %v4755 = vand.u32 %v34, 4294901760
    %v4756 = vsub.f32 %v34, %v4755
    %v4757 = vand.u32 %v4756, 4294901760
    %4758 = vmatprep.subr.mxu0 %v4757
    %v4759 = vand.u32 %v33, 4294901760
    %v4760 = vsub.f32 %v33, %v4759
    %v4761 = vand.u32 %v4760, 4294901760
    %4762 = vmatpush1.msra.mxu0 %v4761
    %v4763 = vand.u32 %v36, 4294901760
    %v4764 = vsub.f32 %v36, %v4763
    %v4765 = vand.u32 %v4764, 4294901760
    %4766 = vmatprep.subr.mxu0 %v4765
    %v4767 = vand.u32 %v35, 4294901760
    %v4768 = vsub.f32 %v35, %v4767
    %v4769 = vand.u32 %v4768, 4294901760
    %4770 = vmatpush1.msra.mxu0 %v4769
    %4771 = vmatprep.subr.mxu0 0.0
    %4772 = vmatpush1.msra.mxu0 0.0
    %4773 = vmatprep.subr.mxu0 0.0
    %4774 = vmatpush1.msra.mxu0 0.0
    %4775 = vmatprep.subr.mxu0 0.0
    %4776 = vmatpush1.msra.mxu0 0.0
    %4777 = vmatprep.subr.mxu0 0.0
    %4778 = vmatpush1.msra.mxu0 0.0
    %4779 = vmatprep.subr.mxu0 0.0
    %4780 = vmatpush1.msra.mxu0 0.0
    %4781 = vmatprep.subr.mxu0 0.0
    %4782 = vmatpush1.msra.mxu0 0.0
    %4783 = vmatprep.subr.mxu0 0.0
    %4784 = vmatpush1.msra.mxu0 0.0
    %4785 = vmatprep.subr.mxu0 0.0
    %4786 = vmatpush1.msra.mxu0 0.0
    %4787 = vmatprep.subr.mxu0 0.0
    %4788 = vmatpush1.msra.mxu0 0.0
    %4789 = vmatprep.subr.mxu0 0.0
    %4790 = vmatpush1.msra.mxu0 0.0
    %4791 = vmatprep.subr.mxu0 0.0
    %4792 = vmatpush1.msra.mxu0 0.0
    %4793 = vmatprep.subr.mxu0 0.0
    %4794 = vmatpush1.msra.mxu0 0.0
    %4795 = vmatprep.subr.mxu0 0.0
    %4796 = vmatpush1.msra.mxu0 0.0
    %4797 = vmatprep.subr.mxu0 0.0
    %4798 = vmatpush1.msra.mxu0 0.0
    %4799 = vmatprep.subr.mxu0 0.0
    %4800 = vmatpush1.msra.mxu0 0.0
    %4801 = vmatprep.subr.mxu0 0.0
    %4802 = vmatpush1.msra.mxu0 0.0
    %4803 = vmatprep.subr.mxu0 0.0
    %4804 = vmatpush1.msra.mxu0 0.0
    %4805 = vmatprep.subr.mxu0 0.0
    %4806 = vmatpush1.msra.mxu0 0.0
    %4807 = vmatprep.subr.mxu0 0.0
    %4808 = vmatpush1.msra.mxu0 0.0
    %4809 = vmatprep.subr.mxu0 0.0
    %4810 = vmatpush1.msra.mxu0 0.0
    %4811 = vmatprep.subr.mxu0 0.0
    %4812 = vmatpush1.msra.mxu0 0.0
    %4813 = vmatprep.subr.mxu0 0.0
    %4814 = vmatpush1.msra.mxu0 0.0
    %4815 = vmatprep.subr.mxu0 0.0
    %4816 = vmatpush1.msra.mxu0 0.0
    %4817 = vmatprep.subr.mxu0 0.0
    %4818 = vmatpush1.msra.mxu0 0.0
    %4819 = vmatprep.subr.mxu0 0.0
    %4820 = vmatpush1.msra.mxu0 0.0
    %4821 = vmatprep.subr.mxu0 0.0
    %4822 = vmatpush1.msra.mxu0 0.0
    %4823 = vmatprep.subr.mxu0 0.0
    %4824 = vmatpush1.msra.mxu0 0.0
    %4825 = vmatprep.subr.mxu0 0.0
    %4826 = vmatpush1.msra.mxu0 0.0
    %4827 = vmatprep.mubr.f32.mxu0 0.0
    %v4828 = vand.u32 %v4370, 4294901760
    %4829 = vmatmul.mubr.f32.gmra.mrb[0].mxu0 %v4828
    %v4830 = vpop.f32.mrb[0].mxu0
    %v4831 = vadd.f32 %v4735, %v4830
    %v4832 = vpop.f32.mrb[0].mxu0
    %v4833 = vadd.f32 %v4737, %v4832
    %4834 = vdwg.mxu0
    %v4835 = vand.u32 %v30, 4294901760
    %4836 = vmatprep.subr.mxu0 %v4835
    %v4837 = vand.u32 %v29, 4294901760
    %4838 = vmatpush1.msra.mxu0 %v4837
    %v4839 = vand.u32 %v32, 4294901760
    %4840 = vmatprep.subr.mxu0 %v4839
    %v4841 = vand.u32 %v31, 4294901760
    %4842 = vmatpush1.msra.mxu0 %v4841
    %v4843 = vand.u32 %v34, 4294901760
    %4844 = vmatprep.subr.mxu0 %v4843
    %v4845 = vand.u32 %v33, 4294901760
    %4846 = vmatpush1.msra.mxu0 %v4845
    %v4847 = vand.u32 %v36, 4294901760
    %4848 = vmatprep.subr.mxu0 %v4847
    %v4849 = vand.u32 %v35, 4294901760
    %4850 = vmatpush1.msra.mxu0 %v4849
    %4851 = vmatprep.subr.mxu0 0.0
    %4852 = vmatpush1.msra.mxu0 0.0
    %4853 = vmatprep.subr.mxu0 0.0
    %4854 = vmatpush1.msra.mxu0 0.0
    %4855 = vmatprep.subr.mxu0 0.0
    %4856 = vmatpush1.msra.mxu0 0.0
    %4857 = vmatprep.subr.mxu0 0.0
    %4858 = vmatpush1.msra.mxu0 0.0
    %4859 = vmatprep.subr.mxu0 0.0
    %4860 = vmatpush1.msra.mxu0 0.0
    %4861 = vmatprep.subr.mxu0 0.0
    %4862 = vmatpush1.msra.mxu0 0.0
    %4863 = vmatprep.subr.mxu0 0.0
    %4864 = vmatpush1.msra.mxu0 0.0
    %4865 = vmatprep.subr.mxu0 0.0
    %4866 = vmatpush1.msra.mxu0 0.0
    %4867 = vmatprep.subr.mxu0 0.0
    %4868 = vmatpush1.msra.mxu0 0.0
    %4869 = vmatprep.subr.mxu0 0.0
    %4870 = vmatpush1.msra.mxu0 0.0
    %4871 = vmatprep.subr.mxu0 0.0
    %4872 = vmatpush1.msra.mxu0 0.0
    %4873 = vmatprep.subr.mxu0 0.0
    %4874 = vmatpush1.msra.mxu0 0.0
    %4875 = vmatprep.subr.mxu0 0.0
    %4876 = vmatpush1.msra.mxu0 0.0
    %4877 = vmatprep.subr.mxu0 0.0
    %4878 = vmatpush1.msra.mxu0 0.0
    %4879 = vmatprep.subr.mxu0 0.0
    %4880 = vmatpush1.msra.mxu0 0.0
    %4881 = vmatprep.subr.mxu0 0.0
    %4882 = vmatpush1.msra.mxu0 0.0
    %4883 = vmatprep.subr.mxu0 0.0
    %4884 = vmatpush1.msra.mxu0 0.0
    %4885 = vmatprep.subr.mxu0 0.0
    %4886 = vmatpush1.msra.mxu0 0.0
    %4887 = vmatprep.subr.mxu0 0.0
    %4888 = vmatpush1.msra.mxu0 0.0
    %4889 = vmatprep.subr.mxu0 0.0
    %4890 = vmatpush1.msra.mxu0 0.0
    %4891 = vmatprep.subr.mxu0 0.0
    %4892 = vmatpush1.msra.mxu0 0.0
    %4893 = vmatprep.subr.mxu0 0.0
    %4894 = vmatpush1.msra.mxu0 0.0
    %4895 = vmatprep.subr.mxu0 0.0
    %4896 = vmatpush1.msra.mxu0 0.0
    %4897 = vmatprep.subr.mxu0 0.0
    %4898 = vmatpush1.msra.mxu0 0.0
    %4899 = vmatprep.subr.mxu0 0.0
    %4900 = vmatpush1.msra.mxu0 0.0
    %4901 = vmatprep.subr.mxu0 0.0
    %4902 = vmatpush1.msra.mxu0 0.0
    %4903 = vmatprep.subr.mxu0 0.0
    %4904 = vmatpush1.msra.mxu0 0.0
    %4905 = vmatprep.subr.mxu0 0.0
    %4906 = vmatpush1.msra.mxu0 0.0
    %4907 = vmatprep.mubr.f32.mxu0 0.0
    %v4908 = vand.u32 %v4370, 4294901760
    %4909 = vmatmul.mubr.f32.gmra.mrb[0].mxu0 %v4908
    %v4910 = vpop.f32.mrb[0].mxu0
    %v4911 = vadd.f32 %v4831, %v4910
    %v4912 = vpop.f32.mrb[0].mxu0
    %v4913 = vadd.f32 %v4833, %v4912
    %4914 = vdwg.mxu0
    %v4915 = vadd.f32 %v105, %v4911
    %v4916 = vadd.f32 %v28, %v4913
    %4917 = vmatprep.subr.mxu0 0.0
    %v4918 = vand.u32 %v18, 4294901760
    %4919 = vmatpush1.msra.mxu0 %v4918
    %4920 = vmatprep.subr.mxu0 0.0
    %v4921 = vand.u32 %v19, 4294901760
    %4922 = vmatpush1.msra.mxu0 %v4921
    %4923 = vmatprep.subr.mxu0 0.0
    %v4924 = vand.u32 %v20, 4294901760
    %4925 = vmatpush1.msra.mxu0 %v4924
    %4926 = vmatprep.subr.mxu0 0.0
    %v4927 = vand.u32 %v21, 4294901760
    %4928 = vmatpush1.msra.mxu0 %v4927
    %4929 = vmatprep.subr.mxu0 0.0
    %4930 = vmatpush1.msra.mxu0 0.0
    %4931 = vmatprep.subr.mxu0 0.0
    %4932 = vmatpush1.msra.mxu0 0.0
    %4933 = vmatprep.subr.mxu0 0.0
    %4934 = vmatpush1.msra.mxu0 0.0
    %4935 = vmatprep.subr.mxu0 0.0
    %4936 = vmatpush1.msra.mxu0 0.0
    %4937 = vmatprep.subr.mxu0 0.0
    %4938 = vmatpush1.msra.mxu0 0.0
    %4939 = vmatprep.subr.mxu0 0.0
    %4940 = vmatpush1.msra.mxu0 0.0
    %4941 = vmatprep.subr.mxu0 0.0
    %4942 = vmatpush1.msra.mxu0 0.0
    %4943 = vmatprep.subr.mxu0 0.0
    %4944 = vmatpush1.msra.mxu0 0.0
    %4945 = vmatprep.subr.mxu0 0.0
    %4946 = vmatpush1.msra.mxu0 0.0
    %4947 = vmatprep.subr.mxu0 0.0
    %4948 = vmatpush1.msra.mxu0 0.0
    %4949 = vmatprep.subr.mxu0 0.0
    %4950 = vmatpush1.msra.mxu0 0.0
    %4951 = vmatprep.subr.mxu0 0.0
    %4952 = vmatpush1.msra.mxu0 0.0
    %4953 = vmatprep.subr.mxu0 0.0
    %4954 = vmatpush1.msra.mxu0 0.0
    %4955 = vmatprep.subr.mxu0 0.0
    %4956 = vmatpush1.msra.mxu0 0.0
    %4957 = vmatprep.subr.mxu0 0.0
    %4958 = vmatpush1.msra.mxu0 0.0
    %4959 = vmatprep.subr.mxu0 0.0
    %4960 = vmatpush1.msra.mxu0 0.0
    %4961 = vmatprep.subr.mxu0 0.0
    %4962 = vmatpush1.msra.mxu0 0.0
    %4963 = vmatprep.subr.mxu0 0.0
    %4964 = vmatpush1.msra.mxu0 0.0
    %4965 = vmatprep.subr.mxu0 0.0
    %4966 = vmatpush1.msra.mxu0 0.0
    %4967 = vmatprep.subr.mxu0 0.0
    %4968 = vmatpush1.msra.mxu0 0.0
    %4969 = vmatprep.subr.mxu0 0.0
    %4970 = vmatpush1.msra.mxu0 0.0
    %4971 = vmatprep.subr.mxu0 0.0
    %4972 = vmatpush1.msra.mxu0 0.0
    %4973 = vmatprep.subr.mxu0 0.0
    %4974 = vmatpush1.msra.mxu0 0.0
    %4975 = vmatprep.subr.mxu0 0.0
    %4976 = vmatpush1.msra.mxu0 0.0
    %4977 = vmatprep.subr.mxu0 0.0
    %4978 = vmatpush1.msra.mxu0 0.0
    %4979 = vmatprep.subr.mxu0 0.0
    %4980 = vmatpush1.msra.mxu0 0.0
    %4981 = vmatprep.subr.mxu0 0.0
    %4982 = vmatpush1.msra.mxu0 0.0
    %4983 = vmatprep.subr.mxu0 0.0
    %4984 = vmatpush1.msra.mxu0 0.0
    %4985 = vmatprep.mubr.f32.mxu0 0.0
    %v4986 = vand.u32 %v3879, 4294901760
    %v4987 = vsub.f32 %v3879, %v4986
    %v4988 = vand.u32 %v4987, 4294901760
    %v4989 = vsub.f32 %v4987, %v4988
    %v4990 = vand.u32 %v4989, 4294901760
    %4991 = vmatmul.mubr.f32.gmra.mrb[0].mxu0 %v4990
    %v4992 = vpop.f32.mrb[0].mxu0
    %v4993 = vadd.f32 0.0, %v4992
    %v4994 = vpop.f32.mrb[0].mxu0
    %4995 = vdwg.mxu0
    %4996 = vmatprep.subr.mxu0 0.0
    %v4997 = vand.u32 %v18, 4294901760
    %v4998 = vsub.f32 %v18, %v4997
    %v4999 = vand.u32 %v4998, 4294901760
    %v5000 = vsub.f32 %v4998, %v4999
    %v5001 = vand.u32 %v5000, 4294901760
    %5002 = vmatpush1.msra.mxu0 %v5001
    %5003 = vmatprep.subr.mxu0 0.0
    %v5004 = vand.u32 %v19, 4294901760
    %v5005 = vsub.f32 %v19, %v5004
    %v5006 = vand.u32 %v5005, 4294901760
    %v5007 = vsub.f32 %v5005, %v5006
    %v5008 = vand.u32 %v5007, 4294901760
    %5009 = vmatpush1.msra.mxu0 %v5008
    %5010 = vmatprep.subr.mxu0 0.0
    %v5011 = vand.u32 %v20, 4294901760
    %v5012 = vsub.f32 %v20, %v5011
    %v5013 = vand.u32 %v5012, 4294901760
    %v5014 = vsub.f32 %v5012, %v5013
    %v5015 = vand.u32 %v5014, 4294901760
    %5016 = vmatpush1.msra.mxu0 %v5015
    %5017 = vmatprep.subr.mxu0 0.0
    %v5018 = vand.u32 %v21, 4294901760
    %v5019 = vsub.f32 %v21, %v5018
    %v5020 = vand.u32 %v5019, 4294901760
    %v5021 = vsub.f32 %v5019, %v5020
    %v5022 = vand.u32 %v5021, 4294901760
    %5023 = vmatpush1.msra.mxu0 %v5022
    %5024 = vmatprep.subr.mxu0 0.0
    %5025 = vmatpush1.msra.mxu0 0.0
    %5026 = vmatprep.subr.mxu0 0.0
    %5027 = vmatpush1.msra.mxu0 0.0
    %5028 = vmatprep.subr.mxu0 0.0
    %5029 = vmatpush1.msra.mxu0 0.0
    %5030 = vmatprep.subr.mxu0 0.0
    %5031 = vmatpush1.msra.mxu0 0.0
    %5032 = vmatprep.subr.mxu0 0.0
    %5033 = vmatpush1.msra.mxu0 0.0
    %5034 = vmatprep.subr.mxu0 0.0
    %5035 = vmatpush1.msra.mxu0 0.0
    %5036 = vmatprep.subr.mxu0 0.0
    %5037 = vmatpush1.msra.mxu0 0.0
    %5038 = vmatprep.subr.mxu0 0.0
    %5039 = vmatpush1.msra.mxu0 0.0
    %5040 = vmatprep.subr.mxu0 0.0
    %5041 = vmatpush1.msra.mxu0 0.0
    %5042 = vmatprep.subr.mxu0 0.0
    %5043 = vmatpush1.msra.mxu0 0.0
    %5044 = vmatprep.subr.mxu0 0.0
    %5045 = vmatpush1.msra.mxu0 0.0
    %5046 = vmatprep.subr.mxu0 0.0
    %5047 = vmatpush1.msra.mxu0 0.0
    %5048 = vmatprep.subr.mxu0 0.0
    %5049 = vmatpush1.msra.mxu0 0.0
    %5050 = vmatprep.subr.mxu0 0.0
    %5051 = vmatpush1.msra.mxu0 0.0
    %5052 = vmatprep.subr.mxu0 0.0
    %5053 = vmatpush1.msra.mxu0 0.0
    %5054 = vmatprep.subr.mxu0 0.0
    %5055 = vmatpush1.msra.mxu0 0.0
    %5056 = vmatprep.subr.mxu0 0.0
    %5057 = vmatpush1.msra.mxu0 0.0
    %5058 = vmatprep.subr.mxu0 0.0
    %5059 = vmatpush1.msra.mxu0 0.0
    %5060 = vmatprep.subr.mxu0 0.0
    %5061 = vmatpush1.msra.mxu0 0.0
    %5062 = vmatprep.subr.mxu0 0.0
    %5063 = vmatpush1.msra.mxu0 0.0
    %5064 = vmatprep.subr.mxu0 0.0
    %5065 = vmatpush1.msra.mxu0 0.0
    %5066 = vmatprep.subr.mxu0 0.0
    %5067 = vmatpush1.msra.mxu0 0.0
    %5068 = vmatprep.subr.mxu0 0.0
    %5069 = vmatpush1.msra.mxu0 0.0
    %5070 = vmatprep.subr.mxu0 0.0
    %5071 = vmatpush1.msra.mxu0 0.0
    %5072 = vmatprep.subr.mxu0 0.0
    %5073 = vmatpush1.msra.mxu0 0.0
    %5074 = vmatprep.subr.mxu0 0.0
    %5075 = vmatpush1.msra.mxu0 0.0
    %5076 = vmatprep.subr.mxu0 0.0
    %5077 = vmatpush1.msra.mxu0 0.0
    %5078 = vmatprep.subr.mxu0 0.0
    %5079 = vmatpush1.msra.mxu0 0.0
    %5080 = vmatprep.mubr.f32.mxu0 0.0
    %v5081 = vand.u32 %v3879, 4294901760
    %5082 = vmatmul.mubr.f32.gmra.mrb[0].mxu0 %v5081
    %v5083 = vpop.f32.mrb[0].mxu0
    %v5084 = vadd.f32 %v4993, %v5083
    %v5085 = vpop.f32.mrb[0].mxu0
    %5086 = vdwg.mxu0
    %5087 = vmatprep.subr.mxu0 0.0
    %v5088 = vand.u32 %v18, 4294901760
    %v5089 = vsub.f32 %v18, %v5088
    %5090 = vmatpush1.msra.mxu0 %v5089
    %5091 = vmatprep.subr.mxu0 0.0
    %v5092 = vand.u32 %v19, 4294901760
    %v5093 = vsub.f32 %v19, %v5092
    %5094 = vmatpush1.msra.mxu0 %v5093
    %5095 = vmatprep.subr.mxu0 0.0
    %v5096 = vand.u32 %v20, 4294901760
    %v5097 = vsub.f32 %v20, %v5096
    %5098 = vmatpush1.msra.mxu0 %v5097
    %5099 = vmatprep.subr.mxu0 0.0
    %v5100 = vand.u32 %v21, 4294901760
    %v5101 = vsub.f32 %v21, %v5100
    %5102 = vmatpush1.msra.mxu0 %v5101
    %5103 = vmatprep.subr.mxu0 0.0
    %5104 = vmatpush1.msra.mxu0 0.0
    %5105 = vmatprep.subr.mxu0 0.0
    %5106 = vmatpush1.msra.mxu0 0.0
    %5107 = vmatprep.subr.mxu0 0.0
    %5108 = vmatpush1.msra.mxu0 0.0
    %5109 = vmatprep.subr.mxu0 0.0
    %5110 = vmatpush1.msra.mxu0 0.0
    %5111 = vmatprep.subr.mxu0 0.0
    %5112 = vmatpush1.msra.mxu0 0.0
    %5113 = vmatprep.subr.mxu0 0.0
    %5114 = vmatpush1.msra.mxu0 0.0
    %5115 = vmatprep.subr.mxu0 0.0
    %5116 = vmatpush1.msra.mxu0 0.0
    %5117 = vmatprep.subr.mxu0 0.0
    %5118 = vmatpush1.msra.mxu0 0.0
    %5119 = vmatprep.subr.mxu0 0.0
    %5120 = vmatpush1.msra.mxu0 0.0
    %5121 = vmatprep.subr.mxu0 0.0
    %5122 = vmatpush1.msra.mxu0 0.0
    %5123 = vmatprep.subr.mxu0 0.0
    %5124 = vmatpush1.msra.mxu0 0.0
    %5125 = vmatprep.subr.mxu0 0.0
    %5126 = vmatpush1.msra.mxu0 0.0
    %5127 = vmatprep.subr.mxu0 0.0
    %5128 = vmatpush1.msra.mxu0 0.0
    %5129 = vmatprep.subr.mxu0 0.0
    %5130 = vmatpush1.msra.mxu0 0.0
    %5131 = vmatprep.subr.mxu0 0.0
    %5132 = vmatpush1.msra.mxu0 0.0
    %5133 = vmatprep.subr.mxu0 0.0
    %5134 = vmatpush1.msra.mxu0 0.0
    %5135 = vmatprep.subr.mxu0 0.0
    %5136 = vmatpush1.msra.mxu0 0.0
    %5137 = vmatprep.subr.mxu0 0.0
    %5138 = vmatpush1.msra.mxu0 0.0
    %5139 = vmatprep.subr.mxu0 0.0
    %5140 = vmatpush1.msra.mxu0 0.0
    %5141 = vmatprep.subr.mxu0 0.0
    %5142 = vmatpush1.msra.mxu0 0.0
    %5143 = vmatprep.subr.mxu0 0.0
    %5144 = vmatpush1.msra.mxu0 0.0
    %5145 = vmatprep.subr.mxu0 0.0
    %5146 = vmatpush1.msra.mxu0 0.0
    %5147 = vmatprep.subr.mxu0 0.0
    %5148 = vmatpush1.msra.mxu0 0.0
    %5149 = vmatprep.subr.mxu0 0.0
    %5150 = vmatpush1.msra.mxu0 0.0
    %5151 = vmatprep.subr.mxu0 0.0
    %5152 = vmatpush1.msra.mxu0 0.0
    %5153 = vmatprep.subr.mxu0 0.0
    %5154 = vmatpush1.msra.mxu0 0.0
    %5155 = vmatprep.subr.mxu0 0.0
    %5156 = vmatpush1.msra.mxu0 0.0
    %5157 = vmatprep.subr.mxu0 0.0
    %5158 = vmatpush1.msra.mxu0 0.0
    %5159 = vmatprep.mubr.f32.mxu0 0.0
    %v5160 = vand.u32 %v3879, 4294901760
    %v5161 = vsub.f32 %v3879, %v5160
    %5162 = vmatmul.mubr.f32.gmra.mrb[0].mxu0 %v5161
    %v5163 = vpop.f32.mrb[0].mxu0
    %v5164 = vadd.f32 %v5084, %v5163
    %v5165 = vpop.f32.mrb[0].mxu0
    %5166 = vdwg.mxu0
    %5167 = vmatprep.subr.mxu0 0.0
    %v5168 = vand.u32 %v18, 4294901760
    %5169 = vmatpush1.msra.mxu0 %v5168
    %5170 = vmatprep.subr.mxu0 0.0
    %v5171 = vand.u32 %v19, 4294901760
    %5172 = vmatpush1.msra.mxu0 %v5171
    %5173 = vmatprep.subr.mxu0 0.0
    %v5174 = vand.u32 %v20, 4294901760
    %5175 = vmatpush1.msra.mxu0 %v5174
    %5176 = vmatprep.subr.mxu0 0.0
    %v5177 = vand.u32 %v21, 4294901760
    %5178 = vmatpush1.msra.mxu0 %v5177
    %5179 = vmatprep.subr.mxu0 0.0
    %5180 = vmatpush1.msra.mxu0 0.0
    %5181 = vmatprep.subr.mxu0 0.0
    %5182 = vmatpush1.msra.mxu0 0.0
    %5183 = vmatprep.subr.mxu0 0.0
    %5184 = vmatpush1.msra.mxu0 0.0
    %5185 = vmatprep.subr.mxu0 0.0
    %5186 = vmatpush1.msra.mxu0 0.0
    %5187 = vmatprep.subr.mxu0 0.0
    %5188 = vmatpush1.msra.mxu0 0.0
    %5189 = vmatprep.subr.mxu0 0.0
    %5190 = vmatpush1.msra.mxu0 0.0
    %5191 = vmatprep.subr.mxu0 0.0
    %5192 = vmatpush1.msra.mxu0 0.0
    %5193 = vmatprep.subr.mxu0 0.0
    %5194 = vmatpush1.msra.mxu0 0.0
    %5195 = vmatprep.subr.mxu0 0.0
    %5196 = vmatpush1.msra.mxu0 0.0
    %5197 = vmatprep.subr.mxu0 0.0
    %5198 = vmatpush1.msra.mxu0 0.0
    %5199 = vmatprep.subr.mxu0 0.0
    %5200 = vmatpush1.msra.mxu0 0.0
    %5201 = vmatprep.subr.mxu0 0.0
    %5202 = vmatpush1.msra.mxu0 0.0
    %5203 = vmatprep.subr.mxu0 0.0
    %5204 = vmatpush1.msra.mxu0 0.0
    %5205 = vmatprep.subr.mxu0 0.0
    %5206 = vmatpush1.msra.mxu0 0.0
    %5207 = vmatprep.subr.mxu0 0.0
    %5208 = vmatpush1.msra.mxu0 0.0
    %5209 = vmatprep.subr.mxu0 0.0
    %5210 = vmatpush1.msra.mxu0 0.0
    %5211 = vmatprep.subr.mxu0 0.0
    %5212 = vmatpush1.msra.mxu0 0.0
    %5213 = vmatprep.subr.mxu0 0.0
    %5214 = vmatpush1.msra.mxu0 0.0
    %5215 = vmatprep.subr.mxu0 0.0
    %5216 = vmatpush1.msra.mxu0 0.0
    %5217 = vmatprep.subr.mxu0 0.0
    %5218 = vmatpush1.msra.mxu0 0.0
    %5219 = vmatprep.subr.mxu0 0.0
    %5220 = vmatpush1.msra.mxu0 0.0
    %5221 = vmatprep.subr.mxu0 0.0
    %5222 = vmatpush1.msra.mxu0 0.0
    %5223 = vmatprep.subr.mxu0 0.0
    %5224 = vmatpush1.msra.mxu0 0.0
    %5225 = vmatprep.subr.mxu0 0.0
    %5226 = vmatpush1.msra.mxu0 0.0
    %5227 = vmatprep.subr.mxu0 0.0
    %5228 = vmatpush1.msra.mxu0 0.0
    %5229 = vmatprep.subr.mxu0 0.0
    %5230 = vmatpush1.msra.mxu0 0.0
    %5231 = vmatprep.subr.mxu0 0.0
    %5232 = vmatpush1.msra.mxu0 0.0
    %5233 = vmatprep.subr.mxu0 0.0
    %5234 = vmatpush1.msra.mxu0 0.0
    %5235 = vmatprep.mubr.f32.mxu0 0.0
    %v5236 = vand.u32 %v3879, 4294901760
    %v5237 = vsub.f32 %v3879, %v5236
    %v5238 = vand.u32 %v5237, 4294901760
    %5239 = vmatmul.mubr.f32.gmra.mrb[0].mxu0 %v5238
    %v5240 = vpop.f32.mrb[0].mxu0
    %v5241 = vadd.f32 %v5164, %v5240
    %v5242 = vpop.f32.mrb[0].mxu0
    %5243 = vdwg.mxu0
    %5244 = vmatprep.subr.mxu0 0.0
    %v5245 = vand.u32 %v18, 4294901760
    %v5246 = vsub.f32 %v18, %v5245
    %v5247 = vand.u32 %v5246, 4294901760
    %5248 = vmatpush1.msra.mxu0 %v5247
    %5249 = vmatprep.subr.mxu0 0.0
    %v5250 = vand.u32 %v19, 4294901760
    %v5251 = vsub.f32 %v19, %v5250
    %v5252 = vand.u32 %v5251, 4294901760
    %5253 = vmatpush1.msra.mxu0 %v5252
    %5254 = vmatprep.subr.mxu0 0.0
    %v5255 = vand.u32 %v20, 4294901760
    %v5256 = vsub.f32 %v20, %v5255
    %v5257 = vand.u32 %v5256, 4294901760
    %5258 = vmatpush1.msra.mxu0 %v5257
    %5259 = vmatprep.subr.mxu0 0.0
    %v5260 = vand.u32 %v21, 4294901760
    %v5261 = vsub.f32 %v21, %v5260
    %v5262 = vand.u32 %v5261, 4294901760
    %5263 = vmatpush1.msra.mxu0 %v5262
    %5264 = vmatprep.subr.mxu0 0.0
    %5265 = vmatpush1.msra.mxu0 0.0
    %5266 = vmatprep.subr.mxu0 0.0
    %5267 = vmatpush1.msra.mxu0 0.0
    %5268 = vmatprep.subr.mxu0 0.0
    %5269 = vmatpush1.msra.mxu0 0.0
    %5270 = vmatprep.subr.mxu0 0.0
    %5271 = vmatpush1.msra.mxu0 0.0
    %5272 = vmatprep.subr.mxu0 0.0
    %5273 = vmatpush1.msra.mxu0 0.0
    %5274 = vmatprep.subr.mxu0 0.0
    %5275 = vmatpush1.msra.mxu0 0.0
    %5276 = vmatprep.subr.mxu0 0.0
    %5277 = vmatpush1.msra.mxu0 0.0
    %5278 = vmatprep.subr.mxu0 0.0
    %5279 = vmatpush1.msra.mxu0 0.0
    %5280 = vmatprep.subr.mxu0 0.0
    %5281 = vmatpush1.msra.mxu0 0.0
    %5282 = vmatprep.subr.mxu0 0.0
    %5283 = vmatpush1.msra.mxu0 0.0
    %5284 = vmatprep.subr.mxu0 0.0
    %5285 = vmatpush1.msra.mxu0 0.0
    %5286 = vmatprep.subr.mxu0 0.0
    %5287 = vmatpush1.msra.mxu0 0.0
    %5288 = vmatprep.subr.mxu0 0.0
    %5289 = vmatpush1.msra.mxu0 0.0
    %5290 = vmatprep.subr.mxu0 0.0
    %5291 = vmatpush1.msra.mxu0 0.0
    %5292 = vmatprep.subr.mxu0 0.0
    %5293 = vmatpush1.msra.mxu0 0.0
    %5294 = vmatprep.subr.mxu0 0.0
    %5295 = vmatpush1.msra.mxu0 0.0
    %5296 = vmatprep.subr.mxu0 0.0
    %5297 = vmatpush1.msra.mxu0 0.0
    %5298 = vmatprep.subr.mxu0 0.0
    %5299 = vmatpush1.msra.mxu0 0.0
    %5300 = vmatprep.subr.mxu0 0.0
    %5301 = vmatpush1.msra.mxu0 0.0
    %5302 = vmatprep.subr.mxu0 0.0
    %5303 = vmatpush1.msra.mxu0 0.0
    %5304 = vmatprep.subr.mxu0 0.0
    %5305 = vmatpush1.msra.mxu0 0.0
    %5306 = vmatprep.subr.mxu0 0.0
    %5307 = vmatpush1.msra.mxu0 0.0
    %5308 = vmatprep.subr.mxu0 0.0
    %5309 = vmatpush1.msra.mxu0 0.0
    %5310 = vmatprep.subr.mxu0 0.0
    %5311 = vmatpush1.msra.mxu0 0.0
    %5312 = vmatprep.subr.mxu0 0.0
    %5313 = vmatpush1.msra.mxu0 0.0
    %5314 = vmatprep.subr.mxu0 0.0
    %5315 = vmatpush1.msra.mxu0 0.0
    %5316 = vmatprep.subr.mxu0 0.0
    %5317 = vmatpush1.msra.mxu0 0.0
    %5318 = vmatprep.subr.mxu0 0.0
    %5319 = vmatpush1.msra.mxu0 0.0
    %5320 = vmatprep.mubr.f32.mxu0 0.0
    %v5321 = vand.u32 %v3879, 4294901760
    %5322 = vmatmul.mubr.f32.gmra.mrb[0].mxu0 %v5321
    %v5323 = vpop.f32.mrb[0].mxu0
    %v5324 = vadd.f32 %v5241, %v5323
    %v5325 = vpop.f32.mrb[0].mxu0
    %5326 = vdwg.mxu0
    %5327 = vmatprep.subr.mxu0 0.0
    %v5328 = vand.u32 %v18, 4294901760
    %5329 = vmatpush1.msra.mxu0 %v5328
    %5330 = vmatprep.subr.mxu0 0.0
    %v5331 = vand.u32 %v19, 4294901760
    %5332 = vmatpush1.msra.mxu0 %v5331
    %5333 = vmatprep.subr.mxu0 0.0
    %v5334 = vand.u32 %v20, 4294901760
    %5335 = vmatpush1.msra.mxu0 %v5334
    %5336 = vmatprep.subr.mxu0 0.0
    %v5337 = vand.u32 %v21, 4294901760
    %5338 = vmatpush1.msra.mxu0 %v5337
    %5339 = vmatprep.subr.mxu0 0.0
    %5340 = vmatpush1.msra.mxu0 0.0
    %5341 = vmatprep.subr.mxu0 0.0
    %5342 = vmatpush1.msra.mxu0 0.0
    %5343 = vmatprep.subr.mxu0 0.0
    %5344 = vmatpush1.msra.mxu0 0.0
    %5345 = vmatprep.subr.mxu0 0.0
    %5346 = vmatpush1.msra.mxu0 0.0
    %5347 = vmatprep.subr.mxu0 0.0
    %5348 = vmatpush1.msra.mxu0 0.0
    %5349 = vmatprep.subr.mxu0 0.0
    %5350 = vmatpush1.msra.mxu0 0.0
    %5351 = vmatprep.subr.mxu0 0.0
    %5352 = vmatpush1.msra.mxu0 0.0
    %5353 = vmatprep.subr.mxu0 0.0
    %5354 = vmatpush1.msra.mxu0 0.0
    %5355 = vmatprep.subr.mxu0 0.0
    %5356 = vmatpush1.msra.mxu0 0.0
    %5357 = vmatprep.subr.mxu0 0.0
    %5358 = vmatpush1.msra.mxu0 0.0
    %5359 = vmatprep.subr.mxu0 0.0
    %5360 = vmatpush1.msra.mxu0 0.0
    %5361 = vmatprep.subr.mxu0 0.0
    %5362 = vmatpush1.msra.mxu0 0.0
    %5363 = vmatprep.subr.mxu0 0.0
    %5364 = vmatpush1.msra.mxu0 0.0
    %5365 = vmatprep.subr.mxu0 0.0
    %5366 = vmatpush1.msra.mxu0 0.0
    %5367 = vmatprep.subr.mxu0 0.0
    %5368 = vmatpush1.msra.mxu0 0.0
    %5369 = vmatprep.subr.mxu0 0.0
    %5370 = vmatpush1.msra.mxu0 0.0
    %5371 = vmatprep.subr.mxu0 0.0
    %5372 = vmatpush1.msra.mxu0 0.0
    %5373 = vmatprep.subr.mxu0 0.0
    %5374 = vmatpush1.msra.mxu0 0.0
    %5375 = vmatprep.subr.mxu0 0.0
    %5376 = vmatpush1.msra.mxu0 0.0
    %5377 = vmatprep.subr.mxu0 0.0
    %5378 = vmatpush1.msra.mxu0 0.0
    %5379 = vmatprep.subr.mxu0 0.0
    %5380 = vmatpush1.msra.mxu0 0.0
    %5381 = vmatprep.subr.mxu0 0.0
    %5382 = vmatpush1.msra.mxu0 0.0
    %5383 = vmatprep.subr.mxu0 0.0
    %5384 = vmatpush1.msra.mxu0 0.0
    %5385 = vmatprep.subr.mxu0 0.0
    %5386 = vmatpush1.msra.mxu0 0.0
    %5387 = vmatprep.subr.mxu0 0.0
    %5388 = vmatpush1.msra.mxu0 0.0
    %5389 = vmatprep.subr.mxu0 0.0
    %5390 = vmatpush1.msra.mxu0 0.0
    %5391 = vmatprep.subr.mxu0 0.0
    %5392 = vmatpush1.msra.mxu0 0.0
    %5393 = vmatprep.subr.mxu0 0.0
    %5394 = vmatpush1.msra.mxu0 0.0
    %5395 = vmatprep.mubr.f32.mxu0 0.0
    %v5396 = vand.u32 %v3879, 4294901760
    %5397 = vmatmul.mubr.f32.gmra.mrb[0].mxu0 %v5396
    %v5398 = vpop.f32.mrb[0].mxu0
    %v5399 = vadd.f32 %v5324, %v5398
    %v5400 = vpop.f32.mrb[0].mxu0
    %5401 = vdwg.mxu0
    %v5402 = vadd.f32 %v4916, %v5399
    %v5403 = vtanh.pop %v4915
    %v5404 = vadd.f32 %v5403, 1.0
    %v5405 = vmul.f32 %v5404, 0.5
    %v5406 = vsel %vm113, %v5403, %v5405
    %v5407 = vmul.f32 %v5406, %v3844
    %5409 = vrot.lane.b32.xlu0 %v5406, 64
    %v5410 = vpop.permute.xlu0 %5409
    %v5412 = vmul.f32 %v5406, %v5410
    %5414 = vrot.lane.b32.xlu0 %v5412, 32
    %v5415 = vpop.permute.xlu0 %5414
    %v5417 = vadd.f32 %v5407, %v5415
    %v5418 = vtanh.pop %v5417
    %5420 = vrot.lane.b32.xlu0 %v5418, 64
    %v5421 = vpop.permute.xlu0 %5420
    %v5423 = vmul.f32 %v5406, %v5421
    %v5424 = vtanh.pop %v5402
    %v5425 = vadd.f32 %v5424, 1.0
    %v5426 = vmul.f32 %v5425, 0.5
    %v5427 = vsel %vm113, %v5424, %v5426
    %v5428 = vmul.f32 %v5427, %v3865
    %5430 = vrot.lane.b32.xlu0 %v5427, 64
    %v5431 = vpop.permute.xlu0 %5430
    %v5433 = vmul.f32 %v5427, %v5431
    %5435 = vrot.lane.b32.xlu0 %v5433, 32
    %v5436 = vpop.permute.xlu0 %5435
    %v5438 = vadd.f32 %v5428, %v5436
    %v5439 = vtanh.pop %v5438
    %5441 = vrot.lane.b32.xlu0 %v5439, 64
    %v5442 = vpop.permute.xlu0 %5441
    %v5444 = vmul.f32 %v5427, %v5442
    %v5445 = vld [vmem:[%s3 + $0x60] sm:$0xff]
    %v5446 = vld [vmem:[%s3 + $0x68] sm:$0xff]
    %v5447 = vld [vmem:[%s3 + $0x70] sm:$0xff]
    %v5448 = vld [vmem:[%s3 + $0x78] sm:$0xff]
    %5450 = vrot.lane.b32.xlu0 %v5444, 32
    %v5451 = vpop.permute.xlu0 %5450
    %v5452 = vsel %vm138, %v5451, 0
    %5454 = vmatprep.subr.mxu0 0.0
    %v5455 = vand.u32 %v5445, 4294901760
    %5456 = vmatpush1.msra.mxu0 %v5455
    %5457 = vmatprep.subr.mxu0 0.0
    %v5458 = vand.u32 %v5446, 4294901760
    %5459 = vmatpush1.msra.mxu0 %v5458
    %5460 = vmatprep.subr.mxu0 0.0
    %v5461 = vand.u32 %v5447, 4294901760
    %5462 = vmatpush1.msra.mxu0 %v5461
    %5463 = vmatprep.subr.mxu0 0.0
    %v5464 = vand.u32 %v5448, 4294901760
    %5465 = vmatpush1.msra.mxu0 %v5464
    %5466 = vmatprep.subr.mxu0 0.0
    %5467 = vmatpush1.msra.mxu0 0.0
    %5468 = vmatprep.subr.mxu0 0.0
    %5469 = vmatpush1.msra.mxu0 0.0
    %5470 = vmatprep.subr.mxu0 0.0
    %5471 = vmatpush1.msra.mxu0 0.0
    %5472 = vmatprep.subr.mxu0 0.0
    %5473 = vmatpush1.msra.mxu0 0.0
    %5474 = vmatprep.subr.mxu0 0.0
    %5475 = vmatpush1.msra.mxu0 0.0
    %5476 = vmatprep.subr.mxu0 0.0
    %5477 = vmatpush1.msra.mxu0 0.0
    %5478 = vmatprep.subr.mxu0 0.0
    %5479 = vmatpush1.msra.mxu0 0.0
    %5480 = vmatprep.subr.mxu0 0.0
    %5481 = vmatpush1.msra.mxu0 0.0
    %5482 = vmatprep.subr.mxu0 0.0
    %5483 = vmatpush1.msra.mxu0 0.0
    %5484 = vmatprep.subr.mxu0 0.0
    %5485 = vmatpush1.msra.mxu0 0.0
    %5486 = vmatprep.subr.mxu0 0.0
    %5487 = vmatpush1.msra.mxu0 0.0
    %5488 = vmatprep.subr.mxu0 0.0
    %5489 = vmatpush1.msra.mxu0 0.0
    %5490 = vmatprep.subr.mxu0 0.0
    %5491 = vmatpush1.msra.mxu0 0.0
    %5492 = vmatprep.subr.mxu0 0.0
    %5493 = vmatpush1.msra.mxu0 0.0
    %5494 = vmatprep.subr.mxu0 0.0
    %5495 = vmatpush1.msra.mxu0 0.0
    %5496 = vmatprep.subr.mxu0 0.0
    %5497 = vmatpush1.msra.mxu0 0.0
    %5498 = vmatprep.subr.mxu0 0.0
    %5499 = vmatpush1.msra.mxu0 0.0
    %5500 = vmatprep.subr.mxu0 0.0
    %5501 = vmatpush1.msra.mxu0 0.0
    %5502 = vmatprep.subr.mxu0 0.0
    %5503 = vmatpush1.msra.mxu0 0.0
    %5504 = vmatprep.subr.mxu0 0.0
    %5505 = vmatpush1.msra.mxu0 0.0
    %5506 = vmatprep.subr.mxu0 0.0
    %5507 = vmatpush1.msra.mxu0 0.0
    %5508 = vmatprep.subr.mxu0 0.0
    %5509 = vmatpush1.msra.mxu0 0.0
    %5510 = vmatprep.subr.mxu0 0.0
    %5511 = vmatpush1.msra.mxu0 0.0
    %5512 = vmatprep.subr.mxu0 0.0
    %5513 = vmatpush1.msra.mxu0 0.0
    %5514 = vmatprep.subr.mxu0 0.0
    %5515 = vmatpush1.msra.mxu0 0.0
    %5516 = vmatprep.subr.mxu0 0.0
    %5517 = vmatpush1.msra.mxu0 0.0
    %5518 = vmatprep.subr.mxu0 0.0
    %5519 = vmatpush1.msra.mxu0 0.0
    %5520 = vmatprep.subr.mxu0 0.0
    %5521 = vmatpush1.msra.mxu0 0.0
    %5522 = vmatprep.mubr.f32.mxu0 0.0
    %v5523 = vand.u32 %v5452, 4294901760
    %v5524 = vsub.f32 %v5452, %v5523
    %v5525 = vand.u32 %v5524, 4294901760
    %v5526 = vsub.f32 %v5524, %v5525
    %v5527 = vand.u32 %v5526, 4294901760
    %5528 = vmatmul.mubr.f32.gmra.mrb[0].mxu0 %v5527
    %v5529 = vpop.f32.mrb[0].mxu0
    %v5530 = vadd.f32 0.0, %v5529
    %v5531 = vpop.f32.mrb[0].mxu0
    %5532 = vdwg.mxu0
    %5533 = vmatprep.subr.mxu0 0.0
    %v5534 = vand.u32 %v5445, 4294901760
    %v5535 = vsub.f32 %v5445, %v5534
    %v5536 = vand.u32 %v5535, 4294901760
    %v5537 = vsub.f32 %v5535, %v5536
    %v5538 = vand.u32 %v5537, 4294901760
    %5539 = vmatpush1.msra.mxu0 %v5538
    %5540 = vmatprep.subr.mxu0 0.0
    %v5541 = vand.u32 %v5446, 4294901760
    %v5542 = vsub.f32 %v5446, %v5541
    %v5543 = vand.u32 %v5542, 4294901760
    %v5544 = vsub.f32 %v5542, %v5543
    %v5545 = vand.u32 %v5544, 4294901760
    %5546 = vmatpush1.msra.mxu0 %v5545
    %5547 = vmatprep.subr.mxu0 0.0
    %v5548 = vand.u32 %v5447, 4294901760
    %v5549 = vsub.f32 %v5447, %v5548
    %v5550 = vand.u32 %v5549, 4294901760
    %v5551 = vsub.f32 %v5549, %v5550
    %v5552 = vand.u32 %v5551, 4294901760
    %5553 = vmatpush1.msra.mxu0 %v5552
    %5554 = vmatprep.subr.mxu0 0.0
    %v5555 = vand.u32 %v5448, 4294901760
    %v5556 = vsub.f32 %v5448, %v5555
    %v5557 = vand.u32 %v5556, 4294901760
    %v5558 = vsub.f32 %v5556, %v5557
    %v5559 = vand.u32 %v5558, 4294901760
    %5560 = vmatpush1.msra.mxu0 %v5559
    %5561 = vmatprep.subr.mxu0 0.0
    %5562 = vmatpush1.msra.mxu0 0.0
    %5563 = vmatprep.subr.mxu0 0.0
    %5564 = vmatpush1.msra.mxu0 0.0
    %5565 = vmatprep.subr.mxu0 0.0
    %5566 = vmatpush1.msra.mxu0 0.0
    %5567 = vmatprep.subr.mxu0 0.0
    %5568 = vmatpush1.msra.mxu0 0.0
    %5569 = vmatprep.subr.mxu0 0.0
    %5570 = vmatpush1.msra.mxu0 0.0
    %5571 = vmatprep.subr.mxu0 0.0
    %5572 = vmatpush1.msra.mxu0 0.0
    %5573 = vmatprep.subr.mxu0 0.0
    %5574 = vmatpush1.msra.mxu0 0.0
    %5575 = vmatprep.subr.mxu0 0.0
    %5576 = vmatpush1.msra.mxu0 0.0
    %5577 = vmatprep.subr.mxu0 0.0
    %5578 = vmatpush1.msra.mxu0 0.0
    %5579 = vmatprep.subr.mxu0 0.0
    %5580 = vmatpush1.msra.mxu0 0.0
    %5581 = vmatprep.subr.mxu0 0.0
    %5582 = vmatpush1.msra.mxu0 0.0
    %5583 = vmatprep.subr.mxu0 0.0
    %5584 = vmatpush1.msra.mxu0 0.0
    %5585 = vmatprep.subr.mxu0 0.0
    %5586 = vmatpush1.msra.mxu0 0.0
    %5587 = vmatprep.subr.mxu0 0.0
    %5588 = vmatpush1.msra.mxu0 0.0
    %5589 = vmatprep.subr.mxu0 0.0
    %5590 = vmatpush1.msra.mxu0 0.0
    %5591 = vmatprep.subr.mxu0 0.0
    %5592 = vmatpush1.msra.mxu0 0.0
    %5593 = vmatprep.subr.mxu0 0.0
    %5594 = vmatpush1.msra.mxu0 0.0
    %5595 = vmatprep.subr.mxu0 0.0
    %5596 = vmatpush1.msra.mxu0 0.0
    %5597 = vmatprep.subr.mxu0 0.0
    %5598 = vmatpush1.msra.mxu0 0.0
    %5599 = vmatprep.subr.mxu0 0.0
    %5600 = vmatpush1.msra.mxu0 0.0
    %5601 = vmatprep.subr.mxu0 0.0
    %5602 = vmatpush1.msra.mxu0 0.0
    %5603 = vmatprep.subr.mxu0 0.0
    %5604 = vmatpush1.msra.mxu0 0.0
    %5605 = vmatprep.subr.mxu0 0.0
    %5606 = vmatpush1.msra.mxu0 0.0
    %5607 = vmatprep.subr.mxu0 0.0
    %5608 = vmatpush1.msra.mxu0 0.0
    %5609 = vmatprep.subr.mxu0 0.0
    %5610 = vmatpush1.msra.mxu0 0.0
    %5611 = vmatprep.subr.mxu0 0.0
    %5612 = vmatpush1.msra.mxu0 0.0
    %5613 = vmatprep.subr.mxu0 0.0
    %5614 = vmatpush1.msra.mxu0 0.0
    %5615 = vmatprep.subr.mxu0 0.0
    %5616 = vmatpush1.msra.mxu0 0.0
    %5617 = vmatprep.mubr.f32.mxu0 0.0
    %v5618 = vand.u32 %v5452, 4294901760
    %5619 = vmatmul.mubr.f32.gmra.mrb[0].mxu0 %v5618
    %v5620 = vpop.f32.mrb[0].mxu0
    %v5621 = vadd.f32 %v5530, %v5620
    %v5622 = vpop.f32.mrb[0].mxu0
    %5623 = vdwg.mxu0
    %5624 = vmatprep.subr.mxu0 0.0
    %v5625 = vand.u32 %v5445, 4294901760
    %v5626 = vsub.f32 %v5445, %v5625
    %5627 = vmatpush1.msra.mxu0 %v5626
    %5628 = vmatprep.subr.mxu0 0.0
    %v5629 = vand.u32 %v5446, 4294901760
    %v5630 = vsub.f32 %v5446, %v5629
    %5631 = vmatpush1.msra.mxu0 %v5630
    %5632 = vmatprep.subr.mxu0 0.0
    %v5633 = vand.u32 %v5447, 4294901760
    %v5634 = vsub.f32 %v5447, %v5633
    %5635 = vmatpush1.msra.mxu0 %v5634
    %5636 = vmatprep.subr.mxu0 0.0
    %v5637 = vand.u32 %v5448, 4294901760
    %v5638 = vsub.f32 %v5448, %v5637
    %5639 = vmatpush1.msra.mxu0 %v5638
    %5640 = vmatprep.subr.mxu0 0.0
    %5641 = vmatpush1.msra.mxu0 0.0
    %5642 = vmatprep.subr.mxu0 0.0
    %5643 = vmatpush1.msra.mxu0 0.0
    %5644 = vmatprep.subr.mxu0 0.0
    %5645 = vmatpush1.msra.mxu0 0.0
    %5646 = vmatprep.subr.mxu0 0.0
    %5647 = vmatpush1.msra.mxu0 0.0
    %5648 = vmatprep.subr.mxu0 0.0
    %5649 = vmatpush1.msra.mxu0 0.0
    %5650 = vmatprep.subr.mxu0 0.0
    %5651 = vmatpush1.msra.mxu0 0.0
    %5652 = vmatprep.subr.mxu0 0.0
    %5653 = vmatpush1.msra.mxu0 0.0
    %5654 = vmatprep.subr.mxu0 0.0
    %5655 = vmatpush1.msra.mxu0 0.0
    %5656 = vmatprep.subr.mxu0 0.0
    %5657 = vmatpush1.msra.mxu0 0.0
    %5658 = vmatprep.subr.mxu0 0.0
    %5659 = vmatpush1.msra.mxu0 0.0
    %5660 = vmatprep.subr.mxu0 0.0
    %5661 = vmatpush1.msra.mxu0 0.0
    %5662 = vmatprep.subr.mxu0 0.0
    %5663 = vmatpush1.msra.mxu0 0.0
    %5664 = vmatprep.subr.mxu0 0.0
    %5665 = vmatpush1.msra.mxu0 0.0
    %5666 = vmatprep.subr.mxu0 0.0
    %5667 = vmatpush1.msra.mxu0 0.0
    %5668 = vmatprep.subr.mxu0 0.0
    %5669 = vmatpush1.msra.mxu0 0.0
    %5670 = vmatprep.subr.mxu0 0.0
    %5671 = vmatpush1.msra.mxu0 0.0
    %5672 = vmatprep.subr.mxu0 0.0
    %5673 = vmatpush1.msra.mxu0 0.0
    %5674 = vmatprep.subr.mxu0 0.0
    %5675 = vmatpush1.msra.mxu0 0.0
    %5676 = vmatprep.subr.mxu0 0.0
    %5677 = vmatpush1.msra.mxu0 0.0
    %5678 = vmatprep.subr.mxu0 0.0
    %5679 = vmatpush1.msra.mxu0 0.0
    %5680 = vmatprep.subr.mxu0 0.0
    %5681 = vmatpush1.msra.mxu0 0.0
    %5682 = vmatprep.subr.mxu0 0.0
    %5683 = vmatpush1.msra.mxu0 0.0
    %5684 = vmatprep.subr.mxu0 0.0
    %5685 = vmatpush1.msra.mxu0 0.0
    %5686 = vmatprep.subr.mxu0 0.0
    %5687 = vmatpush1.msra.mxu0 0.0
    %5688 = vmatprep.subr.mxu0 0.0
    %5689 = vmatpush1.msra.mxu0 0.0
    %5690 = vmatprep.subr.mxu0 0.0
    %5691 = vmatpush1.msra.mxu0 0.0
    %5692 = vmatprep.subr.mxu0 0.0
    %5693 = vmatpush1.msra.mxu0 0.0
    %5694 = vmatprep.subr.mxu0 0.0
    %5695 = vmatpush1.msra.mxu0 0.0
    %5696 = vmatprep.mubr.f32.mxu0 0.0
    %v5697 = vand.u32 %v5452, 4294901760
    %v5698 = vsub.f32 %v5452, %v5697
    %5699 = vmatmul.mubr.f32.gmra.mrb[0].mxu0 %v5698
    %v5700 = vpop.f32.mrb[0].mxu0
    %v5701 = vadd.f32 %v5621, %v5700
    %v5702 = vpop.f32.mrb[0].mxu0
    %5703 = vdwg.mxu0
    %5704 = vmatprep.subr.mxu0 0.0
    %v5705 = vand.u32 %v5445, 4294901760
    %5706 = vmatpush1.msra.mxu0 %v5705
    %5707 = vmatprep.subr.mxu0 0.0
    %v5708 = vand.u32 %v5446, 4294901760
    %5709 = vmatpush1.msra.mxu0 %v5708
    %5710 = vmatprep.subr.mxu0 0.0
    %v5711 = vand.u32 %v5447, 4294901760
    %5712 = vmatpush1.msra.mxu0 %v5711
    %5713 = vmatprep.subr.mxu0 0.0
    %v5714 = vand.u32 %v5448, 4294901760
    %5715 = vmatpush1.msra.mxu0 %v5714
    %5716 = vmatprep.subr.mxu0 0.0
    %5717 = vmatpush1.msra.mxu0 0.0
    %5718 = vmatprep.subr.mxu0 0.0
    %5719 = vmatpush1.msra.mxu0 0.0
    %5720 = vmatprep.subr.mxu0 0.0
    %5721 = vmatpush1.msra.mxu0 0.0
    %5722 = vmatprep.subr.mxu0 0.0
    %5723 = vmatpush1.msra.mxu0 0.0
    %5724 = vmatprep.subr.mxu0 0.0
    %5725 = vmatpush1.msra.mxu0 0.0
    %5726 = vmatprep.subr.mxu0 0.0
    %5727 = vmatpush1.msra.mxu0 0.0
    %5728 = vmatprep.subr.mxu0 0.0
    %5729 = vmatpush1.msra.mxu0 0.0
    %5730 = vmatprep.subr.mxu0 0.0
    %5731 = vmatpush1.msra.mxu0 0.0
    %5732 = vmatprep.subr.mxu0 0.0
    %5733 = vmatpush1.msra.mxu0 0.0
    %5734 = vmatprep.subr.mxu0 0.0
    %5735 = vmatpush1.msra.mxu0 0.0
    %5736 = vmatprep.subr.mxu0 0.0
    %5737 = vmatpush1.msra.mxu0 0.0
    %5738 = vmatprep.subr.mxu0 0.0
    %5739 = vmatpush1.msra.mxu0 0.0
    %5740 = vmatprep.subr.mxu0 0.0
    %5741 = vmatpush1.msra.mxu0 0.0
    %5742 = vmatprep.subr.mxu0 0.0
    %5743 = vmatpush1.msra.mxu0 0.0
    %5744 = vmatprep.subr.mxu0 0.0
    %5745 = vmatpush1.msra.mxu0 0.0
    %5746 = vmatprep.subr.mxu0 0.0
    %5747 = vmatpush1.msra.mxu0 0.0
    %5748 = vmatprep.subr.mxu0 0.0
    %5749 = vmatpush1.msra.mxu0 0.0
    %5750 = vmatprep.subr.mxu0 0.0
    %5751 = vmatpush1.msra.mxu0 0.0
    %5752 = vmatprep.subr.mxu0 0.0
    %5753 = vmatpush1.msra.mxu0 0.0
    %5754 = vmatprep.subr.mxu0 0.0
    %5755 = vmatpush1.msra.mxu0 0.0
    %5756 = vmatprep.subr.mxu0 0.0
    %5757 = vmatpush1.msra.mxu0 0.0
    %5758 = vmatprep.subr.mxu0 0.0
    %5759 = vmatpush1.msra.mxu0 0.0
    %5760 = vmatprep.subr.mxu0 0.0
    %5761 = vmatpush1.msra.mxu0 0.0
    %5762 = vmatprep.subr.mxu0 0.0
    %5763 = vmatpush1.msra.mxu0 0.0
    %5764 = vmatprep.subr.mxu0 0.0
    %5765 = vmatpush1.msra.mxu0 0.0
    %5766 = vmatprep.subr.mxu0 0.0
    %5767 = vmatpush1.msra.mxu0 0.0
    %5768 = vmatprep.subr.mxu0 0.0
    %5769 = vmatpush1.msra.mxu0 0.0
    %5770 = vmatprep.subr.mxu0 0.0
    %5771 = vmatpush1.msra.mxu0 0.0
    %5772 = vmatprep.mubr.f32.mxu0 0.0
    %v5773 = vand.u32 %v5452, 4294901760
    %v5774 = vsub.f32 %v5452, %v5773
    %v5775 = vand.u32 %v5774, 4294901760
    %5776 = vmatmul.mubr.f32.gmra.mrb[0].mxu0 %v5775
    %v5777 = vpop.f32.mrb[0].mxu0
    %v5778 = vadd.f32 %v5701, %v5777
    %v5779 = vpop.f32.mrb[0].mxu0
    %5780 = vdwg.mxu0
    %5781 = vmatprep.subr.mxu0 0.0
    %v5782 = vand.u32 %v5445, 4294901760
    %v5783 = vsub.f32 %v5445, %v5782
    %v5784 = vand.u32 %v5783, 4294901760
    %5785 = vmatpush1.msra.mxu0 %v5784
    %5786 = vmatprep.subr.mxu0 0.0
    %v5787 = vand.u32 %v5446, 4294901760
    %v5788 = vsub.f32 %v5446, %v5787
    %v5789 = vand.u32 %v5788, 4294901760
    %5790 = vmatpush1.msra.mxu0 %v5789
    %5791 = vmatprep.subr.mxu0 0.0
    %v5792 = vand.u32 %v5447, 4294901760
    %v5793 = vsub.f32 %v5447, %v5792
    %v5794 = vand.u32 %v5793, 4294901760
    %5795 = vmatpush1.msra.mxu0 %v5794
    %5796 = vmatprep.subr.mxu0 0.0
    %v5797 = vand.u32 %v5448, 4294901760
    %v5798 = vsub.f32 %v5448, %v5797
    %v5799 = vand.u32 %v5798, 4294901760
    %5800 = vmatpush1.msra.mxu0 %v5799
    %5801 = vmatprep.subr.mxu0 0.0
    %5802 = vmatpush1.msra.mxu0 0.0
    %5803 = vmatprep.subr.mxu0 0.0
    %5804 = vmatpush1.msra.mxu0 0.0
    %5805 = vmatprep.subr.mxu0 0.0
    %5806 = vmatpush1.msra.mxu0 0.0
    %5807 = vmatprep.subr.mxu0 0.0
    %5808 = vmatpush1.msra.mxu0 0.0
    %5809 = vmatprep.subr.mxu0 0.0
    %5810 = vmatpush1.msra.mxu0 0.0
    %5811 = vmatprep.subr.mxu0 0.0
    %5812 = vmatpush1.msra.mxu0 0.0
    %5813 = vmatprep.subr.mxu0 0.0
    %5814 = vmatpush1.msra.mxu0 0.0
    %5815 = vmatprep.subr.mxu0 0.0
    %5816 = vmatpush1.msra.mxu0 0.0
    %5817 = vmatprep.subr.mxu0 0.0
    %5818 = vmatpush1.msra.mxu0 0.0
    %5819 = vmatprep.subr.mxu0 0.0
    %5820 = vmatpush1.msra.mxu0 0.0
    %5821 = vmatprep.subr.mxu0 0.0
    %5822 = vmatpush1.msra.mxu0 0.0
    %5823 = vmatprep.subr.mxu0 0.0
    %5824 = vmatpush1.msra.mxu0 0.0
    %5825 = vmatprep.subr.mxu0 0.0
    %5826 = vmatpush1.msra.mxu0 0.0
    %5827 = vmatprep.subr.mxu0 0.0
    %5828 = vmatpush1.msra.mxu0 0.0
    %5829 = vmatprep.subr.mxu0 0.0
    %5830 = vmatpush1.msra.mxu0 0.0
    %5831 = vmatprep.subr.mxu0 0.0
    %5832 = vmatpush1.msra.mxu0 0.0
    %5833 = vmatprep.subr.mxu0 0.0
    %5834 = vmatpush1.msra.mxu0 0.0
    %5835 = vmatprep.subr.mxu0 0.0
    %5836 = vmatpush1.msra.mxu0 0.0
    %5837 = vmatprep.subr.mxu0 0.0
    %5838 = vmatpush1.msra.mxu0 0.0
    %5839 = vmatprep.subr.mxu0 0.0
    %5840 = vmatpush1.msra.mxu0 0.0
    %5841 = vmatprep.subr.mxu0 0.0
    %5842 = vmatpush1.msra.mxu0 0.0
    %5843 = vmatprep.subr.mxu0 0.0
    %5844 = vmatpush1.msra.mxu0 0.0
    %5845 = vmatprep.subr.mxu0 0.0
    %5846 = vmatpush1.msra.mxu0 0.0
    %5847 = vmatprep.subr.mxu0 0.0
    %5848 = vmatpush1.msra.mxu0 0.0
    %5849 = vmatprep.subr.mxu0 0.0
    %5850 = vmatpush1.msra.mxu0 0.0
    %5851 = vmatprep.subr.mxu0 0.0
    %5852 = vmatpush1.msra.mxu0 0.0
    %5853 = vmatprep.subr.mxu0 0.0
    %5854 = vmatpush1.msra.mxu0 0.0
    %5855 = vmatprep.subr.mxu0 0.0
    %5856 = vmatpush1.msra.mxu0 0.0
    %5857 = vmatprep.mubr.f32.mxu0 0.0
    %v5858 = vand.u32 %v5452, 4294901760
    %5859 = vmatmul.mubr.f32.gmra.mrb[0].mxu0 %v5858
    %v5860 = vpop.f32.mrb[0].mxu0
    %v5861 = vadd.f32 %v5778, %v5860
    %v5862 = vpop.f32.mrb[0].mxu0
    %5863 = vdwg.mxu0
    %5864 = vmatprep.subr.mxu0 0.0
    %v5865 = vand.u32 %v5445, 4294901760
    %5866 = vmatpush1.msra.mxu0 %v5865
    %5867 = vmatprep.subr.mxu0 0.0
    %v5868 = vand.u32 %v5446, 4294901760
    %5869 = vmatpush1.msra.mxu0 %v5868
    %5870 = vmatprep.subr.mxu0 0.0
    %v5871 = vand.u32 %v5447, 4294901760
    %5872 = vmatpush1.msra.mxu0 %v5871
    %5873 = vmatprep.subr.mxu0 0.0
    %v5874 = vand.u32 %v5448, 4294901760
    %5875 = vmatpush1.msra.mxu0 %v5874
    %5876 = vmatprep.subr.mxu0 0.0
    %5877 = vmatpush1.msra.mxu0 0.0
    %5878 = vmatprep.subr.mxu0 0.0
    %5879 = vmatpush1.msra.mxu0 0.0
    %5880 = vmatprep.subr.mxu0 0.0
    %5881 = vmatpush1.msra.mxu0 0.0
    %5882 = vmatprep.subr.mxu0 0.0
    %5883 = vmatpush1.msra.mxu0 0.0
    %5884 = vmatprep.subr.mxu0 0.0
    %5885 = vmatpush1.msra.mxu0 0.0
    %5886 = vmatprep.subr.mxu0 0.0
    %5887 = vmatpush1.msra.mxu0 0.0
    %5888 = vmatprep.subr.mxu0 0.0
    %5889 = vmatpush1.msra.mxu0 0.0
    %5890 = vmatprep.subr.mxu0 0.0
    %5891 = vmatpush1.msra.mxu0 0.0
    %5892 = vmatprep.subr.mxu0 0.0
    %5893 = vmatpush1.msra.mxu0 0.0
    %5894 = vmatprep.subr.mxu0 0.0
    %5895 = vmatpush1.msra.mxu0 0.0
    %5896 = vmatprep.subr.mxu0 0.0
    %5897 = vmatpush1.msra.mxu0 0.0
    %5898 = vmatprep.subr.mxu0 0.0
    %5899 = vmatpush1.msra.mxu0 0.0
    %5900 = vmatprep.subr.mxu0 0.0
    %5901 = vmatpush1.msra.mxu0 0.0
    %5902 = vmatprep.subr.mxu0 0.0
    %5903 = vmatpush1.msra.mxu0 0.0
    %5904 = vmatprep.subr.mxu0 0.0
    %5905 = vmatpush1.msra.mxu0 0.0
    %5906 = vmatprep.subr.mxu0 0.0
    %5907 = vmatpush1.msra.mxu0 0.0
    %5908 = vmatprep.subr.mxu0 0.0
    %5909 = vmatpush1.msra.mxu0 0.0
    %5910 = vmatprep.subr.mxu0 0.0
    %5911 = vmatpush1.msra.mxu0 0.0
    %5912 = vmatprep.subr.mxu0 0.0
    %5913 = vmatpush1.msra.mxu0 0.0
    %5914 = vmatprep.subr.mxu0 0.0
    %5915 = vmatpush1.msra.mxu0 0.0
    %5916 = vmatprep.subr.mxu0 0.0
    %5917 = vmatpush1.msra.mxu0 0.0
    %5918 = vmatprep.subr.mxu0 0.0
    %5919 = vmatpush1.msra.mxu0 0.0
    %5920 = vmatprep.subr.mxu0 0.0
    %5921 = vmatpush1.msra.mxu0 0.0
    %5922 = vmatprep.subr.mxu0 0.0
    %5923 = vmatpush1.msra.mxu0 0.0
    %5924 = vmatprep.subr.mxu0 0.0
    %5925 = vmatpush1.msra.mxu0 0.0
    %5926 = vmatprep.subr.mxu0 0.0
    %5927 = vmatpush1.msra.mxu0 0.0
    %5928 = vmatprep.subr.mxu0 0.0
    %5929 = vmatpush1.msra.mxu0 0.0
    %5930 = vmatprep.subr.mxu0 0.0
    %5931 = vmatpush1.msra.mxu0 0.0
    %5932 = vmatprep.mubr.f32.mxu0 0.0
    %v5933 = vand.u32 %v5452, 4294901760
    %5934 = vmatmul.mubr.f32.gmra.mrb[0].mxu0 %v5933
    %v5935 = vpop.f32.mrb[0].mxu0
    %v5936 = vadd.f32 %v5861, %v5935
    %v5937 = vpop.f32.mrb[0].mxu0
    %5938 = vdwg.mxu0
    %v5939 = vadd.f32 %v4366, %v5936
    %5941 = vrot.lane.b32.xlu0 %v5423, 32
    %v5942 = vpop.permute.xlu0 %5941
    %v5943 = vsel %vm138, %v5942, 0
    %v5945 = vand.u32 %v30, 4294901760
    %5946 = vmatprep.subr.mxu0 %v5945
    %v5947 = vand.u32 %v29, 4294901760
    %5948 = vmatpush1.msra.mxu0 %v5947
    %v5949 = vand.u32 %v32, 4294901760
    %5950 = vmatprep.subr.mxu0 %v5949
    %v5951 = vand.u32 %v31, 4294901760
    %5952 = vmatpush1.msra.mxu0 %v5951
    %v5953 = vand.u32 %v34, 4294901760
    %5954 = vmatprep.subr.mxu0 %v5953
    %v5955 = vand.u32 %v33, 4294901760
    %5956 = vmatpush1.msra.mxu0 %v5955
    %v5957 = vand.u32 %v36, 4294901760
    %5958 = vmatprep.subr.mxu0 %v5957
    %v5959 = vand.u32 %v35, 4294901760
    %5960 = vmatpush1.msra.mxu0 %v5959
    %5961 = vmatprep.subr.mxu0 0.0
    %5962 = vmatpush1.msra.mxu0 0.0
    %5963 = vmatprep.subr.mxu0 0.0
    %5964 = vmatpush1.msra.mxu0 0.0
    %5965 = vmatprep.subr.mxu0 0.0
    %5966 = vmatpush1.msra.mxu0 0.0
    %5967 = vmatprep.subr.mxu0 0.0
    %5968 = vmatpush1.msra.mxu0 0.0
    %5969 = vmatprep.subr.mxu0 0.0
    %5970 = vmatpush1.msra.mxu0 0.0
    %5971 = vmatprep.subr.mxu0 0.0
    %5972 = vmatpush1.msra.mxu0 0.0
    %5973 = vmatprep.subr.mxu0 0.0
    %5974 = vmatpush1.msra.mxu0 0.0
    %5975 = vmatprep.subr.mxu0 0.0
    %5976 = vmatpush1.msra.mxu0 0.0
    %5977 = vmatprep.subr.mxu0 0.0
    %5978 = vmatpush1.msra.mxu0 0.0
    %5979 = vmatprep.subr.mxu0 0.0
    %5980 = vmatpush1.msra.mxu0 0.0
    %5981 = vmatprep.subr.mxu0 0.0
    %5982 = vmatpush1.msra.mxu0 0.0
    %5983 = vmatprep.subr.mxu0 0.0
    %5984 = vmatpush1.msra.mxu0 0.0
    %5985 = vmatprep.subr.mxu0 0.0
    %5986 = vmatpush1.msra.mxu0 0.0
    %5987 = vmatprep.subr.mxu0 0.0
    %5988 = vmatpush1.msra.mxu0 0.0
    %5989 = vmatprep.subr.mxu0 0.0
    %5990 = vmatpush1.msra.mxu0 0.0
    %5991 = vmatprep.subr.mxu0 0.0
    %5992 = vmatpush1.msra.mxu0 0.0
    %5993 = vmatprep.subr.mxu0 0.0
    %5994 = vmatpush1.msra.mxu0 0.0
    %5995 = vmatprep.subr.mxu0 0.0
    %5996 = vmatpush1.msra.mxu0 0.0
    %5997 = vmatprep.subr.mxu0 0.0
    %5998 = vmatpush1.msra.mxu0 0.0
    %5999 = vmatprep.subr.mxu0 0.0
    %6000 = vmatpush1.msra.mxu0 0.0
    %6001 = vmatprep.subr.mxu0 0.0
    %6002 = vmatpush1.msra.mxu0 0.0
    %6003 = vmatprep.subr.mxu0 0.0
    %6004 = vmatpush1.msra.mxu0 0.0
    %6005 = vmatprep.subr.mxu0 0.0
    %6006 = vmatpush1.msra.mxu0 0.0
    %6007 = vmatprep.subr.mxu0 0.0
    %6008 = vmatpush1.msra.mxu0 0.0
    %6009 = vmatprep.subr.mxu0 0.0
    %6010 = vmatpush1.msra.mxu0 0.0
    %6011 = vmatprep.subr.mxu0 0.0
    %6012 = vmatpush1.msra.mxu0 0.0
    %6013 = vmatprep.subr.mxu0 0.0
    %6014 = vmatpush1.msra.mxu0 0.0
    %6015 = vmatprep.subr.mxu0 0.0
    %6016 = vmatpush1.msra.mxu0 0.0
    %6017 = vmatprep.mubr.f32.mxu0 0.0
    %v6018 = vand.u32 %v5943, 4294901760
    %v6019 = vsub.f32 %v5943, %v6018
    %v6020 = vand.u32 %v6019, 4294901760
    %v6021 = vsub.f32 %v6019, %v6020
    %v6022 = vand.u32 %v6021, 4294901760
    %6023 = vmatmul.mubr.f32.gmra.mrb[0].mxu0 %v6022
    %v6024 = vpop.f32.mrb[0].mxu0
    %v6025 = vadd.f32 0.0, %v6024
    %v6026 = vpop.f32.mrb[0].mxu0
    %v6027 = vadd.f32 0.0, %v6026
    %6028 = vdwg.mxu0
    %v6029 = vand.u32 %v30, 4294901760
    %v6030 = vsub.f32 %v30, %v6029
    %v6031 = vand.u32 %v6030, 4294901760
    %v6032 = vsub.f32 %v6030, %v6031
    %v6033 = vand.u32 %v6032, 4294901760
    %6034 = vmatprep.subr.mxu0 %v6033
    %v6035 = vand.u32 %v29, 4294901760
    %v6036 = vsub.f32 %v29, %v6035
    %v6037 = vand.u32 %v6036, 4294901760
    %v6038 = vsub.f32 %v6036, %v6037
    %v6039 = vand.u32 %v6038, 4294901760
    %6040 = vmatpush1.msra.mxu0 %v6039
    %v6041 = vand.u32 %v32, 4294901760
    %v6042 = vsub.f32 %v32, %v6041
    %v6043 = vand.u32 %v6042, 4294901760
    %v6044 = vsub.f32 %v6042, %v6043
    %v6045 = vand.u32 %v6044, 4294901760
    %6046 = vmatprep.subr.mxu0 %v6045
    %v6047 = vand.u32 %v31, 4294901760
    %v6048 = vsub.f32 %v31, %v6047
    %v6049 = vand.u32 %v6048, 4294901760
    %v6050 = vsub.f32 %v6048, %v6049
    %v6051 = vand.u32 %v6050, 4294901760
    %6052 = vmatpush1.msra.mxu0 %v6051
    %v6053 = vand.u32 %v34, 4294901760
    %v6054 = vsub.f32 %v34, %v6053
    %v6055 = vand.u32 %v6054, 4294901760
    %v6056 = vsub.f32 %v6054, %v6055
    %v6057 = vand.u32 %v6056, 4294901760
    %6058 = vmatprep.subr.mxu0 %v6057
    %v6059 = vand.u32 %v33, 4294901760
    %v6060 = vsub.f32 %v33, %v6059
    %v6061 = vand.u32 %v6060, 4294901760
    %v6062 = vsub.f32 %v6060, %v6061
    %v6063 = vand.u32 %v6062, 4294901760
    %6064 = vmatpush1.msra.mxu0 %v6063
    %v6065 = vand.u32 %v36, 4294901760
    %v6066 = vsub.f32 %v36, %v6065
    %v6067 = vand.u32 %v6066, 4294901760
    %v6068 = vsub.f32 %v6066, %v6067
    %v6069 = vand.u32 %v6068, 4294901760
    %6070 = vmatprep.subr.mxu0 %v6069
    %v6071 = vand.u32 %v35, 4294901760
    %v6072 = vsub.f32 %v35, %v6071
    %v6073 = vand.u32 %v6072, 4294901760
    %v6074 = vsub.f32 %v6072, %v6073
    %v6075 = vand.u32 %v6074, 4294901760
    %6076 = vmatpush1.msra.mxu0 %v6075
    %6077 = vmatprep.subr.mxu0 0.0
    %6078 = vmatpush1.msra.mxu0 0.0
    %6079 = vmatprep.subr.mxu0 0.0
    %6080 = vmatpush1.msra.mxu0 0.0
    %6081 = vmatprep.subr.mxu0 0.0
    %6082 = vmatpush1.msra.mxu0 0.0
    %6083 = vmatprep.subr.mxu0 0.0
    %6084 = vmatpush1.msra.mxu0 0.0
    %6085 = vmatprep.subr.mxu0 0.0
    %6086 = vmatpush1.msra.mxu0 0.0
    %6087 = vmatprep.subr.mxu0 0.0
    %6088 = vmatpush1.msra.mxu0 0.0
    %6089 = vmatprep.subr.mxu0 0.0
    %6090 = vmatpush1.msra.mxu0 0.0
    %6091 = vmatprep.subr.mxu0 0.0
    %6092 = vmatpush1.msra.mxu0 0.0
    %6093 = vmatprep.subr.mxu0 0.0
    %6094 = vmatpush1.msra.mxu0 0.0
    %6095 = vmatprep.subr.mxu0 0.0
    %6096 = vmatpush1.msra.mxu0 0.0
    %6097 = vmatprep.subr.mxu0 0.0
    %6098 = vmatpush1.msra.mxu0 0.0
    %6099 = vmatprep.subr.mxu0 0.0
    %6100 = vmatpush1.msra.mxu0 0.0
    %6101 = vmatprep.subr.mxu0 0.0
    %6102 = vmatpush1.msra.mxu0 0.0
    %6103 = vmatprep.subr.mxu0 0.0
    %6104 = vmatpush1.msra.mxu0 0.0
    %6105 = vmatprep.subr.mxu0 0.0
    %6106 = vmatpush1.msra.mxu0 0.0
    %6107 = vmatprep.subr.mxu0 0.0
    %6108 = vmatpush1.msra.mxu0 0.0
    %6109 = vmatprep.subr.mxu0 0.0
    %6110 = vmatpush1.msra.mxu0 0.0
    %6111 = vmatprep.subr.mxu0 0.0
    %6112 = vmatpush1.msra.mxu0 0.0
    %6113 = vmatprep.subr.mxu0 0.0
    %6114 = vmatpush1.msra.mxu0 0.0
    %6115 = vmatprep.subr.mxu0 0.0
    %6116 = vmatpush1.msra.mxu0 0.0
    %6117 = vmatprep.subr.mxu0 0.0
    %6118 = vmatpush1.msra.mxu0 0.0
    %6119 = vmatprep.subr.mxu0 0.0
    %6120 = vmatpush1.msra.mxu0 0.0
    %6121 = vmatprep.subr.mxu0 0.0
    %6122 = vmatpush1.msra.mxu0 0.0
    %6123 = vmatprep.subr.mxu0 0.0
    %6124 = vmatpush1.msra.mxu0 0.0
    %6125 = vmatprep.subr.mxu0 0.0
    %6126 = vmatpush1.msra.mxu0 0.0
    %6127 = vmatprep.subr.mxu0 0.0
    %6128 = vmatpush1.msra.mxu0 0.0
    %6129 = vmatprep.subr.mxu0 0.0
    %6130 = vmatpush1.msra.mxu0 0.0
    %6131 = vmatprep.subr.mxu0 0.0
    %6132 = vmatpush1.msra.mxu0 0.0
    %6133 = vmatprep.mubr.f32.mxu0 0.0
    %v6134 = vand.u32 %v5943, 4294901760
    %6135 = vmatmul.mubr.f32.gmra.mrb[0].mxu0 %v6134
    %v6136 = vpop.f32.mrb[0].mxu0
    %v6137 = vadd.f32 %v6025, %v6136
    %v6138 = vpop.f32.mrb[0].mxu0
    %v6139 = vadd.f32 %v6027, %v6138
    %6140 = vdwg.mxu0
    %v6141 = vand.u32 %v30, 4294901760
    %v6142 = vsub.f32 %v30, %v6141
    %6143 = vmatprep.subr.mxu0 %v6142
    %v6144 = vand.u32 %v29, 4294901760
    %v6145 = vsub.f32 %v29, %v6144
    %6146 = vmatpush1.msra.mxu0 %v6145
    %v6147 = vand.u32 %v32, 4294901760
    %v6148 = vsub.f32 %v32, %v6147
    %6149 = vmatprep.subr.mxu0 %v6148
    %v6150 = vand.u32 %v31, 4294901760
    %v6151 = vsub.f32 %v31, %v6150
    %6152 = vmatpush1.msra.mxu0 %v6151
    %v6153 = vand.u32 %v34, 4294901760
    %v6154 = vsub.f32 %v34, %v6153
    %6155 = vmatprep.subr.mxu0 %v6154
    %v6156 = vand.u32 %v33, 4294901760
    %v6157 = vsub.f32 %v33, %v6156
    %6158 = vmatpush1.msra.mxu0 %v6157
    %v6159 = vand.u32 %v36, 4294901760
    %v6160 = vsub.f32 %v36, %v6159
    %6161 = vmatprep.subr.mxu0 %v6160
    %v6162 = vand.u32 %v35, 4294901760
    %v6163 = vsub.f32 %v35, %v6162
    %6164 = vmatpush1.msra.mxu0 %v6163
    %6165 = vmatprep.subr.mxu0 0.0
    %6166 = vmatpush1.msra.mxu0 0.0
    %6167 = vmatprep.subr.mxu0 0.0
    %6168 = vmatpush1.msra.mxu0 0.0
    %6169 = vmatprep.subr.mxu0 0.0
    %6170 = vmatpush1.msra.mxu0 0.0
    %6171 = vmatprep.subr.mxu0 0.0
    %6172 = vmatpush1.msra.mxu0 0.0
    %6173 = vmatprep.subr.mxu0 0.0
    %6174 = vmatpush1.msra.mxu0 0.0
    %6175 = vmatprep.subr.mxu0 0.0
    %6176 = vmatpush1.msra.mxu0 0.0
    %6177 = vmatprep.subr.mxu0 0.0
    %6178 = vmatpush1.msra.mxu0 0.0
    %6179 = vmatprep.subr.mxu0 0.0
    %6180 = vmatpush1.msra.mxu0 0.0
    %6181 = vmatprep.subr.mxu0 0.0
    %6182 = vmatpush1.msra.mxu0 0.0
    %6183 = vmatprep.subr.mxu0 0.0
    %6184 = vmatpush1.msra.mxu0 0.0
    %6185 = vmatprep.subr.mxu0 0.0
    %6186 = vmatpush1.msra.mxu0 0.0
    %6187 = vmatprep.subr.mxu0 0.0
    %6188 = vmatpush1.msra.mxu0 0.0
    %6189 = vmatprep.subr.mxu0 0.0
    %6190 = vmatpush1.msra.mxu0 0.0
    %6191 = vmatprep.subr.mxu0 0.0
    %6192 = vmatpush1.msra.mxu0 0.0
    %6193 = vmatprep.subr.mxu0 0.0
    %6194 = vmatpush1.msra.mxu0 0.0
    %6195 = vmatprep.subr.mxu0 0.0
    %6196 = vmatpush1.msra.mxu0 0.0
    %6197 = vmatprep.subr.mxu0 0.0
    %6198 = vmatpush1.msra.mxu0 0.0
    %6199 = vmatprep.subr.mxu0 0.0
    %6200 = vmatpush1.msra.mxu0 0.0
    %6201 = vmatprep.subr.mxu0 0.0
    %6202 = vmatpush1.msra.mxu0 0.0
    %6203 = vmatprep.subr.mxu0 0.0
    %6204 = vmatpush1.msra.mxu0 0.0
    %6205 = vmatprep.subr.mxu0 0.0
    %6206 = vmatpush1.msra.mxu0 0.0
    %6207 = vmatprep.subr.mxu0 0.0
    %6208 = vmatpush1.msra.mxu0 0.0
    %6209 = vmatprep.subr.mxu0 0.0
    %6210 = vmatpush1.msra.mxu0 0.0
    %6211 = vmatprep.subr.mxu0 0.0
    %6212 = vmatpush1.msra.mxu0 0.0
    %6213 = vmatprep.subr.mxu0 0.0
    %6214 = vmatpush1.msra.mxu0 0.0
    %6215 = vmatprep.subr.mxu0 0.0
    %6216 = vmatpush1.msra.mxu0 0.0
    %6217 = vmatprep.subr.mxu0 0.0
    %6218 = vmatpush1.msra.mxu0 0.0
    %6219 = vmatprep.subr.mxu0 0.0
    %6220 = vmatpush1.msra.mxu0 0.0
    %6221 = vmatprep.mubr.f32.mxu0 0.0
    %v6222 = vand.u32 %v5943, 4294901760
    %v6223 = vsub.f32 %v5943, %v6222
    %6224 = vmatmul.mubr.f32.gmra.mrb[0].mxu0 %v6223
    %v6225 = vpop.f32.mrb[0].mxu0
    %v6226 = vadd.f32 %v6137, %v6225
    %v6227 = vpop.f32.mrb[0].mxu0
    %v6228 = vadd.f32 %v6139, %v6227
    %6229 = vdwg.mxu0
    %v6230 = vand.u32 %v30, 4294901760
    %6231 = vmatprep.subr.mxu0 %v6230
    %v6232 = vand.u32 %v29, 4294901760
    %6233 = vmatpush1.msra.mxu0 %v6232
    %v6234 = vand.u32 %v32, 4294901760
    %6235 = vmatprep.subr.mxu0 %v6234
    %v6236 = vand.u32 %v31, 4294901760
    %6237 = vmatpush1.msra.mxu0 %v6236
    %v6238 = vand.u32 %v34, 4294901760
    %6239 = vmatprep.subr.mxu0 %v6238
    %v6240 = vand.u32 %v33, 4294901760
    %6241 = vmatpush1.msra.mxu0 %v6240
    %v6242 = vand.u32 %v36, 4294901760
    %6243 = vmatprep.subr.mxu0 %v6242
    %v6244 = vand.u32 %v35, 4294901760
    %6245 = vmatpush1.msra.mxu0 %v6244
    %6246 = vmatprep.subr.mxu0 0.0
    %6247 = vmatpush1.msra.mxu0 0.0
    %6248 = vmatprep.subr.mxu0 0.0
    %6249 = vmatpush1.msra.mxu0 0.0
    %6250 = vmatprep.subr.mxu0 0.0
    %6251 = vmatpush1.msra.mxu0 0.0
    %6252 = vmatprep.subr.mxu0 0.0
    %6253 = vmatpush1.msra.mxu0 0.0
    %6254 = vmatprep.subr.mxu0 0.0
    %6255 = vmatpush1.msra.mxu0 0.0
    %6256 = vmatprep.subr.mxu0 0.0
    %6257 = vmatpush1.msra.mxu0 0.0
    %6258 = vmatprep.subr.mxu0 0.0
    %6259 = vmatpush1.msra.mxu0 0.0
    %6260 = vmatprep.subr.mxu0 0.0
    %6261 = vmatpush1.msra.mxu0 0.0
    %6262 = vmatprep.subr.mxu0 0.0
    %6263 = vmatpush1.msra.mxu0 0.0
    %6264 = vmatprep.subr.mxu0 0.0
    %6265 = vmatpush1.msra.mxu0 0.0
    %6266 = vmatprep.subr.mxu0 0.0
    %6267 = vmatpush1.msra.mxu0 0.0
    %6268 = vmatprep.subr.mxu0 0.0
    %6269 = vmatpush1.msra.mxu0 0.0
    %6270 = vmatprep.subr.mxu0 0.0
    %6271 = vmatpush1.msra.mxu0 0.0
    %6272 = vmatprep.subr.mxu0 0.0
    %6273 = vmatpush1.msra.mxu0 0.0
    %6274 = vmatprep.subr.mxu0 0.0
    %6275 = vmatpush1.msra.mxu0 0.0
    %6276 = vmatprep.subr.mxu0 0.0
    %6277 = vmatpush1.msra.mxu0 0.0
    %6278 = vmatprep.subr.mxu0 0.0
    %6279 = vmatpush1.msra.mxu0 0.0
    %6280 = vmatprep.subr.mxu0 0.0
    %6281 = vmatpush1.msra.mxu0 0.0
    %6282 = vmatprep.subr.mxu0 0.0
    %6283 = vmatpush1.msra.mxu0 0.0
    %6284 = vmatprep.subr.mxu0 0.0
    %6285 = vmatpush1.msra.mxu0 0.0
    %6286 = vmatprep.subr.mxu0 0.0
    %6287 = vmatpush1.msra.mxu0 0.0
    %6288 = vmatprep.subr.mxu0 0.0
    %6289 = vmatpush1.msra.mxu0 0.0
    %6290 = vmatprep.subr.mxu0 0.0
    %6291 = vmatpush1.msra.mxu0 0.0
    %6292 = vmatprep.subr.mxu0 0.0
    %6293 = vmatpush1.msra.mxu0 0.0
    %6294 = vmatprep.subr.mxu0 0.0
    %6295 = vmatpush1.msra.mxu0 0.0
    %6296 = vmatprep.subr.mxu0 0.0
    %6297 = vmatpush1.msra.mxu0 0.0
    %6298 = vmatprep.subr.mxu0 0.0
    %6299 = vmatpush1.msra.mxu0 0.0
    %6300 = vmatprep.subr.mxu0 0.0
    %6301 = vmatpush1.msra.mxu0 0.0
    %6302 = vmatprep.mubr.f32.mxu0 0.0
    %v6303 = vand.u32 %v5943, 4294901760
    %v6304 = vsub.f32 %v5943, %v6303
    %v6305 = vand.u32 %v6304, 4294901760
    %6306 = vmatmul.mubr.f32.gmra.mrb[0].mxu0 %v6305
    %v6307 = vpop.f32.mrb[0].mxu0
    %v6308 = vadd.f32 %v6226, %v6307
    %v6309 = vpop.f32.mrb[0].mxu0
    %v6310 = vadd.f32 %v6228, %v6309
    %6311 = vdwg.mxu0
    %v6312 = vand.u32 %v30, 4294901760
    %v6313 = vsub.f32 %v30, %v6312
    %v6314 = vand.u32 %v6313, 4294901760
    %6315 = vmatprep.subr.mxu0 %v6314
    %v6316 = vand.u32 %v29, 4294901760
    %v6317 = vsub.f32 %v29, %v6316
    %v6318 = vand.u32 %v6317, 4294901760
    %6319 = vmatpush1.msra.mxu0 %v6318
    %v6320 = vand.u32 %v32, 4294901760
    %v6321 = vsub.f32 %v32, %v6320
    %v6322 = vand.u32 %v6321, 4294901760
    %6323 = vmatprep.subr.mxu0 %v6322
    %v6324 = vand.u32 %v31, 4294901760
    %v6325 = vsub.f32 %v31, %v6324
    %v6326 = vand.u32 %v6325, 4294901760
    %6327 = vmatpush1.msra.mxu0 %v6326
    %v6328 = vand.u32 %v34, 4294901760
    %v6329 = vsub.f32 %v34, %v6328
    %v6330 = vand.u32 %v6329, 4294901760
    %6331 = vmatprep.subr.mxu0 %v6330
    %v6332 = vand.u32 %v33, 4294901760
    %v6333 = vsub.f32 %v33, %v6332
    %v6334 = vand.u32 %v6333, 4294901760
    %6335 = vmatpush1.msra.mxu0 %v6334
    %v6336 = vand.u32 %v36, 4294901760
    %v6337 = vsub.f32 %v36, %v6336
    %v6338 = vand.u32 %v6337, 4294901760
    %6339 = vmatprep.subr.mxu0 %v6338
    %v6340 = vand.u32 %v35, 4294901760
    %v6341 = vsub.f32 %v35, %v6340
    %v6342 = vand.u32 %v6341, 4294901760
    %6343 = vmatpush1.msra.mxu0 %v6342
    %6344 = vmatprep.subr.mxu0 0.0
    %6345 = vmatpush1.msra.mxu0 0.0
    %6346 = vmatprep.subr.mxu0 0.0
    %6347 = vmatpush1.msra.mxu0 0.0
    %6348 = vmatprep.subr.mxu0 0.0
    %6349 = vmatpush1.msra.mxu0 0.0
    %6350 = vmatprep.subr.mxu0 0.0
    %6351 = vmatpush1.msra.mxu0 0.0
    %6352 = vmatprep.subr.mxu0 0.0
    %6353 = vmatpush1.msra.mxu0 0.0
    %6354 = vmatprep.subr.mxu0 0.0
    %6355 = vmatpush1.msra.mxu0 0.0
    %6356 = vmatprep.subr.mxu0 0.0
    %6357 = vmatpush1.msra.mxu0 0.0
    %6358 = vmatprep.subr.mxu0 0.0
    %6359 = vmatpush1.msra.mxu0 0.0
    %6360 = vmatprep.subr.mxu0 0.0
    %6361 = vmatpush1.msra.mxu0 0.0
    %6362 = vmatprep.subr.mxu0 0.0
    %6363 = vmatpush1.msra.mxu0 0.0
    %6364 = vmatprep.subr.mxu0 0.0
    %6365 = vmatpush1.msra.mxu0 0.0
    %6366 = vmatprep.subr.mxu0 0.0
    %6367 = vmatpush1.msra.mxu0 0.0
    %6368 = vmatprep.subr.mxu0 0.0
    %6369 = vmatpush1.msra.mxu0 0.0
    %6370 = vmatprep.subr.mxu0 0.0
    %6371 = vmatpush1.msra.mxu0 0.0
    %6372 = vmatprep.subr.mxu0 0.0
    %6373 = vmatpush1.msra.mxu0 0.0
    %6374 = vmatprep.subr.mxu0 0.0
    %6375 = vmatpush1.msra.mxu0 0.0
    %6376 = vmatprep.subr.mxu0 0.0
    %6377 = vmatpush1.msra.mxu0 0.0
    %6378 = vmatprep.subr.mxu0 0.0
    %6379 = vmatpush1.msra.mxu0 0.0
    %6380 = vmatprep.subr.mxu0 0.0
    %6381 = vmatpush1.msra.mxu0 0.0
    %6382 = vmatprep.subr.mxu0 0.0
    %6383 = vmatpush1.msra.mxu0 0.0
    %6384 = vmatprep.subr.mxu0 0.0
    %6385 = vmatpush1.msra.mxu0 0.0
    %6386 = vmatprep.subr.mxu0 0.0
    %6387 = vmatpush1.msra.mxu0 0.0
    %6388 = vmatprep.subr.mxu0 0.0
    %6389 = vmatpush1.msra.mxu0 0.0
    %6390 = vmatprep.subr.mxu0 0.0
    %6391 = vmatpush1.msra.mxu0 0.0
    %6392 = vmatprep.subr.mxu0 0.0
    %6393 = vmatpush1.msra.mxu0 0.0
    %6394 = vmatprep.subr.mxu0 0.0
    %6395 = vmatpush1.msra.mxu0 0.0
    %6396 = vmatprep.subr.mxu0 0.0
    %6397 = vmatpush1.msra.mxu0 0.0
    %6398 = vmatprep.subr.mxu0 0.0
    %6399 = vmatpush1.msra.mxu0 0.0
    %6400 = vmatprep.mubr.f32.mxu0 0.0
    %v6401 = vand.u32 %v5943, 4294901760
    %6402 = vmatmul.mubr.f32.gmra.mrb[0].mxu0 %v6401
    %v6403 = vpop.f32.mrb[0].mxu0
    %v6404 = vadd.f32 %v6308, %v6403
    %v6405 = vpop.f32.mrb[0].mxu0
    %v6406 = vadd.f32 %v6310, %v6405
    %6407 = vdwg.mxu0
    %v6408 = vand.u32 %v30, 4294901760
    %6409 = vmatprep.subr.mxu0 %v6408
    %v6410 = vand.u32 %v29, 4294901760
    %6411 = vmatpush1.msra.mxu0 %v6410
    %v6412 = vand.u32 %v32, 4294901760
    %6413 = vmatprep.subr.mxu0 %v6412
    %v6414 = vand.u32 %v31, 4294901760
    %6415 = vmatpush1.msra.mxu0 %v6414
    %v6416 = vand.u32 %v34, 4294901760
    %6417 = vmatprep.subr.mxu0 %v6416
    %v6418 = vand.u32 %v33, 4294901760
    %6419 = vmatpush1.msra.mxu0 %v6418
    %v6420 = vand.u32 %v36, 4294901760
    %6421 = vmatprep.subr.mxu0 %v6420
    %v6422 = vand.u32 %v35, 4294901760
    %6423 = vmatpush1.msra.mxu0 %v6422
    %6424 = vmatprep.subr.mxu0 0.0
    %6425 = vmatpush1.msra.mxu0 0.0
    %6426 = vmatprep.subr.mxu0 0.0
    %6427 = vmatpush1.msra.mxu0 0.0
    %6428 = vmatprep.subr.mxu0 0.0
    %6429 = vmatpush1.msra.mxu0 0.0
    %6430 = vmatprep.subr.mxu0 0.0
    %6431 = vmatpush1.msra.mxu0 0.0
    %6432 = vmatprep.subr.mxu0 0.0
    %6433 = vmatpush1.msra.mxu0 0.0
    %6434 = vmatprep.subr.mxu0 0.0
    %6435 = vmatpush1.msra.mxu0 0.0
    %6436 = vmatprep.subr.mxu0 0.0
    %6437 = vmatpush1.msra.mxu0 0.0
    %6438 = vmatprep.subr.mxu0 0.0
    %6439 = vmatpush1.msra.mxu0 0.0
    %6440 = vmatprep.subr.mxu0 0.0
    %6441 = vmatpush1.msra.mxu0 0.0
    %6442 = vmatprep.subr.mxu0 0.0
    %6443 = vmatpush1.msra.mxu0 0.0
    %6444 = vmatprep.subr.mxu0 0.0
    %6445 = vmatpush1.msra.mxu0 0.0
    %6446 = vmatprep.subr.mxu0 0.0
    %6447 = vmatpush1.msra.mxu0 0.0
    %6448 = vmatprep.subr.mxu0 0.0
    %6449 = vmatpush1.msra.mxu0 0.0
    %6450 = vmatprep.subr.mxu0 0.0
    %6451 = vmatpush1.msra.mxu0 0.0
    %6452 = vmatprep.subr.mxu0 0.0
    %6453 = vmatpush1.msra.mxu0 0.0
    %6454 = vmatprep.subr.mxu0 0.0
    %6455 = vmatpush1.msra.mxu0 0.0
    %6456 = vmatprep.subr.mxu0 0.0
    %6457 = vmatpush1.msra.mxu0 0.0
    %6458 = vmatprep.subr.mxu0 0.0
    %6459 = vmatpush1.msra.mxu0 0.0
    %6460 = vmatprep.subr.mxu0 0.0
    %6461 = vmatpush1.msra.mxu0 0.0
    %6462 = vmatprep.subr.mxu0 0.0
    %6463 = vmatpush1.msra.mxu0 0.0
    %6464 = vmatprep.subr.mxu0 0.0
    %6465 = vmatpush1.msra.mxu0 0.0
    %6466 = vmatprep.subr.mxu0 0.0
    %6467 = vmatpush1.msra.mxu0 0.0
    %6468 = vmatprep.subr.mxu0 0.0
    %6469 = vmatpush1.msra.mxu0 0.0
    %6470 = vmatprep.subr.mxu0 0.0
    %6471 = vmatpush1.msra.mxu0 0.0
    %6472 = vmatprep.subr.mxu0 0.0
    %6473 = vmatpush1.msra.mxu0 0.0
    %6474 = vmatprep.subr.mxu0 0.0
    %6475 = vmatpush1.msra.mxu0 0.0
    %6476 = vmatprep.subr.mxu0 0.0
    %6477 = vmatpush1.msra.mxu0 0.0
    %6478 = vmatprep.subr.mxu0 0.0
    %6479 = vmatpush1.msra.mxu0 0.0
    %6480 = vmatprep.mubr.f32.mxu0 0.0
    %v6481 = vand.u32 %v5943, 4294901760
    %6482 = vmatmul.mubr.f32.gmra.mrb[0].mxu0 %v6481
    %v6483 = vpop.f32.mrb[0].mxu0
    %v6484 = vadd.f32 %v6404, %v6483
    %v6485 = vpop.f32.mrb[0].mxu0
    %v6486 = vadd.f32 %v6406, %v6485
    %6487 = vdwg.mxu0
    %v6488 = vadd.f32 %v106, %v6484
    %v6489 = vadd.f32 %v28, %v6486
    %6490 = vmatprep.subr.mxu0 0.0
    %v6491 = vand.u32 %v18, 4294901760
    %6492 = vmatpush1.msra.mxu0 %v6491
    %6493 = vmatprep.subr.mxu0 0.0
    %v6494 = vand.u32 %v19, 4294901760
    %6495 = vmatpush1.msra.mxu0 %v6494
    %6496 = vmatprep.subr.mxu0 0.0
    %v6497 = vand.u32 %v20, 4294901760
    %6498 = vmatpush1.msra.mxu0 %v6497
    %6499 = vmatprep.subr.mxu0 0.0
    %v6500 = vand.u32 %v21, 4294901760
    %6501 = vmatpush1.msra.mxu0 %v6500
    %6502 = vmatprep.subr.mxu0 0.0
    %6503 = vmatpush1.msra.mxu0 0.0
    %6504 = vmatprep.subr.mxu0 0.0
    %6505 = vmatpush1.msra.mxu0 0.0
    %6506 = vmatprep.subr.mxu0 0.0
    %6507 = vmatpush1.msra.mxu0 0.0
    %6508 = vmatprep.subr.mxu0 0.0
    %6509 = vmatpush1.msra.mxu0 0.0
    %6510 = vmatprep.subr.mxu0 0.0
    %6511 = vmatpush1.msra.mxu0 0.0
    %6512 = vmatprep.subr.mxu0 0.0
    %6513 = vmatpush1.msra.mxu0 0.0
    %6514 = vmatprep.subr.mxu0 0.0
    %6515 = vmatpush1.msra.mxu0 0.0
    %6516 = vmatprep.subr.mxu0 0.0
    %6517 = vmatpush1.msra.mxu0 0.0
    %6518 = vmatprep.subr.mxu0 0.0
    %6519 = vmatpush1.msra.mxu0 0.0
    %6520 = vmatprep.subr.mxu0 0.0
    %6521 = vmatpush1.msra.mxu0 0.0
    %6522 = vmatprep.subr.mxu0 0.0
    %6523 = vmatpush1.msra.mxu0 0.0
    %6524 = vmatprep.subr.mxu0 0.0
    %6525 = vmatpush1.msra.mxu0 0.0
    %6526 = vmatprep.subr.mxu0 0.0
    %6527 = vmatpush1.msra.mxu0 0.0
    %6528 = vmatprep.subr.mxu0 0.0
    %6529 = vmatpush1.msra.mxu0 0.0
    %6530 = vmatprep.subr.mxu0 0.0
    %6531 = vmatpush1.msra.mxu0 0.0
    %6532 = vmatprep.subr.mxu0 0.0
    %6533 = vmatpush1.msra.mxu0 0.0
    %6534 = vmatprep.subr.mxu0 0.0
    %6535 = vmatpush1.msra.mxu0 0.0
    %6536 = vmatprep.subr.mxu0 0.0
    %6537 = vmatpush1.msra.mxu0 0.0
    %6538 = vmatprep.subr.mxu0 0.0
    %6539 = vmatpush1.msra.mxu0 0.0
    %6540 = vmatprep.subr.mxu0 0.0
    %6541 = vmatpush1.msra.mxu0 0.0
    %6542 = vmatprep.subr.mxu0 0.0
    %6543 = vmatpush1.msra.mxu0 0.0
    %6544 = vmatprep.subr.mxu0 0.0
    %6545 = vmatpush1.msra.mxu0 0.0
    %6546 = vmatprep.subr.mxu0 0.0
    %6547 = vmatpush1.msra.mxu0 0.0
    %6548 = vmatprep.subr.mxu0 0.0
    %6549 = vmatpush1.msra.mxu0 0.0
    %6550 = vmatprep.subr.mxu0 0.0
    %6551 = vmatpush1.msra.mxu0 0.0
    %6552 = vmatprep.subr.mxu0 0.0
    %6553 = vmatpush1.msra.mxu0 0.0
    %6554 = vmatprep.subr.mxu0 0.0
    %6555 = vmatpush1.msra.mxu0 0.0
    %6556 = vmatprep.subr.mxu0 0.0
    %6557 = vmatpush1.msra.mxu0 0.0
    %6558 = vmatprep.mubr.f32.mxu0 0.0
    %v6559 = vand.u32 %v5452, 4294901760
    %v6560 = vsub.f32 %v5452, %v6559
    %v6561 = vand.u32 %v6560, 4294901760
    %v6562 = vsub.f32 %v6560, %v6561
    %v6563 = vand.u32 %v6562, 4294901760
    %6564 = vmatmul.mubr.f32.gmra.mrb[0].mxu0 %v6563
    %v6565 = vpop.f32.mrb[0].mxu0
    %v6566 = vadd.f32 0.0, %v6565
    %v6567 = vpop.f32.mrb[0].mxu0
    %6568 = vdwg.mxu0
    %6569 = vmatprep.subr.mxu0 0.0
    %v6570 = vand.u32 %v18, 4294901760
    %v6571 = vsub.f32 %v18, %v6570
    %v6572 = vand.u32 %v6571, 4294901760
    %v6573 = vsub.f32 %v6571, %v6572
    %v6574 = vand.u32 %v6573, 4294901760
    %6575 = vmatpush1.msra.mxu0 %v6574
    %6576 = vmatprep.subr.mxu0 0.0
    %v6577 = vand.u32 %v19, 4294901760
    %v6578 = vsub.f32 %v19, %v6577
    %v6579 = vand.u32 %v6578, 4294901760
    %v6580 = vsub.f32 %v6578, %v6579
    %v6581 = vand.u32 %v6580, 4294901760
    %6582 = vmatpush1.msra.mxu0 %v6581
    %6583 = vmatprep.subr.mxu0 0.0
    %v6584 = vand.u32 %v20, 4294901760
    %v6585 = vsub.f32 %v20, %v6584
    %v6586 = vand.u32 %v6585, 4294901760
    %v6587 = vsub.f32 %v6585, %v6586
    %v6588 = vand.u32 %v6587, 4294901760
    %6589 = vmatpush1.msra.mxu0 %v6588
    %6590 = vmatprep.subr.mxu0 0.0
    %v6591 = vand.u32 %v21, 4294901760
    %v6592 = vsub.f32 %v21, %v6591
    %v6593 = vand.u32 %v6592, 4294901760
    %v6594 = vsub.f32 %v6592, %v6593
    %v6595 = vand.u32 %v6594, 4294901760
    %6596 = vmatpush1.msra.mxu0 %v6595
    %6597 = vmatprep.subr.mxu0 0.0
    %6598 = vmatpush1.msra.mxu0 0.0
    %6599 = vmatprep.subr.mxu0 0.0
    %6600 = vmatpush1.msra.mxu0 0.0
    %6601 = vmatprep.subr.mxu0 0.0
    %6602 = vmatpush1.msra.mxu0 0.0
    %6603 = vmatprep.subr.mxu0 0.0
    %6604 = vmatpush1.msra.mxu0 0.0
    %6605 = vmatprep.subr.mxu0 0.0
    %6606 = vmatpush1.msra.mxu0 0.0
    %6607 = vmatprep.subr.mxu0 0.0
    %6608 = vmatpush1.msra.mxu0 0.0
    %6609 = vmatprep.subr.mxu0 0.0
    %6610 = vmatpush1.msra.mxu0 0.0
    %6611 = vmatprep.subr.mxu0 0.0
    %6612 = vmatpush1.msra.mxu0 0.0
    %6613 = vmatprep.subr.mxu0 0.0
    %6614 = vmatpush1.msra.mxu0 0.0
    %6615 = vmatprep.subr.mxu0 0.0
    %6616 = vmatpush1.msra.mxu0 0.0
    %6617 = vmatprep.subr.mxu0 0.0
    %6618 = vmatpush1.msra.mxu0 0.0
    %6619 = vmatprep.subr.mxu0 0.0
    %6620 = vmatpush1.msra.mxu0 0.0
    %6621 = vmatprep.subr.mxu0 0.0
    %6622 = vmatpush1.msra.mxu0 0.0
    %6623 = vmatprep.subr.mxu0 0.0
    %6624 = vmatpush1.msra.mxu0 0.0
    %6625 = vmatprep.subr.mxu0 0.0
    %6626 = vmatpush1.msra.mxu0 0.0
    %6627 = vmatprep.subr.mxu0 0.0
    %6628 = vmatpush1.msra.mxu0 0.0
    %6629 = vmatprep.subr.mxu0 0.0
    %6630 = vmatpush1.msra.mxu0 0.0
    %6631 = vmatprep.subr.mxu0 0.0
    %6632 = vmatpush1.msra.mxu0 0.0
    %6633 = vmatprep.subr.mxu0 0.0
    %6634 = vmatpush1.msra.mxu0 0.0
    %6635 = vmatprep.subr.mxu0 0.0
    %6636 = vmatpush1.msra.mxu0 0.0
    %6637 = vmatprep.subr.mxu0 0.0
    %6638 = vmatpush1.msra.mxu0 0.0
    %6639 = vmatprep.subr.mxu0 0.0
    %6640 = vmatpush1.msra.mxu0 0.0
    %6641 = vmatprep.subr.mxu0 0.0
    %6642 = vmatpush1.msra.mxu0 0.0
    %6643 = vmatprep.subr.mxu0 0.0
    %6644 = vmatpush1.msra.mxu0 0.0
    %6645 = vmatprep.subr.mxu0 0.0
    %6646 = vmatpush1.msra.mxu0 0.0
    %6647 = vmatprep.subr.mxu0 0.0
    %6648 = vmatpush1.msra.mxu0 0.0
    %6649 = vmatprep.subr.mxu0 0.0
    %6650 = vmatpush1.msra.mxu0 0.0
    %6651 = vmatprep.subr.mxu0 0.0
    %6652 = vmatpush1.msra.mxu0 0.0
    %6653 = vmatprep.mubr.f32.mxu0 0.0
    %v6654 = vand.u32 %v5452, 4294901760
    %6655 = vmatmul.mubr.f32.gmra.mrb[0].mxu0 %v6654
    %v6656 = vpop.f32.mrb[0].mxu0
    %v6657 = vadd.f32 %v6566, %v6656
    %v6658 = vpop.f32.mrb[0].mxu0
    %6659 = vdwg.mxu0
    %6660 = vmatprep.subr.mxu0 0.0
    %v6661 = vand.u32 %v18, 4294901760
    %v6662 = vsub.f32 %v18, %v6661
    %6663 = vmatpush1.msra.mxu0 %v6662
    %6664 = vmatprep.subr.mxu0 0.0
    %v6665 = vand.u32 %v19, 4294901760
    %v6666 = vsub.f32 %v19, %v6665
    %6667 = vmatpush1.msra.mxu0 %v6666
    %6668 = vmatprep.subr.mxu0 0.0
    %v6669 = vand.u32 %v20, 4294901760
    %v6670 = vsub.f32 %v20, %v6669
    %6671 = vmatpush1.msra.mxu0 %v6670
    %6672 = vmatprep.subr.mxu0 0.0
    %v6673 = vand.u32 %v21, 4294901760
    %v6674 = vsub.f32 %v21, %v6673
    %6675 = vmatpush1.msra.mxu0 %v6674
    %6676 = vmatprep.subr.mxu0 0.0
    %6677 = vmatpush1.msra.mxu0 0.0
    %6678 = vmatprep.subr.mxu0 0.0
    %6679 = vmatpush1.msra.mxu0 0.0
    %6680 = vmatprep.subr.mxu0 0.0
    %6681 = vmatpush1.msra.mxu0 0.0
    %6682 = vmatprep.subr.mxu0 0.0
    %6683 = vmatpush1.msra.mxu0 0.0
    %6684 = vmatprep.subr.mxu0 0.0
    %6685 = vmatpush1.msra.mxu0 0.0
    %6686 = vmatprep.subr.mxu0 0.0
    %6687 = vmatpush1.msra.mxu0 0.0
    %6688 = vmatprep.subr.mxu0 0.0
    %6689 = vmatpush1.msra.mxu0 0.0
    %6690 = vmatprep.subr.mxu0 0.0
    %6691 = vmatpush1.msra.mxu0 0.0
    %6692 = vmatprep.subr.mxu0 0.0
    %6693 = vmatpush1.msra.mxu0 0.0
    %6694 = vmatprep.subr.mxu0 0.0
    %6695 = vmatpush1.msra.mxu0 0.0
    %6696 = vmatprep.subr.mxu0 0.0
    %6697 = vmatpush1.msra.mxu0 0.0
    %6698 = vmatprep.subr.mxu0 0.0
    %6699 = vmatpush1.msra.mxu0 0.0
    %6700 = vmatprep.subr.mxu0 0.0
    %6701 = vmatpush1.msra.mxu0 0.0
    %6702 = vmatprep.subr.mxu0 0.0
    %6703 = vmatpush1.msra.mxu0 0.0
    %6704 = vmatprep.subr.mxu0 0.0
    %6705 = vmatpush1.msra.mxu0 0.0
    %6706 = vmatprep.subr.mxu0 0.0
    %6707 = vmatpush1.msra.mxu0 0.0
    %6708 = vmatprep.subr.mxu0 0.0
    %6709 = vmatpush1.msra.mxu0 0.0
    %6710 = vmatprep.subr.mxu0 0.0
    %6711 = vmatpush1.msra.mxu0 0.0
    %6712 = vmatprep.subr.mxu0 0.0
    %6713 = vmatpush1.msra.mxu0 0.0
    %6714 = vmatprep.subr.mxu0 0.0
    %6715 = vmatpush1.msra.mxu0 0.0
    %6716 = vmatprep.subr.mxu0 0.0
    %6717 = vmatpush1.msra.mxu0 0.0
    %6718 = vmatprep.subr.mxu0 0.0
    %6719 = vmatpush1.msra.mxu0 0.0
    %6720 = vmatprep.subr.mxu0 0.0
    %6721 = vmatpush1.msra.mxu0 0.0
    %6722 = vmatprep.subr.mxu0 0.0
    %6723 = vmatpush1.msra.mxu0 0.0
    %6724 = vmatprep.subr.mxu0 0.0
    %6725 = vmatpush1.msra.mxu0 0.0
    %6726 = vmatprep.subr.mxu0 0.0
    %6727 = vmatpush1.msra.mxu0 0.0
    %6728 = vmatprep.subr.mxu0 0.0
    %6729 = vmatpush1.msra.mxu0 0.0
    %6730 = vmatprep.subr.mxu0 0.0
    %6731 = vmatpush1.msra.mxu0 0.0
    %6732 = vmatprep.mubr.f32.mxu0 0.0
    %v6733 = vand.u32 %v5452, 4294901760
    %v6734 = vsub.f32 %v5452, %v6733
    %6735 = vmatmul.mubr.f32.gmra.mrb[0].mxu0 %v6734
    %v6736 = vpop.f32.mrb[0].mxu0
    %v6737 = vadd.f32 %v6657, %v6736
    %v6738 = vpop.f32.mrb[0].mxu0
    %6739 = vdwg.mxu0
    %6740 = vmatprep.subr.mxu0 0.0
    %v6741 = vand.u32 %v18, 4294901760
    %6742 = vmatpush1.msra.mxu0 %v6741
    %6743 = vmatprep.subr.mxu0 0.0
    %v6744 = vand.u32 %v19, 4294901760
    %6745 = vmatpush1.msra.mxu0 %v6744
    %6746 = vmatprep.subr.mxu0 0.0
    %v6747 = vand.u32 %v20, 4294901760
    %6748 = vmatpush1.msra.mxu0 %v6747
    %6749 = vmatprep.subr.mxu0 0.0
    %v6750 = vand.u32 %v21, 4294901760
    %6751 = vmatpush1.msra.mxu0 %v6750
    %6752 = vmatprep.subr.mxu0 0.0
    %6753 = vmatpush1.msra.mxu0 0.0
    %6754 = vmatprep.subr.mxu0 0.0
    %6755 = vmatpush1.msra.mxu0 0.0
    %6756 = vmatprep.subr.mxu0 0.0
    %6757 = vmatpush1.msra.mxu0 0.0
    %6758 = vmatprep.subr.mxu0 0.0
    %6759 = vmatpush1.msra.mxu0 0.0
    %6760 = vmatprep.subr.mxu0 0.0
    %6761 = vmatpush1.msra.mxu0 0.0
    %6762 = vmatprep.subr.mxu0 0.0
    %6763 = vmatpush1.msra.mxu0 0.0
    %6764 = vmatprep.subr.mxu0 0.0
    %6765 = vmatpush1.msra.mxu0 0.0
    %6766 = vmatprep.subr.mxu0 0.0
    %6767 = vmatpush1.msra.mxu0 0.0
    %6768 = vmatprep.subr.mxu0 0.0
    %6769 = vmatpush1.msra.mxu0 0.0
    %6770 = vmatprep.subr.mxu0 0.0
    %6771 = vmatpush1.msra.mxu0 0.0
    %6772 = vmatprep.subr.mxu0 0.0
    %6773 = vmatpush1.msra.mxu0 0.0
    %6774 = vmatprep.subr.mxu0 0.0
    %6775 = vmatpush1.msra.mxu0 0.0
    %6776 = vmatprep.subr.mxu0 0.0
    %6777 = vmatpush1.msra.mxu0 0.0
    %6778 = vmatprep.subr.mxu0 0.0
    %6779 = vmatpush1.msra.mxu0 0.0
    %6780 = vmatprep.subr.mxu0 0.0
    %6781 = vmatpush1.msra.mxu0 0.0
    %6782 = vmatprep.subr.mxu0 0.0
    %6783 = vmatpush1.msra.mxu0 0.0
    %6784 = vmatprep.subr.mxu0 0.0
    %6785 = vmatpush1.msra.mxu0 0.0
    %6786 = vmatprep.subr.mxu0 0.0
    %6787 = vmatpush1.msra.mxu0 0.0
    %6788 = vmatprep.subr.mxu0 0.0
    %6789 = vmatpush1.msra.mxu0 0.0
    %6790 = vmatprep.subr.mxu0 0.0
    %6791 = vmatpush1.msra.mxu0 0.0
    %6792 = vmatprep.subr.mxu0 0.0
    %6793 = vmatpush1.msra.mxu0 0.0
    %6794 = vmatprep.subr.mxu0 0.0
    %6795 = vmatpush1.msra.mxu0 0.0
    %6796 = vmatprep.subr.mxu0 0.0
    %6797 = vmatpush1.msra.mxu0 0.0
    %6798 = vmatprep.subr.mxu0 0.0
    %6799 = vmatpush1.msra.mxu0 0.0
    %6800 = vmatprep.subr.mxu0 0.0
    %6801 = vmatpush1.msra.mxu0 0.0
    %6802 = vmatprep.subr.mxu0 0.0
    %6803 = vmatpush1.msra.mxu0 0.0
    %6804 = vmatprep.subr.mxu0 0.0
    %6805 = vmatpush1.msra.mxu0 0.0
    %6806 = vmatprep.subr.mxu0 0.0
    %6807 = vmatpush1.msra.mxu0 0.0
    %6808 = vmatprep.mubr.f32.mxu0 0.0
    %v6809 = vand.u32 %v5452, 4294901760
    %v6810 = vsub.f32 %v5452, %v6809
    %v6811 = vand.u32 %v6810, 4294901760
    %6812 = vmatmul.mubr.f32.gmra.mrb[0].mxu0 %v6811
    %v6813 = vpop.f32.mrb[0].mxu0
    %v6814 = vadd.f32 %v6737, %v6813
    %v6815 = vpop.f32.mrb[0].mxu0
    %6816 = vdwg.mxu0
    %6817 = vmatprep.subr.mxu0 0.0
    %v6818 = vand.u32 %v18, 4294901760
    %v6819 = vsub.f32 %v18, %v6818
    %v6820 = vand.u32 %v6819, 4294901760
    %6821 = vmatpush1.msra.mxu0 %v6820
    %6822 = vmatprep.subr.mxu0 0.0
    %v6823 = vand.u32 %v19, 4294901760
    %v6824 = vsub.f32 %v19, %v6823
    %v6825 = vand.u32 %v6824, 4294901760
    %6826 = vmatpush1.msra.mxu0 %v6825
    %6827 = vmatprep.subr.mxu0 0.0
    %v6828 = vand.u32 %v20, 4294901760
    %v6829 = vsub.f32 %v20, %v6828
    %v6830 = vand.u32 %v6829, 4294901760
    %6831 = vmatpush1.msra.mxu0 %v6830
    %6832 = vmatprep.subr.mxu0 0.0
    %v6833 = vand.u32 %v21, 4294901760
    %v6834 = vsub.f32 %v21, %v6833
    %v6835 = vand.u32 %v6834, 4294901760
    %6836 = vmatpush1.msra.mxu0 %v6835
    %6837 = vmatprep.subr.mxu0 0.0
    %6838 = vmatpush1.msra.mxu0 0.0
    %6839 = vmatprep.subr.mxu0 0.0
    %6840 = vmatpush1.msra.mxu0 0.0
    %6841 = vmatprep.subr.mxu0 0.0
    %6842 = vmatpush1.msra.mxu0 0.0
    %6843 = vmatprep.subr.mxu0 0.0
    %6844 = vmatpush1.msra.mxu0 0.0
    %6845 = vmatprep.subr.mxu0 0.0
    %6846 = vmatpush1.msra.mxu0 0.0
    %6847 = vmatprep.subr.mxu0 0.0
    %6848 = vmatpush1.msra.mxu0 0.0
    %6849 = vmatprep.subr.mxu0 0.0
    %6850 = vmatpush1.msra.mxu0 0.0
    %6851 = vmatprep.subr.mxu0 0.0
    %6852 = vmatpush1.msra.mxu0 0.0
    %6853 = vmatprep.subr.mxu0 0.0
    %6854 = vmatpush1.msra.mxu0 0.0
    %6855 = vmatprep.subr.mxu0 0.0
    %6856 = vmatpush1.msra.mxu0 0.0
    %6857 = vmatprep.subr.mxu0 0.0
    %6858 = vmatpush1.msra.mxu0 0.0
    %6859 = vmatprep.subr.mxu0 0.0
    %6860 = vmatpush1.msra.mxu0 0.0
    %6861 = vmatprep.subr.mxu0 0.0
    %6862 = vmatpush1.msra.mxu0 0.0
    %6863 = vmatprep.subr.mxu0 0.0
    %6864 = vmatpush1.msra.mxu0 0.0
    %6865 = vmatprep.subr.mxu0 0.0
    %6866 = vmatpush1.msra.mxu0 0.0
    %6867 = vmatprep.subr.mxu0 0.0
    %6868 = vmatpush1.msra.mxu0 0.0
    %6869 = vmatprep.subr.mxu0 0.0
    %6870 = vmatpush1.msra.mxu0 0.0
    %6871 = vmatprep.subr.mxu0 0.0
    %6872 = vmatpush1.msra.mxu0 0.0
    %6873 = vmatprep.subr.mxu0 0.0
    %6874 = vmatpush1.msra.mxu0 0.0
    %6875 = vmatprep.subr.mxu0 0.0
    %6876 = vmatpush1.msra.mxu0 0.0
    %6877 = vmatprep.subr.mxu0 0.0
    %6878 = vmatpush1.msra.mxu0 0.0
    %6879 = vmatprep.subr.mxu0 0.0
    %6880 = vmatpush1.msra.mxu0 0.0
    %6881 = vmatprep.subr.mxu0 0.0
    %6882 = vmatpush1.msra.mxu0 0.0
    %6883 = vmatprep.subr.mxu0 0.0
    %6884 = vmatpush1.msra.mxu0 0.0
    %6885 = vmatprep.subr.mxu0 0.0
    %6886 = vmatpush1.msra.mxu0 0.0
    %6887 = vmatprep.subr.mxu0 0.0
    %6888 = vmatpush1.msra.mxu0 0.0
    %6889 = vmatprep.subr.mxu0 0.0
    %6890 = vmatpush1.msra.mxu0 0.0
    %6891 = vmatprep.subr.mxu0 0.0
    %6892 = vmatpush1.msra.mxu0 0.0
    %6893 = vmatprep.mubr.f32.mxu0 0.0
    %v6894 = vand.u32 %v5452, 4294901760
    %6895 = vmatmul.mubr.f32.gmra.mrb[0].mxu0 %v6894
    %v6896 = vpop.f32.mrb[0].mxu0
    %v6897 = vadd.f32 %v6814, %v6896
    %v6898 = vpop.f32.mrb[0].mxu0
    %6899 = vdwg.mxu0
    %6900 = vmatprep.subr.mxu0 0.0
    %v6901 = vand.u32 %v18, 4294901760
    %6902 = vmatpush1.msra.mxu0 %v6901
    %6903 = vmatprep.subr.mxu0 0.0
    %v6904 = vand.u32 %v19, 4294901760
    %6905 = vmatpush1.msra.mxu0 %v6904
    %6906 = vmatprep.subr.mxu0 0.0
    %v6907 = vand.u32 %v20, 4294901760
    %6908 = vmatpush1.msra.mxu0 %v6907
    %6909 = vmatprep.subr.mxu0 0.0
    %v6910 = vand.u32 %v21, 4294901760
    %6911 = vmatpush1.msra.mxu0 %v6910
    %6912 = vmatprep.subr.mxu0 0.0
    %6913 = vmatpush1.msra.mxu0 0.0
    %6914 = vmatprep.subr.mxu0 0.0
    %6915 = vmatpush1.msra.mxu0 0.0
    %6916 = vmatprep.subr.mxu0 0.0
    %6917 = vmatpush1.msra.mxu0 0.0
    %6918 = vmatprep.subr.mxu0 0.0
    %6919 = vmatpush1.msra.mxu0 0.0
    %6920 = vmatprep.subr.mxu0 0.0
    %6921 = vmatpush1.msra.mxu0 0.0
    %6922 = vmatprep.subr.mxu0 0.0
    %6923 = vmatpush1.msra.mxu0 0.0
    %6924 = vmatprep.subr.mxu0 0.0
    %6925 = vmatpush1.msra.mxu0 0.0
    %6926 = vmatprep.subr.mxu0 0.0
    %6927 = vmatpush1.msra.mxu0 0.0
    %6928 = vmatprep.subr.mxu0 0.0
    %6929 = vmatpush1.msra.mxu0 0.0
    %6930 = vmatprep.subr.mxu0 0.0
    %6931 = vmatpush1.msra.mxu0 0.0
    %6932 = vmatprep.subr.mxu0 0.0
    %6933 = vmatpush1.msra.mxu0 0.0
    %6934 = vmatprep.subr.mxu0 0.0
    %6935 = vmatpush1.msra.mxu0 0.0
    %6936 = vmatprep.subr.mxu0 0.0
    %6937 = vmatpush1.msra.mxu0 0.0
    %6938 = vmatprep.subr.mxu0 0.0
    %6939 = vmatpush1.msra.mxu0 0.0
    %6940 = vmatprep.subr.mxu0 0.0
    %6941 = vmatpush1.msra.mxu0 0.0
    %6942 = vmatprep.subr.mxu0 0.0
    %6943 = vmatpush1.msra.mxu0 0.0
    %6944 = vmatprep.subr.mxu0 0.0
    %6945 = vmatpush1.msra.mxu0 0.0
    %6946 = vmatprep.subr.mxu0 0.0
    %6947 = vmatpush1.msra.mxu0 0.0
    %6948 = vmatprep.subr.mxu0 0.0
    %6949 = vmatpush1.msra.mxu0 0.0
    %6950 = vmatprep.subr.mxu0 0.0
    %6951 = vmatpush1.msra.mxu0 0.0
    %6952 = vmatprep.subr.mxu0 0.0
    %6953 = vmatpush1.msra.mxu0 0.0
    %6954 = vmatprep.subr.mxu0 0.0
    %6955 = vmatpush1.msra.mxu0 0.0
    %6956 = vmatprep.subr.mxu0 0.0
    %6957 = vmatpush1.msra.mxu0 0.0
    %6958 = vmatprep.subr.mxu0 0.0
    %6959 = vmatpush1.msra.mxu0 0.0
    %6960 = vmatprep.subr.mxu0 0.0
    %6961 = vmatpush1.msra.mxu0 0.0
    %6962 = vmatprep.subr.mxu0 0.0
    %6963 = vmatpush1.msra.mxu0 0.0
    %6964 = vmatprep.subr.mxu0 0.0
    %6965 = vmatpush1.msra.mxu0 0.0
    %6966 = vmatprep.subr.mxu0 0.0
    %6967 = vmatpush1.msra.mxu0 0.0
    %6968 = vmatprep.mubr.f32.mxu0 0.0
    %v6969 = vand.u32 %v5452, 4294901760
    %6970 = vmatmul.mubr.f32.gmra.mrb[0].mxu0 %v6969
    %v6971 = vpop.f32.mrb[0].mxu0
    %v6972 = vadd.f32 %v6897, %v6971
    %v6973 = vpop.f32.mrb[0].mxu0
    %6974 = vdwg.mxu0
    %v6975 = vadd.f32 %v6489, %v6972
    %v6976 = vtanh.pop %v6488
    %v6977 = vadd.f32 %v6976, 1.0
    %v6978 = vmul.f32 %v6977, 0.5
    %v6979 = vsel %vm113, %v6976, %v6978
    %v6980 = vmul.f32 %v6979, %v5417
    %6982 = vrot.lane.b32.xlu0 %v6979, 64
    %v6983 = vpop.permute.xlu0 %6982
    %v6985 = vmul.f32 %v6979, %v6983
    %6987 = vrot.lane.b32.xlu0 %v6985, 32
    %v6988 = vpop.permute.xlu0 %6987
    %v6990 = vadd.f32 %v6980, %v6988
    %v6991 = vtanh.pop %v6990
    %6993 = vrot.lane.b32.xlu0 %v6991, 64
    %v6994 = vpop.permute.xlu0 %6993
    %v6996 = vmul.f32 %v6979, %v6994
    %v6997 = vtanh.pop %v6975
    %v6998 = vadd.f32 %v6997, 1.0
    %v6999 = vmul.f32 %v6998, 0.5
    %v7000 = vsel %vm113, %v6997, %v6999
    %v7001 = vmul.f32 %v7000, %v5438
    %7003 = vrot.lane.b32.xlu0 %v7000, 64
    %v7004 = vpop.permute.xlu0 %7003
    %v7006 = vmul.f32 %v7000, %v7004
    %7008 = vrot.lane.b32.xlu0 %v7006, 32
    %v7009 = vpop.permute.xlu0 %7008
    %v7011 = vadd.f32 %v7001, %v7009
    %v7012 = vtanh.pop %v7011
    %7014 = vrot.lane.b32.xlu0 %v7012, 64
    %v7015 = vpop.permute.xlu0 %7014
    %v7017 = vmul.f32 %v7000, %v7015
    %v7018 = vld [vmem:[%s3 + $0x80] sm:$0xff]
    %v7019 = vld [vmem:[%s3 + $0x88] sm:$0xff]
    %v7020 = vld [vmem:[%s3 + $0x90] sm:$0xff]
    %v7021 = vld [vmem:[%s3 + $0x98] sm:$0xff]
    %7023 = vrot.lane.b32.xlu0 %v7017, 32
    %v7024 = vpop.permute.xlu0 %7023
    %v7025 = vsel %vm138, %v7024, 0
    %7027 = vmatprep.subr.mxu0 0.0
    %v7028 = vand.u32 %v7018, 4294901760
    %7029 = vmatpush1.msra.mxu0 %v7028
    %7030 = vmatprep.subr.mxu0 0.0
    %v7031 = vand.u32 %v7019, 4294901760
    %7032 = vmatpush1.msra.mxu0 %v7031
    %7033 = vmatprep.subr.mxu0 0.0
    %v7034 = vand.u32 %v7020, 4294901760
    %7035 = vmatpush1.msra.mxu0 %v7034
    %7036 = vmatprep.subr.mxu0 0.0
    %v7037 = vand.u32 %v7021, 4294901760
    %7038 = vmatpush1.msra.mxu0 %v7037
    %7039 = vmatprep.subr.mxu0 0.0
    %7040 = vmatpush1.msra.mxu0 0.0
    %7041 = vmatprep.subr.mxu0 0.0
    %7042 = vmatpush1.msra.mxu0 0.0
    %7043 = vmatprep.subr.mxu0 0.0
    %7044 = vmatpush1.msra.mxu0 0.0
    %7045 = vmatprep.subr.mxu0 0.0
    %7046 = vmatpush1.msra.mxu0 0.0
    %7047 = vmatprep.subr.mxu0 0.0
    %7048 = vmatpush1.msra.mxu0 0.0
    %7049 = vmatprep.subr.mxu0 0.0
    %7050 = vmatpush1.msra.mxu0 0.0
    %7051 = vmatprep.subr.mxu0 0.0
    %7052 = vmatpush1.msra.mxu0 0.0
    %7053 = vmatprep.subr.mxu0 0.0
    %7054 = vmatpush1.msra.mxu0 0.0
    %7055 = vmatprep.subr.mxu0 0.0
    %7056 = vmatpush1.msra.mxu0 0.0
    %7057 = vmatprep.subr.mxu0 0.0
    %7058 = vmatpush1.msra.mxu0 0.0
    %7059 = vmatprep.subr.mxu0 0.0
    %7060 = vmatpush1.msra.mxu0 0.0
    %7061 = vmatprep.subr.mxu0 0.0
    %7062 = vmatpush1.msra.mxu0 0.0
    %7063 = vmatprep.subr.mxu0 0.0
    %7064 = vmatpush1.msra.mxu0 0.0
    %7065 = vmatprep.subr.mxu0 0.0
    %7066 = vmatpush1.msra.mxu0 0.0
    %7067 = vmatprep.subr.mxu0 0.0
    %7068 = vmatpush1.msra.mxu0 0.0
    %7069 = vmatprep.subr.mxu0 0.0
    %7070 = vmatpush1.msra.mxu0 0.0
    %7071 = vmatprep.subr.mxu0 0.0
    %7072 = vmatpush1.msra.mxu0 0.0
    %7073 = vmatprep.subr.mxu0 0.0
    %7074 = vmatpush1.msra.mxu0 0.0
    %7075 = vmatprep.subr.mxu0 0.0
    %7076 = vmatpush1.msra.mxu0 0.0
    %7077 = vmatprep.subr.mxu0 0.0
    %7078 = vmatpush1.msra.mxu0 0.0
    %7079 = vmatprep.subr.mxu0 0.0
    %7080 = vmatpush1.msra.mxu0 0.0
    %7081 = vmatprep.subr.mxu0 0.0
    %7082 = vmatpush1.msra.mxu0 0.0
    %7083 = vmatprep.subr.mxu0 0.0
    %7084 = vmatpush1.msra.mxu0 0.0
    %7085 = vmatprep.subr.mxu0 0.0
    %7086 = vmatpush1.msra.mxu0 0.0
    %7087 = vmatprep.subr.mxu0 0.0
    %7088 = vmatpush1.msra.mxu0 0.0
    %7089 = vmatprep.subr.mxu0 0.0
    %7090 = vmatpush1.msra.mxu0 0.0
    %7091 = vmatprep.subr.mxu0 0.0
    %7092 = vmatpush1.msra.mxu0 0.0
    %7093 = vmatprep.subr.mxu0 0.0
    %7094 = vmatpush1.msra.mxu0 0.0
    %7095 = vmatprep.mubr.f32.mxu0 0.0
    %v7096 = vand.u32 %v7025, 4294901760
    %v7097 = vsub.f32 %v7025, %v7096
    %v7098 = vand.u32 %v7097, 4294901760
    %v7099 = vsub.f32 %v7097, %v7098
    %v7100 = vand.u32 %v7099, 4294901760
    %7101 = vmatmul.mubr.f32.gmra.mrb[0].mxu0 %v7100
    %v7102 = vpop.f32.mrb[0].mxu0
    %v7103 = vadd.f32 0.0, %v7102
    %v7104 = vpop.f32.mrb[0].mxu0
    %7105 = vdwg.mxu0
    %7106 = vmatprep.subr.mxu0 0.0
    %v7107 = vand.u32 %v7018, 4294901760
    %v7108 = vsub.f32 %v7018, %v7107
    %v7109 = vand.u32 %v7108, 4294901760
    %v7110 = vsub.f32 %v7108, %v7109
    %v7111 = vand.u32 %v7110, 4294901760
    %7112 = vmatpush1.msra.mxu0 %v7111
    %7113 = vmatprep.subr.mxu0 0.0
    %v7114 = vand.u32 %v7019, 4294901760
    %v7115 = vsub.f32 %v7019, %v7114
    %v7116 = vand.u32 %v7115, 4294901760
    %v7117 = vsub.f32 %v7115, %v7116
    %v7118 = vand.u32 %v7117, 4294901760
    %7119 = vmatpush1.msra.mxu0 %v7118
    %7120 = vmatprep.subr.mxu0 0.0
    %v7121 = vand.u32 %v7020, 4294901760
    %v7122 = vsub.f32 %v7020, %v7121
    %v7123 = vand.u32 %v7122, 4294901760
    %v7124 = vsub.f32 %v7122, %v7123
    %v7125 = vand.u32 %v7124, 4294901760
    %7126 = vmatpush1.msra.mxu0 %v7125
    %7127 = vmatprep.subr.mxu0 0.0
    %v7128 = vand.u32 %v7021, 4294901760
    %v7129 = vsub.f32 %v7021, %v7128
    %v7130 = vand.u32 %v7129, 4294901760
    %v7131 = vsub.f32 %v7129, %v7130
    %v7132 = vand.u32 %v7131, 4294901760
    %7133 = vmatpush1.msra.mxu0 %v7132
    %7134 = vmatprep.subr.mxu0 0.0
    %7135 = vmatpush1.msra.mxu0 0.0
    %7136 = vmatprep.subr.mxu0 0.0
    %7137 = vmatpush1.msra.mxu0 0.0
    %7138 = vmatprep.subr.mxu0 0.0
    %7139 = vmatpush1.msra.mxu0 0.0
    %7140 = vmatprep.subr.mxu0 0.0
    %7141 = vmatpush1.msra.mxu0 0.0
    %7142 = vmatprep.subr.mxu0 0.0
    %7143 = vmatpush1.msra.mxu0 0.0
    %7144 = vmatprep.subr.mxu0 0.0
    %7145 = vmatpush1.msra.mxu0 0.0
    %7146 = vmatprep.subr.mxu0 0.0
    %7147 = vmatpush1.msra.mxu0 0.0
    %7148 = vmatprep.subr.mxu0 0.0
    %7149 = vmatpush1.msra.mxu0 0.0
    %7150 = vmatprep.subr.mxu0 0.0
    %7151 = vmatpush1.msra.mxu0 0.0
    %7152 = vmatprep.subr.mxu0 0.0
    %7153 = vmatpush1.msra.mxu0 0.0
    %7154 = vmatprep.subr.mxu0 0.0
    %7155 = vmatpush1.msra.mxu0 0.0
    %7156 = vmatprep.subr.mxu0 0.0
    %7157 = vmatpush1.msra.mxu0 0.0
    %7158 = vmatprep.subr.mxu0 0.0
    %7159 = vmatpush1.msra.mxu0 0.0
    %7160 = vmatprep.subr.mxu0 0.0
    %7161 = vmatpush1.msra.mxu0 0.0
    %7162 = vmatprep.subr.mxu0 0.0
    %7163 = vmatpush1.msra.mxu0 0.0
    %7164 = vmatprep.subr.mxu0 0.0
    %7165 = vmatpush1.msra.mxu0 0.0
    %7166 = vmatprep.subr.mxu0 0.0
    %7167 = vmatpush1.msra.mxu0 0.0
    %7168 = vmatprep.subr.mxu0 0.0
    %7169 = vmatpush1.msra.mxu0 0.0
    %7170 = vmatprep.subr.mxu0 0.0
    %7171 = vmatpush1.msra.mxu0 0.0
    %7172 = vmatprep.subr.mxu0 0.0
    %7173 = vmatpush1.msra.mxu0 0.0
    %7174 = vmatprep.subr.mxu0 0.0
    %7175 = vmatpush1.msra.mxu0 0.0
    %7176 = vmatprep.subr.mxu0 0.0
    %7177 = vmatpush1.msra.mxu0 0.0
    %7178 = vmatprep.subr.mxu0 0.0
    %7179 = vmatpush1.msra.mxu0 0.0
    %7180 = vmatprep.subr.mxu0 0.0
    %7181 = vmatpush1.msra.mxu0 0.0
    %7182 = vmatprep.subr.mxu0 0.0
    %7183 = vmatpush1.msra.mxu0 0.0
    %7184 = vmatprep.subr.mxu0 0.0
    %7185 = vmatpush1.msra.mxu0 0.0
    %7186 = vmatprep.subr.mxu0 0.0
    %7187 = vmatpush1.msra.mxu0 0.0
    %7188 = vmatprep.subr.mxu0 0.0
    %7189 = vmatpush1.msra.mxu0 0.0
    %7190 = vmatprep.mubr.f32.mxu0 0.0
    %v7191 = vand.u32 %v7025, 4294901760
    %7192 = vmatmul.mubr.f32.gmra.mrb[0].mxu0 %v7191
    %v7193 = vpop.f32.mrb[0].mxu0
    %v7194 = vadd.f32 %v7103, %v7193
    %v7195 = vpop.f32.mrb[0].mxu0
    %7196 = vdwg.mxu0
    %7197 = vmatprep.subr.mxu0 0.0
    %v7198 = vand.u32 %v7018, 4294901760
    %v7199 = vsub.f32 %v7018, %v7198
    %7200 = vmatpush1.msra.mxu0 %v7199
    %7201 = vmatprep.subr.mxu0 0.0
    %v7202 = vand.u32 %v7019, 4294901760
    %v7203 = vsub.f32 %v7019, %v7202
    %7204 = vmatpush1.msra.mxu0 %v7203
    %7205 = vmatprep.subr.mxu0 0.0
    %v7206 = vand.u32 %v7020, 4294901760
    %v7207 = vsub.f32 %v7020, %v7206
    %7208 = vmatpush1.msra.mxu0 %v7207
    %7209 = vmatprep.subr.mxu0 0.0
    %v7210 = vand.u32 %v7021, 4294901760
    %v7211 = vsub.f32 %v7021, %v7210
    %7212 = vmatpush1.msra.mxu0 %v7211
    %7213 = vmatprep.subr.mxu0 0.0
    %7214 = vmatpush1.msra.mxu0 0.0
    %7215 = vmatprep.subr.mxu0 0.0
    %7216 = vmatpush1.msra.mxu0 0.0
    %7217 = vmatprep.subr.mxu0 0.0
    %7218 = vmatpush1.msra.mxu0 0.0
    %7219 = vmatprep.subr.mxu0 0.0
    %7220 = vmatpush1.msra.mxu0 0.0
    %7221 = vmatprep.subr.mxu0 0.0
    %7222 = vmatpush1.msra.mxu0 0.0
    %7223 = vmatprep.subr.mxu0 0.0
    %7224 = vmatpush1.msra.mxu0 0.0
    %7225 = vmatprep.subr.mxu0 0.0
    %7226 = vmatpush1.msra.mxu0 0.0
    %7227 = vmatprep.subr.mxu0 0.0
    %7228 = vmatpush1.msra.mxu0 0.0
    %7229 = vmatprep.subr.mxu0 0.0
    %7230 = vmatpush1.msra.mxu0 0.0
    %7231 = vmatprep.subr.mxu0 0.0
    %7232 = vmatpush1.msra.mxu0 0.0
    %7233 = vmatprep.subr.mxu0 0.0
    %7234 = vmatpush1.msra.mxu0 0.0
    %7235 = vmatprep.subr.mxu0 0.0
    %7236 = vmatpush1.msra.mxu0 0.0
    %7237 = vmatprep.subr.mxu0 0.0
    %7238 = vmatpush1.msra.mxu0 0.0
    %7239 = vmatprep.subr.mxu0 0.0
    %7240 = vmatpush1.msra.mxu0 0.0
    %7241 = vmatprep.subr.mxu0 0.0
    %7242 = vmatpush1.msra.mxu0 0.0
    %7243 = vmatprep.subr.mxu0 0.0
    %7244 = vmatpush1.msra.mxu0 0.0
    %7245 = vmatprep.subr.mxu0 0.0
    %7246 = vmatpush1.msra.mxu0 0.0
    %7247 = vmatprep.subr.mxu0 0.0
    %7248 = vmatpush1.msra.mxu0 0.0
    %7249 = vmatprep.subr.mxu0 0.0
    %7250 = vmatpush1.msra.mxu0 0.0
    %7251 = vmatprep.subr.mxu0 0.0
    %7252 = vmatpush1.msra.mxu0 0.0
    %7253 = vmatprep.subr.mxu0 0.0
    %7254 = vmatpush1.msra.mxu0 0.0
    %7255 = vmatprep.subr.mxu0 0.0
    %7256 = vmatpush1.msra.mxu0 0.0
    %7257 = vmatprep.subr.mxu0 0.0
    %7258 = vmatpush1.msra.mxu0 0.0
    %7259 = vmatprep.subr.mxu0 0.0
    %7260 = vmatpush1.msra.mxu0 0.0
    %7261 = vmatprep.subr.mxu0 0.0
    %7262 = vmatpush1.msra.mxu0 0.0
    %7263 = vmatprep.subr.mxu0 0.0
    %7264 = vmatpush1.msra.mxu0 0.0
    %7265 = vmatprep.subr.mxu0 0.0
    %7266 = vmatpush1.msra.mxu0 0.0
    %7267 = vmatprep.subr.mxu0 0.0
    %7268 = vmatpush1.msra.mxu0 0.0
    %7269 = vmatprep.mubr.f32.mxu0 0.0
    %v7270 = vand.u32 %v7025, 4294901760
    %v7271 = vsub.f32 %v7025, %v7270
    %7272 = vmatmul.mubr.f32.gmra.mrb[0].mxu0 %v7271
    %v7273 = vpop.f32.mrb[0].mxu0
    %v7274 = vadd.f32 %v7194, %v7273
    %v7275 = vpop.f32.mrb[0].mxu0
    %7276 = vdwg.mxu0
    %7277 = vmatprep.subr.mxu0 0.0
    %v7278 = vand.u32 %v7018, 4294901760
    %7279 = vmatpush1.msra.mxu0 %v7278
    %7280 = vmatprep.subr.mxu0 0.0
    %v7281 = vand.u32 %v7019, 4294901760
    %7282 = vmatpush1.msra.mxu0 %v7281
    %7283 = vmatprep.subr.mxu0 0.0
    %v7284 = vand.u32 %v7020, 4294901760
    %7285 = vmatpush1.msra.mxu0 %v7284
    %7286 = vmatprep.subr.mxu0 0.0
    %v7287 = vand.u32 %v7021, 4294901760
    %7288 = vmatpush1.msra.mxu0 %v7287
    %7289 = vmatprep.subr.mxu0 0.0
    %7290 = vmatpush1.msra.mxu0 0.0
    %7291 = vmatprep.subr.mxu0 0.0
    %7292 = vmatpush1.msra.mxu0 0.0
    %7293 = vmatprep.subr.mxu0 0.0
    %7294 = vmatpush1.msra.mxu0 0.0
    %7295 = vmatprep.subr.mxu0 0.0
    %7296 = vmatpush1.msra.mxu0 0.0
    %7297 = vmatprep.subr.mxu0 0.0
    %7298 = vmatpush1.msra.mxu0 0.0
    %7299 = vmatprep.subr.mxu0 0.0
    %7300 = vmatpush1.msra.mxu0 0.0
    %7301 = vmatprep.subr.mxu0 0.0
    %7302 = vmatpush1.msra.mxu0 0.0
    %7303 = vmatprep.subr.mxu0 0.0
    %7304 = vmatpush1.msra.mxu0 0.0
    %7305 = vmatprep.subr.mxu0 0.0
    %7306 = vmatpush1.msra.mxu0 0.0
    %7307 = vmatprep.subr.mxu0 0.0
    %7308 = vmatpush1.msra.mxu0 0.0
    %7309 = vmatprep.subr.mxu0 0.0
    %7310 = vmatpush1.msra.mxu0 0.0
    %7311 = vmatprep.subr.mxu0 0.0
    %7312 = vmatpush1.msra.mxu0 0.0
    %7313 = vmatprep.subr.mxu0 0.0
    %7314 = vmatpush1.msra.mxu0 0.0
    %7315 = vmatprep.subr.mxu0 0.0
    %7316 = vmatpush1.msra.mxu0 0.0
    %7317 = vmatprep.subr.mxu0 0.0
    %7318 = vmatpush1.msra.mxu0 0.0
    %7319 = vmatprep.subr.mxu0 0.0
    %7320 = vmatpush1.msra.mxu0 0.0
    %7321 = vmatprep.subr.mxu0 0.0
    %7322 = vmatpush1.msra.mxu0 0.0
    %7323 = vmatprep.subr.mxu0 0.0
    %7324 = vmatpush1.msra.mxu0 0.0
    %7325 = vmatprep.subr.mxu0 0.0
    %7326 = vmatpush1.msra.mxu0 0.0
    %7327 = vmatprep.subr.mxu0 0.0
    %7328 = vmatpush1.msra.mxu0 0.0
    %7329 = vmatprep.subr.mxu0 0.0
    %7330 = vmatpush1.msra.mxu0 0.0
    %7331 = vmatprep.subr.mxu0 0.0
    %7332 = vmatpush1.msra.mxu0 0.0
    %7333 = vmatprep.subr.mxu0 0.0
    %7334 = vmatpush1.msra.mxu0 0.0
    %7335 = vmatprep.subr.mxu0 0.0
    %7336 = vmatpush1.msra.mxu0 0.0
    %7337 = vmatprep.subr.mxu0 0.0
    %7338 = vmatpush1.msra.mxu0 0.0
    %7339 = vmatprep.subr.mxu0 0.0
    %7340 = vmatpush1.msra.mxu0 0.0
    %7341 = vmatprep.subr.mxu0 0.0
    %7342 = vmatpush1.msra.mxu0 0.0
    %7343 = vmatprep.subr.mxu0 0.0
    %7344 = vmatpush1.msra.mxu0 0.0
    %7345 = vmatprep.mubr.f32.mxu0 0.0
    %v7346 = vand.u32 %v7025, 4294901760
    %v7347 = vsub.f32 %v7025, %v7346
    %v7348 = vand.u32 %v7347, 4294901760
    %7349 = vmatmul.mubr.f32.gmra.mrb[0].mxu0 %v7348
    %v7350 = vpop.f32.mrb[0].mxu0
    %v7351 = vadd.f32 %v7274, %v7350
    %v7352 = vpop.f32.mrb[0].mxu0
    %7353 = vdwg.mxu0
    %7354 = vmatprep.subr.mxu0 0.0
    %v7355 = vand.u32 %v7018, 4294901760
    %v7356 = vsub.f32 %v7018, %v7355
    %v7357 = vand.u32 %v7356, 4294901760
    %7358 = vmatpush1.msra.mxu0 %v7357
    %7359 = vmatprep.subr.mxu0 0.0
    %v7360 = vand.u32 %v7019, 4294901760
    %v7361 = vsub.f32 %v7019, %v7360
    %v7362 = vand.u32 %v7361, 4294901760
    %7363 = vmatpush1.msra.mxu0 %v7362
    %7364 = vmatprep.subr.mxu0 0.0
    %v7365 = vand.u32 %v7020, 4294901760
    %v7366 = vsub.f32 %v7020, %v7365
    %v7367 = vand.u32 %v7366, 4294901760
    %7368 = vmatpush1.msra.mxu0 %v7367
    %7369 = vmatprep.subr.mxu0 0.0
    %v7370 = vand.u32 %v7021, 4294901760
    %v7371 = vsub.f32 %v7021, %v7370
    %v7372 = vand.u32 %v7371, 4294901760
    %7373 = vmatpush1.msra.mxu0 %v7372
    %7374 = vmatprep.subr.mxu0 0.0
    %7375 = vmatpush1.msra.mxu0 0.0
    %7376 = vmatprep.subr.mxu0 0.0
    %7377 = vmatpush1.msra.mxu0 0.0
    %7378 = vmatprep.subr.mxu0 0.0
    %7379 = vmatpush1.msra.mxu0 0.0
    %7380 = vmatprep.subr.mxu0 0.0
    %7381 = vmatpush1.msra.mxu0 0.0
    %7382 = vmatprep.subr.mxu0 0.0
    %7383 = vmatpush1.msra.mxu0 0.0
    %7384 = vmatprep.subr.mxu0 0.0
    %7385 = vmatpush1.msra.mxu0 0.0
    %7386 = vmatprep.subr.mxu0 0.0
    %7387 = vmatpush1.msra.mxu0 0.0
    %7388 = vmatprep.subr.mxu0 0.0
    %7389 = vmatpush1.msra.mxu0 0.0
    %7390 = vmatprep.subr.mxu0 0.0
    %7391 = vmatpush1.msra.mxu0 0.0
    %7392 = vmatprep.subr.mxu0 0.0
    %7393 = vmatpush1.msra.mxu0 0.0
    %7394 = vmatprep.subr.mxu0 0.0
    %7395 = vmatpush1.msra.mxu0 0.0
    %7396 = vmatprep.subr.mxu0 0.0
    %7397 = vmatpush1.msra.mxu0 0.0
    %7398 = vmatprep.subr.mxu0 0.0
    %7399 = vmatpush1.msra.mxu0 0.0
    %7400 = vmatprep.subr.mxu0 0.0
    %7401 = vmatpush1.msra.mxu0 0.0
    %7402 = vmatprep.subr.mxu0 0.0
    %7403 = vmatpush1.msra.mxu0 0.0
    %7404 = vmatprep.subr.mxu0 0.0
    %7405 = vmatpush1.msra.mxu0 0.0
    %7406 = vmatprep.subr.mxu0 0.0
    %7407 = vmatpush1.msra.mxu0 0.0
    %7408 = vmatprep.subr.mxu0 0.0
    %7409 = vmatpush1.msra.mxu0 0.0
    %7410 = vmatprep.subr.mxu0 0.0
    %7411 = vmatpush1.msra.mxu0 0.0
    %7412 = vmatprep.subr.mxu0 0.0
    %7413 = vmatpush1.msra.mxu0 0.0
    %7414 = vmatprep.subr.mxu0 0.0
    %7415 = vmatpush1.msra.mxu0 0.0
    %7416 = vmatprep.subr.mxu0 0.0
    %7417 = vmatpush1.msra.mxu0 0.0
    %7418 = vmatprep.subr.mxu0 0.0
    %7419 = vmatpush1.msra.mxu0 0.0
    %7420 = vmatprep.subr.mxu0 0.0
    %7421 = vmatpush1.msra.mxu0 0.0
    %7422 = vmatprep.subr.mxu0 0.0
    %7423 = vmatpush1.msra.mxu0 0.0
    %7424 = vmatprep.subr.mxu0 0.0
    %7425 = vmatpush1.msra.mxu0 0.0
    %7426 = vmatprep.subr.mxu0 0.0
    %7427 = vmatpush1.msra.mxu0 0.0
    %7428 = vmatprep.subr.mxu0 0.0
    %7429 = vmatpush1.msra.mxu0 0.0
    %7430 = vmatprep.mubr.f32.mxu0 0.0
    %v7431 = vand.u32 %v7025, 4294901760
    %7432 = vmatmul.mubr.f32.gmra.mrb[0].mxu0 %v7431
    %v7433 = vpop.f32.mrb[0].mxu0
    %v7434 = vadd.f32 %v7351, %v7433
    %v7435 = vpop.f32.mrb[0].mxu0
    %7436 = vdwg.mxu0
    %7437 = vmatprep.subr.mxu0 0.0
    %v7438 = vand.u32 %v7018, 4294901760
    %7439 = vmatpush1.msra.mxu0 %v7438
    %7440 = vmatprep.subr.mxu0 0.0
    %v7441 = vand.u32 %v7019, 4294901760
    %7442 = vmatpush1.msra.mxu0 %v7441
    %7443 = vmatprep.subr.mxu0 0.0
    %v7444 = vand.u32 %v7020, 4294901760
    %7445 = vmatpush1.msra.mxu0 %v7444
    %7446 = vmatprep.subr.mxu0 0.0
    %v7447 = vand.u32 %v7021, 4294901760
    %7448 = vmatpush1.msra.mxu0 %v7447
    %7449 = vmatprep.subr.mxu0 0.0
    %7450 = vmatpush1.msra.mxu0 0.0
    %7451 = vmatprep.subr.mxu0 0.0
    %7452 = vmatpush1.msra.mxu0 0.0
    %7453 = vmatprep.subr.mxu0 0.0
    %7454 = vmatpush1.msra.mxu0 0.0
    %7455 = vmatprep.subr.mxu0 0.0
    %7456 = vmatpush1.msra.mxu0 0.0
    %7457 = vmatprep.subr.mxu0 0.0
    %7458 = vmatpush1.msra.mxu0 0.0
    %7459 = vmatprep.subr.mxu0 0.0
    %7460 = vmatpush1.msra.mxu0 0.0
    %7461 = vmatprep.subr.mxu0 0.0
    %7462 = vmatpush1.msra.mxu0 0.0
    %7463 = vmatprep.subr.mxu0 0.0
    %7464 = vmatpush1.msra.mxu0 0.0
    %7465 = vmatprep.subr.mxu0 0.0
    %7466 = vmatpush1.msra.mxu0 0.0
    %7467 = vmatprep.subr.mxu0 0.0
    %7468 = vmatpush1.msra.mxu0 0.0
    %7469 = vmatprep.subr.mxu0 0.0
    %7470 = vmatpush1.msra.mxu0 0.0
    %7471 = vmatprep.subr.mxu0 0.0
    %7472 = vmatpush1.msra.mxu0 0.0
    %7473 = vmatprep.subr.mxu0 0.0
    %7474 = vmatpush1.msra.mxu0 0.0
    %7475 = vmatprep.subr.mxu0 0.0
    %7476 = vmatpush1.msra.mxu0 0.0
    %7477 = vmatprep.subr.mxu0 0.0
    %7478 = vmatpush1.msra.mxu0 0.0
    %7479 = vmatprep.subr.mxu0 0.0
    %7480 = vmatpush1.msra.mxu0 0.0
    %7481 = vmatprep.subr.mxu0 0.0
    %7482 = vmatpush1.msra.mxu0 0.0
    %7483 = vmatprep.subr.mxu0 0.0
    %7484 = vmatpush1.msra.mxu0 0.0
    %7485 = vmatprep.subr.mxu0 0.0
    %7486 = vmatpush1.msra.mxu0 0.0
    %7487 = vmatprep.subr.mxu0 0.0
    %7488 = vmatpush1.msra.mxu0 0.0
    %7489 = vmatprep.subr.mxu0 0.0
    %7490 = vmatpush1.msra.mxu0 0.0
    %7491 = vmatprep.subr.mxu0 0.0
    %7492 = vmatpush1.msra.mxu0 0.0
    %7493 = vmatprep.subr.mxu0 0.0
    %7494 = vmatpush1.msra.mxu0 0.0
    %7495 = vmatprep.subr.mxu0 0.0
    %7496 = vmatpush1.msra.mxu0 0.0
    %7497 = vmatprep.subr.mxu0 0.0
    %7498 = vmatpush1.msra.mxu0 0.0
    %7499 = vmatprep.subr.mxu0 0.0
    %7500 = vmatpush1.msra.mxu0 0.0
    %7501 = vmatprep.subr.mxu0 0.0
    %7502 = vmatpush1.msra.mxu0 0.0
    %7503 = vmatprep.subr.mxu0 0.0
    %7504 = vmatpush1.msra.mxu0 0.0
    %7505 = vmatprep.mubr.f32.mxu0 0.0
    %v7506 = vand.u32 %v7025, 4294901760
    %7507 = vmatmul.mubr.f32.gmra.mrb[0].mxu0 %v7506
    %v7508 = vpop.f32.mrb[0].mxu0
    %v7509 = vadd.f32 %v7434, %v7508
    %v7510 = vpop.f32.mrb[0].mxu0
    %7511 = vdwg.mxu0
    %v7512 = vadd.f32 %v5939, %v7509
    %7514 = vrot.lane.b32.xlu0 %v6996, 32
    %v7515 = vpop.permute.xlu0 %7514
    %v7516 = vsel %vm138, %v7515, 0
    %v7518 = vand.u32 %v30, 4294901760
    %7519 = vmatprep.subr.mxu0 %v7518
    %v7520 = vand.u32 %v29, 4294901760
    %7521 = vmatpush1.msra.mxu0 %v7520
    %v7522 = vand.u32 %v32, 4294901760
    %7523 = vmatprep.subr.mxu0 %v7522
    %v7524 = vand.u32 %v31, 4294901760
    %7525 = vmatpush1.msra.mxu0 %v7524
    %v7526 = vand.u32 %v34, 4294901760
    %7527 = vmatprep.subr.mxu0 %v7526
    %v7528 = vand.u32 %v33, 4294901760
    %7529 = vmatpush1.msra.mxu0 %v7528
    %v7530 = vand.u32 %v36, 4294901760
    %7531 = vmatprep.subr.mxu0 %v7530
    %v7532 = vand.u32 %v35, 4294901760
    %7533 = vmatpush1.msra.mxu0 %v7532
    %7534 = vmatprep.subr.mxu0 0.0
    %7535 = vmatpush1.msra.mxu0 0.0
    %7536 = vmatprep.subr.mxu0 0.0
    %7537 = vmatpush1.msra.mxu0 0.0
    %7538 = vmatprep.subr.mxu0 0.0
    %7539 = vmatpush1.msra.mxu0 0.0
    %7540 = vmatprep.subr.mxu0 0.0
    %7541 = vmatpush1.msra.mxu0 0.0
    %7542 = vmatprep.subr.mxu0 0.0
    %7543 = vmatpush1.msra.mxu0 0.0
    %7544 = vmatprep.subr.mxu0 0.0
    %7545 = vmatpush1.msra.mxu0 0.0
    %7546 = vmatprep.subr.mxu0 0.0
    %7547 = vmatpush1.msra.mxu0 0.0
    %7548 = vmatprep.subr.mxu0 0.0
    %7549 = vmatpush1.msra.mxu0 0.0
    %7550 = vmatprep.subr.mxu0 0.0
    %7551 = vmatpush1.msra.mxu0 0.0
    %7552 = vmatprep.subr.mxu0 0.0
    %7553 = vmatpush1.msra.mxu0 0.0
    %7554 = vmatprep.subr.mxu0 0.0
    %7555 = vmatpush1.msra.mxu0 0.0
    %7556 = vmatprep.subr.mxu0 0.0
    %7557 = vmatpush1.msra.mxu0 0.0
    %7558 = vmatprep.subr.mxu0 0.0
    %7559 = vmatpush1.msra.mxu0 0.0
    %7560 = vmatprep.subr.mxu0 0.0
    %7561 = vmatpush1.msra.mxu0 0.0
    %7562 = vmatprep.subr.mxu0 0.0
    %7563 = vmatpush1.msra.mxu0 0.0
    %7564 = vmatprep.subr.mxu0 0.0
    %7565 = vmatpush1.msra.mxu0 0.0
    %7566 = vmatprep.subr.mxu0 0.0
    %7567 = vmatpush1.msra.mxu0 0.0
    %7568 = vmatprep.subr.mxu0 0.0
    %7569 = vmatpush1.msra.mxu0 0.0
    %7570 = vmatprep.subr.mxu0 0.0
    %7571 = vmatpush1.msra.mxu0 0.0
    %7572 = vmatprep.subr.mxu0 0.0
    %7573 = vmatpush1.msra.mxu0 0.0
    %7574 = vmatprep.subr.mxu0 0.0
    %7575 = vmatpush1.msra.mxu0 0.0
    %7576 = vmatprep.subr.mxu0 0.0
    %7577 = vmatpush1.msra.mxu0 0.0
    %7578 = vmatprep.subr.mxu0 0.0
    %7579 = vmatpush1.msra.mxu0 0.0
    %7580 = vmatprep.subr.mxu0 0.0
    %7581 = vmatpush1.msra.mxu0 0.0
    %7582 = vmatprep.subr.mxu0 0.0
    %7583 = vmatpush1.msra.mxu0 0.0
    %7584 = vmatprep.subr.mxu0 0.0
    %7585 = vmatpush1.msra.mxu0 0.0
    %7586 = vmatprep.subr.mxu0 0.0
    %7587 = vmatpush1.msra.mxu0 0.0
    %7588 = vmatprep.subr.mxu0 0.0
    %7589 = vmatpush1.msra.mxu0 0.0
    %7590 = vmatprep.mubr.f32.mxu0 0.0
    %v7591 = vand.u32 %v7516, 4294901760
    %v7592 = vsub.f32 %v7516, %v7591
    %v7593 = vand.u32 %v7592, 4294901760
    %v7594 = vsub.f32 %v7592, %v7593
    %v7595 = vand.u32 %v7594, 4294901760
    %7596 = vmatmul.mubr.f32.gmra.mrb[0].mxu0 %v7595
    %v7597 = vpop.f32.mrb[0].mxu0
    %v7598 = vadd.f32 0.0, %v7597
    %v7599 = vpop.f32.mrb[0].mxu0
    %v7600 = vadd.f32 0.0, %v7599
    %7601 = vdwg.mxu0
    %v7602 = vand.u32 %v30, 4294901760
    %v7603 = vsub.f32 %v30, %v7602
    %v7604 = vand.u32 %v7603, 4294901760
    %v7605 = vsub.f32 %v7603, %v7604
    %v7606 = vand.u32 %v7605, 4294901760
    %7607 = vmatprep.subr.mxu0 %v7606
    %v7608 = vand.u32 %v29, 4294901760
    %v7609 = vsub.f32 %v29, %v7608
    %v7610 = vand.u32 %v7609, 4294901760
    %v7611 = vsub.f32 %v7609, %v7610
    %v7612 = vand.u32 %v7611, 4294901760
    %7613 = vmatpush1.msra.mxu0 %v7612
    %v7614 = vand.u32 %v32, 4294901760
    %v7615 = vsub.f32 %v32, %v7614
    %v7616 = vand.u32 %v7615, 4294901760
    %v7617 = vsub.f32 %v7615, %v7616
    %v7618 = vand.u32 %v7617, 4294901760
    %7619 = vmatprep.subr.mxu0 %v7618
    %v7620 = vand.u32 %v31, 4294901760
    %v7621 = vsub.f32 %v31, %v7620
    %v7622 = vand.u32 %v7621, 4294901760
    %v7623 = vsub.f32 %v7621, %v7622
    %v7624 = vand.u32 %v7623, 4294901760
    %7625 = vmatpush1.msra.mxu0 %v7624
    %v7626 = vand.u32 %v34, 4294901760
    %v7627 = vsub.f32 %v34, %v7626
    %v7628 = vand.u32 %v7627, 4294901760
    %v7629 = vsub.f32 %v7627, %v7628
    %v7630 = vand.u32 %v7629, 4294901760
    %7631 = vmatprep.subr.mxu0 %v7630
    %v7632 = vand.u32 %v33, 4294901760
    %v7633 = vsub.f32 %v33, %v7632
    %v7634 = vand.u32 %v7633, 4294901760
    %v7635 = vsub.f32 %v7633, %v7634
    %v7636 = vand.u32 %v7635, 4294901760
    %7637 = vmatpush1.msra.mxu0 %v7636
    %v7638 = vand.u32 %v36, 4294901760
    %v7639 = vsub.f32 %v36, %v7638
    %v7640 = vand.u32 %v7639, 4294901760
    %v7641 = vsub.f32 %v7639, %v7640
    %v7642 = vand.u32 %v7641, 4294901760
    %7643 = vmatprep.subr.mxu0 %v7642
    %v7644 = vand.u32 %v35, 4294901760
    %v7645 = vsub.f32 %v35, %v7644
    %v7646 = vand.u32 %v7645, 4294901760
    %v7647 = vsub.f32 %v7645, %v7646
    %v7648 = vand.u32 %v7647, 4294901760
    %7649 = vmatpush1.msra.mxu0 %v7648
    %7650 = vmatprep.subr.mxu0 0.0
    %7651 = vmatpush1.msra.mxu0 0.0
    %7652 = vmatprep.subr.mxu0 0.0
    %7653 = vmatpush1.msra.mxu0 0.0
    %7654 = vmatprep.subr.mxu0 0.0
    %7655 = vmatpush1.msra.mxu0 0.0
    %7656 = vmatprep.subr.mxu0 0.0
    %7657 = vmatpush1.msra.mxu0 0.0
    %7658 = vmatprep.subr.mxu0 0.0
    %7659 = vmatpush1.msra.mxu0 0.0
    %7660 = vmatprep.subr.mxu0 0.0
    %7661 = vmatpush1.msra.mxu0 0.0
    %7662 = vmatprep.subr.mxu0 0.0
    %7663 = vmatpush1.msra.mxu0 0.0
    %7664 = vmatprep.subr.mxu0 0.0
    %7665 = vmatpush1.msra.mxu0 0.0
    %7666 = vmatprep.subr.mxu0 0.0
    %7667 = vmatpush1.msra.mxu0 0.0
    %7668 = vmatprep.subr.mxu0 0.0
    %7669 = vmatpush1.msra.mxu0 0.0
    %7670 = vmatprep.subr.mxu0 0.0
    %7671 = vmatpush1.msra.mxu0 0.0
    %7672 = vmatprep.subr.mxu0 0.0
    %7673 = vmatpush1.msra.mxu0 0.0
    %7674 = vmatprep.subr.mxu0 0.0
    %7675 = vmatpush1.msra.mxu0 0.0
    %7676 = vmatprep.subr.mxu0 0.0
    %7677 = vmatpush1.msra.mxu0 0.0
    %7678 = vmatprep.subr.mxu0 0.0
    %7679 = vmatpush1.msra.mxu0 0.0
    %7680 = vmatprep.subr.mxu0 0.0
    %7681 = vmatpush1.msra.mxu0 0.0
    %7682 = vmatprep.subr.mxu0 0.0
    %7683 = vmatpush1.msra.mxu0 0.0
    %7684 = vmatprep.subr.mxu0 0.0
    %7685 = vmatpush1.msra.mxu0 0.0
    %7686 = vmatprep.subr.mxu0 0.0
    %7687 = vmatpush1.msra.mxu0 0.0
    %7688 = vmatprep.subr.mxu0 0.0
    %7689 = vmatpush1.msra.mxu0 0.0
    %7690 = vmatprep.subr.mxu0 0.0
    %7691 = vmatpush1.msra.mxu0 0.0
    %7692 = vmatprep.subr.mxu0 0.0
    %7693 = vmatpush1.msra.mxu0 0.0
    %7694 = vmatprep.subr.mxu0 0.0
    %7695 = vmatpush1.msra.mxu0 0.0
    %7696 = vmatprep.subr.mxu0 0.0
    %7697 = vmatpush1.msra.mxu0 0.0
    %7698 = vmatprep.subr.mxu0 0.0
    %7699 = vmatpush1.msra.mxu0 0.0
    %7700 = vmatprep.subr.mxu0 0.0
    %7701 = vmatpush1.msra.mxu0 0.0
    %7702 = vmatprep.subr.mxu0 0.0
    %7703 = vmatpush1.msra.mxu0 0.0
    %7704 = vmatprep.subr.mxu0 0.0
    %7705 = vmatpush1.msra.mxu0 0.0
    %7706 = vmatprep.mubr.f32.mxu0 0.0
    %v7707 = vand.u32 %v7516, 4294901760
    %7708 = vmatmul.mubr.f32.gmra.mrb[0].mxu0 %v7707
    %v7709 = vpop.f32.mrb[0].mxu0
    %v7710 = vadd.f32 %v7598, %v7709
    %v7711 = vpop.f32.mrb[0].mxu0
    %v7712 = vadd.f32 %v7600, %v7711
    %7713 = vdwg.mxu0
    %v7714 = vand.u32 %v30, 4294901760
    %v7715 = vsub.f32 %v30, %v7714
    %7716 = vmatprep.subr.mxu0 %v7715
    %v7717 = vand.u32 %v29, 4294901760
    %v7718 = vsub.f32 %v29, %v7717
    %7719 = vmatpush1.msra.mxu0 %v7718
    %v7720 = vand.u32 %v32, 4294901760
    %v7721 = vsub.f32 %v32, %v7720
    %7722 = vmatprep.subr.mxu0 %v7721
    %v7723 = vand.u32 %v31, 4294901760
    %v7724 = vsub.f32 %v31, %v7723
    %7725 = vmatpush1.msra.mxu0 %v7724
    %v7726 = vand.u32 %v34, 4294901760
    %v7727 = vsub.f32 %v34, %v7726
    %7728 = vmatprep.subr.mxu0 %v7727
    %v7729 = vand.u32 %v33, 4294901760
    %v7730 = vsub.f32 %v33, %v7729
    %7731 = vmatpush1.msra.mxu0 %v7730
    %v7732 = vand.u32 %v36, 4294901760
    %v7733 = vsub.f32 %v36, %v7732
    %7734 = vmatprep.subr.mxu0 %v7733
    %v7735 = vand.u32 %v35, 4294901760
    %v7736 = vsub.f32 %v35, %v7735
    %7737 = vmatpush1.msra.mxu0 %v7736
    %7738 = vmatprep.subr.mxu0 0.0
    %7739 = vmatpush1.msra.mxu0 0.0
    %7740 = vmatprep.subr.mxu0 0.0
    %7741 = vmatpush1.msra.mxu0 0.0
    %7742 = vmatprep.subr.mxu0 0.0
    %7743 = vmatpush1.msra.mxu0 0.0
    %7744 = vmatprep.subr.mxu0 0.0
    %7745 = vmatpush1.msra.mxu0 0.0
    %7746 = vmatprep.subr.mxu0 0.0
    %7747 = vmatpush1.msra.mxu0 0.0
    %7748 = vmatprep.subr.mxu0 0.0
    %7749 = vmatpush1.msra.mxu0 0.0
    %7750 = vmatprep.subr.mxu0 0.0
    %7751 = vmatpush1.msra.mxu0 0.0
    %7752 = vmatprep.subr.mxu0 0.0
    %7753 = vmatpush1.msra.mxu0 0.0
    %7754 = vmatprep.subr.mxu0 0.0
    %7755 = vmatpush1.msra.mxu0 0.0
    %7756 = vmatprep.subr.mxu0 0.0
    %7757 = vmatpush1.msra.mxu0 0.0
    %7758 = vmatprep.subr.mxu0 0.0
    %7759 = vmatpush1.msra.mxu0 0.0
    %7760 = vmatprep.subr.mxu0 0.0
    %7761 = vmatpush1.msra.mxu0 0.0
    %7762 = vmatprep.subr.mxu0 0.0
    %7763 = vmatpush1.msra.mxu0 0.0
    %7764 = vmatprep.subr.mxu0 0.0
    %7765 = vmatpush1.msra.mxu0 0.0
    %7766 = vmatprep.subr.mxu0 0.0
    %7767 = vmatpush1.msra.mxu0 0.0
    %7768 = vmatprep.subr.mxu0 0.0
    %7769 = vmatpush1.msra.mxu0 0.0
    %7770 = vmatprep.subr.mxu0 0.0
    %7771 = vmatpush1.msra.mxu0 0.0
    %7772 = vmatprep.subr.mxu0 0.0
    %7773 = vmatpush1.msra.mxu0 0.0
    %7774 = vmatprep.subr.mxu0 0.0
    %7775 = vmatpush1.msra.mxu0 0.0
    %7776 = vmatprep.subr.mxu0 0.0
    %7777 = vmatpush1.msra.mxu0 0.0
    %7778 = vmatprep.subr.mxu0 0.0
    %7779 = vmatpush1.msra.mxu0 0.0
    %7780 = vmatprep.subr.mxu0 0.0
    %7781 = vmatpush1.msra.mxu0 0.0
    %7782 = vmatprep.subr.mxu0 0.0
    %7783 = vmatpush1.msra.mxu0 0.0
    %7784 = vmatprep.subr.mxu0 0.0
    %7785 = vmatpush1.msra.mxu0 0.0
    %7786 = vmatprep.subr.mxu0 0.0
    %7787 = vmatpush1.msra.mxu0 0.0
    %7788 = vmatprep.subr.mxu0 0.0
    %7789 = vmatpush1.msra.mxu0 0.0
    %7790 = vmatprep.subr.mxu0 0.0
    %7791 = vmatpush1.msra.mxu0 0.0
    %7792 = vmatprep.subr.mxu0 0.0
    %7793 = vmatpush1.msra.mxu0 0.0
    %7794 = vmatprep.mubr.f32.mxu0 0.0
    %v7795 = vand.u32 %v7516, 4294901760
    %v7796 = vsub.f32 %v7516, %v7795
    %7797 = vmatmul.mubr.f32.gmra.mrb[0].mxu0 %v7796
    %v7798 = vpop.f32.mrb[0].mxu0
    %v7799 = vadd.f32 %v7710, %v7798
    %v7800 = vpop.f32.mrb[0].mxu0
    %v7801 = vadd.f32 %v7712, %v7800
    %7802 = vdwg.mxu0
    %v7803 = vand.u32 %v30, 4294901760
    %7804 = vmatprep.subr.mxu0 %v7803
    %v7805 = vand.u32 %v29, 4294901760
    %7806 = vmatpush1.msra.mxu0 %v7805
    %v7807 = vand.u32 %v32, 4294901760
    %7808 = vmatprep.subr.mxu0 %v7807
    %v7809 = vand.u32 %v31, 4294901760
    %7810 = vmatpush1.msra.mxu0 %v7809
    %v7811 = vand.u32 %v34, 4294901760
    %7812 = vmatprep.subr.mxu0 %v7811
    %v7813 = vand.u32 %v33, 4294901760
    %7814 = vmatpush1.msra.mxu0 %v7813
    %v7815 = vand.u32 %v36, 4294901760
    %7816 = vmatprep.subr.mxu0 %v7815
    %v7817 = vand.u32 %v35, 4294901760
    %7818 = vmatpush1.msra.mxu0 %v7817
    %7819 = vmatprep.subr.mxu0 0.0
    %7820 = vmatpush1.msra.mxu0 0.0
    %7821 = vmatprep.subr.mxu0 0.0
    %7822 = vmatpush1.msra.mxu0 0.0
    %7823 = vmatprep.subr.mxu0 0.0
    %7824 = vmatpush1.msra.mxu0 0.0
    %7825 = vmatprep.subr.mxu0 0.0
    %7826 = vmatpush1.msra.mxu0 0.0
    %7827 = vmatprep.subr.mxu0 0.0
    %7828 = vmatpush1.msra.mxu0 0.0
    %7829 = vmatprep.subr.mxu0 0.0
    %7830 = vmatpush1.msra.mxu0 0.0
    %7831 = vmatprep.subr.mxu0 0.0
    %7832 = vmatpush1.msra.mxu0 0.0
    %7833 = vmatprep.subr.mxu0 0.0
    %7834 = vmatpush1.msra.mxu0 0.0
    %7835 = vmatprep.subr.mxu0 0.0
    %7836 = vmatpush1.msra.mxu0 0.0
    %7837 = vmatprep.subr.mxu0 0.0
    %7838 = vmatpush1.msra.mxu0 0.0
    %7839 = vmatprep.subr.mxu0 0.0
    %7840 = vmatpush1.msra.mxu0 0.0
    %7841 = vmatprep.subr.mxu0 0.0
    %7842 = vmatpush1.msra.mxu0 0.0
    %7843 = vmatprep.subr.mxu0 0.0
    %7844 = vmatpush1.msra.mxu0 0.0
    %7845 = vmatprep.subr.mxu0 0.0
    %7846 = vmatpush1.msra.mxu0 0.0
    %7847 = vmatprep.subr.mxu0 0.0
    %7848 = vmatpush1.msra.mxu0 0.0
    %7849 = vmatprep.subr.mxu0 0.0
    %7850 = vmatpush1.msra.mxu0 0.0
    %7851 = vmatprep.subr.mxu0 0.0
    %7852 = vmatpush1.msra.mxu0 0.0
    %7853 = vmatprep.subr.mxu0 0.0
    %7854 = vmatpush1.msra.mxu0 0.0
    %7855 = vmatprep.subr.mxu0 0.0
    %7856 = vmatpush1.msra.mxu0 0.0
    %7857 = vmatprep.subr.mxu0 0.0
    %7858 = vmatpush1.msra.mxu0 0.0
    %7859 = vmatprep.subr.mxu0 0.0
    %7860 = vmatpush1.msra.mxu0 0.0
    %7861 = vmatprep.subr.mxu0 0.0
    %7862 = vmatpush1.msra.mxu0 0.0
    %7863 = vmatprep.subr.mxu0 0.0
    %7864 = vmatpush1.msra.mxu0 0.0
    %7865 = vmatprep.subr.mxu0 0.0
    %7866 = vmatpush1.msra.mxu0 0.0
    %7867 = vmatprep.subr.mxu0 0.0
    %7868 = vmatpush1.msra.mxu0 0.0
    %7869 = vmatprep.subr.mxu0 0.0
    %7870 = vmatpush1.msra.mxu0 0.0
    %7871 = vmatprep.subr.mxu0 0.0
    %7872 = vmatpush1.msra.mxu0 0.0
    %7873 = vmatprep.subr.mxu0 0.0
    %7874 = vmatpush1.msra.mxu0 0.0
    %7875 = vmatprep.mubr.f32.mxu0 0.0
    %v7876 = vand.u32 %v7516, 4294901760
    %v7877 = vsub.f32 %v7516, %v7876
    %v7878 = vand.u32 %v7877, 4294901760
    %7879 = vmatmul.mubr.f32.gmra.mrb[0].mxu0 %v7878
    %v7880 = vpop.f32.mrb[0].mxu0
    %v7881 = vadd.f32 %v7799, %v7880
    %v7882 = vpop.f32.mrb[0].mxu0
    %v7883 = vadd.f32 %v7801, %v7882
    %7884 = vdwg.mxu0
    %v7885 = vand.u32 %v30, 4294901760
    %v7886 = vsub.f32 %v30, %v7885
    %v7887 = vand.u32 %v7886, 4294901760
    %7888 = vmatprep.subr.mxu0 %v7887
    %v7889 = vand.u32 %v29, 4294901760
    %v7890 = vsub.f32 %v29, %v7889
    %v7891 = vand.u32 %v7890, 4294901760
    %7892 = vmatpush1.msra.mxu0 %v7891
    %v7893 = vand.u32 %v32, 4294901760
    %v7894 = vsub.f32 %v32, %v7893
    %v7895 = vand.u32 %v7894, 4294901760
    %7896 = vmatprep.subr.mxu0 %v7895
    %v7897 = vand.u32 %v31, 4294901760
    %v7898 = vsub.f32 %v31, %v7897
    %v7899 = vand.u32 %v7898, 4294901760
    %7900 = vmatpush1.msra.mxu0 %v7899
    %v7901 = vand.u32 %v34, 4294901760
    %v7902 = vsub.f32 %v34, %v7901
    %v7903 = vand.u32 %v7902, 4294901760
    %7904 = vmatprep.subr.mxu0 %v7903
    %v7905 = vand.u32 %v33, 4294901760
    %v7906 = vsub.f32 %v33, %v7905
    %v7907 = vand.u32 %v7906, 4294901760
    %7908 = vmatpush1.msra.mxu0 %v7907
    %v7909 = vand.u32 %v36, 4294901760
    %v7910 = vsub.f32 %v36, %v7909
    %v7911 = vand.u32 %v7910, 4294901760
    %7912 = vmatprep.subr.mxu0 %v7911
    %v7913 = vand.u32 %v35, 4294901760
    %v7914 = vsub.f32 %v35, %v7913
    %v7915 = vand.u32 %v7914, 4294901760
    %7916 = vmatpush1.msra.mxu0 %v7915
    %7917 = vmatprep.subr.mxu0 0.0
    %7918 = vmatpush1.msra.mxu0 0.0
    %7919 = vmatprep.subr.mxu0 0.0
    %7920 = vmatpush1.msra.mxu0 0.0
    %7921 = vmatprep.subr.mxu0 0.0
    %7922 = vmatpush1.msra.mxu0 0.0
    %7923 = vmatprep.subr.mxu0 0.0
    %7924 = vmatpush1.msra.mxu0 0.0
    %7925 = vmatprep.subr.mxu0 0.0
    %7926 = vmatpush1.msra.mxu0 0.0
    %7927 = vmatprep.subr.mxu0 0.0
    %7928 = vmatpush1.msra.mxu0 0.0
    %7929 = vmatprep.subr.mxu0 0.0
    %7930 = vmatpush1.msra.mxu0 0.0
    %7931 = vmatprep.subr.mxu0 0.0
    %7932 = vmatpush1.msra.mxu0 0.0
    %7933 = vmatprep.subr.mxu0 0.0
    %7934 = vmatpush1.msra.mxu0 0.0
    %7935 = vmatprep.subr.mxu0 0.0
    %7936 = vmatpush1.msra.mxu0 0.0
    %7937 = vmatprep.subr.mxu0 0.0
    %7938 = vmatpush1.msra.mxu0 0.0
    %7939 = vmatprep.subr.mxu0 0.0
    %7940 = vmatpush1.msra.mxu0 0.0
    %7941 = vmatprep.subr.mxu0 0.0
    %7942 = vmatpush1.msra.mxu0 0.0
    %7943 = vmatprep.subr.mxu0 0.0
    %7944 = vmatpush1.msra.mxu0 0.0
    %7945 = vmatprep.subr.mxu0 0.0
    %7946 = vmatpush1.msra.mxu0 0.0
    %7947 = vmatprep.subr.mxu0 0.0
    %7948 = vmatpush1.msra.mxu0 0.0
    %7949 = vmatprep.subr.mxu0 0.0
    %7950 = vmatpush1.msra.mxu0 0.0
    %7951 = vmatprep.subr.mxu0 0.0
    %7952 = vmatpush1.msra.mxu0 0.0
    %7953 = vmatprep.subr.mxu0 0.0
    %7954 = vmatpush1.msra.mxu0 0.0
    %7955 = vmatprep.subr.mxu0 0.0
    %7956 = vmatpush1.msra.mxu0 0.0
    %7957 = vmatprep.subr.mxu0 0.0
    %7958 = vmatpush1.msra.mxu0 0.0
    %7959 = vmatprep.subr.mxu0 0.0
    %7960 = vmatpush1.msra.mxu0 0.0
    %7961 = vmatprep.subr.mxu0 0.0
    %7962 = vmatpush1.msra.mxu0 0.0
    %7963 = vmatprep.subr.mxu0 0.0
    %7964 = vmatpush1.msra.mxu0 0.0
    %7965 = vmatprep.subr.mxu0 0.0
    %7966 = vmatpush1.msra.mxu0 0.0
    %7967 = vmatprep.subr.mxu0 0.0
    %7968 = vmatpush1.msra.mxu0 0.0
    %7969 = vmatprep.subr.mxu0 0.0
    %7970 = vmatpush1.msra.mxu0 0.0
    %7971 = vmatprep.subr.mxu0 0.0
    %7972 = vmatpush1.msra.mxu0 0.0
    %7973 = vmatprep.mubr.f32.mxu0 0.0
    %v7974 = vand.u32 %v7516, 4294901760
    %7975 = vmatmul.mubr.f32.gmra.mrb[0].mxu0 %v7974
    %v7976 = vpop.f32.mrb[0].mxu0
    %v7977 = vadd.f32 %v7881, %v7976
    %v7978 = vpop.f32.mrb[0].mxu0
    %v7979 = vadd.f32 %v7883, %v7978
    %7980 = vdwg.mxu0
    %v7981 = vand.u32 %v30, 4294901760
    %7982 = vmatprep.subr.mxu0 %v7981
    %v7983 = vand.u32 %v29, 4294901760
    %7984 = vmatpush1.msra.mxu0 %v7983
    %v7985 = vand.u32 %v32, 4294901760
    %7986 = vmatprep.subr.mxu0 %v7985
    %v7987 = vand.u32 %v31, 4294901760
    %7988 = vmatpush1.msra.mxu0 %v7987
    %v7989 = vand.u32 %v34, 4294901760
    %7990 = vmatprep.subr.mxu0 %v7989
    %v7991 = vand.u32 %v33, 4294901760
    %7992 = vmatpush1.msra.mxu0 %v7991
    %v7993 = vand.u32 %v36, 4294901760
    %7994 = vmatprep.subr.mxu0 %v7993
    %v7995 = vand.u32 %v35, 4294901760
    %7996 = vmatpush1.msra.mxu0 %v7995
    %7997 = vmatprep.subr.mxu0 0.0
    %7998 = vmatpush1.msra.mxu0 0.0
    %7999 = vmatprep.subr.mxu0 0.0
    %8000 = vmatpush1.msra.mxu0 0.0
    %8001 = vmatprep.subr.mxu0 0.0
    %8002 = vmatpush1.msra.mxu0 0.0
    %8003 = vmatprep.subr.mxu0 0.0
    %8004 = vmatpush1.msra.mxu0 0.0
    %8005 = vmatprep.subr.mxu0 0.0
    %8006 = vmatpush1.msra.mxu0 0.0
    %8007 = vmatprep.subr.mxu0 0.0
    %8008 = vmatpush1.msra.mxu0 0.0
    %8009 = vmatprep.subr.mxu0 0.0
    %8010 = vmatpush1.msra.mxu0 0.0
    %8011 = vmatprep.subr.mxu0 0.0
    %8012 = vmatpush1.msra.mxu0 0.0
    %8013 = vmatprep.subr.mxu0 0.0
    %8014 = vmatpush1.msra.mxu0 0.0
    %8015 = vmatprep.subr.mxu0 0.0
    %8016 = vmatpush1.msra.mxu0 0.0
    %8017 = vmatprep.subr.mxu0 0.0
    %8018 = vmatpush1.msra.mxu0 0.0
    %8019 = vmatprep.subr.mxu0 0.0
    %8020 = vmatpush1.msra.mxu0 0.0
    %8021 = vmatprep.subr.mxu0 0.0
    %8022 = vmatpush1.msra.mxu0 0.0
    %8023 = vmatprep.subr.mxu0 0.0
    %8024 = vmatpush1.msra.mxu0 0.0
    %8025 = vmatprep.subr.mxu0 0.0
    %8026 = vmatpush1.msra.mxu0 0.0
    %8027 = vmatprep.subr.mxu0 0.0
    %8028 = vmatpush1.msra.mxu0 0.0
    %8029 = vmatprep.subr.mxu0 0.0
    %8030 = vmatpush1.msra.mxu0 0.0
    %8031 = vmatprep.subr.mxu0 0.0
    %8032 = vmatpush1.msra.mxu0 0.0
    %8033 = vmatprep.subr.mxu0 0.0
    %8034 = vmatpush1.msra.mxu0 0.0
    %8035 = vmatprep.subr.mxu0 0.0
    %8036 = vmatpush1.msra.mxu0 0.0
    %8037 = vmatprep.subr.mxu0 0.0
    %8038 = vmatpush1.msra.mxu0 0.0
    %8039 = vmatprep.subr.mxu0 0.0
    %8040 = vmatpush1.msra.mxu0 0.0
    %8041 = vmatprep.subr.mxu0 0.0
    %8042 = vmatpush1.msra.mxu0 0.0
    %8043 = vmatprep.subr.mxu0 0.0
    %8044 = vmatpush1.msra.mxu0 0.0
    %8045 = vmatprep.subr.mxu0 0.0
    %8046 = vmatpush1.msra.mxu0 0.0
    %8047 = vmatprep.subr.mxu0 0.0
    %8048 = vmatpush1.msra.mxu0 0.0
    %8049 = vmatprep.subr.mxu0 0.0
    %8050 = vmatpush1.msra.mxu0 0.0
    %8051 = vmatprep.subr.mxu0 0.0
    %8052 = vmatpush1.msra.mxu0 0.0
    %8053 = vmatprep.mubr.f32.mxu0 0.0
    %v8054 = vand.u32 %v7516, 4294901760
    %8055 = vmatmul.mubr.f32.gmra.mrb[0].mxu0 %v8054
    %v8056 = vpop.f32.mrb[0].mxu0
    %v8057 = vadd.f32 %v7977, %v8056
    %v8058 = vpop.f32.mrb[0].mxu0
    %v8059 = vadd.f32 %v7979, %v8058
    %8060 = vdwg.mxu0
    %v8061 = vadd.f32 %v107, %v8057
    %v8062 = vadd.f32 %v28, %v8059
    %8063 = vmatprep.subr.mxu0 0.0
    %v8064 = vand.u32 %v18, 4294901760
    %8065 = vmatpush1.msra.mxu0 %v8064
    %8066 = vmatprep.subr.mxu0 0.0
    %v8067 = vand.u32 %v19, 4294901760
    %8068 = vmatpush1.msra.mxu0 %v8067
    %8069 = vmatprep.subr.mxu0 0.0
    %v8070 = vand.u32 %v20, 4294901760
    %8071 = vmatpush1.msra.mxu0 %v8070
    %8072 = vmatprep.subr.mxu0 0.0
    %v8073 = vand.u32 %v21, 4294901760
    %8074 = vmatpush1.msra.mxu0 %v8073
    %8075 = vmatprep.subr.mxu0 0.0
    %8076 = vmatpush1.msra.mxu0 0.0
    %8077 = vmatprep.subr.mxu0 0.0
    %8078 = vmatpush1.msra.mxu0 0.0
    %8079 = vmatprep.subr.mxu0 0.0
    %8080 = vmatpush1.msra.mxu0 0.0
    %8081 = vmatprep.subr.mxu0 0.0
    %8082 = vmatpush1.msra.mxu0 0.0
    %8083 = vmatprep.subr.mxu0 0.0
    %8084 = vmatpush1.msra.mxu0 0.0
    %8085 = vmatprep.subr.mxu0 0.0
    %8086 = vmatpush1.msra.mxu0 0.0
    %8087 = vmatprep.subr.mxu0 0.0
    %8088 = vmatpush1.msra.mxu0 0.0
    %8089 = vmatprep.subr.mxu0 0.0
    %8090 = vmatpush1.msra.mxu0 0.0
    %8091 = vmatprep.subr.mxu0 0.0
    %8092 = vmatpush1.msra.mxu0 0.0
    %8093 = vmatprep.subr.mxu0 0.0
    %8094 = vmatpush1.msra.mxu0 0.0
    %8095 = vmatprep.subr.mxu0 0.0
    %8096 = vmatpush1.msra.mxu0 0.0
    %8097 = vmatprep.subr.mxu0 0.0
    %8098 = vmatpush1.msra.mxu0 0.0
    %8099 = vmatprep.subr.mxu0 0.0
    %8100 = vmatpush1.msra.mxu0 0.0
    %8101 = vmatprep.subr.mxu0 0.0
    %8102 = vmatpush1.msra.mxu0 0.0
    %8103 = vmatprep.subr.mxu0 0.0
    %8104 = vmatpush1.msra.mxu0 0.0
    %8105 = vmatprep.subr.mxu0 0.0
    %8106 = vmatpush1.msra.mxu0 0.0
    %8107 = vmatprep.subr.mxu0 0.0
    %8108 = vmatpush1.msra.mxu0 0.0
    %8109 = vmatprep.subr.mxu0 0.0
    %8110 = vmatpush1.msra.mxu0 0.0
    %8111 = vmatprep.subr.mxu0 0.0
    %8112 = vmatpush1.msra.mxu0 0.0
    %8113 = vmatprep.subr.mxu0 0.0
    %8114 = vmatpush1.msra.mxu0 0.0
    %8115 = vmatprep.subr.mxu0 0.0
    %8116 = vmatpush1.msra.mxu0 0.0
    %8117 = vmatprep.subr.mxu0 0.0
    %8118 = vmatpush1.msra.mxu0 0.0
    %8119 = vmatprep.subr.mxu0 0.0
    %8120 = vmatpush1.msra.mxu0 0.0
    %8121 = vmatprep.subr.mxu0 0.0
    %8122 = vmatpush1.msra.mxu0 0.0
    %8123 = vmatprep.subr.mxu0 0.0
    %8124 = vmatpush1.msra.mxu0 0.0
    %8125 = vmatprep.subr.mxu0 0.0
    %8126 = vmatpush1.msra.mxu0 0.0
    %8127 = vmatprep.subr.mxu0 0.0
    %8128 = vmatpush1.msra.mxu0 0.0
    %8129 = vmatprep.subr.mxu0 0.0
    %8130 = vmatpush1.msra.mxu0 0.0
    %8131 = vmatprep.mubr.f32.mxu0 0.0
    %v8132 = vand.u32 %v7025, 4294901760
    %v8133 = vsub.f32 %v7025, %v8132
    %v8134 = vand.u32 %v8133, 4294901760
    %v8135 = vsub.f32 %v8133, %v8134
    %v8136 = vand.u32 %v8135, 4294901760
    %8137 = vmatmul.mubr.f32.gmra.mrb[0].mxu0 %v8136
    %v8138 = vpop.f32.mrb[0].mxu0
    %v8139 = vadd.f32 0.0, %v8138
    %v8140 = vpop.f32.mrb[0].mxu0
    %8141 = vdwg.mxu0
    %8142 = vmatprep.subr.mxu0 0.0
    %v8143 = vand.u32 %v18, 4294901760
    %v8144 = vsub.f32 %v18, %v8143
    %v8145 = vand.u32 %v8144, 4294901760
    %v8146 = vsub.f32 %v8144, %v8145
    %v8147 = vand.u32 %v8146, 4294901760
    %8148 = vmatpush1.msra.mxu0 %v8147
    %8149 = vmatprep.subr.mxu0 0.0
    %v8150 = vand.u32 %v19, 4294901760
    %v8151 = vsub.f32 %v19, %v8150
    %v8152 = vand.u32 %v8151, 4294901760
    %v8153 = vsub.f32 %v8151, %v8152
    %v8154 = vand.u32 %v8153, 4294901760
    %8155 = vmatpush1.msra.mxu0 %v8154
    %8156 = vmatprep.subr.mxu0 0.0
    %v8157 = vand.u32 %v20, 4294901760
    %v8158 = vsub.f32 %v20, %v8157
    %v8159 = vand.u32 %v8158, 4294901760
    %v8160 = vsub.f32 %v8158, %v8159
    %v8161 = vand.u32 %v8160, 4294901760
    %8162 = vmatpush1.msra.mxu0 %v8161
    %8163 = vmatprep.subr.mxu0 0.0
    %v8164 = vand.u32 %v21, 4294901760
    %v8165 = vsub.f32 %v21, %v8164
    %v8166 = vand.u32 %v8165, 4294901760
    %v8167 = vsub.f32 %v8165, %v8166
    %v8168 = vand.u32 %v8167, 4294901760
    %8169 = vmatpush1.msra.mxu0 %v8168
    %8170 = vmatprep.subr.mxu0 0.0
    %8171 = vmatpush1.msra.mxu0 0.0
    %8172 = vmatprep.subr.mxu0 0.0
    %8173 = vmatpush1.msra.mxu0 0.0
    %8174 = vmatprep.subr.mxu0 0.0
    %8175 = vmatpush1.msra.mxu0 0.0
    %8176 = vmatprep.subr.mxu0 0.0
    %8177 = vmatpush1.msra.mxu0 0.0
    %8178 = vmatprep.subr.mxu0 0.0
    %8179 = vmatpush1.msra.mxu0 0.0
    %8180 = vmatprep.subr.mxu0 0.0
    %8181 = vmatpush1.msra.mxu0 0.0
    %8182 = vmatprep.subr.mxu0 0.0
    %8183 = vmatpush1.msra.mxu0 0.0
    %8184 = vmatprep.subr.mxu0 0.0
    %8185 = vmatpush1.msra.mxu0 0.0
    %8186 = vmatprep.subr.mxu0 0.0
    %8187 = vmatpush1.msra.mxu0 0.0
    %8188 = vmatprep.subr.mxu0 0.0
    %8189 = vmatpush1.msra.mxu0 0.0
    %8190 = vmatprep.subr.mxu0 0.0
    %8191 = vmatpush1.msra.mxu0 0.0
    %8192 = vmatprep.subr.mxu0 0.0
    %8193 = vmatpush1.msra.mxu0 0.0
    %8194 = vmatprep.subr.mxu0 0.0
    %8195 = vmatpush1.msra.mxu0 0.0
    %8196 = vmatprep.subr.mxu0 0.0
    %8197 = vmatpush1.msra.mxu0 0.0
    %8198 = vmatprep.subr.mxu0 0.0
    %8199 = vmatpush1.msra.mxu0 0.0
    %8200 = vmatprep.subr.mxu0 0.0
    %8201 = vmatpush1.msra.mxu0 0.0
    %8202 = vmatprep.subr.mxu0 0.0
    %8203 = vmatpush1.msra.mxu0 0.0
    %8204 = vmatprep.subr.mxu0 0.0
    %8205 = vmatpush1.msra.mxu0 0.0
    %8206 = vmatprep.subr.mxu0 0.0
    %8207 = vmatpush1.msra.mxu0 0.0
    %8208 = vmatprep.subr.mxu0 0.0
    %8209 = vmatpush1.msra.mxu0 0.0
    %8210 = vmatprep.subr.mxu0 0.0
    %8211 = vmatpush1.msra.mxu0 0.0
    %8212 = vmatprep.subr.mxu0 0.0
    %8213 = vmatpush1.msra.mxu0 0.0
    %8214 = vmatprep.subr.mxu0 0.0
    %8215 = vmatpush1.msra.mxu0 0.0
    %8216 = vmatprep.subr.mxu0 0.0
    %8217 = vmatpush1.msra.mxu0 0.0
    %8218 = vmatprep.subr.mxu0 0.0
    %8219 = vmatpush1.msra.mxu0 0.0
    %8220 = vmatprep.subr.mxu0 0.0
    %8221 = vmatpush1.msra.mxu0 0.0
    %8222 = vmatprep.subr.mxu0 0.0
    %8223 = vmatpush1.msra.mxu0 0.0
    %8224 = vmatprep.subr.mxu0 0.0
    %8225 = vmatpush1.msra.mxu0 0.0
    %8226 = vmatprep.mubr.f32.mxu0 0.0
    %v8227 = vand.u32 %v7025, 4294901760
    %8228 = vmatmul.mubr.f32.gmra.mrb[0].mxu0 %v8227
    %v8229 = vpop.f32.mrb[0].mxu0
    %v8230 = vadd.f32 %v8139, %v8229
    %v8231 = vpop.f32.mrb[0].mxu0
    %8232 = vdwg.mxu0
    %8233 = vmatprep.subr.mxu0 0.0
    %v8234 = vand.u32 %v18, 4294901760
    %v8235 = vsub.f32 %v18, %v8234
    %8236 = vmatpush1.msra.mxu0 %v8235
    %8237 = vmatprep.subr.mxu0 0.0
    %v8238 = vand.u32 %v19, 4294901760
    %v8239 = vsub.f32 %v19, %v8238
    %8240 = vmatpush1.msra.mxu0 %v8239
    %8241 = vmatprep.subr.mxu0 0.0
    %v8242 = vand.u32 %v20, 4294901760
    %v8243 = vsub.f32 %v20, %v8242
    %8244 = vmatpush1.msra.mxu0 %v8243
    %8245 = vmatprep.subr.mxu0 0.0
    %v8246 = vand.u32 %v21, 4294901760
    %v8247 = vsub.f32 %v21, %v8246
    %8248 = vmatpush1.msra.mxu0 %v8247
    %8249 = vmatprep.subr.mxu0 0.0
    %8250 = vmatpush1.msra.mxu0 0.0
    %8251 = vmatprep.subr.mxu0 0.0
    %8252 = vmatpush1.msra.mxu0 0.0
    %8253 = vmatprep.subr.mxu0 0.0
    %8254 = vmatpush1.msra.mxu0 0.0
    %8255 = vmatprep.subr.mxu0 0.0
    %8256 = vmatpush1.msra.mxu0 0.0
    %8257 = vmatprep.subr.mxu0 0.0
    %8258 = vmatpush1.msra.mxu0 0.0
    %8259 = vmatprep.subr.mxu0 0.0
    %8260 = vmatpush1.msra.mxu0 0.0
    %8261 = vmatprep.subr.mxu0 0.0
    %8262 = vmatpush1.msra.mxu0 0.0
    %8263 = vmatprep.subr.mxu0 0.0
    %8264 = vmatpush1.msra.mxu0 0.0
    %8265 = vmatprep.subr.mxu0 0.0
    %8266 = vmatpush1.msra.mxu0 0.0
    %8267 = vmatprep.subr.mxu0 0.0
    %8268 = vmatpush1.msra.mxu0 0.0
    %8269 = vmatprep.subr.mxu0 0.0
    %8270 = vmatpush1.msra.mxu0 0.0
    %8271 = vmatprep.subr.mxu0 0.0
    %8272 = vmatpush1.msra.mxu0 0.0
    %8273 = vmatprep.subr.mxu0 0.0
    %8274 = vmatpush1.msra.mxu0 0.0
    %8275 = vmatprep.subr.mxu0 0.0
    %8276 = vmatpush1.msra.mxu0 0.0
    %8277 = vmatprep.subr.mxu0 0.0
    %8278 = vmatpush1.msra.mxu0 0.0
    %8279 = vmatprep.subr.mxu0 0.0
    %8280 = vmatpush1.msra.mxu0 0.0
    %8281 = vmatprep.subr.mxu0 0.0
    %8282 = vmatpush1.msra.mxu0 0.0
    %8283 = vmatprep.subr.mxu0 0.0
    %8284 = vmatpush1.msra.mxu0 0.0
    %8285 = vmatprep.subr.mxu0 0.0
    %8286 = vmatpush1.msra.mxu0 0.0
    %8287 = vmatprep.subr.mxu0 0.0
    %8288 = vmatpush1.msra.mxu0 0.0
    %8289 = vmatprep.subr.mxu0 0.0
    %8290 = vmatpush1.msra.mxu0 0.0
    %8291 = vmatprep.subr.mxu0 0.0
    %8292 = vmatpush1.msra.mxu0 0.0
    %8293 = vmatprep.subr.mxu0 0.0
    %8294 = vmatpush1.msra.mxu0 0.0
    %8295 = vmatprep.subr.mxu0 0.0
    %8296 = vmatpush1.msra.mxu0 0.0
    %8297 = vmatprep.subr.mxu0 0.0
    %8298 = vmatpush1.msra.mxu0 0.0
    %8299 = vmatprep.subr.mxu0 0.0
    %8300 = vmatpush1.msra.mxu0 0.0
    %8301 = vmatprep.subr.mxu0 0.0
    %8302 = vmatpush1.msra.mxu0 0.0
    %8303 = vmatprep.subr.mxu0 0.0
    %8304 = vmatpush1.msra.mxu0 0.0
    %8305 = vmatprep.mubr.f32.mxu0 0.0
    %v8306 = vand.u32 %v7025, 4294901760
    %v8307 = vsub.f32 %v7025, %v8306
    %8308 = vmatmul.mubr.f32.gmra.mrb[0].mxu0 %v8307
    %v8309 = vpop.f32.mrb[0].mxu0
    %v8310 = vadd.f32 %v8230, %v8309
    %v8311 = vpop.f32.mrb[0].mxu0
    %8312 = vdwg.mxu0
    %8313 = vmatprep.subr.mxu0 0.0
    %v8314 = vand.u32 %v18, 4294901760
    %8315 = vmatpush1.msra.mxu0 %v8314
    %8316 = vmatprep.subr.mxu0 0.0
    %v8317 = vand.u32 %v19, 4294901760
    %8318 = vmatpush1.msra.mxu0 %v8317
    %8319 = vmatprep.subr.mxu0 0.0
    %v8320 = vand.u32 %v20, 4294901760
    %8321 = vmatpush1.msra.mxu0 %v8320
    %8322 = vmatprep.subr.mxu0 0.0
    %v8323 = vand.u32 %v21, 4294901760
    %8324 = vmatpush1.msra.mxu0 %v8323
    %8325 = vmatprep.subr.mxu0 0.0
    %8326 = vmatpush1.msra.mxu0 0.0
    %8327 = vmatprep.subr.mxu0 0.0
    %8328 = vmatpush1.msra.mxu0 0.0
    %8329 = vmatprep.subr.mxu0 0.0
    %8330 = vmatpush1.msra.mxu0 0.0
    %8331 = vmatprep.subr.mxu0 0.0
    %8332 = vmatpush1.msra.mxu0 0.0
    %8333 = vmatprep.subr.mxu0 0.0
    %8334 = vmatpush1.msra.mxu0 0.0
    %8335 = vmatprep.subr.mxu0 0.0
    %8336 = vmatpush1.msra.mxu0 0.0
    %8337 = vmatprep.subr.mxu0 0.0
    %8338 = vmatpush1.msra.mxu0 0.0
    %8339 = vmatprep.subr.mxu0 0.0
    %8340 = vmatpush1.msra.mxu0 0.0
    %8341 = vmatprep.subr.mxu0 0.0
    %8342 = vmatpush1.msra.mxu0 0.0
    %8343 = vmatprep.subr.mxu0 0.0
    %8344 = vmatpush1.msra.mxu0 0.0
    %8345 = vmatprep.subr.mxu0 0.0
    %8346 = vmatpush1.msra.mxu0 0.0
    %8347 = vmatprep.subr.mxu0 0.0
    %8348 = vmatpush1.msra.mxu0 0.0
    %8349 = vmatprep.subr.mxu0 0.0
    %8350 = vmatpush1.msra.mxu0 0.0
    %8351 = vmatprep.subr.mxu0 0.0
    %8352 = vmatpush1.msra.mxu0 0.0
    %8353 = vmatprep.subr.mxu0 0.0
    %8354 = vmatpush1.msra.mxu0 0.0
    %8355 = vmatprep.subr.mxu0 0.0
    %8356 = vmatpush1.msra.mxu0 0.0
    %8357 = vmatprep.subr.mxu0 0.0
    %8358 = vmatpush1.msra.mxu0 0.0
    %8359 = vmatprep.subr.mxu0 0.0
    %8360 = vmatpush1.msra.mxu0 0.0
    %8361 = vmatprep.subr.mxu0 0.0
    %8362 = vmatpush1.msra.mxu0 0.0
    %8363 = vmatprep.subr.mxu0 0.0
    %8364 = vmatpush1.msra.mxu0 0.0
    %8365 = vmatprep.subr.mxu0 0.0
    %8366 = vmatpush1.msra.mxu0 0.0
    %8367 = vmatprep.subr.mxu0 0.0
    %8368 = vmatpush1.msra.mxu0 0.0
    %8369 = vmatprep.subr.mxu0 0.0
    %8370 = vmatpush1.msra.mxu0 0.0
    %8371 = vmatprep.subr.mxu0 0.0
    %8372 = vmatpush1.msra.mxu0 0.0
    %8373 = vmatprep.subr.mxu0 0.0
    %8374 = vmatpush1.msra.mxu0 0.0
    %8375 = vmatprep.subr.mxu0 0.0
    %8376 = vmatpush1.msra.mxu0 0.0
    %8377 = vmatprep.subr.mxu0 0.0
    %8378 = vmatpush1.msra.mxu0 0.0
    %8379 = vmatprep.subr.mxu0 0.0
    %8380 = vmatpush1.msra.mxu0 0.0
    %8381 = vmatprep.mubr.f32.mxu0 0.0
    %v8382 = vand.u32 %v7025, 4294901760
    %v8383 = vsub.f32 %v7025, %v8382
    %v8384 = vand.u32 %v8383, 4294901760
    %8385 = vmatmul.mubr.f32.gmra.mrb[0].mxu0 %v8384
    %v8386 = vpop.f32.mrb[0].mxu0
    %v8387 = vadd.f32 %v8310, %v8386
    %v8388 = vpop.f32.mrb[0].mxu0
    %8389 = vdwg.mxu0
    %8390 = vmatprep.subr.mxu0 0.0
    %v8391 = vand.u32 %v18, 4294901760
    %v8392 = vsub.f32 %v18, %v8391
    %v8393 = vand.u32 %v8392, 4294901760
    %8394 = vmatpush1.msra.mxu0 %v8393
    %8395 = vmatprep.subr.mxu0 0.0
    %v8396 = vand.u32 %v19, 4294901760
    %v8397 = vsub.f32 %v19, %v8396
    %v8398 = vand.u32 %v8397, 4294901760
    %8399 = vmatpush1.msra.mxu0 %v8398
    %8400 = vmatprep.subr.mxu0 0.0
    %v8401 = vand.u32 %v20, 4294901760
    %v8402 = vsub.f32 %v20, %v8401
    %v8403 = vand.u32 %v8402, 4294901760
    %8404 = vmatpush1.msra.mxu0 %v8403
    %8405 = vmatprep.subr.mxu0 0.0
    %v8406 = vand.u32 %v21, 4294901760
    %v8407 = vsub.f32 %v21, %v8406
    %v8408 = vand.u32 %v8407, 4294901760
    %8409 = vmatpush1.msra.mxu0 %v8408
    %8410 = vmatprep.subr.mxu0 0.0
    %8411 = vmatpush1.msra.mxu0 0.0
    %8412 = vmatprep.subr.mxu0 0.0
    %8413 = vmatpush1.msra.mxu0 0.0
    %8414 = vmatprep.subr.mxu0 0.0
    %8415 = vmatpush1.msra.mxu0 0.0
    %8416 = vmatprep.subr.mxu0 0.0
    %8417 = vmatpush1.msra.mxu0 0.0
    %8418 = vmatprep.subr.mxu0 0.0
    %8419 = vmatpush1.msra.mxu0 0.0
    %8420 = vmatprep.subr.mxu0 0.0
    %8421 = vmatpush1.msra.mxu0 0.0
    %8422 = vmatprep.subr.mxu0 0.0
    %8423 = vmatpush1.msra.mxu0 0.0
    %8424 = vmatprep.subr.mxu0 0.0
    %8425 = vmatpush1.msra.mxu0 0.0
    %8426 = vmatprep.subr.mxu0 0.0
    %8427 = vmatpush1.msra.mxu0 0.0
    %8428 = vmatprep.subr.mxu0 0.0
    %8429 = vmatpush1.msra.mxu0 0.0
    %8430 = vmatprep.subr.mxu0 0.0
    %8431 = vmatpush1.msra.mxu0 0.0
    %8432 = vmatprep.subr.mxu0 0.0
    %8433 = vmatpush1.msra.mxu0 0.0
    %8434 = vmatprep.subr.mxu0 0.0
    %8435 = vmatpush1.msra.mxu0 0.0
    %8436 = vmatprep.subr.mxu0 0.0
    %8437 = vmatpush1.msra.mxu0 0.0
    %8438 = vmatprep.subr.mxu0 0.0
    %8439 = vmatpush1.msra.mxu0 0.0
    %8440 = vmatprep.subr.mxu0 0.0
    %8441 = vmatpush1.msra.mxu0 0.0
    %8442 = vmatprep.subr.mxu0 0.0
    %8443 = vmatpush1.msra.mxu0 0.0
    %8444 = vmatprep.subr.mxu0 0.0
    %8445 = vmatpush1.msra.mxu0 0.0
    %8446 = vmatprep.subr.mxu0 0.0
    %8447 = vmatpush1.msra.mxu0 0.0
    %8448 = vmatprep.subr.mxu0 0.0
    %8449 = vmatpush1.msra.mxu0 0.0
    %8450 = vmatprep.subr.mxu0 0.0
    %8451 = vmatpush1.msra.mxu0 0.0
    %8452 = vmatprep.subr.mxu0 0.0
    %8453 = vmatpush1.msra.mxu0 0.0
    %8454 = vmatprep.subr.mxu0 0.0
    %8455 = vmatpush1.msra.mxu0 0.0
    %8456 = vmatprep.subr.mxu0 0.0
    %8457 = vmatpush1.msra.mxu0 0.0
    %8458 = vmatprep.subr.mxu0 0.0
    %8459 = vmatpush1.msra.mxu0 0.0
    %8460 = vmatprep.subr.mxu0 0.0
    %8461 = vmatpush1.msra.mxu0 0.0
    %8462 = vmatprep.subr.mxu0 0.0
    %8463 = vmatpush1.msra.mxu0 0.0
    %8464 = vmatprep.subr.mxu0 0.0
    %8465 = vmatpush1.msra.mxu0 0.0
    %8466 = vmatprep.mubr.f32.mxu0 0.0
    %v8467 = vand.u32 %v7025, 4294901760
    %8468 = vmatmul.mubr.f32.gmra.mrb[0].mxu0 %v8467
    %v8469 = vpop.f32.mrb[0].mxu0
    %v8470 = vadd.f32 %v8387, %v8469
    %v8471 = vpop.f32.mrb[0].mxu0
    %8472 = vdwg.mxu0
    %8473 = vmatprep.subr.mxu0 0.0
    %v8474 = vand.u32 %v18, 4294901760
    %8475 = vmatpush1.msra.mxu0 %v8474
    %8476 = vmatprep.subr.mxu0 0.0
    %v8477 = vand.u32 %v19, 4294901760
    %8478 = vmatpush1.msra.mxu0 %v8477
    %8479 = vmatprep.subr.mxu0 0.0
    %v8480 = vand.u32 %v20, 4294901760
    %8481 = vmatpush1.msra.mxu0 %v8480
    %8482 = vmatprep.subr.mxu0 0.0
    %v8483 = vand.u32 %v21, 4294901760
    %8484 = vmatpush1.msra.mxu0 %v8483
    %8485 = vmatprep.subr.mxu0 0.0
    %8486 = vmatpush1.msra.mxu0 0.0
    %8487 = vmatprep.subr.mxu0 0.0
    %8488 = vmatpush1.msra.mxu0 0.0
    %8489 = vmatprep.subr.mxu0 0.0
    %8490 = vmatpush1.msra.mxu0 0.0
    %8491 = vmatprep.subr.mxu0 0.0
    %8492 = vmatpush1.msra.mxu0 0.0
    %8493 = vmatprep.subr.mxu0 0.0
    %8494 = vmatpush1.msra.mxu0 0.0
    %8495 = vmatprep.subr.mxu0 0.0
    %8496 = vmatpush1.msra.mxu0 0.0
    %8497 = vmatprep.subr.mxu0 0.0
    %8498 = vmatpush1.msra.mxu0 0.0
    %8499 = vmatprep.subr.mxu0 0.0
    %8500 = vmatpush1.msra.mxu0 0.0
    %8501 = vmatprep.subr.mxu0 0.0
    %8502 = vmatpush1.msra.mxu0 0.0
    %8503 = vmatprep.subr.mxu0 0.0
    %8504 = vmatpush1.msra.mxu0 0.0
    %8505 = vmatprep.subr.mxu0 0.0
    %8506 = vmatpush1.msra.mxu0 0.0
    %8507 = vmatprep.subr.mxu0 0.0
    %8508 = vmatpush1.msra.mxu0 0.0
    %8509 = vmatprep.subr.mxu0 0.0
    %8510 = vmatpush1.msra.mxu0 0.0
    %8511 = vmatprep.subr.mxu0 0.0
    %8512 = vmatpush1.msra.mxu0 0.0
    %8513 = vmatprep.subr.mxu0 0.0
    %8514 = vmatpush1.msra.mxu0 0.0
    %8515 = vmatprep.subr.mxu0 0.0
    %8516 = vmatpush1.msra.mxu0 0.0
    %8517 = vmatprep.subr.mxu0 0.0
    %8518 = vmatpush1.msra.mxu0 0.0
    %8519 = vmatprep.subr.mxu0 0.0
    %8520 = vmatpush1.msra.mxu0 0.0
    %8521 = vmatprep.subr.mxu0 0.0
    %8522 = vmatpush1.msra.mxu0 0.0
    %8523 = vmatprep.subr.mxu0 0.0
    %8524 = vmatpush1.msra.mxu0 0.0
    %8525 = vmatprep.subr.mxu0 0.0
    %8526 = vmatpush1.msra.mxu0 0.0
    %8527 = vmatprep.subr.mxu0 0.0
    %8528 = vmatpush1.msra.mxu0 0.0
    %8529 = vmatprep.subr.mxu0 0.0
    %8530 = vmatpush1.msra.mxu0 0.0
    %8531 = vmatprep.subr.mxu0 0.0
    %8532 = vmatpush1.msra.mxu0 0.0
    %8533 = vmatprep.subr.mxu0 0.0
    %8534 = vmatpush1.msra.mxu0 0.0
    %8535 = vmatprep.subr.mxu0 0.0
    %8536 = vmatpush1.msra.mxu0 0.0
    %8537 = vmatprep.subr.mxu0 0.0
    %8538 = vmatpush1.msra.mxu0 0.0
    %8539 = vmatprep.subr.mxu0 0.0
    %8540 = vmatpush1.msra.mxu0 0.0
    %8541 = vmatprep.mubr.f32.mxu0 0.0
    %v8542 = vand.u32 %v7025, 4294901760
    %8543 = vmatmul.mubr.f32.gmra.mrb[0].mxu0 %v8542
    %v8544 = vpop.f32.mrb[0].mxu0
    %v8545 = vadd.f32 %v8470, %v8544
    %v8546 = vpop.f32.mrb[0].mxu0
    %8547 = vdwg.mxu0
    %v8548 = vadd.f32 %v8062, %v8545
    %v8549 = vtanh.pop %v8061
    %v8550 = vadd.f32 %v8549, 1.0
    %v8551 = vmul.f32 %v8550, 0.5
    %v8552 = vsel %vm113, %v8549, %v8551
    %v8553 = vmul.f32 %v8552, %v6990
    %8555 = vrot.lane.b32.xlu0 %v8552, 64
    %v8556 = vpop.permute.xlu0 %8555
    %v8558 = vmul.f32 %v8552, %v8556
    %8560 = vrot.lane.b32.xlu0 %v8558, 32
    %v8561 = vpop.permute.xlu0 %8560
    %v8563 = vadd.f32 %v8553, %v8561
    %v8564 = vtanh.pop %v8563
    %8566 = vrot.lane.b32.xlu0 %v8564, 64
    %v8567 = vpop.permute.xlu0 %8566
    %v8569 = vmul.f32 %v8552, %v8567
    %v8570 = vtanh.pop %v8548
    %v8571 = vadd.f32 %v8570, 1.0
    %v8572 = vmul.f32 %v8571, 0.5
    %v8573 = vsel %vm113, %v8570, %v8572
    %v8574 = vmul.f32 %v8573, %v7011
    %8576 = vrot.lane.b32.xlu0 %v8573, 64
    %v8577 = vpop.permute.xlu0 %8576
    %v8579 = vmul.f32 %v8573, %v8577
    %8581 = vrot.lane.b32.xlu0 %v8579, 32
    %v8582 = vpop.permute.xlu0 %8581
    %v8584 = vadd.f32 %v8574, %v8582
    %v8585 = vtanh.pop %v8584
    %8587 = vrot.lane.b32.xlu0 %v8585, 64
    %v8588 = vpop.permute.xlu0 %8587
    %v8590 = vmul.f32 %v8573, %v8588
    %v8591 = vld [vmem:[%s3 + $0xa0] sm:$0xff]
    %v8592 = vld [vmem:[%s3 + $0xa8] sm:$0xff]
    %v8593 = vld [vmem:[%s3 + $0xb0] sm:$0xff]
    %v8594 = vld [vmem:[%s3 + $0xb8] sm:$0xff]
    %8596 = vrot.lane.b32.xlu0 %v8590, 32
    %v8597 = vpop.permute.xlu0 %8596
    %v8598 = vsel %vm138, %v8597, 0
    %8600 = vmatprep.subr.mxu0 0.0
    %v8601 = vand.u32 %v8591, 4294901760
    %8602 = vmatpush1.msra.mxu0 %v8601
    %8603 = vmatprep.subr.mxu0 0.0
    %v8604 = vand.u32 %v8592, 4294901760
    %8605 = vmatpush1.msra.mxu0 %v8604
    %8606 = vmatprep.subr.mxu0 0.0
    %v8607 = vand.u32 %v8593, 4294901760
    %8608 = vmatpush1.msra.mxu0 %v8607
    %8609 = vmatprep.subr.mxu0 0.0
    %v8610 = vand.u32 %v8594, 4294901760
    %8611 = vmatpush1.msra.mxu0 %v8610
    %8612 = vmatprep.subr.mxu0 0.0
    %8613 = vmatpush1.msra.mxu0 0.0
    %8614 = vmatprep.subr.mxu0 0.0
    %8615 = vmatpush1.msra.mxu0 0.0
    %8616 = vmatprep.subr.mxu0 0.0
    %8617 = vmatpush1.msra.mxu0 0.0
    %8618 = vmatprep.subr.mxu0 0.0
    %8619 = vmatpush1.msra.mxu0 0.0
    %8620 = vmatprep.subr.mxu0 0.0
    %8621 = vmatpush1.msra.mxu0 0.0
    %8622 = vmatprep.subr.mxu0 0.0
    %8623 = vmatpush1.msra.mxu0 0.0
    %8624 = vmatprep.subr.mxu0 0.0
    %8625 = vmatpush1.msra.mxu0 0.0
    %8626 = vmatprep.subr.mxu0 0.0
    %8627 = vmatpush1.msra.mxu0 0.0
    %8628 = vmatprep.subr.mxu0 0.0
    %8629 = vmatpush1.msra.mxu0 0.0
    %8630 = vmatprep.subr.mxu0 0.0
    %8631 = vmatpush1.msra.mxu0 0.0
    %8632 = vmatprep.subr.mxu0 0.0
    %8633 = vmatpush1.msra.mxu0 0.0
    %8634 = vmatprep.subr.mxu0 0.0
    %8635 = vmatpush1.msra.mxu0 0.0
    %8636 = vmatprep.subr.mxu0 0.0
    %8637 = vmatpush1.msra.mxu0 0.0
    %8638 = vmatprep.subr.mxu0 0.0
    %8639 = vmatpush1.msra.mxu0 0.0
    %8640 = vmatprep.subr.mxu0 0.0
    %8641 = vmatpush1.msra.mxu0 0.0
    %8642 = vmatprep.subr.mxu0 0.0
    %8643 = vmatpush1.msra.mxu0 0.0
    %8644 = vmatprep.subr.mxu0 0.0
    %8645 = vmatpush1.msra.mxu0 0.0
    %8646 = vmatprep.subr.mxu0 0.0
    %8647 = vmatpush1.msra.mxu0 0.0
    %8648 = vmatprep.subr.mxu0 0.0
    %8649 = vmatpush1.msra.mxu0 0.0
    %8650 = vmatprep.subr.mxu0 0.0
    %8651 = vmatpush1.msra.mxu0 0.0
    %8652 = vmatprep.subr.mxu0 0.0
    %8653 = vmatpush1.msra.mxu0 0.0
    %8654 = vmatprep.subr.mxu0 0.0
    %8655 = vmatpush1.msra.mxu0 0.0
    %8656 = vmatprep.subr.mxu0 0.0
    %8657 = vmatpush1.msra.mxu0 0.0
    %8658 = vmatprep.subr.mxu0 0.0
    %8659 = vmatpush1.msra.mxu0 0.0
    %8660 = vmatprep.subr.mxu0 0.0
    %8661 = vmatpush1.msra.mxu0 0.0
    %8662 = vmatprep.subr.mxu0 0.0
    %8663 = vmatpush1.msra.mxu0 0.0
    %8664 = vmatprep.subr.mxu0 0.0
    %8665 = vmatpush1.msra.mxu0 0.0
    %8666 = vmatprep.subr.mxu0 0.0
    %8667 = vmatpush1.msra.mxu0 0.0
    %8668 = vmatprep.mubr.f32.mxu0 0.0
    %v8669 = vand.u32 %v8598, 4294901760
    %v8670 = vsub.f32 %v8598, %v8669
    %v8671 = vand.u32 %v8670, 4294901760
    %v8672 = vsub.f32 %v8670, %v8671
    %v8673 = vand.u32 %v8672, 4294901760
    %8674 = vmatmul.mubr.f32.gmra.mrb[0].mxu0 %v8673
    %v8675 = vpop.f32.mrb[0].mxu0
    %v8676 = vadd.f32 0.0, %v8675
    %v8677 = vpop.f32.mrb[0].mxu0
    %8678 = vdwg.mxu0
    %8679 = vmatprep.subr.mxu0 0.0
    %v8680 = vand.u32 %v8591, 4294901760
    %v8681 = vsub.f32 %v8591, %v8680
    %v8682 = vand.u32 %v8681, 4294901760
    %v8683 = vsub.f32 %v8681, %v8682
    %v8684 = vand.u32 %v8683, 4294901760
    %8685 = vmatpush1.msra.mxu0 %v8684
    %8686 = vmatprep.subr.mxu0 0.0
    %v8687 = vand.u32 %v8592, 4294901760
    %v8688 = vsub.f32 %v8592, %v8687
    %v8689 = vand.u32 %v8688, 4294901760
    %v8690 = vsub.f32 %v8688, %v8689
    %v8691 = vand.u32 %v8690, 4294901760
    %8692 = vmatpush1.msra.mxu0 %v8691
    %8693 = vmatprep.subr.mxu0 0.0
    %v8694 = vand.u32 %v8593, 4294901760
    %v8695 = vsub.f32 %v8593, %v8694
    %v8696 = vand.u32 %v8695, 4294901760
    %v8697 = vsub.f32 %v8695, %v8696
    %v8698 = vand.u32 %v8697, 4294901760
    %8699 = vmatpush1.msra.mxu0 %v8698
    %8700 = vmatprep.subr.mxu0 0.0
    %v8701 = vand.u32 %v8594, 4294901760
    %v8702 = vsub.f32 %v8594, %v8701
    %v8703 = vand.u32 %v8702, 4294901760
    %v8704 = vsub.f32 %v8702, %v8703
    %v8705 = vand.u32 %v8704, 4294901760
    %8706 = vmatpush1.msra.mxu0 %v8705
    %8707 = vmatprep.subr.mxu0 0.0
    %8708 = vmatpush1.msra.mxu0 0.0
    %8709 = vmatprep.subr.mxu0 0.0
    %8710 = vmatpush1.msra.mxu0 0.0
    %8711 = vmatprep.subr.mxu0 0.0
    %8712 = vmatpush1.msra.mxu0 0.0
    %8713 = vmatprep.subr.mxu0 0.0
    %8714 = vmatpush1.msra.mxu0 0.0
    %8715 = vmatprep.subr.mxu0 0.0
    %8716 = vmatpush1.msra.mxu0 0.0
    %8717 = vmatprep.subr.mxu0 0.0
    %8718 = vmatpush1.msra.mxu0 0.0
    %8719 = vmatprep.subr.mxu0 0.0
    %8720 = vmatpush1.msra.mxu0 0.0
    %8721 = vmatprep.subr.mxu0 0.0
    %8722 = vmatpush1.msra.mxu0 0.0
    %8723 = vmatprep.subr.mxu0 0.0
    %8724 = vmatpush1.msra.mxu0 0.0
    %8725 = vmatprep.subr.mxu0 0.0
    %8726 = vmatpush1.msra.mxu0 0.0
    %8727 = vmatprep.subr.mxu0 0.0
    %8728 = vmatpush1.msra.mxu0 0.0
    %8729 = vmatprep.subr.mxu0 0.0
    %8730 = vmatpush1.msra.mxu0 0.0
    %8731 = vmatprep.subr.mxu0 0.0
    %8732 = vmatpush1.msra.mxu0 0.0
    %8733 = vmatprep.subr.mxu0 0.0
    %8734 = vmatpush1.msra.mxu0 0.0
    %8735 = vmatprep.subr.mxu0 0.0
    %8736 = vmatpush1.msra.mxu0 0.0
    %8737 = vmatprep.subr.mxu0 0.0
    %8738 = vmatpush1.msra.mxu0 0.0
    %8739 = vmatprep.subr.mxu0 0.0
    %8740 = vmatpush1.msra.mxu0 0.0
    %8741 = vmatprep.subr.mxu0 0.0
    %8742 = vmatpush1.msra.mxu0 0.0
    %8743 = vmatprep.subr.mxu0 0.0
    %8744 = vmatpush1.msra.mxu0 0.0
    %8745 = vmatprep.subr.mxu0 0.0
    %8746 = vmatpush1.msra.mxu0 0.0
    %8747 = vmatprep.subr.mxu0 0.0
    %8748 = vmatpush1.msra.mxu0 0.0
    %8749 = vmatprep.subr.mxu0 0.0
    %8750 = vmatpush1.msra.mxu0 0.0
    %8751 = vmatprep.subr.mxu0 0.0
    %8752 = vmatpush1.msra.mxu0 0.0
    %8753 = vmatprep.subr.mxu0 0.0
    %8754 = vmatpush1.msra.mxu0 0.0
    %8755 = vmatprep.subr.mxu0 0.0
    %8756 = vmatpush1.msra.mxu0 0.0
    %8757 = vmatprep.subr.mxu0 0.0
    %8758 = vmatpush1.msra.mxu0 0.0
    %8759 = vmatprep.subr.mxu0 0.0
    %8760 = vmatpush1.msra.mxu0 0.0
    %8761 = vmatprep.subr.mxu0 0.0
    %8762 = vmatpush1.msra.mxu0 0.0
    %8763 = vmatprep.mubr.f32.mxu0 0.0
    %v8764 = vand.u32 %v8598, 4294901760
    %8765 = vmatmul.mubr.f32.gmra.mrb[0].mxu0 %v8764
    %v8766 = vpop.f32.mrb[0].mxu0
    %v8767 = vadd.f32 %v8676, %v8766
    %v8768 = vpop.f32.mrb[0].mxu0
    %8769 = vdwg.mxu0
    %8770 = vmatprep.subr.mxu0 0.0
    %v8771 = vand.u32 %v8591, 4294901760
    %v8772 = vsub.f32 %v8591, %v8771
    %8773 = vmatpush1.msra.mxu0 %v8772
    %8774 = vmatprep.subr.mxu0 0.0
    %v8775 = vand.u32 %v8592, 4294901760
    %v8776 = vsub.f32 %v8592, %v8775
    %8777 = vmatpush1.msra.mxu0 %v8776
    %8778 = vmatprep.subr.mxu0 0.0
    %v8779 = vand.u32 %v8593, 4294901760
    %v8780 = vsub.f32 %v8593, %v8779
    %8781 = vmatpush1.msra.mxu0 %v8780
    %8782 = vmatprep.subr.mxu0 0.0
    %v8783 = vand.u32 %v8594, 4294901760
    %v8784 = vsub.f32 %v8594, %v8783
    %8785 = vmatpush1.msra.mxu0 %v8784
    %8786 = vmatprep.subr.mxu0 0.0
    %8787 = vmatpush1.msra.mxu0 0.0
    %8788 = vmatprep.subr.mxu0 0.0
    %8789 = vmatpush1.msra.mxu0 0.0
    %8790 = vmatprep.subr.mxu0 0.0
    %8791 = vmatpush1.msra.mxu0 0.0
    %8792 = vmatprep.subr.mxu0 0.0
    %8793 = vmatpush1.msra.mxu0 0.0
    %8794 = vmatprep.subr.mxu0 0.0
    %8795 = vmatpush1.msra.mxu0 0.0
    %8796 = vmatprep.subr.mxu0 0.0
    %8797 = vmatpush1.msra.mxu0 0.0
    %8798 = vmatprep.subr.mxu0 0.0
    %8799 = vmatpush1.msra.mxu0 0.0
    %8800 = vmatprep.subr.mxu0 0.0
    %8801 = vmatpush1.msra.mxu0 0.0
    %8802 = vmatprep.subr.mxu0 0.0
    %8803 = vmatpush1.msra.mxu0 0.0
    %8804 = vmatprep.subr.mxu0 0.0
    %8805 = vmatpush1.msra.mxu0 0.0
    %8806 = vmatprep.subr.mxu0 0.0
    %8807 = vmatpush1.msra.mxu0 0.0
    %8808 = vmatprep.subr.mxu0 0.0
    %8809 = vmatpush1.msra.mxu0 0.0
    %8810 = vmatprep.subr.mxu0 0.0
    %8811 = vmatpush1.msra.mxu0 0.0
    %8812 = vmatprep.subr.mxu0 0.0
    %8813 = vmatpush1.msra.mxu0 0.0
    %8814 = vmatprep.subr.mxu0 0.0
    %8815 = vmatpush1.msra.mxu0 0.0
    %8816 = vmatprep.subr.mxu0 0.0
    %8817 = vmatpush1.msra.mxu0 0.0
    %8818 = vmatprep.subr.mxu0 0.0
    %8819 = vmatpush1.msra.mxu0 0.0
    %8820 = vmatprep.subr.mxu0 0.0
    %8821 = vmatpush1.msra.mxu0 0.0
    %8822 = vmatprep.subr.mxu0 0.0
    %8823 = vmatpush1.msra.mxu0 0.0
    %8824 = vmatprep.subr.mxu0 0.0
    %8825 = vmatpush1.msra.mxu0 0.0
    %8826 = vmatprep.subr.mxu0 0.0
    %8827 = vmatpush1.msra.mxu0 0.0
    %8828 = vmatprep.subr.mxu0 0.0
    %8829 = vmatpush1.msra.mxu0 0.0
    %8830 = vmatprep.subr.mxu0 0.0
    %8831 = vmatpush1.msra.mxu0 0.0
    %8832 = vmatprep.subr.mxu0 0.0
    %8833 = vmatpush1.msra.mxu0 0.0
    %8834 = vmatprep.subr.mxu0 0.0
    %8835 = vmatpush1.msra.mxu0 0.0
    %8836 = vmatprep.subr.mxu0 0.0
    %8837 = vmatpush1.msra.mxu0 0.0
    %8838 = vmatprep.subr.mxu0 0.0
    %8839 = vmatpush1.msra.mxu0 0.0
    %8840 = vmatprep.subr.mxu0 0.0
    %8841 = vmatpush1.msra.mxu0 0.0
    %8842 = vmatprep.mubr.f32.mxu0 0.0
    %v8843 = vand.u32 %v8598, 4294901760
    %v8844 = vsub.f32 %v8598, %v8843
    %8845 = vmatmul.mubr.f32.gmra.mrb[0].mxu0 %v8844
    %v8846 = vpop.f32.mrb[0].mxu0
    %v8847 = vadd.f32 %v8767, %v8846
    %v8848 = vpop.f32.mrb[0].mxu0
    %8849 = vdwg.mxu0
    %8850 = vmatprep.subr.mxu0 0.0
    %v8851 = vand.u32 %v8591, 4294901760
    %8852 = vmatpush1.msra.mxu0 %v8851
    %8853 = vmatprep.subr.mxu0 0.0
    %v8854 = vand.u32 %v8592, 4294901760
    %8855 = vmatpush1.msra.mxu0 %v8854
    %8856 = vmatprep.subr.mxu0 0.0
    %v8857 = vand.u32 %v8593, 4294901760
    %8858 = vmatpush1.msra.mxu0 %v8857
    %8859 = vmatprep.subr.mxu0 0.0
    %v8860 = vand.u32 %v8594, 4294901760
    %8861 = vmatpush1.msra.mxu0 %v8860
    %8862 = vmatprep.subr.mxu0 0.0
    %8863 = vmatpush1.msra.mxu0 0.0
    %8864 = vmatprep.subr.mxu0 0.0
    %8865 = vmatpush1.msra.mxu0 0.0
    %8866 = vmatprep.subr.mxu0 0.0
    %8867 = vmatpush1.msra.mxu0 0.0
    %8868 = vmatprep.subr.mxu0 0.0
    %8869 = vmatpush1.msra.mxu0 0.0
    %8870 = vmatprep.subr.mxu0 0.0
    %8871 = vmatpush1.msra.mxu0 0.0
    %8872 = vmatprep.subr.mxu0 0.0
    %8873 = vmatpush1.msra.mxu0 0.0
    %8874 = vmatprep.subr.mxu0 0.0
    %8875 = vmatpush1.msra.mxu0 0.0
    %8876 = vmatprep.subr.mxu0 0.0
    %8877 = vmatpush1.msra.mxu0 0.0
    %8878 = vmatprep.subr.mxu0 0.0
    %8879 = vmatpush1.msra.mxu0 0.0
    %8880 = vmatprep.subr.mxu0 0.0
    %8881 = vmatpush1.msra.mxu0 0.0
    %8882 = vmatprep.subr.mxu0 0.0
    %8883 = vmatpush1.msra.mxu0 0.0
    %8884 = vmatprep.subr.mxu0 0.0
    %8885 = vmatpush1.msra.mxu0 0.0
    %8886 = vmatprep.subr.mxu0 0.0
    %8887 = vmatpush1.msra.mxu0 0.0
    %8888 = vmatprep.subr.mxu0 0.0
    %8889 = vmatpush1.msra.mxu0 0.0
    %8890 = vmatprep.subr.mxu0 0.0
    %8891 = vmatpush1.msra.mxu0 0.0
    %8892 = vmatprep.subr.mxu0 0.0
    %8893 = vmatpush1.msra.mxu0 0.0
    %8894 = vmatprep.subr.mxu0 0.0
    %8895 = vmatpush1.msra.mxu0 0.0
    %8896 = vmatprep.subr.mxu0 0.0
    %8897 = vmatpush1.msra.mxu0 0.0
    %8898 = vmatprep.subr.mxu0 0.0
    %8899 = vmatpush1.msra.mxu0 0.0
    %8900 = vmatprep.subr.mxu0 0.0
    %8901 = vmatpush1.msra.mxu0 0.0
    %8902 = vmatprep.subr.mxu0 0.0
    %8903 = vmatpush1.msra.mxu0 0.0
    %8904 = vmatprep.subr.mxu0 0.0
    %8905 = vmatpush1.msra.mxu0 0.0
    %8906 = vmatprep.subr.mxu0 0.0
    %8907 = vmatpush1.msra.mxu0 0.0
    %8908 = vmatprep.subr.mxu0 0.0
    %8909 = vmatpush1.msra.mxu0 0.0
    %8910 = vmatprep.subr.mxu0 0.0
    %8911 = vmatpush1.msra.mxu0 0.0
    %8912 = vmatprep.subr.mxu0 0.0
    %8913 = vmatpush1.msra.mxu0 0.0
    %8914 = vmatprep.subr.mxu0 0.0
    %8915 = vmatpush1.msra.mxu0 0.0
    %8916 = vmatprep.subr.mxu0 0.0
    %8917 = vmatpush1.msra.mxu0 0.0
    %8918 = vmatprep.mubr.f32.mxu0 0.0
    %v8919 = vand.u32 %v8598, 4294901760
    %v8920 = vsub.f32 %v8598, %v8919
    %v8921 = vand.u32 %v8920, 4294901760
    %8922 = vmatmul.mubr.f32.gmra.mrb[0].mxu0 %v8921
    %v8923 = vpop.f32.mrb[0].mxu0
    %v8924 = vadd.f32 %v8847, %v8923
    %v8925 = vpop.f32.mrb[0].mxu0
    %8926 = vdwg.mxu0
    %8927 = vmatprep.subr.mxu0 0.0
    %v8928 = vand.u32 %v8591, 4294901760
    %v8929 = vsub.f32 %v8591, %v8928
    %v8930 = vand.u32 %v8929, 4294901760
    %8931 = vmatpush1.msra.mxu0 %v8930
    %8932 = vmatprep.subr.mxu0 0.0
    %v8933 = vand.u32 %v8592, 4294901760
    %v8934 = vsub.f32 %v8592, %v8933
    %v8935 = vand.u32 %v8934, 4294901760
    %8936 = vmatpush1.msra.mxu0 %v8935
    %8937 = vmatprep.subr.mxu0 0.0
    %v8938 = vand.u32 %v8593, 4294901760
    %v8939 = vsub.f32 %v8593, %v8938
    %v8940 = vand.u32 %v8939, 4294901760
    %8941 = vmatpush1.msra.mxu0 %v8940
    %8942 = vmatprep.subr.mxu0 0.0
    %v8943 = vand.u32 %v8594, 4294901760
    %v8944 = vsub.f32 %v8594, %v8943
    %v8945 = vand.u32 %v8944, 4294901760
    %8946 = vmatpush1.msra.mxu0 %v8945
    %8947 = vmatprep.subr.mxu0 0.0
    %8948 = vmatpush1.msra.mxu0 0.0
    %8949 = vmatprep.subr.mxu0 0.0
    %8950 = vmatpush1.msra.mxu0 0.0
    %8951 = vmatprep.subr.mxu0 0.0
    %8952 = vmatpush1.msra.mxu0 0.0
    %8953 = vmatprep.subr.mxu0 0.0
    %8954 = vmatpush1.msra.mxu0 0.0
    %8955 = vmatprep.subr.mxu0 0.0
    %8956 = vmatpush1.msra.mxu0 0.0
    %8957 = vmatprep.subr.mxu0 0.0
    %8958 = vmatpush1.msra.mxu0 0.0
    %8959 = vmatprep.subr.mxu0 0.0
    %8960 = vmatpush1.msra.mxu0 0.0
    %8961 = vmatprep.subr.mxu0 0.0
    %8962 = vmatpush1.msra.mxu0 0.0
    %8963 = vmatprep.subr.mxu0 0.0
    %8964 = vmatpush1.msra.mxu0 0.0
    %8965 = vmatprep.subr.mxu0 0.0
    %8966 = vmatpush1.msra.mxu0 0.0
    %8967 = vmatprep.subr.mxu0 0.0
    %8968 = vmatpush1.msra.mxu0 0.0
    %8969 = vmatprep.subr.mxu0 0.0
    %8970 = vmatpush1.msra.mxu0 0.0
    %8971 = vmatprep.subr.mxu0 0.0
    %8972 = vmatpush1.msra.mxu0 0.0
    %8973 = vmatprep.subr.mxu0 0.0
    %8974 = vmatpush1.msra.mxu0 0.0
    %8975 = vmatprep.subr.mxu0 0.0
    %8976 = vmatpush1.msra.mxu0 0.0
    %8977 = vmatprep.subr.mxu0 0.0
    %8978 = vmatpush1.msra.mxu0 0.0
    %8979 = vmatprep.subr.mxu0 0.0
    %8980 = vmatpush1.msra.mxu0 0.0
    %8981 = vmatprep.subr.mxu0 0.0
    %8982 = vmatpush1.msra.mxu0 0.0
    %8983 = vmatprep.subr.mxu0 0.0
    %8984 = vmatpush1.msra.mxu0 0.0
    %8985 = vmatprep.subr.mxu0 0.0
    %8986 = vmatpush1.msra.mxu0 0.0
    %8987 = vmatprep.subr.mxu0 0.0
    %8988 = vmatpush1.msra.mxu0 0.0
    %8989 = vmatprep.subr.mxu0 0.0
    %8990 = vmatpush1.msra.mxu0 0.0
    %8991 = vmatprep.subr.mxu0 0.0
    %8992 = vmatpush1.msra.mxu0 0.0
    %8993 = vmatprep.subr.mxu0 0.0
    %8994 = vmatpush1.msra.mxu0 0.0
    %8995 = vmatprep.subr.mxu0 0.0
    %8996 = vmatpush1.msra.mxu0 0.0
    %8997 = vmatprep.subr.mxu0 0.0
    %8998 = vmatpush1.msra.mxu0 0.0
    %8999 = vmatprep.subr.mxu0 0.0
    %9000 = vmatpush1.msra.mxu0 0.0
    %9001 = vmatprep.subr.mxu0 0.0
    %9002 = vmatpush1.msra.mxu0 0.0
    %9003 = vmatprep.mubr.f32.mxu0 0.0
    %v9004 = vand.u32 %v8598, 4294901760
    %9005 = vmatmul.mubr.f32.gmra.mrb[0].mxu0 %v9004
    %v9006 = vpop.f32.mrb[0].mxu0
    %v9007 = vadd.f32 %v8924, %v9006
    %v9008 = vpop.f32.mrb[0].mxu0
    %9009 = vdwg.mxu0
    %9010 = vmatprep.subr.mxu0 0.0
    %v9011 = vand.u32 %v8591, 4294901760
    %9012 = vmatpush1.msra.mxu0 %v9011
    %9013 = vmatprep.subr.mxu0 0.0
    %v9014 = vand.u32 %v8592, 4294901760
    %9015 = vmatpush1.msra.mxu0 %v9014
    %9016 = vmatprep.subr.mxu0 0.0
    %v9017 = vand.u32 %v8593, 4294901760
    %9018 = vmatpush1.msra.mxu0 %v9017
    %9019 = vmatprep.subr.mxu0 0.0
    %v9020 = vand.u32 %v8594, 4294901760
    %9021 = vmatpush1.msra.mxu0 %v9020
    %9022 = vmatprep.subr.mxu0 0.0
    %9023 = vmatpush1.msra.mxu0 0.0
    %9024 = vmatprep.subr.mxu0 0.0
    %9025 = vmatpush1.msra.mxu0 0.0
    %9026 = vmatprep.subr.mxu0 0.0
    %9027 = vmatpush1.msra.mxu0 0.0
    %9028 = vmatprep.subr.mxu0 0.0
    %9029 = vmatpush1.msra.mxu0 0.0
    %9030 = vmatprep.subr.mxu0 0.0
    %9031 = vmatpush1.msra.mxu0 0.0
    %9032 = vmatprep.subr.mxu0 0.0
    %9033 = vmatpush1.msra.mxu0 0.0
    %9034 = vmatprep.subr.mxu0 0.0
    %9035 = vmatpush1.msra.mxu0 0.0
    %9036 = vmatprep.subr.mxu0 0.0
    %9037 = vmatpush1.msra.mxu0 0.0
    %9038 = vmatprep.subr.mxu0 0.0
    %9039 = vmatpush1.msra.mxu0 0.0
    %9040 = vmatprep.subr.mxu0 0.0
    %9041 = vmatpush1.msra.mxu0 0.0
    %9042 = vmatprep.subr.mxu0 0.0
    %9043 = vmatpush1.msra.mxu0 0.0
    %9044 = vmatprep.subr.mxu0 0.0
    %9045 = vmatpush1.msra.mxu0 0.0
    %9046 = vmatprep.subr.mxu0 0.0
    %9047 = vmatpush1.msra.mxu0 0.0
    %9048 = vmatprep.subr.mxu0 0.0
    %9049 = vmatpush1.msra.mxu0 0.0
    %9050 = vmatprep.subr.mxu0 0.0
    %9051 = vmatpush1.msra.mxu0 0.0
    %9052 = vmatprep.subr.mxu0 0.0
    %9053 = vmatpush1.msra.mxu0 0.0
    %9054 = vmatprep.subr.mxu0 0.0
    %9055 = vmatpush1.msra.mxu0 0.0
    %9056 = vmatprep.subr.mxu0 0.0
    %9057 = vmatpush1.msra.mxu0 0.0
    %9058 = vmatprep.subr.mxu0 0.0
    %9059 = vmatpush1.msra.mxu0 0.0
    %9060 = vmatprep.subr.mxu0 0.0
    %9061 = vmatpush1.msra.mxu0 0.0
    %9062 = vmatprep.subr.mxu0 0.0
    %9063 = vmatpush1.msra.mxu0 0.0
    %9064 = vmatprep.subr.mxu0 0.0
    %9065 = vmatpush1.msra.mxu0 0.0
    %9066 = vmatprep.subr.mxu0 0.0
    %9067 = vmatpush1.msra.mxu0 0.0
    %9068 = vmatprep.subr.mxu0 0.0
    %9069 = vmatpush1.msra.mxu0 0.0
    %9070 = vmatprep.subr.mxu0 0.0
    %9071 = vmatpush1.msra.mxu0 0.0
    %9072 = vmatprep.subr.mxu0 0.0
    %9073 = vmatpush1.msra.mxu0 0.0
    %9074 = vmatprep.subr.mxu0 0.0
    %9075 = vmatpush1.msra.mxu0 0.0
    %9076 = vmatprep.subr.mxu0 0.0
    %9077 = vmatpush1.msra.mxu0 0.0
    %9078 = vmatprep.mubr.f32.mxu0 0.0
    %v9079 = vand.u32 %v8598, 4294901760
    %9080 = vmatmul.mubr.f32.gmra.mrb[0].mxu0 %v9079
    %v9081 = vpop.f32.mrb[0].mxu0
    %v9082 = vadd.f32 %v9007, %v9081
    %v9083 = vpop.f32.mrb[0].mxu0
    %9084 = vdwg.mxu0
    %v9085 = vadd.f32 %v7512, %v9082
    %9087 = vrot.lane.b32.xlu0 %v8569, 32
    %v9088 = vpop.permute.xlu0 %9087
    %v9089 = vsel %vm138, %v9088, 0
    %v9091 = vand.u32 %v30, 4294901760
    %9092 = vmatprep.subr.mxu0 %v9091
    %v9093 = vand.u32 %v29, 4294901760
    %9094 = vmatpush1.msra.mxu0 %v9093
    %v9095 = vand.u32 %v32, 4294901760
    %9096 = vmatprep.subr.mxu0 %v9095
    %v9097 = vand.u32 %v31, 4294901760
    %9098 = vmatpush1.msra.mxu0 %v9097
    %v9099 = vand.u32 %v34, 4294901760
    %9100 = vmatprep.subr.mxu0 %v9099
    %v9101 = vand.u32 %v33, 4294901760
    %9102 = vmatpush1.msra.mxu0 %v9101
    %v9103 = vand.u32 %v36, 4294901760
    %9104 = vmatprep.subr.mxu0 %v9103
    %v9105 = vand.u32 %v35, 4294901760
    %9106 = vmatpush1.msra.mxu0 %v9105
    %9107 = vmatprep.subr.mxu0 0.0
    %9108 = vmatpush1.msra.mxu0 0.0
    %9109 = vmatprep.subr.mxu0 0.0
    %9110 = vmatpush1.msra.mxu0 0.0
    %9111 = vmatprep.subr.mxu0 0.0
    %9112 = vmatpush1.msra.mxu0 0.0
    %9113 = vmatprep.subr.mxu0 0.0
    %9114 = vmatpush1.msra.mxu0 0.0
    %9115 = vmatprep.subr.mxu0 0.0
    %9116 = vmatpush1.msra.mxu0 0.0
    %9117 = vmatprep.subr.mxu0 0.0
    %9118 = vmatpush1.msra.mxu0 0.0
    %9119 = vmatprep.subr.mxu0 0.0
    %9120 = vmatpush1.msra.mxu0 0.0
    %9121 = vmatprep.subr.mxu0 0.0
    %9122 = vmatpush1.msra.mxu0 0.0
    %9123 = vmatprep.subr.mxu0 0.0
    %9124 = vmatpush1.msra.mxu0 0.0
    %9125 = vmatprep.subr.mxu0 0.0
    %9126 = vmatpush1.msra.mxu0 0.0
    %9127 = vmatprep.subr.mxu0 0.0
    %9128 = vmatpush1.msra.mxu0 0.0
    %9129 = vmatprep.subr.mxu0 0.0
    %9130 = vmatpush1.msra.mxu0 0.0
    %9131 = vmatprep.subr.mxu0 0.0
    %9132 = vmatpush1.msra.mxu0 0.0
    %9133 = vmatprep.subr.mxu0 0.0
    %9134 = vmatpush1.msra.mxu0 0.0
    %9135 = vmatprep.subr.mxu0 0.0
    %9136 = vmatpush1.msra.mxu0 0.0
    %9137 = vmatprep.subr.mxu0 0.0
    %9138 = vmatpush1.msra.mxu0 0.0
    %9139 = vmatprep.subr.mxu0 0.0
    %9140 = vmatpush1.msra.mxu0 0.0
    %9141 = vmatprep.subr.mxu0 0.0
    %9142 = vmatpush1.msra.mxu0 0.0
    %9143 = vmatprep.subr.mxu0 0.0
    %9144 = vmatpush1.msra.mxu0 0.0
    %9145 = vmatprep.subr.mxu0 0.0
    %9146 = vmatpush1.msra.mxu0 0.0
    %9147 = vmatprep.subr.mxu0 0.0
    %9148 = vmatpush1.msra.mxu0 0.0
    %9149 = vmatprep.subr.mxu0 0.0
    %9150 = vmatpush1.msra.mxu0 0.0
    %9151 = vmatprep.subr.mxu0 0.0
    %9152 = vmatpush1.msra.mxu0 0.0
    %9153 = vmatprep.subr.mxu0 0.0
    %9154 = vmatpush1.msra.mxu0 0.0
    %9155 = vmatprep.subr.mxu0 0.0
    %9156 = vmatpush1.msra.mxu0 0.0
    %9157 = vmatprep.subr.mxu0 0.0
    %9158 = vmatpush1.msra.mxu0 0.0
    %9159 = vmatprep.subr.mxu0 0.0
    %9160 = vmatpush1.msra.mxu0 0.0
    %9161 = vmatprep.subr.mxu0 0.0
    %9162 = vmatpush1.msra.mxu0 0.0
    %9163 = vmatprep.mubr.f32.mxu0 0.0
    %v9164 = vand.u32 %v9089, 4294901760
    %v9165 = vsub.f32 %v9089, %v9164
    %v9166 = vand.u32 %v9165, 4294901760
    %v9167 = vsub.f32 %v9165, %v9166
    %v9168 = vand.u32 %v9167, 4294901760
    %9169 = vmatmul.mubr.f32.gmra.mrb[0].mxu0 %v9168
    %v9170 = vpop.f32.mrb[0].mxu0
    %v9171 = vadd.f32 0.0, %v9170
    %v9172 = vpop.f32.mrb[0].mxu0
    %v9173 = vadd.f32 0.0, %v9172
    %9174 = vdwg.mxu0
    %v9175 = vand.u32 %v30, 4294901760
    %v9176 = vsub.f32 %v30, %v9175
    %v9177 = vand.u32 %v9176, 4294901760
    %v9178 = vsub.f32 %v9176, %v9177
    %v9179 = vand.u32 %v9178, 4294901760
    %9180 = vmatprep.subr.mxu0 %v9179
    %v9181 = vand.u32 %v29, 4294901760
    %v9182 = vsub.f32 %v29, %v9181
    %v9183 = vand.u32 %v9182, 4294901760
    %v9184 = vsub.f32 %v9182, %v9183
    %v9185 = vand.u32 %v9184, 4294901760
    %9186 = vmatpush1.msra.mxu0 %v9185
    %v9187 = vand.u32 %v32, 4294901760
    %v9188 = vsub.f32 %v32, %v9187
    %v9189 = vand.u32 %v9188, 4294901760
    %v9190 = vsub.f32 %v9188, %v9189
    %v9191 = vand.u32 %v9190, 4294901760
    %9192 = vmatprep.subr.mxu0 %v9191
    %v9193 = vand.u32 %v31, 4294901760
    %v9194 = vsub.f32 %v31, %v9193
    %v9195 = vand.u32 %v9194, 4294901760
    %v9196 = vsub.f32 %v9194, %v9195
    %v9197 = vand.u32 %v9196, 4294901760
    %9198 = vmatpush1.msra.mxu0 %v9197
    %v9199 = vand.u32 %v34, 4294901760
    %v9200 = vsub.f32 %v34, %v9199
    %v9201 = vand.u32 %v9200, 4294901760
    %v9202 = vsub.f32 %v9200, %v9201
    %v9203 = vand.u32 %v9202, 4294901760
    %9204 = vmatprep.subr.mxu0 %v9203
    %v9205 = vand.u32 %v33, 4294901760
    %v9206 = vsub.f32 %v33, %v9205
    %v9207 = vand.u32 %v9206, 4294901760
    %v9208 = vsub.f32 %v9206, %v9207
    %v9209 = vand.u32 %v9208, 4294901760
    %9210 = vmatpush1.msra.mxu0 %v9209
    %v9211 = vand.u32 %v36, 4294901760
    %v9212 = vsub.f32 %v36, %v9211
    %v9213 = vand.u32 %v9212, 4294901760
    %v9214 = vsub.f32 %v9212, %v9213
    %v9215 = vand.u32 %v9214, 4294901760
    %9216 = vmatprep.subr.mxu0 %v9215
    %v9217 = vand.u32 %v35, 4294901760
    %v9218 = vsub.f32 %v35, %v9217
    %v9219 = vand.u32 %v9218, 4294901760
    %v9220 = vsub.f32 %v9218, %v9219
    %v9221 = vand.u32 %v9220, 4294901760
    %9222 = vmatpush1.msra.mxu0 %v9221
    %9223 = vmatprep.subr.mxu0 0.0
    %9224 = vmatpush1.msra.mxu0 0.0
    %9225 = vmatprep.subr.mxu0 0.0
    %9226 = vmatpush1.msra.mxu0 0.0
    %9227 = vmatprep.subr.mxu0 0.0
    %9228 = vmatpush1.msra.mxu0 0.0
    %9229 = vmatprep.subr.mxu0 0.0
    %9230 = vmatpush1.msra.mxu0 0.0
    %9231 = vmatprep.subr.mxu0 0.0
    %9232 = vmatpush1.msra.mxu0 0.0
    %9233 = vmatprep.subr.mxu0 0.0
    %9234 = vmatpush1.msra.mxu0 0.0
    %9235 = vmatprep.subr.mxu0 0.0
    %9236 = vmatpush1.msra.mxu0 0.0
    %9237 = vmatprep.subr.mxu0 0.0
    %9238 = vmatpush1.msra.mxu0 0.0
    %9239 = vmatprep.subr.mxu0 0.0
    %9240 = vmatpush1.msra.mxu0 0.0
    %9241 = vmatprep.subr.mxu0 0.0
    %9242 = vmatpush1.msra.mxu0 0.0
    %9243 = vmatprep.subr.mxu0 0.0
    %9244 = vmatpush1.msra.mxu0 0.0
    %9245 = vmatprep.subr.mxu0 0.0
    %9246 = vmatpush1.msra.mxu0 0.0
    %9247 = vmatprep.subr.mxu0 0.0
    %9248 = vmatpush1.msra.mxu0 0.0
    %9249 = vmatprep.subr.mxu0 0.0
    %9250 = vmatpush1.msra.mxu0 0.0
    %9251 = vmatprep.subr.mxu0 0.0
    %9252 = vmatpush1.msra.mxu0 0.0
    %9253 = vmatprep.subr.mxu0 0.0
    %9254 = vmatpush1.msra.mxu0 0.0
    %9255 = vmatprep.subr.mxu0 0.0
    %9256 = vmatpush1.msra.mxu0 0.0
    %9257 = vmatprep.subr.mxu0 0.0
    %9258 = vmatpush1.msra.mxu0 0.0
    %9259 = vmatprep.subr.mxu0 0.0
    %9260 = vmatpush1.msra.mxu0 0.0
    %9261 = vmatprep.subr.mxu0 0.0
    %9262 = vmatpush1.msra.mxu0 0.0
    %9263 = vmatprep.subr.mxu0 0.0
    %9264 = vmatpush1.msra.mxu0 0.0
    %9265 = vmatprep.subr.mxu0 0.0
    %9266 = vmatpush1.msra.mxu0 0.0
    %9267 = vmatprep.subr.mxu0 0.0
    %9268 = vmatpush1.msra.mxu0 0.0
    %9269 = vmatprep.subr.mxu0 0.0
    %9270 = vmatpush1.msra.mxu0 0.0
    %9271 = vmatprep.subr.mxu0 0.0
    %9272 = vmatpush1.msra.mxu0 0.0
    %9273 = vmatprep.subr.mxu0 0.0
    %9274 = vmatpush1.msra.mxu0 0.0
    %9275 = vmatprep.subr.mxu0 0.0
    %9276 = vmatpush1.msra.mxu0 0.0
    %9277 = vmatprep.subr.mxu0 0.0
    %9278 = vmatpush1.msra.mxu0 0.0
    %9279 = vmatprep.mubr.f32.mxu0 0.0
    %v9280 = vand.u32 %v9089, 4294901760
    %9281 = vmatmul.mubr.f32.gmra.mrb[0].mxu0 %v9280
    %v9282 = vpop.f32.mrb[0].mxu0
    %v9283 = vadd.f32 %v9171, %v9282
    %v9284 = vpop.f32.mrb[0].mxu0
    %v9285 = vadd.f32 %v9173, %v9284
    %9286 = vdwg.mxu0
    %v9287 = vand.u32 %v30, 4294901760
    %v9288 = vsub.f32 %v30, %v9287
    %9289 = vmatprep.subr.mxu0 %v9288
    %v9290 = vand.u32 %v29, 4294901760
    %v9291 = vsub.f32 %v29, %v9290
    %9292 = vmatpush1.msra.mxu0 %v9291
    %v9293 = vand.u32 %v32, 4294901760
    %v9294 = vsub.f32 %v32, %v9293
    %9295 = vmatprep.subr.mxu0 %v9294
    %v9296 = vand.u32 %v31, 4294901760
    %v9297 = vsub.f32 %v31, %v9296
    %9298 = vmatpush1.msra.mxu0 %v9297
    %v9299 = vand.u32 %v34, 4294901760
    %v9300 = vsub.f32 %v34, %v9299
    %9301 = vmatprep.subr.mxu0 %v9300
    %v9302 = vand.u32 %v33, 4294901760
    %v9303 = vsub.f32 %v33, %v9302
    %9304 = vmatpush1.msra.mxu0 %v9303
    %v9305 = vand.u32 %v36, 4294901760
    %v9306 = vsub.f32 %v36, %v9305
    %9307 = vmatprep.subr.mxu0 %v9306
    %v9308 = vand.u32 %v35, 4294901760
    %v9309 = vsub.f32 %v35, %v9308
    %9310 = vmatpush1.msra.mxu0 %v9309
    %9311 = vmatprep.subr.mxu0 0.0
    %9312 = vmatpush1.msra.mxu0 0.0
    %9313 = vmatprep.subr.mxu0 0.0
    %9314 = vmatpush1.msra.mxu0 0.0
    %9315 = vmatprep.subr.mxu0 0.0
    %9316 = vmatpush1.msra.mxu0 0.0
    %9317 = vmatprep.subr.mxu0 0.0
    %9318 = vmatpush1.msra.mxu0 0.0
    %9319 = vmatprep.subr.mxu0 0.0
    %9320 = vmatpush1.msra.mxu0 0.0
    %9321 = vmatprep.subr.mxu0 0.0
    %9322 = vmatpush1.msra.mxu0 0.0
    %9323 = vmatprep.subr.mxu0 0.0
    %9324 = vmatpush1.msra.mxu0 0.0
    %9325 = vmatprep.subr.mxu0 0.0
    %9326 = vmatpush1.msra.mxu0 0.0
    %9327 = vmatprep.subr.mxu0 0.0
    %9328 = vmatpush1.msra.mxu0 0.0
    %9329 = vmatprep.subr.mxu0 0.0
    %9330 = vmatpush1.msra.mxu0 0.0
    %9331 = vmatprep.subr.mxu0 0.0
    %9332 = vmatpush1.msra.mxu0 0.0
    %9333 = vmatprep.subr.mxu0 0.0
    %9334 = vmatpush1.msra.mxu0 0.0
    %9335 = vmatprep.subr.mxu0 0.0
    %9336 = vmatpush1.msra.mxu0 0.0
    %9337 = vmatprep.subr.mxu0 0.0
    %9338 = vmatpush1.msra.mxu0 0.0
    %9339 = vmatprep.subr.mxu0 0.0
    %9340 = vmatpush1.msra.mxu0 0.0
    %9341 = vmatprep.subr.mxu0 0.0
    %9342 = vmatpush1.msra.mxu0 0.0
    %9343 = vmatprep.subr.mxu0 0.0
    %9344 = vmatpush1.msra.mxu0 0.0
    %9345 = vmatprep.subr.mxu0 0.0
    %9346 = vmatpush1.msra.mxu0 0.0
    %9347 = vmatprep.subr.mxu0 0.0
    %9348 = vmatpush1.msra.mxu0 0.0
    %9349 = vmatprep.subr.mxu0 0.0
    %9350 = vmatpush1.msra.mxu0 0.0
    %9351 = vmatprep.subr.mxu0 0.0
    %9352 = vmatpush1.msra.mxu0 0.0
    %9353 = vmatprep.subr.mxu0 0.0
    %9354 = vmatpush1.msra.mxu0 0.0
    %9355 = vmatprep.subr.mxu0 0.0
    %9356 = vmatpush1.msra.mxu0 0.0
    %9357 = vmatprep.subr.mxu0 0.0
    %9358 = vmatpush1.msra.mxu0 0.0
    %9359 = vmatprep.subr.mxu0 0.0
    %9360 = vmatpush1.msra.mxu0 0.0
    %9361 = vmatprep.subr.mxu0 0.0
    %9362 = vmatpush1.msra.mxu0 0.0
    %9363 = vmatprep.subr.mxu0 0.0
    %9364 = vmatpush1.msra.mxu0 0.0
    %9365 = vmatprep.subr.mxu0 0.0
    %9366 = vmatpush1.msra.mxu0 0.0
    %9367 = vmatprep.mubr.f32.mxu0 0.0
    %v9368 = vand.u32 %v9089, 4294901760
    %v9369 = vsub.f32 %v9089, %v9368
    %9370 = vmatmul.mubr.f32.gmra.mrb[0].mxu0 %v9369
    %v9371 = vpop.f32.mrb[0].mxu0
    %v9372 = vadd.f32 %v9283, %v9371
    %v9373 = vpop.f32.mrb[0].mxu0
    %v9374 = vadd.f32 %v9285, %v9373
    %9375 = vdwg.mxu0
    %v9376 = vand.u32 %v30, 4294901760
    %9377 = vmatprep.subr.mxu0 %v9376
    %v9378 = vand.u32 %v29, 4294901760
    %9379 = vmatpush1.msra.mxu0 %v9378
    %v9380 = vand.u32 %v32, 4294901760
    %9381 = vmatprep.subr.mxu0 %v9380
    %v9382 = vand.u32 %v31, 4294901760
    %9383 = vmatpush1.msra.mxu0 %v9382
    %v9384 = vand.u32 %v34, 4294901760
    %9385 = vmatprep.subr.mxu0 %v9384
    %v9386 = vand.u32 %v33, 4294901760
    %9387 = vmatpush1.msra.mxu0 %v9386
    %v9388 = vand.u32 %v36, 4294901760
    %9389 = vmatprep.subr.mxu0 %v9388
    %v9390 = vand.u32 %v35, 4294901760
    %9391 = vmatpush1.msra.mxu0 %v9390
    %9392 = vmatprep.subr.mxu0 0.0
    %9393 = vmatpush1.msra.mxu0 0.0
    %9394 = vmatprep.subr.mxu0 0.0
    %9395 = vmatpush1.msra.mxu0 0.0
    %9396 = vmatprep.subr.mxu0 0.0
    %9397 = vmatpush1.msra.mxu0 0.0
    %9398 = vmatprep.subr.mxu0 0.0
    %9399 = vmatpush1.msra.mxu0 0.0
    %9400 = vmatprep.subr.mxu0 0.0
    %9401 = vmatpush1.msra.mxu0 0.0
    %9402 = vmatprep.subr.mxu0 0.0
    %9403 = vmatpush1.msra.mxu0 0.0
    %9404 = vmatprep.subr.mxu0 0.0
    %9405 = vmatpush1.msra.mxu0 0.0
    %9406 = vmatprep.subr.mxu0 0.0
    %9407 = vmatpush1.msra.mxu0 0.0
    %9408 = vmatprep.subr.mxu0 0.0
    %9409 = vmatpush1.msra.mxu0 0.0
    %9410 = vmatprep.subr.mxu0 0.0
    %9411 = vmatpush1.msra.mxu0 0.0
    %9412 = vmatprep.subr.mxu0 0.0
    %9413 = vmatpush1.msra.mxu0 0.0
    %9414 = vmatprep.subr.mxu0 0.0
    %9415 = vmatpush1.msra.mxu0 0.0
    %9416 = vmatprep.subr.mxu0 0.0
    %9417 = vmatpush1.msra.mxu0 0.0
    %9418 = vmatprep.subr.mxu0 0.0
    %9419 = vmatpush1.msra.mxu0 0.0
    %9420 = vmatprep.subr.mxu0 0.0
    %9421 = vmatpush1.msra.mxu0 0.0
    %9422 = vmatprep.subr.mxu0 0.0
    %9423 = vmatpush1.msra.mxu0 0.0
    %9424 = vmatprep.subr.mxu0 0.0
    %9425 = vmatpush1.msra.mxu0 0.0
    %9426 = vmatprep.subr.mxu0 0.0
    %9427 = vmatpush1.msra.mxu0 0.0
    %9428 = vmatprep.subr.mxu0 0.0
    %9429 = vmatpush1.msra.mxu0 0.0
    %9430 = vmatprep.subr.mxu0 0.0
    %9431 = vmatpush1.msra.mxu0 0.0
    %9432 = vmatprep.subr.mxu0 0.0
    %9433 = vmatpush1.msra.mxu0 0.0
    %9434 = vmatprep.subr.mxu0 0.0
    %9435 = vmatpush1.msra.mxu0 0.0
    %9436 = vmatprep.subr.mxu0 0.0
    %9437 = vmatpush1.msra.mxu0 0.0
    %9438 = vmatprep.subr.mxu0 0.0
    %9439 = vmatpush1.msra.mxu0 0.0
    %9440 = vmatprep.subr.mxu0 0.0
    %9441 = vmatpush1.msra.mxu0 0.0
    %9442 = vmatprep.subr.mxu0 0.0
    %9443 = vmatpush1.msra.mxu0 0.0
    %9444 = vmatprep.subr.mxu0 0.0
    %9445 = vmatpush1.msra.mxu0 0.0
    %9446 = vmatprep.subr.mxu0 0.0
    %9447 = vmatpush1.msra.mxu0 0.0
    %9448 = vmatprep.mubr.f32.mxu0 0.0
    %v9449 = vand.u32 %v9089, 4294901760
    %v9450 = vsub.f32 %v9089, %v9449
    %v9451 = vand.u32 %v9450, 4294901760
    %9452 = vmatmul.mubr.f32.gmra.mrb[0].mxu0 %v9451
    %v9453 = vpop.f32.mrb[0].mxu0
    %v9454 = vadd.f32 %v9372, %v9453
    %v9455 = vpop.f32.mrb[0].mxu0
    %v9456 = vadd.f32 %v9374, %v9455
    %9457 = vdwg.mxu0
    %v9458 = vand.u32 %v30, 4294901760
    %v9459 = vsub.f32 %v30, %v9458
    %v9460 = vand.u32 %v9459, 4294901760
    %9461 = vmatprep.subr.mxu0 %v9460
    %v9462 = vand.u32 %v29, 4294901760
    %v9463 = vsub.f32 %v29, %v9462
    %v9464 = vand.u32 %v9463, 4294901760
    %9465 = vmatpush1.msra.mxu0 %v9464
    %v9466 = vand.u32 %v32, 4294901760
    %v9467 = vsub.f32 %v32, %v9466
    %v9468 = vand.u32 %v9467, 4294901760
    %9469 = vmatprep.subr.mxu0 %v9468
    %v9470 = vand.u32 %v31, 4294901760
    %v9471 = vsub.f32 %v31, %v9470
    %v9472 = vand.u32 %v9471, 4294901760
    %9473 = vmatpush1.msra.mxu0 %v9472
    %v9474 = vand.u32 %v34, 4294901760
    %v9475 = vsub.f32 %v34, %v9474
    %v9476 = vand.u32 %v9475, 4294901760
    %9477 = vmatprep.subr.mxu0 %v9476
    %v9478 = vand.u32 %v33, 4294901760
    %v9479 = vsub.f32 %v33, %v9478
    %v9480 = vand.u32 %v9479, 4294901760
    %9481 = vmatpush1.msra.mxu0 %v9480
    %v9482 = vand.u32 %v36, 4294901760
    %v9483 = vsub.f32 %v36, %v9482
    %v9484 = vand.u32 %v9483, 4294901760
    %9485 = vmatprep.subr.mxu0 %v9484
    %v9486 = vand.u32 %v35, 4294901760
    %v9487 = vsub.f32 %v35, %v9486
    %v9488 = vand.u32 %v9487, 4294901760
    %9489 = vmatpush1.msra.mxu0 %v9488
    %9490 = vmatprep.subr.mxu0 0.0
    %9491 = vmatpush1.msra.mxu0 0.0
    %9492 = vmatprep.subr.mxu0 0.0
    %9493 = vmatpush1.msra.mxu0 0.0
    %9494 = vmatprep.subr.mxu0 0.0
    %9495 = vmatpush1.msra.mxu0 0.0
    %9496 = vmatprep.subr.mxu0 0.0
    %9497 = vmatpush1.msra.mxu0 0.0
    %9498 = vmatprep.subr.mxu0 0.0
    %9499 = vmatpush1.msra.mxu0 0.0
    %9500 = vmatprep.subr.mxu0 0.0
    %9501 = vmatpush1.msra.mxu0 0.0
    %9502 = vmatprep.subr.mxu0 0.0
    %9503 = vmatpush1.msra.mxu0 0.0
    %9504 = vmatprep.subr.mxu0 0.0
    %9505 = vmatpush1.msra.mxu0 0.0
    %9506 = vmatprep.subr.mxu0 0.0
    %9507 = vmatpush1.msra.mxu0 0.0
    %9508 = vmatprep.subr.mxu0 0.0
    %9509 = vmatpush1.msra.mxu0 0.0
    %9510 = vmatprep.subr.mxu0 0.0
    %9511 = vmatpush1.msra.mxu0 0.0
    %9512 = vmatprep.subr.mxu0 0.0
    %9513 = vmatpush1.msra.mxu0 0.0
    %9514 = vmatprep.subr.mxu0 0.0
    %9515 = vmatpush1.msra.mxu0 0.0
    %9516 = vmatprep.subr.mxu0 0.0
    %9517 = vmatpush1.msra.mxu0 0.0
    %9518 = vmatprep.subr.mxu0 0.0
    %9519 = vmatpush1.msra.mxu0 0.0
    %9520 = vmatprep.subr.mxu0 0.0
    %9521 = vmatpush1.msra.mxu0 0.0
    %9522 = vmatprep.subr.mxu0 0.0
    %9523 = vmatpush1.msra.mxu0 0.0
    %9524 = vmatprep.subr.mxu0 0.0
    %9525 = vmatpush1.msra.mxu0 0.0
    %9526 = vmatprep.subr.mxu0 0.0
    %9527 = vmatpush1.msra.mxu0 0.0
    %9528 = vmatprep.subr.mxu0 0.0
    %9529 = vmatpush1.msra.mxu0 0.0
    %9530 = vmatprep.subr.mxu0 0.0
    %9531 = vmatpush1.msra.mxu0 0.0
    %9532 = vmatprep.subr.mxu0 0.0
    %9533 = vmatpush1.msra.mxu0 0.0
    %9534 = vmatprep.subr.mxu0 0.0
    %9535 = vmatpush1.msra.mxu0 0.0
    %9536 = vmatprep.subr.mxu0 0.0
    %9537 = vmatpush1.msra.mxu0 0.0
    %9538 = vmatprep.subr.mxu0 0.0
    %9539 = vmatpush1.msra.mxu0 0.0
    %9540 = vmatprep.subr.mxu0 0.0
    %9541 = vmatpush1.msra.mxu0 0.0
    %9542 = vmatprep.subr.mxu0 0.0
    %9543 = vmatpush1.msra.mxu0 0.0
    %9544 = vmatprep.subr.mxu0 0.0
    %9545 = vmatpush1.msra.mxu0 0.0
    %9546 = vmatprep.mubr.f32.mxu0 0.0
    %v9547 = vand.u32 %v9089, 4294901760
    %9548 = vmatmul.mubr.f32.gmra.mrb[0].mxu0 %v9547
    %v9549 = vpop.f32.mrb[0].mxu0
    %v9550 = vadd.f32 %v9454, %v9549
    %v9551 = vpop.f32.mrb[0].mxu0
    %v9552 = vadd.f32 %v9456, %v9551
    %9553 = vdwg.mxu0
    %v9554 = vand.u32 %v30, 4294901760
    %9555 = vmatprep.subr.mxu0 %v9554
    %v9556 = vand.u32 %v29, 4294901760
    %9557 = vmatpush1.msra.mxu0 %v9556
    %v9558 = vand.u32 %v32, 4294901760
    %9559 = vmatprep.subr.mxu0 %v9558
    %v9560 = vand.u32 %v31, 4294901760
    %9561 = vmatpush1.msra.mxu0 %v9560
    %v9562 = vand.u32 %v34, 4294901760
    %9563 = vmatprep.subr.mxu0 %v9562
    %v9564 = vand.u32 %v33, 4294901760
    %9565 = vmatpush1.msra.mxu0 %v9564
    %v9566 = vand.u32 %v36, 4294901760
    %9567 = vmatprep.subr.mxu0 %v9566
    %v9568 = vand.u32 %v35, 4294901760
    %9569 = vmatpush1.msra.mxu0 %v9568
    %9570 = vmatprep.subr.mxu0 0.0
    %9571 = vmatpush1.msra.mxu0 0.0
    %9572 = vmatprep.subr.mxu0 0.0
    %9573 = vmatpush1.msra.mxu0 0.0
    %9574 = vmatprep.subr.mxu0 0.0
    %9575 = vmatpush1.msra.mxu0 0.0
    %9576 = vmatprep.subr.mxu0 0.0
    %9577 = vmatpush1.msra.mxu0 0.0
    %9578 = vmatprep.subr.mxu0 0.0
    %9579 = vmatpush1.msra.mxu0 0.0
    %9580 = vmatprep.subr.mxu0 0.0
    %9581 = vmatpush1.msra.mxu0 0.0
    %9582 = vmatprep.subr.mxu0 0.0
    %9583 = vmatpush1.msra.mxu0 0.0
    %9584 = vmatprep.subr.mxu0 0.0
    %9585 = vmatpush1.msra.mxu0 0.0
    %9586 = vmatprep.subr.mxu0 0.0
    %9587 = vmatpush1.msra.mxu0 0.0
    %9588 = vmatprep.subr.mxu0 0.0
    %9589 = vmatpush1.msra.mxu0 0.0
    %9590 = vmatprep.subr.mxu0 0.0
    %9591 = vmatpush1.msra.mxu0 0.0
    %9592 = vmatprep.subr.mxu0 0.0
    %9593 = vmatpush1.msra.mxu0 0.0
    %9594 = vmatprep.subr.mxu0 0.0
    %9595 = vmatpush1.msra.mxu0 0.0
    %9596 = vmatprep.subr.mxu0 0.0
    %9597 = vmatpush1.msra.mxu0 0.0
    %9598 = vmatprep.subr.mxu0 0.0
    %9599 = vmatpush1.msra.mxu0 0.0
    %9600 = vmatprep.subr.mxu0 0.0
    %9601 = vmatpush1.msra.mxu0 0.0
    %9602 = vmatprep.subr.mxu0 0.0
    %9603 = vmatpush1.msra.mxu0 0.0
    %9604 = vmatprep.subr.mxu0 0.0
    %9605 = vmatpush1.msra.mxu0 0.0
    %9606 = vmatprep.subr.mxu0 0.0
    %9607 = vmatpush1.msra.mxu0 0.0
    %9608 = vmatprep.subr.mxu0 0.0
    %9609 = vmatpush1.msra.mxu0 0.0
    %9610 = vmatprep.subr.mxu0 0.0
    %9611 = vmatpush1.msra.mxu0 0.0
    %9612 = vmatprep.subr.mxu0 0.0
    %9613 = vmatpush1.msra.mxu0 0.0
    %9614 = vmatprep.subr.mxu0 0.0
    %9615 = vmatpush1.msra.mxu0 0.0
    %9616 = vmatprep.subr.mxu0 0.0
    %9617 = vmatpush1.msra.mxu0 0.0
    %9618 = vmatprep.subr.mxu0 0.0
    %9619 = vmatpush1.msra.mxu0 0.0
    %9620 = vmatprep.subr.mxu0 0.0
    %9621 = vmatpush1.msra.mxu0 0.0
    %9622 = vmatprep.subr.mxu0 0.0
    %9623 = vmatpush1.msra.mxu0 0.0
    %9624 = vmatprep.subr.mxu0 0.0
    %9625 = vmatpush1.msra.mxu0 0.0
    %9626 = vmatprep.mubr.f32.mxu0 0.0
    %v9627 = vand.u32 %v9089, 4294901760
    %9628 = vmatmul.mubr.f32.gmra.mrb[0].mxu0 %v9627
    %v9629 = vpop.f32.mrb[0].mxu0
    %v9630 = vadd.f32 %v9550, %v9629
    %v9631 = vpop.f32.mrb[0].mxu0
    %v9632 = vadd.f32 %v9552, %v9631
    %9633 = vdwg.mxu0
    %v9634 = vadd.f32 %v108, %v9630
    %v9635 = vadd.f32 %v28, %v9632
    %9636 = vmatprep.subr.mxu0 0.0
    %v9637 = vand.u32 %v18, 4294901760
    %9638 = vmatpush1.msra.mxu0 %v9637
    %9639 = vmatprep.subr.mxu0 0.0
    %v9640 = vand.u32 %v19, 4294901760
    %9641 = vmatpush1.msra.mxu0 %v9640
    %9642 = vmatprep.subr.mxu0 0.0
    %v9643 = vand.u32 %v20, 4294901760
    %9644 = vmatpush1.msra.mxu0 %v9643
    %9645 = vmatprep.subr.mxu0 0.0
    %v9646 = vand.u32 %v21, 4294901760
    %9647 = vmatpush1.msra.mxu0 %v9646
    %9648 = vmatprep.subr.mxu0 0.0
    %9649 = vmatpush1.msra.mxu0 0.0
    %9650 = vmatprep.subr.mxu0 0.0
    %9651 = vmatpush1.msra.mxu0 0.0
    %9652 = vmatprep.subr.mxu0 0.0
    %9653 = vmatpush1.msra.mxu0 0.0
    %9654 = vmatprep.subr.mxu0 0.0
    %9655 = vmatpush1.msra.mxu0 0.0
    %9656 = vmatprep.subr.mxu0 0.0
    %9657 = vmatpush1.msra.mxu0 0.0
    %9658 = vmatprep.subr.mxu0 0.0
    %9659 = vmatpush1.msra.mxu0 0.0
    %9660 = vmatprep.subr.mxu0 0.0
    %9661 = vmatpush1.msra.mxu0 0.0
    %9662 = vmatprep.subr.mxu0 0.0
    %9663 = vmatpush1.msra.mxu0 0.0
    %9664 = vmatprep.subr.mxu0 0.0
    %9665 = vmatpush1.msra.mxu0 0.0
    %9666 = vmatprep.subr.mxu0 0.0
    %9667 = vmatpush1.msra.mxu0 0.0
    %9668 = vmatprep.subr.mxu0 0.0
    %9669 = vmatpush1.msra.mxu0 0.0
    %9670 = vmatprep.subr.mxu0 0.0
    %9671 = vmatpush1.msra.mxu0 0.0
    %9672 = vmatprep.subr.mxu0 0.0
    %9673 = vmatpush1.msra.mxu0 0.0
    %9674 = vmatprep.subr.mxu0 0.0
    %9675 = vmatpush1.msra.mxu0 0.0
    %9676 = vmatprep.subr.mxu0 0.0
    %9677 = vmatpush1.msra.mxu0 0.0
    %9678 = vmatprep.subr.mxu0 0.0
    %9679 = vmatpush1.msra.mxu0 0.0
    %9680 = vmatprep.subr.mxu0 0.0
    %9681 = vmatpush1.msra.mxu0 0.0
    %9682 = vmatprep.subr.mxu0 0.0
    %9683 = vmatpush1.msra.mxu0 0.0
    %9684 = vmatprep.subr.mxu0 0.0
    %9685 = vmatpush1.msra.mxu0 0.0
    %9686 = vmatprep.subr.mxu0 0.0
    %9687 = vmatpush1.msra.mxu0 0.0
    %9688 = vmatprep.subr.mxu0 0.0
    %9689 = vmatpush1.msra.mxu0 0.0
    %9690 = vmatprep.subr.mxu0 0.0
    %9691 = vmatpush1.msra.mxu0 0.0
    %9692 = vmatprep.subr.mxu0 0.0
    %9693 = vmatpush1.msra.mxu0 0.0
    %9694 = vmatprep.subr.mxu0 0.0
    %9695 = vmatpush1.msra.mxu0 0.0
    %9696 = vmatprep.subr.mxu0 0.0
    %9697 = vmatpush1.msra.mxu0 0.0
    %9698 = vmatprep.subr.mxu0 0.0
    %9699 = vmatpush1.msra.mxu0 0.0
    %9700 = vmatprep.subr.mxu0 0.0
    %9701 = vmatpush1.msra.mxu0 0.0
    %9702 = vmatprep.subr.mxu0 0.0
    %9703 = vmatpush1.msra.mxu0 0.0
    %9704 = vmatprep.mubr.f32.mxu0 0.0
    %v9705 = vand.u32 %v8598, 4294901760
    %v9706 = vsub.f32 %v8598, %v9705
    %v9707 = vand.u32 %v9706, 4294901760
    %v9708 = vsub.f32 %v9706, %v9707
    %v9709 = vand.u32 %v9708, 4294901760
    %9710 = vmatmul.mubr.f32.gmra.mrb[0].mxu0 %v9709
    %v9711 = vpop.f32.mrb[0].mxu0
    %v9712 = vadd.f32 0.0, %v9711
    %v9713 = vpop.f32.mrb[0].mxu0
    %9714 = vdwg.mxu0
    %9715 = vmatprep.subr.mxu0 0.0
    %v9716 = vand.u32 %v18, 4294901760
    %v9717 = vsub.f32 %v18, %v9716
    %v9718 = vand.u32 %v9717, 4294901760
    %v9719 = vsub.f32 %v9717, %v9718
    %v9720 = vand.u32 %v9719, 4294901760
    %9721 = vmatpush1.msra.mxu0 %v9720
    %9722 = vmatprep.subr.mxu0 0.0
    %v9723 = vand.u32 %v19, 4294901760
    %v9724 = vsub.f32 %v19, %v9723
    %v9725 = vand.u32 %v9724, 4294901760
    %v9726 = vsub.f32 %v9724, %v9725
    %v9727 = vand.u32 %v9726, 4294901760
    %9728 = vmatpush1.msra.mxu0 %v9727
    %9729 = vmatprep.subr.mxu0 0.0
    %v9730 = vand.u32 %v20, 4294901760
    %v9731 = vsub.f32 %v20, %v9730
    %v9732 = vand.u32 %v9731, 4294901760
    %v9733 = vsub.f32 %v9731, %v9732
    %v9734 = vand.u32 %v9733, 4294901760
    %9735 = vmatpush1.msra.mxu0 %v9734
    %9736 = vmatprep.subr.mxu0 0.0
    %v9737 = vand.u32 %v21, 4294901760
    %v9738 = vsub.f32 %v21, %v9737
    %v9739 = vand.u32 %v9738, 4294901760
    %v9740 = vsub.f32 %v9738, %v9739
    %v9741 = vand.u32 %v9740, 4294901760
    %9742 = vmatpush1.msra.mxu0 %v9741
    %9743 = vmatprep.subr.mxu0 0.0
    %9744 = vmatpush1.msra.mxu0 0.0
    %9745 = vmatprep.subr.mxu0 0.0
    %9746 = vmatpush1.msra.mxu0 0.0
    %9747 = vmatprep.subr.mxu0 0.0
    %9748 = vmatpush1.msra.mxu0 0.0
    %9749 = vmatprep.subr.mxu0 0.0
    %9750 = vmatpush1.msra.mxu0 0.0
    %9751 = vmatprep.subr.mxu0 0.0
    %9752 = vmatpush1.msra.mxu0 0.0
    %9753 = vmatprep.subr.mxu0 0.0
    %9754 = vmatpush1.msra.mxu0 0.0
    %9755 = vmatprep.subr.mxu0 0.0
    %9756 = vmatpush1.msra.mxu0 0.0
    %9757 = vmatprep.subr.mxu0 0.0
    %9758 = vmatpush1.msra.mxu0 0.0
    %9759 = vmatprep.subr.mxu0 0.0
    %9760 = vmatpush1.msra.mxu0 0.0
    %9761 = vmatprep.subr.mxu0 0.0
    %9762 = vmatpush1.msra.mxu0 0.0
    %9763 = vmatprep.subr.mxu0 0.0
    %9764 = vmatpush1.msra.mxu0 0.0
    %9765 = vmatprep.subr.mxu0 0.0
    %9766 = vmatpush1.msra.mxu0 0.0
    %9767 = vmatprep.subr.mxu0 0.0
    %9768 = vmatpush1.msra.mxu0 0.0
    %9769 = vmatprep.subr.mxu0 0.0
    %9770 = vmatpush1.msra.mxu0 0.0
    %9771 = vmatprep.subr.mxu0 0.0
    %9772 = vmatpush1.msra.mxu0 0.0
    %9773 = vmatprep.subr.mxu0 0.0
    %9774 = vmatpush1.msra.mxu0 0.0
    %9775 = vmatprep.subr.mxu0 0.0
    %9776 = vmatpush1.msra.mxu0 0.0
    %9777 = vmatprep.subr.mxu0 0.0
    %9778 = vmatpush1.msra.mxu0 0.0
    %9779 = vmatprep.subr.mxu0 0.0
    %9780 = vmatpush1.msra.mxu0 0.0
    %9781 = vmatprep.subr.mxu0 0.0
    %9782 = vmatpush1.msra.mxu0 0.0
    %9783 = vmatprep.subr.mxu0 0.0
    %9784 = vmatpush1.msra.mxu0 0.0
    %9785 = vmatprep.subr.mxu0 0.0
    %9786 = vmatpush1.msra.mxu0 0.0
    %9787 = vmatprep.subr.mxu0 0.0
    %9788 = vmatpush1.msra.mxu0 0.0
    %9789 = vmatprep.subr.mxu0 0.0
    %9790 = vmatpush1.msra.mxu0 0.0
    %9791 = vmatprep.subr.mxu0 0.0
    %9792 = vmatpush1.msra.mxu0 0.0
    %9793 = vmatprep.subr.mxu0 0.0
    %9794 = vmatpush1.msra.mxu0 0.0
    %9795 = vmatprep.subr.mxu0 0.0
    %9796 = vmatpush1.msra.mxu0 0.0
    %9797 = vmatprep.subr.mxu0 0.0
    %9798 = vmatpush1.msra.mxu0 0.0
    %9799 = vmatprep.mubr.f32.mxu0 0.0
    %v9800 = vand.u32 %v8598, 4294901760
    %9801 = vmatmul.mubr.f32.gmra.mrb[0].mxu0 %v9800
    %v9802 = vpop.f32.mrb[0].mxu0
    %v9803 = vadd.f32 %v9712, %v9802
    %v9804 = vpop.f32.mrb[0].mxu0
    %9805 = vdwg.mxu0
    %9806 = vmatprep.subr.mxu0 0.0
    %v9807 = vand.u32 %v18, 4294901760
    %v9808 = vsub.f32 %v18, %v9807
    %9809 = vmatpush1.msra.mxu0 %v9808
    %9810 = vmatprep.subr.mxu0 0.0
    %v9811 = vand.u32 %v19, 4294901760
    %v9812 = vsub.f32 %v19, %v9811
    %9813 = vmatpush1.msra.mxu0 %v9812
    %9814 = vmatprep.subr.mxu0 0.0
    %v9815 = vand.u32 %v20, 4294901760
    %v9816 = vsub.f32 %v20, %v9815
    %9817 = vmatpush1.msra.mxu0 %v9816
    %9818 = vmatprep.subr.mxu0 0.0
    %v9819 = vand.u32 %v21, 4294901760
    %v9820 = vsub.f32 %v21, %v9819
    %9821 = vmatpush1.msra.mxu0 %v9820
    %9822 = vmatprep.subr.mxu0 0.0
    %9823 = vmatpush1.msra.mxu0 0.0
    %9824 = vmatprep.subr.mxu0 0.0
    %9825 = vmatpush1.msra.mxu0 0.0
    %9826 = vmatprep.subr.mxu0 0.0
    %9827 = vmatpush1.msra.mxu0 0.0
    %9828 = vmatprep.subr.mxu0 0.0
    %9829 = vmatpush1.msra.mxu0 0.0
    %9830 = vmatprep.subr.mxu0 0.0
    %9831 = vmatpush1.msra.mxu0 0.0
    %9832 = vmatprep.subr.mxu0 0.0
    %9833 = vmatpush1.msra.mxu0 0.0
    %9834 = vmatprep.subr.mxu0 0.0
    %9835 = vmatpush1.msra.mxu0 0.0
    %9836 = vmatprep.subr.mxu0 0.0
    %9837 = vmatpush1.msra.mxu0 0.0
    %9838 = vmatprep.subr.mxu0 0.0
    %9839 = vmatpush1.msra.mxu0 0.0
    %9840 = vmatprep.subr.mxu0 0.0
    %9841 = vmatpush1.msra.mxu0 0.0
    %9842 = vmatprep.subr.mxu0 0.0
    %9843 = vmatpush1.msra.mxu0 0.0
    %9844 = vmatprep.subr.mxu0 0.0
    %9845 = vmatpush1.msra.mxu0 0.0
    %9846 = vmatprep.subr.mxu0 0.0
    %9847 = vmatpush1.msra.mxu0 0.0
    %9848 = vmatprep.subr.mxu0 0.0
    %9849 = vmatpush1.msra.mxu0 0.0
    %9850 = vmatprep.subr.mxu0 0.0
    %9851 = vmatpush1.msra.mxu0 0.0
    %9852 = vmatprep.subr.mxu0 0.0
    %9853 = vmatpush1.msra.mxu0 0.0
    %9854 = vmatprep.subr.mxu0 0.0
    %9855 = vmatpush1.msra.mxu0 0.0
    %9856 = vmatprep.subr.mxu0 0.0
    %9857 = vmatpush1.msra.mxu0 0.0
    %9858 = vmatprep.subr.mxu0 0.0
    %9859 = vmatpush1.msra.mxu0 0.0
    %9860 = vmatprep.subr.mxu0 0.0
    %9861 = vmatpush1.msra.mxu0 0.0
    %9862 = vmatprep.subr.mxu0 0.0
    %9863 = vmatpush1.msra.mxu0 0.0
    %9864 = vmatprep.subr.mxu0 0.0
    %9865 = vmatpush1.msra.mxu0 0.0
    %9866 = vmatprep.subr.mxu0 0.0
    %9867 = vmatpush1.msra.mxu0 0.0
    %9868 = vmatprep.subr.mxu0 0.0
    %9869 = vmatpush1.msra.mxu0 0.0
    %9870 = vmatprep.subr.mxu0 0.0
    %9871 = vmatpush1.msra.mxu0 0.0
    %9872 = vmatprep.subr.mxu0 0.0
    %9873 = vmatpush1.msra.mxu0 0.0
    %9874 = vmatprep.subr.mxu0 0.0
    %9875 = vmatpush1.msra.mxu0 0.0
    %9876 = vmatprep.subr.mxu0 0.0
    %9877 = vmatpush1.msra.mxu0 0.0
    %9878 = vmatprep.mubr.f32.mxu0 0.0
    %v9879 = vand.u32 %v8598, 4294901760
    %v9880 = vsub.f32 %v8598, %v9879
    %9881 = vmatmul.mubr.f32.gmra.mrb[0].mxu0 %v9880
    %v9882 = vpop.f32.mrb[0].mxu0
    %v9883 = vadd.f32 %v9803, %v9882
    %v9884 = vpop.f32.mrb[0].mxu0
    %9885 = vdwg.mxu0
    %9886 = vmatprep.subr.mxu0 0.0
    %v9887 = vand.u32 %v18, 4294901760
    %9888 = vmatpush1.msra.mxu0 %v9887
    %9889 = vmatprep.subr.mxu0 0.0
    %v9890 = vand.u32 %v19, 4294901760
    %9891 = vmatpush1.msra.mxu0 %v9890
    %9892 = vmatprep.subr.mxu0 0.0
    %v9893 = vand.u32 %v20, 4294901760
    %9894 = vmatpush1.msra.mxu0 %v9893
    %9895 = vmatprep.subr.mxu0 0.0
    %v9896 = vand.u32 %v21, 4294901760
    %9897 = vmatpush1.msra.mxu0 %v9896
    %9898 = vmatprep.subr.mxu0 0.0
    %9899 = vmatpush1.msra.mxu0 0.0
    %9900 = vmatprep.subr.mxu0 0.0
    %9901 = vmatpush1.msra.mxu0 0.0
    %9902 = vmatprep.subr.mxu0 0.0
    %9903 = vmatpush1.msra.mxu0 0.0
    %9904 = vmatprep.subr.mxu0 0.0
    %9905 = vmatpush1.msra.mxu0 0.0
    %9906 = vmatprep.subr.mxu0 0.0
    %9907 = vmatpush1.msra.mxu0 0.0
    %9908 = vmatprep.subr.mxu0 0.0
    %9909 = vmatpush1.msra.mxu0 0.0
    %9910 = vmatprep.subr.mxu0 0.0
    %9911 = vmatpush1.msra.mxu0 0.0
    %9912 = vmatprep.subr.mxu0 0.0
    %9913 = vmatpush1.msra.mxu0 0.0
    %9914 = vmatprep.subr.mxu0 0.0
    %9915 = vmatpush1.msra.mxu0 0.0
    %9916 = vmatprep.subr.mxu0 0.0
    %9917 = vmatpush1.msra.mxu0 0.0
    %9918 = vmatprep.subr.mxu0 0.0
    %9919 = vmatpush1.msra.mxu0 0.0
    %9920 = vmatprep.subr.mxu0 0.0
    %9921 = vmatpush1.msra.mxu0 0.0
    %9922 = vmatprep.subr.mxu0 0.0
    %9923 = vmatpush1.msra.mxu0 0.0
    %9924 = vmatprep.subr.mxu0 0.0
    %9925 = vmatpush1.msra.mxu0 0.0
    %9926 = vmatprep.subr.mxu0 0.0
    %9927 = vmatpush1.msra.mxu0 0.0
    %9928 = vmatprep.subr.mxu0 0.0
    %9929 = vmatpush1.msra.mxu0 0.0
    %9930 = vmatprep.subr.mxu0 0.0
    %9931 = vmatpush1.msra.mxu0 0.0
    %9932 = vmatprep.subr.mxu0 0.0
    %9933 = vmatpush1.msra.mxu0 0.0
    %9934 = vmatprep.subr.mxu0 0.0
    %9935 = vmatpush1.msra.mxu0 0.0
    %9936 = vmatprep.subr.mxu0 0.0
    %9937 = vmatpush1.msra.mxu0 0.0
    %9938 = vmatprep.subr.mxu0 0.0
    %9939 = vmatpush1.msra.mxu0 0.0
    %9940 = vmatprep.subr.mxu0 0.0
    %9941 = vmatpush1.msra.mxu0 0.0
    %9942 = vmatprep.subr.mxu0 0.0
    %9943 = vmatpush1.msra.mxu0 0.0
    %9944 = vmatprep.subr.mxu0 0.0
    %9945 = vmatpush1.msra.mxu0 0.0
    %9946 = vmatprep.subr.mxu0 0.0
    %9947 = vmatpush1.msra.mxu0 0.0
    %9948 = vmatprep.subr.mxu0 0.0
    %9949 = vmatpush1.msra.mxu0 0.0
    %9950 = vmatprep.subr.mxu0 0.0
    %9951 = vmatpush1.msra.mxu0 0.0
    %9952 = vmatprep.subr.mxu0 0.0
    %9953 = vmatpush1.msra.mxu0 0.0
    %9954 = vmatprep.mubr.f32.mxu0 0.0
    %v9955 = vand.u32 %v8598, 4294901760
    %v9956 = vsub.f32 %v8598, %v9955
    %v9957 = vand.u32 %v9956, 4294901760
    %9958 = vmatmul.mubr.f32.gmra.mrb[0].mxu0 %v9957
    %v9959 = vpop.f32.mrb[0].mxu0
    %v9960 = vadd.f32 %v9883, %v9959
    %v9961 = vpop.f32.mrb[0].mxu0
    %9962 = vdwg.mxu0
    %9963 = vmatprep.subr.mxu0 0.0
    %v9964 = vand.u32 %v18, 4294901760
    %v9965 = vsub.f32 %v18, %v9964
    %v9966 = vand.u32 %v9965, 4294901760
    %9967 = vmatpush1.msra.mxu0 %v9966
    %9968 = vmatprep.subr.mxu0 0.0
    %v9969 = vand.u32 %v19, 4294901760
    %v9970 = vsub.f32 %v19, %v9969
    %v9971 = vand.u32 %v9970, 4294901760
    %9972 = vmatpush1.msra.mxu0 %v9971
    %9973 = vmatprep.subr.mxu0 0.0
    %v9974 = vand.u32 %v20, 4294901760
    %v9975 = vsub.f32 %v20, %v9974
    %v9976 = vand.u32 %v9975, 4294901760
    %9977 = vmatpush1.msra.mxu0 %v9976
    %9978 = vmatprep.subr.mxu0 0.0
    %v9979 = vand.u32 %v21, 4294901760
    %v9980 = vsub.f32 %v21, %v9979
    %v9981 = vand.u32 %v9980, 4294901760
    %9982 = vmatpush1.msra.mxu0 %v9981
    %9983 = vmatprep.subr.mxu0 0.0
    %9984 = vmatpush1.msra.mxu0 0.0
    %9985 = vmatprep.subr.mxu0 0.0
    %9986 = vmatpush1.msra.mxu0 0.0
    %9987 = vmatprep.subr.mxu0 0.0
    %9988 = vmatpush1.msra.mxu0 0.0
    %9989 = vmatprep.subr.mxu0 0.0
    %9990 = vmatpush1.msra.mxu0 0.0
    %9991 = vmatprep.subr.mxu0 0.0
    %9992 = vmatpush1.msra.mxu0 0.0
    %9993 = vmatprep.subr.mxu0 0.0
    %9994 = vmatpush1.msra.mxu0 0.0
    %9995 = vmatprep.subr.mxu0 0.0
    %9996 = vmatpush1.msra.mxu0 0.0
    %9997 = vmatprep.subr.mxu0 0.0
    %9998 = vmatpush1.msra.mxu0 0.0
    %9999 = vmatprep.subr.mxu0 0.0
    %10000 = vmatpush1.msra.mxu0 0.0
    %10001 = vmatprep.subr.mxu0 0.0
    %10002 = vmatpush1.msra.mxu0 0.0
    %10003 = vmatprep.subr.mxu0 0.0
    %10004 = vmatpush1.msra.mxu0 0.0
    %10005 = vmatprep.subr.mxu0 0.0
    %10006 = vmatpush1.msra.mxu0 0.0
    %10007 = vmatprep.subr.mxu0 0.0
    %10008 = vmatpush1.msra.mxu0 0.0
    %10009 = vmatprep.subr.mxu0 0.0
    %10010 = vmatpush1.msra.mxu0 0.0
    %10011 = vmatprep.subr.mxu0 0.0
    %10012 = vmatpush1.msra.mxu0 0.0
    %10013 = vmatprep.subr.mxu0 0.0
    %10014 = vmatpush1.msra.mxu0 0.0
    %10015 = vmatprep.subr.mxu0 0.0
    %10016 = vmatpush1.msra.mxu0 0.0
    %10017 = vmatprep.subr.mxu0 0.0
    %10018 = vmatpush1.msra.mxu0 0.0
    %10019 = vmatprep.subr.mxu0 0.0
    %10020 = vmatpush1.msra.mxu0 0.0
    %10021 = vmatprep.subr.mxu0 0.0
    %10022 = vmatpush1.msra.mxu0 0.0
    %10023 = vmatprep.subr.mxu0 0.0
    %10024 = vmatpush1.msra.mxu0 0.0
    %10025 = vmatprep.subr.mxu0 0.0
    %10026 = vmatpush1.msra.mxu0 0.0
    %10027 = vmatprep.subr.mxu0 0.0
    %10028 = vmatpush1.msra.mxu0 0.0
    %10029 = vmatprep.subr.mxu0 0.0
    %10030 = vmatpush1.msra.mxu0 0.0
    %10031 = vmatprep.subr.mxu0 0.0
    %10032 = vmatpush1.msra.mxu0 0.0
    %10033 = vmatprep.subr.mxu0 0.0
    %10034 = vmatpush1.msra.mxu0 0.0
    %10035 = vmatprep.subr.mxu0 0.0
    %10036 = vmatpush1.msra.mxu0 0.0
    %10037 = vmatprep.subr.mxu0 0.0
    %10038 = vmatpush1.msra.mxu0 0.0
    %10039 = vmatprep.mubr.f32.mxu0 0.0
    %v10040 = vand.u32 %v8598, 4294901760
    %10041 = vmatmul.mubr.f32.gmra.mrb[0].mxu0 %v10040
    %v10042 = vpop.f32.mrb[0].mxu0
    %v10043 = vadd.f32 %v9960, %v10042
    %v10044 = vpop.f32.mrb[0].mxu0
    %10045 = vdwg.mxu0
    %10046 = vmatprep.subr.mxu0 0.0
    %v10047 = vand.u32 %v18, 4294901760
    %10048 = vmatpush1.msra.mxu0 %v10047
    %10049 = vmatprep.subr.mxu0 0.0
    %v10050 = vand.u32 %v19, 4294901760
    %10051 = vmatpush1.msra.mxu0 %v10050
    %10052 = vmatprep.subr.mxu0 0.0
    %v10053 = vand.u32 %v20, 4294901760
    %10054 = vmatpush1.msra.mxu0 %v10053
    %10055 = vmatprep.subr.mxu0 0.0
    %v10056 = vand.u32 %v21, 4294901760
    %10057 = vmatpush1.msra.mxu0 %v10056
    %10058 = vmatprep.subr.mxu0 0.0
    %10059 = vmatpush1.msra.mxu0 0.0
    %10060 = vmatprep.subr.mxu0 0.0
    %10061 = vmatpush1.msra.mxu0 0.0
    %10062 = vmatprep.subr.mxu0 0.0
    %10063 = vmatpush1.msra.mxu0 0.0
    %10064 = vmatprep.subr.mxu0 0.0
    %10065 = vmatpush1.msra.mxu0 0.0
    %10066 = vmatprep.subr.mxu0 0.0
    %10067 = vmatpush1.msra.mxu0 0.0
    %10068 = vmatprep.subr.mxu0 0.0
    %10069 = vmatpush1.msra.mxu0 0.0
    %10070 = vmatprep.subr.mxu0 0.0
    %10071 = vmatpush1.msra.mxu0 0.0
    %10072 = vmatprep.subr.mxu0 0.0
    %10073 = vmatpush1.msra.mxu0 0.0
    %10074 = vmatprep.subr.mxu0 0.0
    %10075 = vmatpush1.msra.mxu0 0.0
    %10076 = vmatprep.subr.mxu0 0.0
    %10077 = vmatpush1.msra.mxu0 0.0
    %10078 = vmatprep.subr.mxu0 0.0
    %10079 = vmatpush1.msra.mxu0 0.0
    %10080 = vmatprep.subr.mxu0 0.0
    %10081 = vmatpush1.msra.mxu0 0.0
    %10082 = vmatprep.subr.mxu0 0.0
    %10083 = vmatpush1.msra.mxu0 0.0
    %10084 = vmatprep.subr.mxu0 0.0
    %10085 = vmatpush1.msra.mxu0 0.0
    %10086 = vmatprep.subr.mxu0 0.0
    %10087 = vmatpush1.msra.mxu0 0.0
    %10088 = vmatprep.subr.mxu0 0.0
    %10089 = vmatpush1.msra.mxu0 0.0
    %10090 = vmatprep.subr.mxu0 0.0
    %10091 = vmatpush1.msra.mxu0 0.0
    %10092 = vmatprep.subr.mxu0 0.0
    %10093 = vmatpush1.msra.mxu0 0.0
    %10094 = vmatprep.subr.mxu0 0.0
    %10095 = vmatpush1.msra.mxu0 0.0
    %10096 = vmatprep.subr.mxu0 0.0
    %10097 = vmatpush1.msra.mxu0 0.0
    %10098 = vmatprep.subr.mxu0 0.0
    %10099 = vmatpush1.msra.mxu0 0.0
    %10100 = vmatprep.subr.mxu0 0.0
    %10101 = vmatpush1.msra.mxu0 0.0
    %10102 = vmatprep.subr.mxu0 0.0
    %10103 = vmatpush1.msra.mxu0 0.0
    %10104 = vmatprep.subr.mxu0 0.0
    %10105 = vmatpush1.msra.mxu0 0.0
    %10106 = vmatprep.subr.mxu0 0.0
    %10107 = vmatpush1.msra.mxu0 0.0
    %10108 = vmatprep.subr.mxu0 0.0
    %10109 = vmatpush1.msra.mxu0 0.0
    %10110 = vmatprep.subr.mxu0 0.0
    %10111 = vmatpush1.msra.mxu0 0.0
    %10112 = vmatprep.subr.mxu0 0.0
    %10113 = vmatpush1.msra.mxu0 0.0
    %10114 = vmatprep.mubr.f32.mxu0 0.0
    %v10115 = vand.u32 %v8598, 4294901760
    %10116 = vmatmul.mubr.f32.gmra.mrb[0].mxu0 %v10115
    %v10117 = vpop.f32.mrb[0].mxu0
    %v10118 = vadd.f32 %v10043, %v10117
    %v10119 = vpop.f32.mrb[0].mxu0
    %10120 = vdwg.mxu0
    %v10121 = vadd.f32 %v9635, %v10118
    %v10122 = vtanh.pop %v9634
    %v10123 = vadd.f32 %v10122, 1.0
    %v10124 = vmul.f32 %v10123, 0.5
    %v10125 = vsel %vm113, %v10122, %v10124
    %v10126 = vmul.f32 %v10125, %v8563
    %10128 = vrot.lane.b32.xlu0 %v10125, 64
    %v10129 = vpop.permute.xlu0 %10128
    %v10131 = vmul.f32 %v10125, %v10129
    %10133 = vrot.lane.b32.xlu0 %v10131, 32
    %v10134 = vpop.permute.xlu0 %10133
    %v10136 = vadd.f32 %v10126, %v10134
    %v10137 = vtanh.pop %v10136
    %10139 = vrot.lane.b32.xlu0 %v10137, 64
    %v10140 = vpop.permute.xlu0 %10139
    %v10142 = vmul.f32 %v10125, %v10140
    %v10143 = vtanh.pop %v10121
    %v10144 = vadd.f32 %v10143, 1.0
    %v10145 = vmul.f32 %v10144, 0.5
    %v10146 = vsel %vm113, %v10143, %v10145
    %v10147 = vmul.f32 %v10146, %v8584
    %10149 = vrot.lane.b32.xlu0 %v10146, 64
    %v10150 = vpop.permute.xlu0 %10149
    %v10152 = vmul.f32 %v10146, %v10150
    %10154 = vrot.lane.b32.xlu0 %v10152, 32
    %v10155 = vpop.permute.xlu0 %10154
    %v10157 = vadd.f32 %v10147, %v10155
    %v10158 = vtanh.pop %v10157
    %10160 = vrot.lane.b32.xlu0 %v10158, 64
    %v10161 = vpop.permute.xlu0 %10160
    %v10163 = vmul.f32 %v10146, %v10161
    %v10164 = vld [vmem:[%s3 + $0xc0] sm:$0xff]
    %v10165 = vld [vmem:[%s3 + $0xc8] sm:$0xff]
    %v10166 = vld [vmem:[%s3 + $0xd0] sm:$0xff]
    %v10167 = vld [vmem:[%s3 + $0xd8] sm:$0xff]
    %10169 = vrot.lane.b32.xlu0 %v10163, 32
    %v10170 = vpop.permute.xlu0 %10169
    %v10171 = vsel %vm138, %v10170, 0
    %10173 = vmatprep.subr.mxu0 0.0
    %v10174 = vand.u32 %v10164, 4294901760
    %10175 = vmatpush1.msra.mxu0 %v10174
    %10176 = vmatprep.subr.mxu0 0.0
    %v10177 = vand.u32 %v10165, 4294901760
    %10178 = vmatpush1.msra.mxu0 %v10177
    %10179 = vmatprep.subr.mxu0 0.0
    %v10180 = vand.u32 %v10166, 4294901760
    %10181 = vmatpush1.msra.mxu0 %v10180
    %10182 = vmatprep.subr.mxu0 0.0
    %v10183 = vand.u32 %v10167, 4294901760
    %10184 = vmatpush1.msra.mxu0 %v10183
    %10185 = vmatprep.subr.mxu0 0.0
    %10186 = vmatpush1.msra.mxu0 0.0
    %10187 = vmatprep.subr.mxu0 0.0
    %10188 = vmatpush1.msra.mxu0 0.0
    %10189 = vmatprep.subr.mxu0 0.0
    %10190 = vmatpush1.msra.mxu0 0.0
    %10191 = vmatprep.subr.mxu0 0.0
    %10192 = vmatpush1.msra.mxu0 0.0
    %10193 = vmatprep.subr.mxu0 0.0
    %10194 = vmatpush1.msra.mxu0 0.0
    %10195 = vmatprep.subr.mxu0 0.0
    %10196 = vmatpush1.msra.mxu0 0.0
    %10197 = vmatprep.subr.mxu0 0.0
    %10198 = vmatpush1.msra.mxu0 0.0
    %10199 = vmatprep.subr.mxu0 0.0
    %10200 = vmatpush1.msra.mxu0 0.0
    %10201 = vmatprep.subr.mxu0 0.0
    %10202 = vmatpush1.msra.mxu0 0.0
    %10203 = vmatprep.subr.mxu0 0.0
    %10204 = vmatpush1.msra.mxu0 0.0
    %10205 = vmatprep.subr.mxu0 0.0
    %10206 = vmatpush1.msra.mxu0 0.0
    %10207 = vmatprep.subr.mxu0 0.0
    %10208 = vmatpush1.msra.mxu0 0.0
    %10209 = vmatprep.subr.mxu0 0.0
    %10210 = vmatpush1.msra.mxu0 0.0
    %10211 = vmatprep.subr.mxu0 0.0
    %10212 = vmatpush1.msra.mxu0 0.0
    %10213 = vmatprep.subr.mxu0 0.0
    %10214 = vmatpush1.msra.mxu0 0.0
    %10215 = vmatprep.subr.mxu0 0.0
    %10216 = vmatpush1.msra.mxu0 0.0
    %10217 = vmatprep.subr.mxu0 0.0
    %10218 = vmatpush1.msra.mxu0 0.0
    %10219 = vmatprep.subr.mxu0 0.0
    %10220 = vmatpush1.msra.mxu0 0.0
    %10221 = vmatprep.subr.mxu0 0.0
    %10222 = vmatpush1.msra.mxu0 0.0
    %10223 = vmatprep.subr.mxu0 0.0
    %10224 = vmatpush1.msra.mxu0 0.0
    %10225 = vmatprep.subr.mxu0 0.0
    %10226 = vmatpush1.msra.mxu0 0.0
    %10227 = vmatprep.subr.mxu0 0.0
    %10228 = vmatpush1.msra.mxu0 0.0
    %10229 = vmatprep.subr.mxu0 0.0
    %10230 = vmatpush1.msra.mxu0 0.0
    %10231 = vmatprep.subr.mxu0 0.0
    %10232 = vmatpush1.msra.mxu0 0.0
    %10233 = vmatprep.subr.mxu0 0.0
    %10234 = vmatpush1.msra.mxu0 0.0
    %10235 = vmatprep.subr.mxu0 0.0
    %10236 = vmatpush1.msra.mxu0 0.0
    %10237 = vmatprep.subr.mxu0 0.0
    %10238 = vmatpush1.msra.mxu0 0.0
    %10239 = vmatprep.subr.mxu0 0.0
    %10240 = vmatpush1.msra.mxu0 0.0
    %10241 = vmatprep.mubr.f32.mxu0 0.0
    %v10242 = vand.u32 %v10171, 4294901760
    %v10243 = vsub.f32 %v10171, %v10242
    %v10244 = vand.u32 %v10243, 4294901760
    %v10245 = vsub.f32 %v10243, %v10244
    %v10246 = vand.u32 %v10245, 4294901760
    %10247 = vmatmul.mubr.f32.gmra.mrb[0].mxu0 %v10246
    %v10248 = vpop.f32.mrb[0].mxu0
    %v10249 = vadd.f32 0.0, %v10248
    %v10250 = vpop.f32.mrb[0].mxu0
    %10251 = vdwg.mxu0
    %10252 = vmatprep.subr.mxu0 0.0
    %v10253 = vand.u32 %v10164, 4294901760
    %v10254 = vsub.f32 %v10164, %v10253
    %v10255 = vand.u32 %v10254, 4294901760
    %v10256 = vsub.f32 %v10254, %v10255
    %v10257 = vand.u32 %v10256, 4294901760
    %10258 = vmatpush1.msra.mxu0 %v10257
    %10259 = vmatprep.subr.mxu0 0.0
    %v10260 = vand.u32 %v10165, 4294901760
    %v10261 = vsub.f32 %v10165, %v10260
    %v10262 = vand.u32 %v10261, 4294901760
    %v10263 = vsub.f32 %v10261, %v10262
    %v10264 = vand.u32 %v10263, 4294901760
    %10265 = vmatpush1.msra.mxu0 %v10264
    %10266 = vmatprep.subr.mxu0 0.0
    %v10267 = vand.u32 %v10166, 4294901760
    %v10268 = vsub.f32 %v10166, %v10267
    %v10269 = vand.u32 %v10268, 4294901760
    %v10270 = vsub.f32 %v10268, %v10269
    %v10271 = vand.u32 %v10270, 4294901760
    %10272 = vmatpush1.msra.mxu0 %v10271
    %10273 = vmatprep.subr.mxu0 0.0
    %v10274 = vand.u32 %v10167, 4294901760
    %v10275 = vsub.f32 %v10167, %v10274
    %v10276 = vand.u32 %v10275, 4294901760
    %v10277 = vsub.f32 %v10275, %v10276
    %v10278 = vand.u32 %v10277, 4294901760
    %10279 = vmatpush1.msra.mxu0 %v10278
    %10280 = vmatprep.subr.mxu0 0.0
    %10281 = vmatpush1.msra.mxu0 0.0
    %10282 = vmatprep.subr.mxu0 0.0
    %10283 = vmatpush1.msra.mxu0 0.0
    %10284 = vmatprep.subr.mxu0 0.0
    %10285 = vmatpush1.msra.mxu0 0.0
    %10286 = vmatprep.subr.mxu0 0.0
    %10287 = vmatpush1.msra.mxu0 0.0
    %10288 = vmatprep.subr.mxu0 0.0
    %10289 = vmatpush1.msra.mxu0 0.0
    %10290 = vmatprep.subr.mxu0 0.0
    %10291 = vmatpush1.msra.mxu0 0.0
    %10292 = vmatprep.subr.mxu0 0.0
    %10293 = vmatpush1.msra.mxu0 0.0
    %10294 = vmatprep.subr.mxu0 0.0
    %10295 = vmatpush1.msra.mxu0 0.0
    %10296 = vmatprep.subr.mxu0 0.0
    %10297 = vmatpush1.msra.mxu0 0.0
    %10298 = vmatprep.subr.mxu0 0.0
    %10299 = vmatpush1.msra.mxu0 0.0
    %10300 = vmatprep.subr.mxu0 0.0
    %10301 = vmatpush1.msra.mxu0 0.0
    %10302 = vmatprep.subr.mxu0 0.0
    %10303 = vmatpush1.msra.mxu0 0.0
    %10304 = vmatprep.subr.mxu0 0.0
    %10305 = vmatpush1.msra.mxu0 0.0
    %10306 = vmatprep.subr.mxu0 0.0
    %10307 = vmatpush1.msra.mxu0 0.0
    %10308 = vmatprep.subr.mxu0 0.0
    %10309 = vmatpush1.msra.mxu0 0.0
    %10310 = vmatprep.subr.mxu0 0.0
    %10311 = vmatpush1.msra.mxu0 0.0
    %10312 = vmatprep.subr.mxu0 0.0
    %10313 = vmatpush1.msra.mxu0 0.0
    %10314 = vmatprep.subr.mxu0 0.0
    %10315 = vmatpush1.msra.mxu0 0.0
    %10316 = vmatprep.subr.mxu0 0.0
    %10317 = vmatpush1.msra.mxu0 0.0
    %10318 = vmatprep.subr.mxu0 0.0
    %10319 = vmatpush1.msra.mxu0 0.0
    %10320 = vmatprep.subr.mxu0 0.0
    %10321 = vmatpush1.msra.mxu0 0.0
    %10322 = vmatprep.subr.mxu0 0.0
    %10323 = vmatpush1.msra.mxu0 0.0
    %10324 = vmatprep.subr.mxu0 0.0
    %10325 = vmatpush1.msra.mxu0 0.0
    %10326 = vmatprep.subr.mxu0 0.0
    %10327 = vmatpush1.msra.mxu0 0.0
    %10328 = vmatprep.subr.mxu0 0.0
    %10329 = vmatpush1.msra.mxu0 0.0
    %10330 = vmatprep.subr.mxu0 0.0
    %10331 = vmatpush1.msra.mxu0 0.0
    %10332 = vmatprep.subr.mxu0 0.0
    %10333 = vmatpush1.msra.mxu0 0.0
    %10334 = vmatprep.subr.mxu0 0.0
    %10335 = vmatpush1.msra.mxu0 0.0
    %10336 = vmatprep.mubr.f32.mxu0 0.0
    %v10337 = vand.u32 %v10171, 4294901760
    %10338 = vmatmul.mubr.f32.gmra.mrb[0].mxu0 %v10337
    %v10339 = vpop.f32.mrb[0].mxu0
    %v10340 = vadd.f32 %v10249, %v10339
    %v10341 = vpop.f32.mrb[0].mxu0
    %10342 = vdwg.mxu0
    %10343 = vmatprep.subr.mxu0 0.0
    %v10344 = vand.u32 %v10164, 4294901760
    %v10345 = vsub.f32 %v10164, %v10344
    %10346 = vmatpush1.msra.mxu0 %v10345
    %10347 = vmatprep.subr.mxu0 0.0
    %v10348 = vand.u32 %v10165, 4294901760
    %v10349 = vsub.f32 %v10165, %v10348
    %10350 = vmatpush1.msra.mxu0 %v10349
    %10351 = vmatprep.subr.mxu0 0.0
    %v10352 = vand.u32 %v10166, 4294901760
    %v10353 = vsub.f32 %v10166, %v10352
    %10354 = vmatpush1.msra.mxu0 %v10353
    %10355 = vmatprep.subr.mxu0 0.0
    %v10356 = vand.u32 %v10167, 4294901760
    %v10357 = vsub.f32 %v10167, %v10356
    %10358 = vmatpush1.msra.mxu0 %v10357
    %10359 = vmatprep.subr.mxu0 0.0
    %10360 = vmatpush1.msra.mxu0 0.0
    %10361 = vmatprep.subr.mxu0 0.0
    %10362 = vmatpush1.msra.mxu0 0.0
    %10363 = vmatprep.subr.mxu0 0.0
    %10364 = vmatpush1.msra.mxu0 0.0
    %10365 = vmatprep.subr.mxu0 0.0
    %10366 = vmatpush1.msra.mxu0 0.0
    %10367 = vmatprep.subr.mxu0 0.0
    %10368 = vmatpush1.msra.mxu0 0.0
    %10369 = vmatprep.subr.mxu0 0.0
    %10370 = vmatpush1.msra.mxu0 0.0
    %10371 = vmatprep.subr.mxu0 0.0
    %10372 = vmatpush1.msra.mxu0 0.0
    %10373 = vmatprep.subr.mxu0 0.0
    %10374 = vmatpush1.msra.mxu0 0.0
    %10375 = vmatprep.subr.mxu0 0.0
    %10376 = vmatpush1.msra.mxu0 0.0
    %10377 = vmatprep.subr.mxu0 0.0
    %10378 = vmatpush1.msra.mxu0 0.0
    %10379 = vmatprep.subr.mxu0 0.0
    %10380 = vmatpush1.msra.mxu0 0.0
    %10381 = vmatprep.subr.mxu0 0.0
    %10382 = vmatpush1.msra.mxu0 0.0
    %10383 = vmatprep.subr.mxu0 0.0
    %10384 = vmatpush1.msra.mxu0 0.0
    %10385 = vmatprep.subr.mxu0 0.0
    %10386 = vmatpush1.msra.mxu0 0.0
    %10387 = vmatprep.subr.mxu0 0.0
    %10388 = vmatpush1.msra.mxu0 0.0
    %10389 = vmatprep.subr.mxu0 0.0
    %10390 = vmatpush1.msra.mxu0 0.0
    %10391 = vmatprep.subr.mxu0 0.0
    %10392 = vmatpush1.msra.mxu0 0.0
    %10393 = vmatprep.subr.mxu0 0.0
    %10394 = vmatpush1.msra.mxu0 0.0
    %10395 = vmatprep.subr.mxu0 0.0
    %10396 = vmatpush1.msra.mxu0 0.0
    %10397 = vmatprep.subr.mxu0 0.0
    %10398 = vmatpush1.msra.mxu0 0.0
    %10399 = vmatprep.subr.mxu0 0.0
    %10400 = vmatpush1.msra.mxu0 0.0
    %10401 = vmatprep.subr.mxu0 0.0
    %10402 = vmatpush1.msra.mxu0 0.0
    %10403 = vmatprep.subr.mxu0 0.0
    %10404 = vmatpush1.msra.mxu0 0.0
    %10405 = vmatprep.subr.mxu0 0.0
    %10406 = vmatpush1.msra.mxu0 0.0
    %10407 = vmatprep.subr.mxu0 0.0
    %10408 = vmatpush1.msra.mxu0 0.0
    %10409 = vmatprep.subr.mxu0 0.0
    %10410 = vmatpush1.msra.mxu0 0.0
    %10411 = vmatprep.subr.mxu0 0.0
    %10412 = vmatpush1.msra.mxu0 0.0
    %10413 = vmatprep.subr.mxu0 0.0
    %10414 = vmatpush1.msra.mxu0 0.0
    %10415 = vmatprep.mubr.f32.mxu0 0.0
    %v10416 = vand.u32 %v10171, 4294901760
    %v10417 = vsub.f32 %v10171, %v10416
    %10418 = vmatmul.mubr.f32.gmra.mrb[0].mxu0 %v10417
    %v10419 = vpop.f32.mrb[0].mxu0
    %v10420 = vadd.f32 %v10340, %v10419
    %v10421 = vpop.f32.mrb[0].mxu0
    %10422 = vdwg.mxu0
    %10423 = vmatprep.subr.mxu0 0.0
    %v10424 = vand.u32 %v10164, 4294901760
    %10425 = vmatpush1.msra.mxu0 %v10424
    %10426 = vmatprep.subr.mxu0 0.0
    %v10427 = vand.u32 %v10165, 4294901760
    %10428 = vmatpush1.msra.mxu0 %v10427
    %10429 = vmatprep.subr.mxu0 0.0
    %v10430 = vand.u32 %v10166, 4294901760
    %10431 = vmatpush1.msra.mxu0 %v10430
    %10432 = vmatprep.subr.mxu0 0.0
    %v10433 = vand.u32 %v10167, 4294901760
    %10434 = vmatpush1.msra.mxu0 %v10433
    %10435 = vmatprep.subr.mxu0 0.0
    %10436 = vmatpush1.msra.mxu0 0.0
    %10437 = vmatprep.subr.mxu0 0.0
    %10438 = vmatpush1.msra.mxu0 0.0
    %10439 = vmatprep.subr.mxu0 0.0
    %10440 = vmatpush1.msra.mxu0 0.0
    %10441 = vmatprep.subr.mxu0 0.0
    %10442 = vmatpush1.msra.mxu0 0.0
    %10443 = vmatprep.subr.mxu0 0.0
    %10444 = vmatpush1.msra.mxu0 0.0
    %10445 = vmatprep.subr.mxu0 0.0
    %10446 = vmatpush1.msra.mxu0 0.0
    %10447 = vmatprep.subr.mxu0 0.0
    %10448 = vmatpush1.msra.mxu0 0.0
    %10449 = vmatprep.subr.mxu0 0.0
    %10450 = vmatpush1.msra.mxu0 0.0
    %10451 = vmatprep.subr.mxu0 0.0
    %10452 = vmatpush1.msra.mxu0 0.0
    %10453 = vmatprep.subr.mxu0 0.0
    %10454 = vmatpush1.msra.mxu0 0.0
    %10455 = vmatprep.subr.mxu0 0.0
    %10456 = vmatpush1.msra.mxu0 0.0
    %10457 = vmatprep.subr.mxu0 0.0
    %10458 = vmatpush1.msra.mxu0 0.0
    %10459 = vmatprep.subr.mxu0 0.0
    %10460 = vmatpush1.msra.mxu0 0.0
    %10461 = vmatprep.subr.mxu0 0.0
    %10462 = vmatpush1.msra.mxu0 0.0
    %10463 = vmatprep.subr.mxu0 0.0
    %10464 = vmatpush1.msra.mxu0 0.0
    %10465 = vmatprep.subr.mxu0 0.0
    %10466 = vmatpush1.msra.mxu0 0.0
    %10467 = vmatprep.subr.mxu0 0.0
    %10468 = vmatpush1.msra.mxu0 0.0
    %10469 = vmatprep.subr.mxu0 0.0
    %10470 = vmatpush1.msra.mxu0 0.0
    %10471 = vmatprep.subr.mxu0 0.0
    %10472 = vmatpush1.msra.mxu0 0.0
    %10473 = vmatprep.subr.mxu0 0.0
    %10474 = vmatpush1.msra.mxu0 0.0
    %10475 = vmatprep.subr.mxu0 0.0
    %10476 = vmatpush1.msra.mxu0 0.0
    %10477 = vmatprep.subr.mxu0 0.0
    %10478 = vmatpush1.msra.mxu0 0.0
    %10479 = vmatprep.subr.mxu0 0.0
    %10480 = vmatpush1.msra.mxu0 0.0
    %10481 = vmatprep.subr.mxu0 0.0
    %10482 = vmatpush1.msra.mxu0 0.0
    %10483 = vmatprep.subr.mxu0 0.0
    %10484 = vmatpush1.msra.mxu0 0.0
    %10485 = vmatprep.subr.mxu0 0.0
    %10486 = vmatpush1.msra.mxu0 0.0
    %10487 = vmatprep.subr.mxu0 0.0
    %10488 = vmatpush1.msra.mxu0 0.0
    %10489 = vmatprep.subr.mxu0 0.0
    %10490 = vmatpush1.msra.mxu0 0.0
    %10491 = vmatprep.mubr.f32.mxu0 0.0
    %v10492 = vand.u32 %v10171, 4294901760
    %v10493 = vsub.f32 %v10171, %v10492
    %v10494 = vand.u32 %v10493, 4294901760
    %10495 = vmatmul.mubr.f32.gmra.mrb[0].mxu0 %v10494
    %v10496 = vpop.f32.mrb[0].mxu0
    %v10497 = vadd.f32 %v10420, %v10496
    %v10498 = vpop.f32.mrb[0].mxu0
    %10499 = vdwg.mxu0
    %10500 = vmatprep.subr.mxu0 0.0
    %v10501 = vand.u32 %v10164, 4294901760
    %v10502 = vsub.f32 %v10164, %v10501
    %v10503 = vand.u32 %v10502, 4294901760
    %10504 = vmatpush1.msra.mxu0 %v10503
    %10505 = vmatprep.subr.mxu0 0.0
    %v10506 = vand.u32 %v10165, 4294901760
    %v10507 = vsub.f32 %v10165, %v10506
    %v10508 = vand.u32 %v10507, 4294901760
    %10509 = vmatpush1.msra.mxu0 %v10508
    %10510 = vmatprep.subr.mxu0 0.0
    %v10511 = vand.u32 %v10166, 4294901760
    %v10512 = vsub.f32 %v10166, %v10511
    %v10513 = vand.u32 %v10512, 4294901760
    %10514 = vmatpush1.msra.mxu0 %v10513
    %10515 = vmatprep.subr.mxu0 0.0
    %v10516 = vand.u32 %v10167, 4294901760
    %v10517 = vsub.f32 %v10167, %v10516
    %v10518 = vand.u32 %v10517, 4294901760
    %10519 = vmatpush1.msra.mxu0 %v10518
    %10520 = vmatprep.subr.mxu0 0.0
    %10521 = vmatpush1.msra.mxu0 0.0
    %10522 = vmatprep.subr.mxu0 0.0
    %10523 = vmatpush1.msra.mxu0 0.0
    %10524 = vmatprep.subr.mxu0 0.0
    %10525 = vmatpush1.msra.mxu0 0.0
    %10526 = vmatprep.subr.mxu0 0.0
    %10527 = vmatpush1.msra.mxu0 0.0
    %10528 = vmatprep.subr.mxu0 0.0
    %10529 = vmatpush1.msra.mxu0 0.0
    %10530 = vmatprep.subr.mxu0 0.0
    %10531 = vmatpush1.msra.mxu0 0.0
    %10532 = vmatprep.subr.mxu0 0.0
    %10533 = vmatpush1.msra.mxu0 0.0
    %10534 = vmatprep.subr.mxu0 0.0
    %10535 = vmatpush1.msra.mxu0 0.0
    %10536 = vmatprep.subr.mxu0 0.0
    %10537 = vmatpush1.msra.mxu0 0.0
    %10538 = vmatprep.subr.mxu0 0.0
    %10539 = vmatpush1.msra.mxu0 0.0
    %10540 = vmatprep.subr.mxu0 0.0
    %10541 = vmatpush1.msra.mxu0 0.0
    %10542 = vmatprep.subr.mxu0 0.0
    %10543 = vmatpush1.msra.mxu0 0.0
    %10544 = vmatprep.subr.mxu0 0.0
    %10545 = vmatpush1.msra.mxu0 0.0
    %10546 = vmatprep.subr.mxu0 0.0
    %10547 = vmatpush1.msra.mxu0 0.0
    %10548 = vmatprep.subr.mxu0 0.0
    %10549 = vmatpush1.msra.mxu0 0.0
    %10550 = vmatprep.subr.mxu0 0.0
    %10551 = vmatpush1.msra.mxu0 0.0
    %10552 = vmatprep.subr.mxu0 0.0
    %10553 = vmatpush1.msra.mxu0 0.0
    %10554 = vmatprep.subr.mxu0 0.0
    %10555 = vmatpush1.msra.mxu0 0.0
    %10556 = vmatprep.subr.mxu0 0.0
    %10557 = vmatpush1.msra.mxu0 0.0
    %10558 = vmatprep.subr.mxu0 0.0
    %10559 = vmatpush1.msra.mxu0 0.0
    %10560 = vmatprep.subr.mxu0 0.0
    %10561 = vmatpush1.msra.mxu0 0.0
    %10562 = vmatprep.subr.mxu0 0.0
    %10563 = vmatpush1.msra.mxu0 0.0
    %10564 = vmatprep.subr.mxu0 0.0
    %10565 = vmatpush1.msra.mxu0 0.0
    %10566 = vmatprep.subr.mxu0 0.0
    %10567 = vmatpush1.msra.mxu0 0.0
    %10568 = vmatprep.subr.mxu0 0.0
    %10569 = vmatpush1.msra.mxu0 0.0
    %10570 = vmatprep.subr.mxu0 0.0
    %10571 = vmatpush1.msra.mxu0 0.0
    %10572 = vmatprep.subr.mxu0 0.0
    %10573 = vmatpush1.msra.mxu0 0.0
    %10574 = vmatprep.subr.mxu0 0.0
    %10575 = vmatpush1.msra.mxu0 0.0
    %10576 = vmatprep.mubr.f32.mxu0 0.0
    %v10577 = vand.u32 %v10171, 4294901760
    %10578 = vmatmul.mubr.f32.gmra.mrb[0].mxu0 %v10577
    %v10579 = vpop.f32.mrb[0].mxu0
    %v10580 = vadd.f32 %v10497, %v10579
    %v10581 = vpop.f32.mrb[0].mxu0
    %10582 = vdwg.mxu0
    %10583 = vmatprep.subr.mxu0 0.0
    %v10584 = vand.u32 %v10164, 4294901760
    %10585 = vmatpush1.msra.mxu0 %v10584
    %10586 = vmatprep.subr.mxu0 0.0
    %v10587 = vand.u32 %v10165, 4294901760
    %10588 = vmatpush1.msra.mxu0 %v10587
    %10589 = vmatprep.subr.mxu0 0.0
    %v10590 = vand.u32 %v10166, 4294901760
    %10591 = vmatpush1.msra.mxu0 %v10590
    %10592 = vmatprep.subr.mxu0 0.0
    %v10593 = vand.u32 %v10167, 4294901760
    %10594 = vmatpush1.msra.mxu0 %v10593
    %10595 = vmatprep.subr.mxu0 0.0
    %10596 = vmatpush1.msra.mxu0 0.0
    %10597 = vmatprep.subr.mxu0 0.0
    %10598 = vmatpush1.msra.mxu0 0.0
    %10599 = vmatprep.subr.mxu0 0.0
    %10600 = vmatpush1.msra.mxu0 0.0
    %10601 = vmatprep.subr.mxu0 0.0
    %10602 = vmatpush1.msra.mxu0 0.0
    %10603 = vmatprep.subr.mxu0 0.0
    %10604 = vmatpush1.msra.mxu0 0.0
    %10605 = vmatprep.subr.mxu0 0.0
    %10606 = vmatpush1.msra.mxu0 0.0
    %10607 = vmatprep.subr.mxu0 0.0
    %10608 = vmatpush1.msra.mxu0 0.0
    %10609 = vmatprep.subr.mxu0 0.0
    %10610 = vmatpush1.msra.mxu0 0.0
    %10611 = vmatprep.subr.mxu0 0.0
    %10612 = vmatpush1.msra.mxu0 0.0
    %10613 = vmatprep.subr.mxu0 0.0
    %10614 = vmatpush1.msra.mxu0 0.0
    %10615 = vmatprep.subr.mxu0 0.0
    %10616 = vmatpush1.msra.mxu0 0.0
    %10617 = vmatprep.subr.mxu0 0.0
    %10618 = vmatpush1.msra.mxu0 0.0
    %10619 = vmatprep.subr.mxu0 0.0
    %10620 = vmatpush1.msra.mxu0 0.0
    %10621 = vmatprep.subr.mxu0 0.0
    %10622 = vmatpush1.msra.mxu0 0.0
    %10623 = vmatprep.subr.mxu0 0.0
    %10624 = vmatpush1.msra.mxu0 0.0
    %10625 = vmatprep.subr.mxu0 0.0
    %10626 = vmatpush1.msra.mxu0 0.0
    %10627 = vmatprep.subr.mxu0 0.0
    %10628 = vmatpush1.msra.mxu0 0.0
    %10629 = vmatprep.subr.mxu0 0.0
    %10630 = vmatpush1.msra.mxu0 0.0
    %10631 = vmatprep.subr.mxu0 0.0
    %10632 = vmatpush1.msra.mxu0 0.0
    %10633 = vmatprep.subr.mxu0 0.0
    %10634 = vmatpush1.msra.mxu0 0.0
    %10635 = vmatprep.subr.mxu0 0.0
    %10636 = vmatpush1.msra.mxu0 0.0
    %10637 = vmatprep.subr.mxu0 0.0
    %10638 = vmatpush1.msra.mxu0 0.0
    %10639 = vmatprep.subr.mxu0 0.0
    %10640 = vmatpush1.msra.mxu0 0.0
    %10641 = vmatprep.subr.mxu0 0.0
    %10642 = vmatpush1.msra.mxu0 0.0
    %10643 = vmatprep.subr.mxu0 0.0
    %10644 = vmatpush1.msra.mxu0 0.0
    %10645 = vmatprep.subr.mxu0 0.0
    %10646 = vmatpush1.msra.mxu0 0.0
    %10647 = vmatprep.subr.mxu0 0.0
    %10648 = vmatpush1.msra.mxu0 0.0
    %10649 = vmatprep.subr.mxu0 0.0
    %10650 = vmatpush1.msra.mxu0 0.0
    %10651 = vmatprep.mubr.f32.mxu0 0.0
    %v10652 = vand.u32 %v10171, 4294901760
    %10653 = vmatmul.mubr.f32.gmra.mrb[0].mxu0 %v10652
    %v10654 = vpop.f32.mrb[0].mxu0
    %v10655 = vadd.f32 %v10580, %v10654
    %v10656 = vpop.f32.mrb[0].mxu0
    %10657 = vdwg.mxu0
    %v10658 = vadd.f32 %v9085, %v10655
    %10660 = vrot.lane.b32.xlu0 %v10142, 32
    %v10661 = vpop.permute.xlu0 %10660
    %v10662 = vsel %vm138, %v10661, 0
    %10664 = vmatprep.subr.mxu0 0.0
    %v10665 = vand.u32 %v30, 4294901760
    %10666 = vmatpush1.msra.mxu0 %v10665
    %10667 = vmatprep.subr.mxu0 0.0
    %v10668 = vand.u32 %v32, 4294901760
    %10669 = vmatpush1.msra.mxu0 %v10668
    %10670 = vmatprep.subr.mxu0 0.0
    %v10671 = vand.u32 %v34, 4294901760
    %10672 = vmatpush1.msra.mxu0 %v10671
    %10673 = vmatprep.subr.mxu0 0.0
    %v10674 = vand.u32 %v36, 4294901760
    %10675 = vmatpush1.msra.mxu0 %v10674
    %10676 = vmatprep.subr.mxu0 0.0
    %10677 = vmatpush1.msra.mxu0 0.0
    %10678 = vmatprep.subr.mxu0 0.0
    %10679 = vmatpush1.msra.mxu0 0.0
    %10680 = vmatprep.subr.mxu0 0.0
    %10681 = vmatpush1.msra.mxu0 0.0
    %10682 = vmatprep.subr.mxu0 0.0
    %10683 = vmatpush1.msra.mxu0 0.0
    %10684 = vmatprep.subr.mxu0 0.0
    %10685 = vmatpush1.msra.mxu0 0.0
    %10686 = vmatprep.subr.mxu0 0.0
    %10687 = vmatpush1.msra.mxu0 0.0
    %10688 = vmatprep.subr.mxu0 0.0
    %10689 = vmatpush1.msra.mxu0 0.0
    %10690 = vmatprep.subr.mxu0 0.0
    %10691 = vmatpush1.msra.mxu0 0.0
    %10692 = vmatprep.subr.mxu0 0.0
    %10693 = vmatpush1.msra.mxu0 0.0
    %10694 = vmatprep.subr.mxu0 0.0
    %10695 = vmatpush1.msra.mxu0 0.0
    %10696 = vmatprep.subr.mxu0 0.0
    %10697 = vmatpush1.msra.mxu0 0.0
    %10698 = vmatprep.subr.mxu0 0.0
    %10699 = vmatpush1.msra.mxu0 0.0
    %10700 = vmatprep.subr.mxu0 0.0
    %10701 = vmatpush1.msra.mxu0 0.0
    %10702 = vmatprep.subr.mxu0 0.0
    %10703 = vmatpush1.msra.mxu0 0.0
    %10704 = vmatprep.subr.mxu0 0.0
    %10705 = vmatpush1.msra.mxu0 0.0
    %10706 = vmatprep.subr.mxu0 0.0
    %10707 = vmatpush1.msra.mxu0 0.0
    %10708 = vmatprep.subr.mxu0 0.0
    %10709 = vmatpush1.msra.mxu0 0.0
    %10710 = vmatprep.subr.mxu0 0.0
    %10711 = vmatpush1.msra.mxu0 0.0
    %10712 = vmatprep.subr.mxu0 0.0
    %10713 = vmatpush1.msra.mxu0 0.0
    %10714 = vmatprep.subr.mxu0 0.0
    %10715 = vmatpush1.msra.mxu0 0.0
    %10716 = vmatprep.subr.mxu0 0.0
    %10717 = vmatpush1.msra.mxu0 0.0
    %10718 = vmatprep.subr.mxu0 0.0
    %10719 = vmatpush1.msra.mxu0 0.0
    %10720 = vmatprep.subr.mxu0 0.0
    %10721 = vmatpush1.msra.mxu0 0.0
    %10722 = vmatprep.subr.mxu0 0.0
    %10723 = vmatpush1.msra.mxu0 0.0
    %10724 = vmatprep.subr.mxu0 0.0
    %10725 = vmatpush1.msra.mxu0 0.0
    %10726 = vmatprep.subr.mxu0 0.0
    %10727 = vmatpush1.msra.mxu0 0.0
    %10728 = vmatprep.subr.mxu0 0.0
    %10729 = vmatpush1.msra.mxu0 0.0
    %10730 = vmatprep.subr.mxu0 0.0
    %10731 = vmatpush1.msra.mxu0 0.0
    %10732 = vmatprep.mubr.f32.mxu0 0.0
    %v10733 = vand.u32 %v10662, 4294901760
    %v10734 = vsub.f32 %v10662, %v10733
    %v10735 = vand.u32 %v10734, 4294901760
    %v10736 = vsub.f32 %v10734, %v10735
    %v10737 = vand.u32 %v10736, 4294901760
    %10738 = vmatmul.mubr.f32.gmra.mrb[0].mxu0 %v10737
    %v10739 = vpop.f32.mrb[0].mxu0
    %v10740 = vadd.f32 0.0, %v10739
    %v10741 = vpop.f32.mrb[0].mxu0
    %10742 = vdwg.mxu0
    %10743 = vmatprep.subr.mxu0 0.0
    %v10744 = vand.u32 %v30, 4294901760
    %v10745 = vsub.f32 %v30, %v10744
    %v10746 = vand.u32 %v10745, 4294901760
    %v10747 = vsub.f32 %v10745, %v10746
    %v10748 = vand.u32 %v10747, 4294901760
    %10749 = vmatpush1.msra.mxu0 %v10748
    %10750 = vmatprep.subr.mxu0 0.0
    %v10751 = vand.u32 %v32, 4294901760
    %v10752 = vsub.f32 %v32, %v10751
    %v10753 = vand.u32 %v10752, 4294901760
    %v10754 = vsub.f32 %v10752, %v10753
    %v10755 = vand.u32 %v10754, 4294901760
    %10756 = vmatpush1.msra.mxu0 %v10755
    %10757 = vmatprep.subr.mxu0 0.0
    %v10758 = vand.u32 %v34, 4294901760
    %v10759 = vsub.f32 %v34, %v10758
    %v10760 = vand.u32 %v10759, 4294901760
    %v10761 = vsub.f32 %v10759, %v10760
    %v10762 = vand.u32 %v10761, 4294901760
    %10763 = vmatpush1.msra.mxu0 %v10762
    %10764 = vmatprep.subr.mxu0 0.0
    %v10765 = vand.u32 %v36, 4294901760
    %v10766 = vsub.f32 %v36, %v10765
    %v10767 = vand.u32 %v10766, 4294901760
    %v10768 = vsub.f32 %v10766, %v10767
    %v10769 = vand.u32 %v10768, 4294901760
    %10770 = vmatpush1.msra.mxu0 %v10769
    %10771 = vmatprep.subr.mxu0 0.0
    %10772 = vmatpush1.msra.mxu0 0.0
    %10773 = vmatprep.subr.mxu0 0.0
    %10774 = vmatpush1.msra.mxu0 0.0
    %10775 = vmatprep.subr.mxu0 0.0
    %10776 = vmatpush1.msra.mxu0 0.0
    %10777 = vmatprep.subr.mxu0 0.0
    %10778 = vmatpush1.msra.mxu0 0.0
    %10779 = vmatprep.subr.mxu0 0.0
    %10780 = vmatpush1.msra.mxu0 0.0
    %10781 = vmatprep.subr.mxu0 0.0
    %10782 = vmatpush1.msra.mxu0 0.0
    %10783 = vmatprep.subr.mxu0 0.0
    %10784 = vmatpush1.msra.mxu0 0.0
    %10785 = vmatprep.subr.mxu0 0.0
    %10786 = vmatpush1.msra.mxu0 0.0
    %10787 = vmatprep.subr.mxu0 0.0
    %10788 = vmatpush1.msra.mxu0 0.0
    %10789 = vmatprep.subr.mxu0 0.0
    %10790 = vmatpush1.msra.mxu0 0.0
    %10791 = vmatprep.subr.mxu0 0.0
    %10792 = vmatpush1.msra.mxu0 0.0
    %10793 = vmatprep.subr.mxu0 0.0
    %10794 = vmatpush1.msra.mxu0 0.0
    %10795 = vmatprep.subr.mxu0 0.0
    %10796 = vmatpush1.msra.mxu0 0.0
    %10797 = vmatprep.subr.mxu0 0.0
    %10798 = vmatpush1.msra.mxu0 0.0
    %10799 = vmatprep.subr.mxu0 0.0
    %10800 = vmatpush1.msra.mxu0 0.0
    %10801 = vmatprep.subr.mxu0 0.0
    %10802 = vmatpush1.msra.mxu0 0.0
    %10803 = vmatprep.subr.mxu0 0.0
    %10804 = vmatpush1.msra.mxu0 0.0
    %10805 = vmatprep.subr.mxu0 0.0
    %10806 = vmatpush1.msra.mxu0 0.0
    %10807 = vmatprep.subr.mxu0 0.0
    %10808 = vmatpush1.msra.mxu0 0.0
    %10809 = vmatprep.subr.mxu0 0.0
    %10810 = vmatpush1.msra.mxu0 0.0
    %10811 = vmatprep.subr.mxu0 0.0
    %10812 = vmatpush1.msra.mxu0 0.0
    %10813 = vmatprep.subr.mxu0 0.0
    %10814 = vmatpush1.msra.mxu0 0.0
    %10815 = vmatprep.subr.mxu0 0.0
    %10816 = vmatpush1.msra.mxu0 0.0
    %10817 = vmatprep.subr.mxu0 0.0
    %10818 = vmatpush1.msra.mxu0 0.0
    %10819 = vmatprep.subr.mxu0 0.0
    %10820 = vmatpush1.msra.mxu0 0.0
    %10821 = vmatprep.subr.mxu0 0.0
    %10822 = vmatpush1.msra.mxu0 0.0
    %10823 = vmatprep.subr.mxu0 0.0
    %10824 = vmatpush1.msra.mxu0 0.0
    %10825 = vmatprep.subr.mxu0 0.0
    %10826 = vmatpush1.msra.mxu0 0.0
    %10827 = vmatprep.mubr.f32.mxu0 0.0
    %v10828 = vand.u32 %v10662, 4294901760
    %10829 = vmatmul.mubr.f32.gmra.mrb[0].mxu0 %v10828
    %v10830 = vpop.f32.mrb[0].mxu0
    %v10831 = vadd.f32 %v10740, %v10830
    %v10832 = vpop.f32.mrb[0].mxu0
    %10833 = vdwg.mxu0
    %10834 = vmatprep.subr.mxu0 0.0
    %v10835 = vand.u32 %v30, 4294901760
    %v10836 = vsub.f32 %v30, %v10835
    %10837 = vmatpush1.msra.mxu0 %v10836
    %10838 = vmatprep.subr.mxu0 0.0
    %v10839 = vand.u32 %v32, 4294901760
    %v10840 = vsub.f32 %v32, %v10839
    %10841 = vmatpush1.msra.mxu0 %v10840
    %10842 = vmatprep.subr.mxu0 0.0
    %v10843 = vand.u32 %v34, 4294901760
    %v10844 = vsub.f32 %v34, %v10843
    %10845 = vmatpush1.msra.mxu0 %v10844
    %10846 = vmatprep.subr.mxu0 0.0
    %v10847 = vand.u32 %v36, 4294901760
    %v10848 = vsub.f32 %v36, %v10847
    %10849 = vmatpush1.msra.mxu0 %v10848
    %10850 = vmatprep.subr.mxu0 0.0
    %10851 = vmatpush1.msra.mxu0 0.0
    %10852 = vmatprep.subr.mxu0 0.0
    %10853 = vmatpush1.msra.mxu0 0.0
    %10854 = vmatprep.subr.mxu0 0.0
    %10855 = vmatpush1.msra.mxu0 0.0
    %10856 = vmatprep.subr.mxu0 0.0
    %10857 = vmatpush1.msra.mxu0 0.0
    %10858 = vmatprep.subr.mxu0 0.0
    %10859 = vmatpush1.msra.mxu0 0.0
    %10860 = vmatprep.subr.mxu0 0.0
    %10861 = vmatpush1.msra.mxu0 0.0
    %10862 = vmatprep.subr.mxu0 0.0
    %10863 = vmatpush1.msra.mxu0 0.0
    %10864 = vmatprep.subr.mxu0 0.0
    %10865 = vmatpush1.msra.mxu0 0.0
    %10866 = vmatprep.subr.mxu0 0.0
    %10867 = vmatpush1.msra.mxu0 0.0
    %10868 = vmatprep.subr.mxu0 0.0
    %10869 = vmatpush1.msra.mxu0 0.0
    %10870 = vmatprep.subr.mxu0 0.0
    %10871 = vmatpush1.msra.mxu0 0.0
    %10872 = vmatprep.subr.mxu0 0.0
    %10873 = vmatpush1.msra.mxu0 0.0
    %10874 = vmatprep.subr.mxu0 0.0
    %10875 = vmatpush1.msra.mxu0 0.0
    %10876 = vmatprep.subr.mxu0 0.0
    %10877 = vmatpush1.msra.mxu0 0.0
    %10878 = vmatprep.subr.mxu0 0.0
    %10879 = vmatpush1.msra.mxu0 0.0
    %10880 = vmatprep.subr.mxu0 0.0
    %10881 = vmatpush1.msra.mxu0 0.0
    %10882 = vmatprep.subr.mxu0 0.0
    %10883 = vmatpush1.msra.mxu0 0.0
    %10884 = vmatprep.subr.mxu0 0.0
    %10885 = vmatpush1.msra.mxu0 0.0
    %10886 = vmatprep.subr.mxu0 0.0
    %10887 = vmatpush1.msra.mxu0 0.0
    %10888 = vmatprep.subr.mxu0 0.0
    %10889 = vmatpush1.msra.mxu0 0.0
    %10890 = vmatprep.subr.mxu0 0.0
    %10891 = vmatpush1.msra.mxu0 0.0
    %10892 = vmatprep.subr.mxu0 0.0
    %10893 = vmatpush1.msra.mxu0 0.0
    %10894 = vmatprep.subr.mxu0 0.0
    %10895 = vmatpush1.msra.mxu0 0.0
    %10896 = vmatprep.subr.mxu0 0.0
    %10897 = vmatpush1.msra.mxu0 0.0
    %10898 = vmatprep.subr.mxu0 0.0
    %10899 = vmatpush1.msra.mxu0 0.0
    %10900 = vmatprep.subr.mxu0 0.0
    %10901 = vmatpush1.msra.mxu0 0.0
    %10902 = vmatprep.subr.mxu0 0.0
    %10903 = vmatpush1.msra.mxu0 0.0
    %10904 = vmatprep.subr.mxu0 0.0
    %10905 = vmatpush1.msra.mxu0 0.0
    %10906 = vmatprep.mubr.f32.mxu0 0.0
    %v10907 = vand.u32 %v10662, 4294901760
    %v10908 = vsub.f32 %v10662, %v10907
    %10909 = vmatmul.mubr.f32.gmra.mrb[0].mxu0 %v10908
    %v10910 = vpop.f32.mrb[0].mxu0
    %v10911 = vadd.f32 %v10831, %v10910
    %v10912 = vpop.f32.mrb[0].mxu0
    %10913 = vdwg.mxu0
    %10914 = vmatprep.subr.mxu0 0.0
    %v10915 = vand.u32 %v30, 4294901760
    %10916 = vmatpush1.msra.mxu0 %v10915
    %10917 = vmatprep.subr.mxu0 0.0
    %v10918 = vand.u32 %v32, 4294901760
    %10919 = vmatpush1.msra.mxu0 %v10918
    %10920 = vmatprep.subr.mxu0 0.0
    %v10921 = vand.u32 %v34, 4294901760
    %10922 = vmatpush1.msra.mxu0 %v10921
    %10923 = vmatprep.subr.mxu0 0.0
    %v10924 = vand.u32 %v36, 4294901760
    %10925 = vmatpush1.msra.mxu0 %v10924
    %10926 = vmatprep.subr.mxu0 0.0
    %10927 = vmatpush1.msra.mxu0 0.0
    %10928 = vmatprep.subr.mxu0 0.0
    %10929 = vmatpush1.msra.mxu0 0.0
    %10930 = vmatprep.subr.mxu0 0.0
    %10931 = vmatpush1.msra.mxu0 0.0
    %10932 = vmatprep.subr.mxu0 0.0
    %10933 = vmatpush1.msra.mxu0 0.0
    %10934 = vmatprep.subr.mxu0 0.0
    %10935 = vmatpush1.msra.mxu0 0.0
    %10936 = vmatprep.subr.mxu0 0.0
    %10937 = vmatpush1.msra.mxu0 0.0
    %10938 = vmatprep.subr.mxu0 0.0
    %10939 = vmatpush1.msra.mxu0 0.0
    %10940 = vmatprep.subr.mxu0 0.0
    %10941 = vmatpush1.msra.mxu0 0.0
    %10942 = vmatprep.subr.mxu0 0.0
    %10943 = vmatpush1.msra.mxu0 0.0
    %10944 = vmatprep.subr.mxu0 0.0
    %10945 = vmatpush1.msra.mxu0 0.0
    %10946 = vmatprep.subr.mxu0 0.0
    %10947 = vmatpush1.msra.mxu0 0.0
    %10948 = vmatprep.subr.mxu0 0.0
    %10949 = vmatpush1.msra.mxu0 0.0
    %10950 = vmatprep.subr.mxu0 0.0
    %10951 = vmatpush1.msra.mxu0 0.0
    %10952 = vmatprep.subr.mxu0 0.0
    %10953 = vmatpush1.msra.mxu0 0.0
    %10954 = vmatprep.subr.mxu0 0.0
    %10955 = vmatpush1.msra.mxu0 0.0
    %10956 = vmatprep.subr.mxu0 0.0
    %10957 = vmatpush1.msra.mxu0 0.0
    %10958 = vmatprep.subr.mxu0 0.0
    %10959 = vmatpush1.msra.mxu0 0.0
    %10960 = vmatprep.subr.mxu0 0.0
    %10961 = vmatpush1.msra.mxu0 0.0
    %10962 = vmatprep.subr.mxu0 0.0
    %10963 = vmatpush1.msra.mxu0 0.0
    %10964 = vmatprep.subr.mxu0 0.0
    %10965 = vmatpush1.msra.mxu0 0.0
    %10966 = vmatprep.subr.mxu0 0.0
    %10967 = vmatpush1.msra.mxu0 0.0
    %10968 = vmatprep.subr.mxu0 0.0
    %10969 = vmatpush1.msra.mxu0 0.0
    %10970 = vmatprep.subr.mxu0 0.0
    %10971 = vmatpush1.msra.mxu0 0.0
    %10972 = vmatprep.subr.mxu0 0.0
    %10973 = vmatpush1.msra.mxu0 0.0
    %10974 = vmatprep.subr.mxu0 0.0
    %10975 = vmatpush1.msra.mxu0 0.0
    %10976 = vmatprep.subr.mxu0 0.0
    %10977 = vmatpush1.msra.mxu0 0.0
    %10978 = vmatprep.subr.mxu0 0.0
    %10979 = vmatpush1.msra.mxu0 0.0
    %10980 = vmatprep.subr.mxu0 0.0
    %10981 = vmatpush1.msra.mxu0 0.0
    %10982 = vmatprep.mubr.f32.mxu0 0.0
    %v10983 = vand.u32 %v10662, 4294901760
    %v10984 = vsub.f32 %v10662, %v10983
    %v10985 = vand.u32 %v10984, 4294901760
    %10986 = vmatmul.mubr.f32.gmra.mrb[0].mxu0 %v10985
    %v10987 = vpop.f32.mrb[0].mxu0
    %v10988 = vadd.f32 %v10911, %v10987
    %v10989 = vpop.f32.mrb[0].mxu0
    %10990 = vdwg.mxu0
    %10991 = vmatprep.subr.mxu0 0.0
    %v10992 = vand.u32 %v30, 4294901760
    %v10993 = vsub.f32 %v30, %v10992
    %v10994 = vand.u32 %v10993, 4294901760
    %10995 = vmatpush1.msra.mxu0 %v10994
    %10996 = vmatprep.subr.mxu0 0.0
    %v10997 = vand.u32 %v32, 4294901760
    %v10998 = vsub.f32 %v32, %v10997
    %v10999 = vand.u32 %v10998, 4294901760
    %11000 = vmatpush1.msra.mxu0 %v10999
    %11001 = vmatprep.subr.mxu0 0.0
    %v11002 = vand.u32 %v34, 4294901760
    %v11003 = vsub.f32 %v34, %v11002
    %v11004 = vand.u32 %v11003, 4294901760
    %11005 = vmatpush1.msra.mxu0 %v11004
    %11006 = vmatprep.subr.mxu0 0.0
    %v11007 = vand.u32 %v36, 4294901760
    %v11008 = vsub.f32 %v36, %v11007
    %v11009 = vand.u32 %v11008, 4294901760
    %11010 = vmatpush1.msra.mxu0 %v11009
    %11011 = vmatprep.subr.mxu0 0.0
    %11012 = vmatpush1.msra.mxu0 0.0
    %11013 = vmatprep.subr.mxu0 0.0
    %11014 = vmatpush1.msra.mxu0 0.0
    %11015 = vmatprep.subr.mxu0 0.0
    %11016 = vmatpush1.msra.mxu0 0.0
    %11017 = vmatprep.subr.mxu0 0.0
    %11018 = vmatpush1.msra.mxu0 0.0
    %11019 = vmatprep.subr.mxu0 0.0
    %11020 = vmatpush1.msra.mxu0 0.0
    %11021 = vmatprep.subr.mxu0 0.0
    %11022 = vmatpush1.msra.mxu0 0.0
    %11023 = vmatprep.subr.mxu0 0.0
    %11024 = vmatpush1.msra.mxu0 0.0
    %11025 = vmatprep.subr.mxu0 0.0
    %11026 = vmatpush1.msra.mxu0 0.0
    %11027 = vmatprep.subr.mxu0 0.0
    %11028 = vmatpush1.msra.mxu0 0.0
    %11029 = vmatprep.subr.mxu0 0.0
    %11030 = vmatpush1.msra.mxu0 0.0
    %11031 = vmatprep.subr.mxu0 0.0
    %11032 = vmatpush1.msra.mxu0 0.0
    %11033 = vmatprep.subr.mxu0 0.0
    %11034 = vmatpush1.msra.mxu0 0.0
    %11035 = vmatprep.subr.mxu0 0.0
    %11036 = vmatpush1.msra.mxu0 0.0
    %11037 = vmatprep.subr.mxu0 0.0
    %11038 = vmatpush1.msra.mxu0 0.0
    %11039 = vmatprep.subr.mxu0 0.0
    %11040 = vmatpush1.msra.mxu0 0.0
    %11041 = vmatprep.subr.mxu0 0.0
    %11042 = vmatpush1.msra.mxu0 0.0
    %11043 = vmatprep.subr.mxu0 0.0
    %11044 = vmatpush1.msra.mxu0 0.0
    %11045 = vmatprep.subr.mxu0 0.0
    %11046 = vmatpush1.msra.mxu0 0.0
    %11047 = vmatprep.subr.mxu0 0.0
    %11048 = vmatpush1.msra.mxu0 0.0
    %11049 = vmatprep.subr.mxu0 0.0
    %11050 = vmatpush1.msra.mxu0 0.0
    %11051 = vmatprep.subr.mxu0 0.0
    %11052 = vmatpush1.msra.mxu0 0.0
    %11053 = vmatprep.subr.mxu0 0.0
    %11054 = vmatpush1.msra.mxu0 0.0
    %11055 = vmatprep.subr.mxu0 0.0
    %11056 = vmatpush1.msra.mxu0 0.0
    %11057 = vmatprep.subr.mxu0 0.0
    %11058 = vmatpush1.msra.mxu0 0.0
    %11059 = vmatprep.subr.mxu0 0.0
    %11060 = vmatpush1.msra.mxu0 0.0
    %11061 = vmatprep.subr.mxu0 0.0
    %11062 = vmatpush1.msra.mxu0 0.0
    %11063 = vmatprep.subr.mxu0 0.0
    %11064 = vmatpush1.msra.mxu0 0.0
    %11065 = vmatprep.subr.mxu0 0.0
    %11066 = vmatpush1.msra.mxu0 0.0
    %11067 = vmatprep.mubr.f32.mxu0 0.0
    %v11068 = vand.u32 %v10662, 4294901760
    %11069 = vmatmul.mubr.f32.gmra.mrb[0].mxu0 %v11068
    %v11070 = vpop.f32.mrb[0].mxu0
    %v11071 = vadd.f32 %v10988, %v11070
    %v11072 = vpop.f32.mrb[0].mxu0
    %11073 = vdwg.mxu0
    %11074 = vmatprep.subr.mxu0 0.0
    %v11075 = vand.u32 %v30, 4294901760
    %11076 = vmatpush1.msra.mxu0 %v11075
    %11077 = vmatprep.subr.mxu0 0.0
    %v11078 = vand.u32 %v32, 4294901760
    %11079 = vmatpush1.msra.mxu0 %v11078
    %11080 = vmatprep.subr.mxu0 0.0
    %v11081 = vand.u32 %v34, 4294901760
    %11082 = vmatpush1.msra.mxu0 %v11081
    %11083 = vmatprep.subr.mxu0 0.0
    %v11084 = vand.u32 %v36, 4294901760
    %11085 = vmatpush1.msra.mxu0 %v11084
    %11086 = vmatprep.subr.mxu0 0.0
    %11087 = vmatpush1.msra.mxu0 0.0
    %11088 = vmatprep.subr.mxu0 0.0
    %11089 = vmatpush1.msra.mxu0 0.0
    %11090 = vmatprep.subr.mxu0 0.0
    %11091 = vmatpush1.msra.mxu0 0.0
    %11092 = vmatprep.subr.mxu0 0.0
    %11093 = vmatpush1.msra.mxu0 0.0
    %11094 = vmatprep.subr.mxu0 0.0
    %11095 = vmatpush1.msra.mxu0 0.0
    %11096 = vmatprep.subr.mxu0 0.0
    %11097 = vmatpush1.msra.mxu0 0.0
    %11098 = vmatprep.subr.mxu0 0.0
    %11099 = vmatpush1.msra.mxu0 0.0
    %11100 = vmatprep.subr.mxu0 0.0
    %11101 = vmatpush1.msra.mxu0 0.0
    %11102 = vmatprep.subr.mxu0 0.0
    %11103 = vmatpush1.msra.mxu0 0.0
    %11104 = vmatprep.subr.mxu0 0.0
    %11105 = vmatpush1.msra.mxu0 0.0
    %11106 = vmatprep.subr.mxu0 0.0
    %11107 = vmatpush1.msra.mxu0 0.0
    %11108 = vmatprep.subr.mxu0 0.0
    %11109 = vmatpush1.msra.mxu0 0.0
    %11110 = vmatprep.subr.mxu0 0.0
    %11111 = vmatpush1.msra.mxu0 0.0
    %11112 = vmatprep.subr.mxu0 0.0
    %11113 = vmatpush1.msra.mxu0 0.0
    %11114 = vmatprep.subr.mxu0 0.0
    %11115 = vmatpush1.msra.mxu0 0.0
    %11116 = vmatprep.subr.mxu0 0.0
    %11117 = vmatpush1.msra.mxu0 0.0
    %11118 = vmatprep.subr.mxu0 0.0
    %11119 = vmatpush1.msra.mxu0 0.0
    %11120 = vmatprep.subr.mxu0 0.0
    %11121 = vmatpush1.msra.mxu0 0.0
    %11122 = vmatprep.subr.mxu0 0.0
    %11123 = vmatpush1.msra.mxu0 0.0
    %11124 = vmatprep.subr.mxu0 0.0
    %11125 = vmatpush1.msra.mxu0 0.0
    %11126 = vmatprep.subr.mxu0 0.0
    %11127 = vmatpush1.msra.mxu0 0.0
    %11128 = vmatprep.subr.mxu0 0.0
    %11129 = vmatpush1.msra.mxu0 0.0
    %11130 = vmatprep.subr.mxu0 0.0
    %11131 = vmatpush1.msra.mxu0 0.0
    %11132 = vmatprep.subr.mxu0 0.0
    %11133 = vmatpush1.msra.mxu0 0.0
    %11134 = vmatprep.subr.mxu0 0.0
    %11135 = vmatpush1.msra.mxu0 0.0
    %11136 = vmatprep.subr.mxu0 0.0
    %11137 = vmatpush1.msra.mxu0 0.0
    %11138 = vmatprep.subr.mxu0 0.0
    %11139 = vmatpush1.msra.mxu0 0.0
    %11140 = vmatprep.subr.mxu0 0.0
    %11141 = vmatpush1.msra.mxu0 0.0
    %11142 = vmatprep.mubr.f32.mxu0 0.0
    %v11143 = vand.u32 %v10662, 4294901760
    %11144 = vmatmul.mubr.f32.gmra.mrb[0].mxu0 %v11143
    %v11145 = vpop.f32.mrb[0].mxu0
    %v11146 = vadd.f32 %v11071, %v11145
    %v11147 = vpop.f32.mrb[0].mxu0
    %11148 = vdwg.mxu0
    %v11149 = vadd.f32 %v28, %v11146
    %11150 = vmatprep.subr.mxu0 0.0
    %v11151 = vand.u32 %v18, 4294901760
    %11152 = vmatpush1.msra.mxu0 %v11151
    %11153 = vmatprep.subr.mxu0 0.0
    %v11154 = vand.u32 %v19, 4294901760
    %11155 = vmatpush1.msra.mxu0 %v11154
    %11156 = vmatprep.subr.mxu0 0.0
    %v11157 = vand.u32 %v20, 4294901760
    %11158 = vmatpush1.msra.mxu0 %v11157
    %11159 = vmatprep.subr.mxu0 0.0
    %v11160 = vand.u32 %v21, 4294901760
    %11161 = vmatpush1.msra.mxu0 %v11160
    %11162 = vmatprep.subr.mxu0 0.0
    %11163 = vmatpush1.msra.mxu0 0.0
    %11164 = vmatprep.subr.mxu0 0.0
    %11165 = vmatpush1.msra.mxu0 0.0
    %11166 = vmatprep.subr.mxu0 0.0
    %11167 = vmatpush1.msra.mxu0 0.0
    %11168 = vmatprep.subr.mxu0 0.0
    %11169 = vmatpush1.msra.mxu0 0.0
    %11170 = vmatprep.subr.mxu0 0.0
    %11171 = vmatpush1.msra.mxu0 0.0
    %11172 = vmatprep.subr.mxu0 0.0
    %11173 = vmatpush1.msra.mxu0 0.0
    %11174 = vmatprep.subr.mxu0 0.0
    %11175 = vmatpush1.msra.mxu0 0.0
    %11176 = vmatprep.subr.mxu0 0.0
    %11177 = vmatpush1.msra.mxu0 0.0
    %11178 = vmatprep.subr.mxu0 0.0
    %11179 = vmatpush1.msra.mxu0 0.0
    %11180 = vmatprep.subr.mxu0 0.0
    %11181 = vmatpush1.msra.mxu0 0.0
    %11182 = vmatprep.subr.mxu0 0.0
    %11183 = vmatpush1.msra.mxu0 0.0
    %11184 = vmatprep.subr.mxu0 0.0
    %11185 = vmatpush1.msra.mxu0 0.0
    %11186 = vmatprep.subr.mxu0 0.0
    %11187 = vmatpush1.msra.mxu0 0.0
    %11188 = vmatprep.subr.mxu0 0.0
    %11189 = vmatpush1.msra.mxu0 0.0
    %11190 = vmatprep.subr.mxu0 0.0
    %11191 = vmatpush1.msra.mxu0 0.0
    %11192 = vmatprep.subr.mxu0 0.0
    %11193 = vmatpush1.msra.mxu0 0.0
    %11194 = vmatprep.subr.mxu0 0.0
    %11195 = vmatpush1.msra.mxu0 0.0
    %11196 = vmatprep.subr.mxu0 0.0
    %11197 = vmatpush1.msra.mxu0 0.0
    %11198 = vmatprep.subr.mxu0 0.0
    %11199 = vmatpush1.msra.mxu0 0.0
    %11200 = vmatprep.subr.mxu0 0.0
    %11201 = vmatpush1.msra.mxu0 0.0
    %11202 = vmatprep.subr.mxu0 0.0
    %11203 = vmatpush1.msra.mxu0 0.0
    %11204 = vmatprep.subr.mxu0 0.0
    %11205 = vmatpush1.msra.mxu0 0.0
    %11206 = vmatprep.subr.mxu0 0.0
    %11207 = vmatpush1.msra.mxu0 0.0
    %11208 = vmatprep.subr.mxu0 0.0
    %11209 = vmatpush1.msra.mxu0 0.0
    %11210 = vmatprep.subr.mxu0 0.0
    %11211 = vmatpush1.msra.mxu0 0.0
    %11212 = vmatprep.subr.mxu0 0.0
    %11213 = vmatpush1.msra.mxu0 0.0
    %11214 = vmatprep.subr.mxu0 0.0
    %11215 = vmatpush1.msra.mxu0 0.0
    %11216 = vmatprep.subr.mxu0 0.0
    %11217 = vmatpush1.msra.mxu0 0.0
    %11218 = vmatprep.mubr.f32.mxu0 0.0
    %v11219 = vand.u32 %v10171, 4294901760
    %v11220 = vsub.f32 %v10171, %v11219
    %v11221 = vand.u32 %v11220, 4294901760
    %v11222 = vsub.f32 %v11220, %v11221
    %v11223 = vand.u32 %v11222, 4294901760
    %11224 = vmatmul.mubr.f32.gmra.mrb[0].mxu0 %v11223
    %v11225 = vpop.f32.mrb[0].mxu0
    %v11226 = vadd.f32 0.0, %v11225
    %v11227 = vpop.f32.mrb[0].mxu0
    %11228 = vdwg.mxu0
    %11229 = vmatprep.subr.mxu0 0.0
    %v11230 = vand.u32 %v18, 4294901760
    %v11231 = vsub.f32 %v18, %v11230
    %v11232 = vand.u32 %v11231, 4294901760
    %v11233 = vsub.f32 %v11231, %v11232
    %v11234 = vand.u32 %v11233, 4294901760
    %11235 = vmatpush1.msra.mxu0 %v11234
    %11236 = vmatprep.subr.mxu0 0.0
    %v11237 = vand.u32 %v19, 4294901760
    %v11238 = vsub.f32 %v19, %v11237
    %v11239 = vand.u32 %v11238, 4294901760
    %v11240 = vsub.f32 %v11238, %v11239
    %v11241 = vand.u32 %v11240, 4294901760
    %11242 = vmatpush1.msra.mxu0 %v11241
    %11243 = vmatprep.subr.mxu0 0.0
    %v11244 = vand.u32 %v20, 4294901760
    %v11245 = vsub.f32 %v20, %v11244
    %v11246 = vand.u32 %v11245, 4294901760
    %v11247 = vsub.f32 %v11245, %v11246
    %v11248 = vand.u32 %v11247, 4294901760
    %11249 = vmatpush1.msra.mxu0 %v11248
    %11250 = vmatprep.subr.mxu0 0.0
    %v11251 = vand.u32 %v21, 4294901760
    %v11252 = vsub.f32 %v21, %v11251
    %v11253 = vand.u32 %v11252, 4294901760
    %v11254 = vsub.f32 %v11252, %v11253
    %v11255 = vand.u32 %v11254, 4294901760
    %11256 = vmatpush1.msra.mxu0 %v11255
    %11257 = vmatprep.subr.mxu0 0.0
    %11258 = vmatpush1.msra.mxu0 0.0
    %11259 = vmatprep.subr.mxu0 0.0
    %11260 = vmatpush1.msra.mxu0 0.0
    %11261 = vmatprep.subr.mxu0 0.0
    %11262 = vmatpush1.msra.mxu0 0.0
    %11263 = vmatprep.subr.mxu0 0.0
    %11264 = vmatpush1.msra.mxu0 0.0
    %11265 = vmatprep.subr.mxu0 0.0
    %11266 = vmatpush1.msra.mxu0 0.0
    %11267 = vmatprep.subr.mxu0 0.0
    %11268 = vmatpush1.msra.mxu0 0.0
    %11269 = vmatprep.subr.mxu0 0.0
    %11270 = vmatpush1.msra.mxu0 0.0
    %11271 = vmatprep.subr.mxu0 0.0
    %11272 = vmatpush1.msra.mxu0 0.0
    %11273 = vmatprep.subr.mxu0 0.0
    %11274 = vmatpush1.msra.mxu0 0.0
    %11275 = vmatprep.subr.mxu0 0.0
    %11276 = vmatpush1.msra.mxu0 0.0
    %11277 = vmatprep.subr.mxu0 0.0
    %11278 = vmatpush1.msra.mxu0 0.0
    %11279 = vmatprep.subr.mxu0 0.0
    %11280 = vmatpush1.msra.mxu0 0.0
    %11281 = vmatprep.subr.mxu0 0.0
    %11282 = vmatpush1.msra.mxu0 0.0
    %11283 = vmatprep.subr.mxu0 0.0
    %11284 = vmatpush1.msra.mxu0 0.0
    %11285 = vmatprep.subr.mxu0 0.0
    %11286 = vmatpush1.msra.mxu0 0.0
    %11287 = vmatprep.subr.mxu0 0.0
    %11288 = vmatpush1.msra.mxu0 0.0
    %11289 = vmatprep.subr.mxu0 0.0
    %11290 = vmatpush1.msra.mxu0 0.0
    %11291 = vmatprep.subr.mxu0 0.0
    %11292 = vmatpush1.msra.mxu0 0.0
    %11293 = vmatprep.subr.mxu0 0.0
    %11294 = vmatpush1.msra.mxu0 0.0
    %11295 = vmatprep.subr.mxu0 0.0
    %11296 = vmatpush1.msra.mxu0 0.0
    %11297 = vmatprep.subr.mxu0 0.0
    %11298 = vmatpush1.msra.mxu0 0.0
    %11299 = vmatprep.subr.mxu0 0.0
    %11300 = vmatpush1.msra.mxu0 0.0
    %11301 = vmatprep.subr.mxu0 0.0
    %11302 = vmatpush1.msra.mxu0 0.0
    %11303 = vmatprep.subr.mxu0 0.0
    %11304 = vmatpush1.msra.mxu0 0.0
    %11305 = vmatprep.subr.mxu0 0.0
    %11306 = vmatpush1.msra.mxu0 0.0
    %11307 = vmatprep.subr.mxu0 0.0
    %11308 = vmatpush1.msra.mxu0 0.0
    %11309 = vmatprep.subr.mxu0 0.0
    %11310 = vmatpush1.msra.mxu0 0.0
    %11311 = vmatprep.subr.mxu0 0.0
    %11312 = vmatpush1.msra.mxu0 0.0
    %11313 = vmatprep.mubr.f32.mxu0 0.0
    %v11314 = vand.u32 %v10171, 4294901760
    %11315 = vmatmul.mubr.f32.gmra.mrb[0].mxu0 %v11314
    %v11316 = vpop.f32.mrb[0].mxu0
    %v11317 = vadd.f32 %v11226, %v11316
    %v11318 = vpop.f32.mrb[0].mxu0
    %11319 = vdwg.mxu0
    %11320 = vmatprep.subr.mxu0 0.0
    %v11321 = vand.u32 %v18, 4294901760
    %v11322 = vsub.f32 %v18, %v11321
    %11323 = vmatpush1.msra.mxu0 %v11322
    %11324 = vmatprep.subr.mxu0 0.0
    %v11325 = vand.u32 %v19, 4294901760
    %v11326 = vsub.f32 %v19, %v11325
    %11327 = vmatpush1.msra.mxu0 %v11326
    %11328 = vmatprep.subr.mxu0 0.0
    %v11329 = vand.u32 %v20, 4294901760
    %v11330 = vsub.f32 %v20, %v11329
    %11331 = vmatpush1.msra.mxu0 %v11330
    %11332 = vmatprep.subr.mxu0 0.0
    %v11333 = vand.u32 %v21, 4294901760
    %v11334 = vsub.f32 %v21, %v11333
    %11335 = vmatpush1.msra.mxu0 %v11334
    %11336 = vmatprep.subr.mxu0 0.0
    %11337 = vmatpush1.msra.mxu0 0.0
    %11338 = vmatprep.subr.mxu0 0.0
    %11339 = vmatpush1.msra.mxu0 0.0
    %11340 = vmatprep.subr.mxu0 0.0
    %11341 = vmatpush1.msra.mxu0 0.0
    %11342 = vmatprep.subr.mxu0 0.0
    %11343 = vmatpush1.msra.mxu0 0.0
    %11344 = vmatprep.subr.mxu0 0.0
    %11345 = vmatpush1.msra.mxu0 0.0
    %11346 = vmatprep.subr.mxu0 0.0
    %11347 = vmatpush1.msra.mxu0 0.0
    %11348 = vmatprep.subr.mxu0 0.0
    %11349 = vmatpush1.msra.mxu0 0.0
    %11350 = vmatprep.subr.mxu0 0.0
    %11351 = vmatpush1.msra.mxu0 0.0
    %11352 = vmatprep.subr.mxu0 0.0
    %11353 = vmatpush1.msra.mxu0 0.0
    %11354 = vmatprep.subr.mxu0 0.0
    %11355 = vmatpush1.msra.mxu0 0.0
    %11356 = vmatprep.subr.mxu0 0.0
    %11357 = vmatpush1.msra.mxu0 0.0
    %11358 = vmatprep.subr.mxu0 0.0
    %11359 = vmatpush1.msra.mxu0 0.0
    %11360 = vmatprep.subr.mxu0 0.0
    %11361 = vmatpush1.msra.mxu0 0.0
    %11362 = vmatprep.subr.mxu0 0.0
    %11363 = vmatpush1.msra.mxu0 0.0
    %11364 = vmatprep.subr.mxu0 0.0
    %11365 = vmatpush1.msra.mxu0 0.0
    %11366 = vmatprep.subr.mxu0 0.0
    %11367 = vmatpush1.msra.mxu0 0.0
    %11368 = vmatprep.subr.mxu0 0.0
    %11369 = vmatpush1.msra.mxu0 0.0
    %11370 = vmatprep.subr.mxu0 0.0
    %11371 = vmatpush1.msra.mxu0 0.0
    %11372 = vmatprep.subr.mxu0 0.0
    %11373 = vmatpush1.msra.mxu0 0.0
    %11374 = vmatprep.subr.mxu0 0.0
    %11375 = vmatpush1.msra.mxu0 0.0
    %11376 = vmatprep.subr.mxu0 0.0
    %11377 = vmatpush1.msra.mxu0 0.0
    %11378 = vmatprep.subr.mxu0 0.0
    %11379 = vmatpush1.msra.mxu0 0.0
    %11380 = vmatprep.subr.mxu0 0.0
    %11381 = vmatpush1.msra.mxu0 0.0
    %11382 = vmatprep.subr.mxu0 0.0
    %11383 = vmatpush1.msra.mxu0 0.0
    %11384 = vmatprep.subr.mxu0 0.0
    %11385 = vmatpush1.msra.mxu0 0.0
    %11386 = vmatprep.subr.mxu0 0.0
    %11387 = vmatpush1.msra.mxu0 0.0
    %11388 = vmatprep.subr.mxu0 0.0
    %11389 = vmatpush1.msra.mxu0 0.0
    %11390 = vmatprep.subr.mxu0 0.0
    %11391 = vmatpush1.msra.mxu0 0.0
    %11392 = vmatprep.mubr.f32.mxu0 0.0
    %v11393 = vand.u32 %v10171, 4294901760
    %v11394 = vsub.f32 %v10171, %v11393
    %11395 = vmatmul.mubr.f32.gmra.mrb[0].mxu0 %v11394
    %v11396 = vpop.f32.mrb[0].mxu0
    %v11397 = vadd.f32 %v11317, %v11396
    %v11398 = vpop.f32.mrb[0].mxu0
    %11399 = vdwg.mxu0
    %11400 = vmatprep.subr.mxu0 0.0
    %v11401 = vand.u32 %v18, 4294901760
    %11402 = vmatpush1.msra.mxu0 %v11401
    %11403 = vmatprep.subr.mxu0 0.0
    %v11404 = vand.u32 %v19, 4294901760
    %11405 = vmatpush1.msra.mxu0 %v11404
    %11406 = vmatprep.subr.mxu0 0.0
    %v11407 = vand.u32 %v20, 4294901760
    %11408 = vmatpush1.msra.mxu0 %v11407
    %11409 = vmatprep.subr.mxu0 0.0
    %v11410 = vand.u32 %v21, 4294901760
    %11411 = vmatpush1.msra.mxu0 %v11410
    %11412 = vmatprep.subr.mxu0 0.0
    %11413 = vmatpush1.msra.mxu0 0.0
    %11414 = vmatprep.subr.mxu0 0.0
    %11415 = vmatpush1.msra.mxu0 0.0
    %11416 = vmatprep.subr.mxu0 0.0
    %11417 = vmatpush1.msra.mxu0 0.0
    %11418 = vmatprep.subr.mxu0 0.0
    %11419 = vmatpush1.msra.mxu0 0.0
    %11420 = vmatprep.subr.mxu0 0.0
    %11421 = vmatpush1.msra.mxu0 0.0
    %11422 = vmatprep.subr.mxu0 0.0
    %11423 = vmatpush1.msra.mxu0 0.0
    %11424 = vmatprep.subr.mxu0 0.0
    %11425 = vmatpush1.msra.mxu0 0.0
    %11426 = vmatprep.subr.mxu0 0.0
    %11427 = vmatpush1.msra.mxu0 0.0
    %11428 = vmatprep.subr.mxu0 0.0
    %11429 = vmatpush1.msra.mxu0 0.0
    %11430 = vmatprep.subr.mxu0 0.0
    %11431 = vmatpush1.msra.mxu0 0.0
    %11432 = vmatprep.subr.mxu0 0.0
    %11433 = vmatpush1.msra.mxu0 0.0
    %11434 = vmatprep.subr.mxu0 0.0
    %11435 = vmatpush1.msra.mxu0 0.0
    %11436 = vmatprep.subr.mxu0 0.0
    %11437 = vmatpush1.msra.mxu0 0.0
    %11438 = vmatprep.subr.mxu0 0.0
    %11439 = vmatpush1.msra.mxu0 0.0
    %11440 = vmatprep.subr.mxu0 0.0
    %11441 = vmatpush1.msra.mxu0 0.0
    %11442 = vmatprep.subr.mxu0 0.0
    %11443 = vmatpush1.msra.mxu0 0.0
    %11444 = vmatprep.subr.mxu0 0.0
    %11445 = vmatpush1.msra.mxu0 0.0
    %11446 = vmatprep.subr.mxu0 0.0
    %11447 = vmatpush1.msra.mxu0 0.0
    %11448 = vmatprep.subr.mxu0 0.0
    %11449 = vmatpush1.msra.mxu0 0.0
    %11450 = vmatprep.subr.mxu0 0.0
    %11451 = vmatpush1.msra.mxu0 0.0
    %11452 = vmatprep.subr.mxu0 0.0
    %11453 = vmatpush1.msra.mxu0 0.0
    %11454 = vmatprep.subr.mxu0 0.0
    %11455 = vmatpush1.msra.mxu0 0.0
    %11456 = vmatprep.subr.mxu0 0.0
    %11457 = vmatpush1.msra.mxu0 0.0
    %11458 = vmatprep.subr.mxu0 0.0
    %11459 = vmatpush1.msra.mxu0 0.0
    %11460 = vmatprep.subr.mxu0 0.0
    %11461 = vmatpush1.msra.mxu0 0.0
    %11462 = vmatprep.subr.mxu0 0.0
    %11463 = vmatpush1.msra.mxu0 0.0
    %11464 = vmatprep.subr.mxu0 0.0
    %11465 = vmatpush1.msra.mxu0 0.0
    %11466 = vmatprep.subr.mxu0 0.0
    %11467 = vmatpush1.msra.mxu0 0.0
    %11468 = vmatprep.mubr.f32.mxu0 0.0
    %v11469 = vand.u32 %v10171, 4294901760
    %v11470 = vsub.f32 %v10171, %v11469
    %v11471 = vand.u32 %v11470, 4294901760
    %11472 = vmatmul.mubr.f32.gmra.mrb[0].mxu0 %v11471
    %v11473 = vpop.f32.mrb[0].mxu0
    %v11474 = vadd.f32 %v11397, %v11473
    %v11475 = vpop.f32.mrb[0].mxu0
    %11476 = vdwg.mxu0
    %11477 = vmatprep.subr.mxu0 0.0
    %v11478 = vand.u32 %v18, 4294901760
    %v11479 = vsub.f32 %v18, %v11478
    %v11480 = vand.u32 %v11479, 4294901760
    %11481 = vmatpush1.msra.mxu0 %v11480
    %11482 = vmatprep.subr.mxu0 0.0
    %v11483 = vand.u32 %v19, 4294901760
    %v11484 = vsub.f32 %v19, %v11483
    %v11485 = vand.u32 %v11484, 4294901760
    %11486 = vmatpush1.msra.mxu0 %v11485
    %11487 = vmatprep.subr.mxu0 0.0
    %v11488 = vand.u32 %v20, 4294901760
    %v11489 = vsub.f32 %v20, %v11488
    %v11490 = vand.u32 %v11489, 4294901760
    %11491 = vmatpush1.msra.mxu0 %v11490
    %11492 = vmatprep.subr.mxu0 0.0
    %v11493 = vand.u32 %v21, 4294901760
    %v11494 = vsub.f32 %v21, %v11493
    %v11495 = vand.u32 %v11494, 4294901760
    %11496 = vmatpush1.msra.mxu0 %v11495
    %11497 = vmatprep.subr.mxu0 0.0
    %11498 = vmatpush1.msra.mxu0 0.0
    %11499 = vmatprep.subr.mxu0 0.0
    %11500 = vmatpush1.msra.mxu0 0.0
    %11501 = vmatprep.subr.mxu0 0.0
    %11502 = vmatpush1.msra.mxu0 0.0
    %11503 = vmatprep.subr.mxu0 0.0
    %11504 = vmatpush1.msra.mxu0 0.0
    %11505 = vmatprep.subr.mxu0 0.0
    %11506 = vmatpush1.msra.mxu0 0.0
    %11507 = vmatprep.subr.mxu0 0.0
    %11508 = vmatpush1.msra.mxu0 0.0
    %11509 = vmatprep.subr.mxu0 0.0
    %11510 = vmatpush1.msra.mxu0 0.0
    %11511 = vmatprep.subr.mxu0 0.0
    %11512 = vmatpush1.msra.mxu0 0.0
    %11513 = vmatprep.subr.mxu0 0.0
    %11514 = vmatpush1.msra.mxu0 0.0
    %11515 = vmatprep.subr.mxu0 0.0
    %11516 = vmatpush1.msra.mxu0 0.0
    %11517 = vmatprep.subr.mxu0 0.0
    %11518 = vmatpush1.msra.mxu0 0.0
    %11519 = vmatprep.subr.mxu0 0.0
    %11520 = vmatpush1.msra.mxu0 0.0
    %11521 = vmatprep.subr.mxu0 0.0
    %11522 = vmatpush1.msra.mxu0 0.0
    %11523 = vmatprep.subr.mxu0 0.0
    %11524 = vmatpush1.msra.mxu0 0.0
    %11525 = vmatprep.subr.mxu0 0.0
    %11526 = vmatpush1.msra.mxu0 0.0
    %11527 = vmatprep.subr.mxu0 0.0
    %11528 = vmatpush1.msra.mxu0 0.0
    %11529 = vmatprep.subr.mxu0 0.0
    %11530 = vmatpush1.msra.mxu0 0.0
    %11531 = vmatprep.subr.mxu0 0.0
    %11532 = vmatpush1.msra.mxu0 0.0
    %11533 = vmatprep.subr.mxu0 0.0
    %11534 = vmatpush1.msra.mxu0 0.0
    %11535 = vmatprep.subr.mxu0 0.0
    %11536 = vmatpush1.msra.mxu0 0.0
    %11537 = vmatprep.subr.mxu0 0.0
    %11538 = vmatpush1.msra.mxu0 0.0
    %11539 = vmatprep.subr.mxu0 0.0
    %11540 = vmatpush1.msra.mxu0 0.0
    %11541 = vmatprep.subr.mxu0 0.0
    %11542 = vmatpush1.msra.mxu0 0.0
    %11543 = vmatprep.subr.mxu0 0.0
    %11544 = vmatpush1.msra.mxu0 0.0
    %11545 = vmatprep.subr.mxu0 0.0
    %11546 = vmatpush1.msra.mxu0 0.0
    %11547 = vmatprep.subr.mxu0 0.0
    %11548 = vmatpush1.msra.mxu0 0.0
    %11549 = vmatprep.subr.mxu0 0.0
    %11550 = vmatpush1.msra.mxu0 0.0
    %11551 = vmatprep.subr.mxu0 0.0
    %11552 = vmatpush1.msra.mxu0 0.0
    %11553 = vmatprep.mubr.f32.mxu0 0.0
    %v11554 = vand.u32 %v10171, 4294901760
    %11555 = vmatmul.mubr.f32.gmra.mrb[0].mxu0 %v11554
    %v11556 = vpop.f32.mrb[0].mxu0
    %v11557 = vadd.f32 %v11474, %v11556
    %v11558 = vpop.f32.mrb[0].mxu0
    %11559 = vdwg.mxu0
    %11560 = vmatprep.subr.mxu0 0.0
    %v11561 = vand.u32 %v18, 4294901760
    %11562 = vmatpush1.msra.mxu0 %v11561
    %11563 = vmatprep.subr.mxu0 0.0
    %v11564 = vand.u32 %v19, 4294901760
    %11565 = vmatpush1.msra.mxu0 %v11564
    %11566 = vmatprep.subr.mxu0 0.0
    %v11567 = vand.u32 %v20, 4294901760
    %11568 = vmatpush1.msra.mxu0 %v11567
    %11569 = vmatprep.subr.mxu0 0.0
    %v11570 = vand.u32 %v21, 4294901760
    %11571 = vmatpush1.msra.mxu0 %v11570
    %11572 = vmatprep.subr.mxu0 0.0
    %11573 = vmatpush1.msra.mxu0 0.0
    %11574 = vmatprep.subr.mxu0 0.0
    %11575 = vmatpush1.msra.mxu0 0.0
    %11576 = vmatprep.subr.mxu0 0.0
    %11577 = vmatpush1.msra.mxu0 0.0
    %11578 = vmatprep.subr.mxu0 0.0
    %11579 = vmatpush1.msra.mxu0 0.0
    %11580 = vmatprep.subr.mxu0 0.0
    %11581 = vmatpush1.msra.mxu0 0.0
    %11582 = vmatprep.subr.mxu0 0.0
    %11583 = vmatpush1.msra.mxu0 0.0
    %11584 = vmatprep.subr.mxu0 0.0
    %11585 = vmatpush1.msra.mxu0 0.0
    %11586 = vmatprep.subr.mxu0 0.0
    %11587 = vmatpush1.msra.mxu0 0.0
    %11588 = vmatprep.subr.mxu0 0.0
    %11589 = vmatpush1.msra.mxu0 0.0
    %11590 = vmatprep.subr.mxu0 0.0
    %11591 = vmatpush1.msra.mxu0 0.0
    %11592 = vmatprep.subr.mxu0 0.0
    %11593 = vmatpush1.msra.mxu0 0.0
    %11594 = vmatprep.subr.mxu0 0.0
    %11595 = vmatpush1.msra.mxu0 0.0
    %11596 = vmatprep.subr.mxu0 0.0
    %11597 = vmatpush1.msra.mxu0 0.0
    %11598 = vmatprep.subr.mxu0 0.0
    %11599 = vmatpush1.msra.mxu0 0.0
    %11600 = vmatprep.subr.mxu0 0.0
    %11601 = vmatpush1.msra.mxu0 0.0
    %11602 = vmatprep.subr.mxu0 0.0
    %11603 = vmatpush1.msra.mxu0 0.0
    %11604 = vmatprep.subr.mxu0 0.0
    %11605 = vmatpush1.msra.mxu0 0.0
    %11606 = vmatprep.subr.mxu0 0.0
    %11607 = vmatpush1.msra.mxu0 0.0
    %11608 = vmatprep.subr.mxu0 0.0
    %11609 = vmatpush1.msra.mxu0 0.0
    %11610 = vmatprep.subr.mxu0 0.0
    %11611 = vmatpush1.msra.mxu0 0.0
    %11612 = vmatprep.subr.mxu0 0.0
    %11613 = vmatpush1.msra.mxu0 0.0
    %11614 = vmatprep.subr.mxu0 0.0
    %11615 = vmatpush1.msra.mxu0 0.0
    %11616 = vmatprep.subr.mxu0 0.0
    %11617 = vmatpush1.msra.mxu0 0.0
    %11618 = vmatprep.subr.mxu0 0.0
    %11619 = vmatpush1.msra.mxu0 0.0
    %11620 = vmatprep.subr.mxu0 0.0
    %11621 = vmatpush1.msra.mxu0 0.0
    %11622 = vmatprep.subr.mxu0 0.0
    %11623 = vmatpush1.msra.mxu0 0.0
    %11624 = vmatprep.subr.mxu0 0.0
    %11625 = vmatpush1.msra.mxu0 0.0
    %11626 = vmatprep.subr.mxu0 0.0
    %11627 = vmatpush1.msra.mxu0 0.0
    %11628 = vmatprep.mubr.f32.mxu0 0.0
    %v11629 = vand.u32 %v10171, 4294901760
    %11630 = vmatmul.mubr.f32.gmra.mrb[0].mxu0 %v11629
    %v11631 = vpop.f32.mrb[0].mxu0
    %v11632 = vadd.f32 %v11557, %v11631
    %v11633 = vpop.f32.mrb[0].mxu0
    %11634 = vdwg.mxu0
    %v11635 = vadd.f32 %v11149, %v11632
    %v11636 = vtanh.pop %v11635
    %v11637 = vadd.f32 %v11636, 1.0
    %v11638 = vmul.f32 %v11637, 0.5
    %v11639 = vsel %vm113, %v11636, %v11638
    %v11640 = vmul.f32 %v11639, %v10157
    %11642 = vrot.lane.b32.xlu0 %v11639, 64
    %v11643 = vpop.permute.xlu0 %11642
    %v11645 = vmul.f32 %v11639, %v11643
    %11647 = vrot.lane.b32.xlu0 %v11645, 32
    %v11648 = vpop.permute.xlu0 %11647
    %v11650 = vadd.f32 %v11640, %v11648
    %v11651 = vtanh.pop %v11650
    %11653 = vrot.lane.b32.xlu0 %v11651, 64
    %v11654 = vpop.permute.xlu0 %11653
    %v11656 = vmul.f32 %v11639, %v11654
    %v11657 = vld [vmem:[%s3 + $0xe0] sm:$0xff]
    %v11658 = vld [vmem:[%s3 + $0xe8] sm:$0xff]
    %v11659 = vld [vmem:[%s3 + $0xf0] sm:$0xff]
    %v11660 = vld [vmem:[%s3 + $0xf8] sm:$0xff]
    %11662 = vrot.lane.b32.xlu0 %v11656, 32
    %v11663 = vpop.permute.xlu0 %11662
    %v11664 = vsel %vm138, %v11663, 0
    %11666 = vmatprep.subr.mxu0 0.0
    %v11667 = vand.u32 %v11657, 4294901760
    %11668 = vmatpush1.msra.mxu0 %v11667
    %11669 = vmatprep.subr.mxu0 0.0
    %v11670 = vand.u32 %v11658, 4294901760
    %11671 = vmatpush1.msra.mxu0 %v11670
    %11672 = vmatprep.subr.mxu0 0.0
    %v11673 = vand.u32 %v11659, 4294901760
    %11674 = vmatpush1.msra.mxu0 %v11673
    %11675 = vmatprep.subr.mxu0 0.0
    %v11676 = vand.u32 %v11660, 4294901760
    %11677 = vmatpush1.msra.mxu0 %v11676
    %11678 = vmatprep.subr.mxu0 0.0
    %11679 = vmatpush1.msra.mxu0 0.0
    %11680 = vmatprep.subr.mxu0 0.0
    %11681 = vmatpush1.msra.mxu0 0.0
    %11682 = vmatprep.subr.mxu0 0.0
    %11683 = vmatpush1.msra.mxu0 0.0
    %11684 = vmatprep.subr.mxu0 0.0
    %11685 = vmatpush1.msra.mxu0 0.0
    %11686 = vmatprep.subr.mxu0 0.0
    %11687 = vmatpush1.msra.mxu0 0.0
    %11688 = vmatprep.subr.mxu0 0.0
    %11689 = vmatpush1.msra.mxu0 0.0
    %11690 = vmatprep.subr.mxu0 0.0
    %11691 = vmatpush1.msra.mxu0 0.0
    %11692 = vmatprep.subr.mxu0 0.0
    %11693 = vmatpush1.msra.mxu0 0.0
    %11694 = vmatprep.subr.mxu0 0.0
    %11695 = vmatpush1.msra.mxu0 0.0
    %11696 = vmatprep.subr.mxu0 0.0
    %11697 = vmatpush1.msra.mxu0 0.0
    %11698 = vmatprep.subr.mxu0 0.0
    %11699 = vmatpush1.msra.mxu0 0.0
    %11700 = vmatprep.subr.mxu0 0.0
    %11701 = vmatpush1.msra.mxu0 0.0
    %11702 = vmatprep.subr.mxu0 0.0
    %11703 = vmatpush1.msra.mxu0 0.0
    %11704 = vmatprep.subr.mxu0 0.0
    %11705 = vmatpush1.msra.mxu0 0.0
    %11706 = vmatprep.subr.mxu0 0.0
    %11707 = vmatpush1.msra.mxu0 0.0
    %11708 = vmatprep.subr.mxu0 0.0
    %11709 = vmatpush1.msra.mxu0 0.0
    %11710 = vmatprep.subr.mxu0 0.0
    %11711 = vmatpush1.msra.mxu0 0.0
    %11712 = vmatprep.subr.mxu0 0.0
    %11713 = vmatpush1.msra.mxu0 0.0
    %11714 = vmatprep.subr.mxu0 0.0
    %11715 = vmatpush1.msra.mxu0 0.0
    %11716 = vmatprep.subr.mxu0 0.0
    %11717 = vmatpush1.msra.mxu0 0.0
    %11718 = vmatprep.subr.mxu0 0.0
    %11719 = vmatpush1.msra.mxu0 0.0
    %11720 = vmatprep.subr.mxu0 0.0
    %11721 = vmatpush1.msra.mxu0 0.0
    %11722 = vmatprep.subr.mxu0 0.0
    %11723 = vmatpush1.msra.mxu0 0.0
    %11724 = vmatprep.subr.mxu0 0.0
    %11725 = vmatpush1.msra.mxu0 0.0
    %11726 = vmatprep.subr.mxu0 0.0
    %11727 = vmatpush1.msra.mxu0 0.0
    %11728 = vmatprep.subr.mxu0 0.0
    %11729 = vmatpush1.msra.mxu0 0.0
    %11730 = vmatprep.subr.mxu0 0.0
    %11731 = vmatpush1.msra.mxu0 0.0
    %11732 = vmatprep.subr.mxu0 0.0
    %11733 = vmatpush1.msra.mxu0 0.0
    %11734 = vmatprep.mubr.f32.mxu0 0.0
    %v11735 = vand.u32 %v11664, 4294901760
    %v11736 = vsub.f32 %v11664, %v11735
    %v11737 = vand.u32 %v11736, 4294901760
    %v11738 = vsub.f32 %v11736, %v11737
    %v11739 = vand.u32 %v11738, 4294901760
    %11740 = vmatmul.mubr.f32.gmra.mrb[0].mxu0 %v11739
    %v11741 = vpop.f32.mrb[0].mxu0
    %v11742 = vadd.f32 0.0, %v11741
    %v11743 = vpop.f32.mrb[0].mxu0
    %11744 = vdwg.mxu0
    %11745 = vmatprep.subr.mxu0 0.0
    %v11746 = vand.u32 %v11657, 4294901760
    %v11747 = vsub.f32 %v11657, %v11746
    %v11748 = vand.u32 %v11747, 4294901760
    %v11749 = vsub.f32 %v11747, %v11748
    %v11750 = vand.u32 %v11749, 4294901760
    %11751 = vmatpush1.msra.mxu0 %v11750
    %11752 = vmatprep.subr.mxu0 0.0
    %v11753 = vand.u32 %v11658, 4294901760
    %v11754 = vsub.f32 %v11658, %v11753
    %v11755 = vand.u32 %v11754, 4294901760
    %v11756 = vsub.f32 %v11754, %v11755
    %v11757 = vand.u32 %v11756, 4294901760
    %11758 = vmatpush1.msra.mxu0 %v11757
    %11759 = vmatprep.subr.mxu0 0.0
    %v11760 = vand.u32 %v11659, 4294901760
    %v11761 = vsub.f32 %v11659, %v11760
    %v11762 = vand.u32 %v11761, 4294901760
    %v11763 = vsub.f32 %v11761, %v11762
    %v11764 = vand.u32 %v11763, 4294901760
    %11765 = vmatpush1.msra.mxu0 %v11764
    %11766 = vmatprep.subr.mxu0 0.0
    %v11767 = vand.u32 %v11660, 4294901760
    %v11768 = vsub.f32 %v11660, %v11767
    %v11769 = vand.u32 %v11768, 4294901760
    %v11770 = vsub.f32 %v11768, %v11769
    %v11771 = vand.u32 %v11770, 4294901760
    %11772 = vmatpush1.msra.mxu0 %v11771
    %11773 = vmatprep.subr.mxu0 0.0
    %11774 = vmatpush1.msra.mxu0 0.0
    %11775 = vmatprep.subr.mxu0 0.0
    %11776 = vmatpush1.msra.mxu0 0.0
    %11777 = vmatprep.subr.mxu0 0.0
    %11778 = vmatpush1.msra.mxu0 0.0
    %11779 = vmatprep.subr.mxu0 0.0
    %11780 = vmatpush1.msra.mxu0 0.0
    %11781 = vmatprep.subr.mxu0 0.0
    %11782 = vmatpush1.msra.mxu0 0.0
    %11783 = vmatprep.subr.mxu0 0.0
    %11784 = vmatpush1.msra.mxu0 0.0
    %11785 = vmatprep.subr.mxu0 0.0
    %11786 = vmatpush1.msra.mxu0 0.0
    %11787 = vmatprep.subr.mxu0 0.0
    %11788 = vmatpush1.msra.mxu0 0.0
    %11789 = vmatprep.subr.mxu0 0.0
    %11790 = vmatpush1.msra.mxu0 0.0
    %11791 = vmatprep.subr.mxu0 0.0
    %11792 = vmatpush1.msra.mxu0 0.0
    %11793 = vmatprep.subr.mxu0 0.0
    %11794 = vmatpush1.msra.mxu0 0.0
    %11795 = vmatprep.subr.mxu0 0.0
    %11796 = vmatpush1.msra.mxu0 0.0
    %11797 = vmatprep.subr.mxu0 0.0
    %11798 = vmatpush1.msra.mxu0 0.0
    %11799 = vmatprep.subr.mxu0 0.0
    %11800 = vmatpush1.msra.mxu0 0.0
    %11801 = vmatprep.subr.mxu0 0.0
    %11802 = vmatpush1.msra.mxu0 0.0
    %11803 = vmatprep.subr.mxu0 0.0
    %11804 = vmatpush1.msra.mxu0 0.0
    %11805 = vmatprep.subr.mxu0 0.0
    %11806 = vmatpush1.msra.mxu0 0.0
    %11807 = vmatprep.subr.mxu0 0.0
    %11808 = vmatpush1.msra.mxu0 0.0
    %11809 = vmatprep.subr.mxu0 0.0
    %11810 = vmatpush1.msra.mxu0 0.0
    %11811 = vmatprep.subr.mxu0 0.0
    %11812 = vmatpush1.msra.mxu0 0.0
    %11813 = vmatprep.subr.mxu0 0.0
    %11814 = vmatpush1.msra.mxu0 0.0
    %11815 = vmatprep.subr.mxu0 0.0
    %11816 = vmatpush1.msra.mxu0 0.0
    %11817 = vmatprep.subr.mxu0 0.0
    %11818 = vmatpush1.msra.mxu0 0.0
    %11819 = vmatprep.subr.mxu0 0.0
    %11820 = vmatpush1.msra.mxu0 0.0
    %11821 = vmatprep.subr.mxu0 0.0
    %11822 = vmatpush1.msra.mxu0 0.0
    %11823 = vmatprep.subr.mxu0 0.0
    %11824 = vmatpush1.msra.mxu0 0.0
    %11825 = vmatprep.subr.mxu0 0.0
    %11826 = vmatpush1.msra.mxu0 0.0
    %11827 = vmatprep.subr.mxu0 0.0
    %11828 = vmatpush1.msra.mxu0 0.0
    %11829 = vmatprep.mubr.f32.mxu0 0.0
    %v11830 = vand.u32 %v11664, 4294901760
    %11831 = vmatmul.mubr.f32.gmra.mrb[0].mxu0 %v11830
    %v11832 = vpop.f32.mrb[0].mxu0
    %v11833 = vadd.f32 %v11742, %v11832
    %v11834 = vpop.f32.mrb[0].mxu0
    %11835 = vdwg.mxu0
    %11836 = vmatprep.subr.mxu0 0.0
    %v11837 = vand.u32 %v11657, 4294901760
    %v11838 = vsub.f32 %v11657, %v11837
    %11839 = vmatpush1.msra.mxu0 %v11838
    %11840 = vmatprep.subr.mxu0 0.0
    %v11841 = vand.u32 %v11658, 4294901760
    %v11842 = vsub.f32 %v11658, %v11841
    %11843 = vmatpush1.msra.mxu0 %v11842
    %11844 = vmatprep.subr.mxu0 0.0
    %v11845 = vand.u32 %v11659, 4294901760
    %v11846 = vsub.f32 %v11659, %v11845
    %11847 = vmatpush1.msra.mxu0 %v11846
    %11848 = vmatprep.subr.mxu0 0.0
    %v11849 = vand.u32 %v11660, 4294901760
    %v11850 = vsub.f32 %v11660, %v11849
    %11851 = vmatpush1.msra.mxu0 %v11850
    %11852 = vmatprep.subr.mxu0 0.0
    %11853 = vmatpush1.msra.mxu0 0.0
    %11854 = vmatprep.subr.mxu0 0.0
    %11855 = vmatpush1.msra.mxu0 0.0
    %11856 = vmatprep.subr.mxu0 0.0
    %11857 = vmatpush1.msra.mxu0 0.0
    %11858 = vmatprep.subr.mxu0 0.0
    %11859 = vmatpush1.msra.mxu0 0.0
    %11860 = vmatprep.subr.mxu0 0.0
    %11861 = vmatpush1.msra.mxu0 0.0
    %11862 = vmatprep.subr.mxu0 0.0
    %11863 = vmatpush1.msra.mxu0 0.0
    %11864 = vmatprep.subr.mxu0 0.0
    %11865 = vmatpush1.msra.mxu0 0.0
    %11866 = vmatprep.subr.mxu0 0.0
    %11867 = vmatpush1.msra.mxu0 0.0
    %11868 = vmatprep.subr.mxu0 0.0
    %11869 = vmatpush1.msra.mxu0 0.0
    %11870 = vmatprep.subr.mxu0 0.0
    %11871 = vmatpush1.msra.mxu0 0.0
    %11872 = vmatprep.subr.mxu0 0.0
    %11873 = vmatpush1.msra.mxu0 0.0
    %11874 = vmatprep.subr.mxu0 0.0
    %11875 = vmatpush1.msra.mxu0 0.0
    %11876 = vmatprep.subr.mxu0 0.0
    %11877 = vmatpush1.msra.mxu0 0.0
    %11878 = vmatprep.subr.mxu0 0.0
    %11879 = vmatpush1.msra.mxu0 0.0
    %11880 = vmatprep.subr.mxu0 0.0
    %11881 = vmatpush1.msra.mxu0 0.0
    %11882 = vmatprep.subr.mxu0 0.0
    %11883 = vmatpush1.msra.mxu0 0.0
    %11884 = vmatprep.subr.mxu0 0.0
    %11885 = vmatpush1.msra.mxu0 0.0
    %11886 = vmatprep.subr.mxu0 0.0
    %11887 = vmatpush1.msra.mxu0 0.0
    %11888 = vmatprep.subr.mxu0 0.0
    %11889 = vmatpush1.msra.mxu0 0.0
    %11890 = vmatprep.subr.mxu0 0.0
    %11891 = vmatpush1.msra.mxu0 0.0
    %11892 = vmatprep.subr.mxu0 0.0
    %11893 = vmatpush1.msra.mxu0 0.0
    %11894 = vmatprep.subr.mxu0 0.0
    %11895 = vmatpush1.msra.mxu0 0.0
    %11896 = vmatprep.subr.mxu0 0.0
    %11897 = vmatpush1.msra.mxu0 0.0
    %11898 = vmatprep.subr.mxu0 0.0
    %11899 = vmatpush1.msra.mxu0 0.0
    %11900 = vmatprep.subr.mxu0 0.0
    %11901 = vmatpush1.msra.mxu0 0.0
    %11902 = vmatprep.subr.mxu0 0.0
    %11903 = vmatpush1.msra.mxu0 0.0
    %11904 = vmatprep.subr.mxu0 0.0
    %11905 = vmatpush1.msra.mxu0 0.0
    %11906 = vmatprep.subr.mxu0 0.0
    %11907 = vmatpush1.msra.mxu0 0.0
    %11908 = vmatprep.mubr.f32.mxu0 0.0
    %v11909 = vand.u32 %v11664, 4294901760
    %v11910 = vsub.f32 %v11664, %v11909
    %11911 = vmatmul.mubr.f32.gmra.mrb[0].mxu0 %v11910
    %v11912 = vpop.f32.mrb[0].mxu0
    %v11913 = vadd.f32 %v11833, %v11912
    %v11914 = vpop.f32.mrb[0].mxu0
    %11915 = vdwg.mxu0
    %11916 = vmatprep.subr.mxu0 0.0
    %v11917 = vand.u32 %v11657, 4294901760
    %11918 = vmatpush1.msra.mxu0 %v11917
    %11919 = vmatprep.subr.mxu0 0.0
    %v11920 = vand.u32 %v11658, 4294901760
    %11921 = vmatpush1.msra.mxu0 %v11920
    %11922 = vmatprep.subr.mxu0 0.0
    %v11923 = vand.u32 %v11659, 4294901760
    %11924 = vmatpush1.msra.mxu0 %v11923
    %11925 = vmatprep.subr.mxu0 0.0
    %v11926 = vand.u32 %v11660, 4294901760
    %11927 = vmatpush1.msra.mxu0 %v11926
    %11928 = vmatprep.subr.mxu0 0.0
    %11929 = vmatpush1.msra.mxu0 0.0
    %11930 = vmatprep.subr.mxu0 0.0
    %11931 = vmatpush1.msra.mxu0 0.0
    %11932 = vmatprep.subr.mxu0 0.0
    %11933 = vmatpush1.msra.mxu0 0.0
    %11934 = vmatprep.subr.mxu0 0.0
    %11935 = vmatpush1.msra.mxu0 0.0
    %11936 = vmatprep.subr.mxu0 0.0
    %11937 = vmatpush1.msra.mxu0 0.0
    %11938 = vmatprep.subr.mxu0 0.0
    %11939 = vmatpush1.msra.mxu0 0.0
    %11940 = vmatprep.subr.mxu0 0.0
    %11941 = vmatpush1.msra.mxu0 0.0
    %11942 = vmatprep.subr.mxu0 0.0
    %11943 = vmatpush1.msra.mxu0 0.0
    %11944 = vmatprep.subr.mxu0 0.0
    %11945 = vmatpush1.msra.mxu0 0.0
    %11946 = vmatprep.subr.mxu0 0.0
    %11947 = vmatpush1.msra.mxu0 0.0
    %11948 = vmatprep.subr.mxu0 0.0
    %11949 = vmatpush1.msra.mxu0 0.0
    %11950 = vmatprep.subr.mxu0 0.0
    %11951 = vmatpush1.msra.mxu0 0.0
    %11952 = vmatprep.subr.mxu0 0.0
    %11953 = vmatpush1.msra.mxu0 0.0
    %11954 = vmatprep.subr.mxu0 0.0
    %11955 = vmatpush1.msra.mxu0 0.0
    %11956 = vmatprep.subr.mxu0 0.0
    %11957 = vmatpush1.msra.mxu0 0.0
    %11958 = vmatprep.subr.mxu0 0.0
    %11959 = vmatpush1.msra.mxu0 0.0
    %11960 = vmatprep.subr.mxu0 0.0
    %11961 = vmatpush1.msra.mxu0 0.0
    %11962 = vmatprep.subr.mxu0 0.0
    %11963 = vmatpush1.msra.mxu0 0.0
    %11964 = vmatprep.subr.mxu0 0.0
    %11965 = vmatpush1.msra.mxu0 0.0
    %11966 = vmatprep.subr.mxu0 0.0
    %11967 = vmatpush1.msra.mxu0 0.0
    %11968 = vmatprep.subr.mxu0 0.0
    %11969 = vmatpush1.msra.mxu0 0.0
    %11970 = vmatprep.subr.mxu0 0.0
    %11971 = vmatpush1.msra.mxu0 0.0
    %11972 = vmatprep.subr.mxu0 0.0
    %11973 = vmatpush1.msra.mxu0 0.0
    %11974 = vmatprep.subr.mxu0 0.0
    %11975 = vmatpush1.msra.mxu0 0.0
    %11976 = vmatprep.subr.mxu0 0.0
    %11977 = vmatpush1.msra.mxu0 0.0
    %11978 = vmatprep.subr.mxu0 0.0
    %11979 = vmatpush1.msra.mxu0 0.0
    %11980 = vmatprep.subr.mxu0 0.0
    %11981 = vmatpush1.msra.mxu0 0.0
    %11982 = vmatprep.subr.mxu0 0.0
    %11983 = vmatpush1.msra.mxu0 0.0
    %11984 = vmatprep.mubr.f32.mxu0 0.0
    %v11985 = vand.u32 %v11664, 4294901760
    %v11986 = vsub.f32 %v11664, %v11985
    %v11987 = vand.u32 %v11986, 4294901760
    %11988 = vmatmul.mubr.f32.gmra.mrb[0].mxu0 %v11987
    %v11989 = vpop.f32.mrb[0].mxu0
    %v11990 = vadd.f32 %v11913, %v11989
    %v11991 = vpop.f32.mrb[0].mxu0
    %11992 = vdwg.mxu0
    %11993 = vmatprep.subr.mxu0 0.0
    %v11994 = vand.u32 %v11657, 4294901760
    %v11995 = vsub.f32 %v11657, %v11994
    %v11996 = vand.u32 %v11995, 4294901760
    %11997 = vmatpush1.msra.mxu0 %v11996
    %11998 = vmatprep.subr.mxu0 0.0
    %v11999 = vand.u32 %v11658, 4294901760
    %v12000 = vsub.f32 %v11658, %v11999
    %v12001 = vand.u32 %v12000, 4294901760
    %12002 = vmatpush1.msra.mxu0 %v12001
    %12003 = vmatprep.subr.mxu0 0.0
    %v12004 = vand.u32 %v11659, 4294901760
    %v12005 = vsub.f32 %v11659, %v12004
    %v12006 = vand.u32 %v12005, 4294901760
    %12007 = vmatpush1.msra.mxu0 %v12006
    %12008 = vmatprep.subr.mxu0 0.0
    %v12009 = vand.u32 %v11660, 4294901760
    %v12010 = vsub.f32 %v11660, %v12009
    %v12011 = vand.u32 %v12010, 4294901760
    %12012 = vmatpush1.msra.mxu0 %v12011
    %12013 = vmatprep.subr.mxu0 0.0
    %12014 = vmatpush1.msra.mxu0 0.0
    %12015 = vmatprep.subr.mxu0 0.0
    %12016 = vmatpush1.msra.mxu0 0.0
    %12017 = vmatprep.subr.mxu0 0.0
    %12018 = vmatpush1.msra.mxu0 0.0
    %12019 = vmatprep.subr.mxu0 0.0
    %12020 = vmatpush1.msra.mxu0 0.0
    %12021 = vmatprep.subr.mxu0 0.0
    %12022 = vmatpush1.msra.mxu0 0.0
    %12023 = vmatprep.subr.mxu0 0.0
    %12024 = vmatpush1.msra.mxu0 0.0
    %12025 = vmatprep.subr.mxu0 0.0
    %12026 = vmatpush1.msra.mxu0 0.0
    %12027 = vmatprep.subr.mxu0 0.0
    %12028 = vmatpush1.msra.mxu0 0.0
    %12029 = vmatprep.subr.mxu0 0.0
    %12030 = vmatpush1.msra.mxu0 0.0
    %12031 = vmatprep.subr.mxu0 0.0
    %12032 = vmatpush1.msra.mxu0 0.0
    %12033 = vmatprep.subr.mxu0 0.0
    %12034 = vmatpush1.msra.mxu0 0.0
    %12035 = vmatprep.subr.mxu0 0.0
    %12036 = vmatpush1.msra.mxu0 0.0
    %12037 = vmatprep.subr.mxu0 0.0
    %12038 = vmatpush1.msra.mxu0 0.0
    %12039 = vmatprep.subr.mxu0 0.0
    %12040 = vmatpush1.msra.mxu0 0.0
    %12041 = vmatprep.subr.mxu0 0.0
    %12042 = vmatpush1.msra.mxu0 0.0
    %12043 = vmatprep.subr.mxu0 0.0
    %12044 = vmatpush1.msra.mxu0 0.0
    %12045 = vmatprep.subr.mxu0 0.0
    %12046 = vmatpush1.msra.mxu0 0.0
    %12047 = vmatprep.subr.mxu0 0.0
    %12048 = vmatpush1.msra.mxu0 0.0
    %12049 = vmatprep.subr.mxu0 0.0
    %12050 = vmatpush1.msra.mxu0 0.0
    %12051 = vmatprep.subr.mxu0 0.0
    %12052 = vmatpush1.msra.mxu0 0.0
    %12053 = vmatprep.subr.mxu0 0.0
    %12054 = vmatpush1.msra.mxu0 0.0
    %12055 = vmatprep.subr.mxu0 0.0
    %12056 = vmatpush1.msra.mxu0 0.0
    %12057 = vmatprep.subr.mxu0 0.0
    %12058 = vmatpush1.msra.mxu0 0.0
    %12059 = vmatprep.subr.mxu0 0.0
    %12060 = vmatpush1.msra.mxu0 0.0
    %12061 = vmatprep.subr.mxu0 0.0
    %12062 = vmatpush1.msra.mxu0 0.0
    %12063 = vmatprep.subr.mxu0 0.0
    %12064 = vmatpush1.msra.mxu0 0.0
    %12065 = vmatprep.subr.mxu0 0.0
    %12066 = vmatpush1.msra.mxu0 0.0
    %12067 = vmatprep.subr.mxu0 0.0
    %12068 = vmatpush1.msra.mxu0 0.0
    %12069 = vmatprep.mubr.f32.mxu0 0.0
    %v12070 = vand.u32 %v11664, 4294901760
    %12071 = vmatmul.mubr.f32.gmra.mrb[0].mxu0 %v12070
    %v12072 = vpop.f32.mrb[0].mxu0
    %v12073 = vadd.f32 %v11990, %v12072
    %v12074 = vpop.f32.mrb[0].mxu0
    %12075 = vdwg.mxu0
    %12076 = vmatprep.subr.mxu0 0.0
    %v12077 = vand.u32 %v11657, 4294901760
    %12078 = vmatpush1.msra.mxu0 %v12077
    %12079 = vmatprep.subr.mxu0 0.0
    %v12080 = vand.u32 %v11658, 4294901760
    %12081 = vmatpush1.msra.mxu0 %v12080
    %12082 = vmatprep.subr.mxu0 0.0
    %v12083 = vand.u32 %v11659, 4294901760
    %12084 = vmatpush1.msra.mxu0 %v12083
    %12085 = vmatprep.subr.mxu0 0.0
    %v12086 = vand.u32 %v11660, 4294901760
    %12087 = vmatpush1.msra.mxu0 %v12086
    %12088 = vmatprep.subr.mxu0 0.0
    %12089 = vmatpush1.msra.mxu0 0.0
    %12090 = vmatprep.subr.mxu0 0.0
    %12091 = vmatpush1.msra.mxu0 0.0
    %12092 = vmatprep.subr.mxu0 0.0
    %12093 = vmatpush1.msra.mxu0 0.0
    %12094 = vmatprep.subr.mxu0 0.0
    %12095 = vmatpush1.msra.mxu0 0.0
    %12096 = vmatprep.subr.mxu0 0.0
    %12097 = vmatpush1.msra.mxu0 0.0
    %12098 = vmatprep.subr.mxu0 0.0
    %12099 = vmatpush1.msra.mxu0 0.0
    %12100 = vmatprep.subr.mxu0 0.0
    %12101 = vmatpush1.msra.mxu0 0.0
    %12102 = vmatprep.subr.mxu0 0.0
    %12103 = vmatpush1.msra.mxu0 0.0
    %12104 = vmatprep.subr.mxu0 0.0
    %12105 = vmatpush1.msra.mxu0 0.0
    %12106 = vmatprep.subr.mxu0 0.0
    %12107 = vmatpush1.msra.mxu0 0.0
    %12108 = vmatprep.subr.mxu0 0.0
    %12109 = vmatpush1.msra.mxu0 0.0
    %12110 = vmatprep.subr.mxu0 0.0
    %12111 = vmatpush1.msra.mxu0 0.0
    %12112 = vmatprep.subr.mxu0 0.0
    %12113 = vmatpush1.msra.mxu0 0.0
    %12114 = vmatprep.subr.mxu0 0.0
    %12115 = vmatpush1.msra.mxu0 0.0
    %12116 = vmatprep.subr.mxu0 0.0
    %12117 = vmatpush1.msra.mxu0 0.0
    %12118 = vmatprep.subr.mxu0 0.0
    %12119 = vmatpush1.msra.mxu0 0.0
    %12120 = vmatprep.subr.mxu0 0.0
    %12121 = vmatpush1.msra.mxu0 0.0
    %12122 = vmatprep.subr.mxu0 0.0
    %12123 = vmatpush1.msra.mxu0 0.0
    %12124 = vmatprep.subr.mxu0 0.0
    %12125 = vmatpush1.msra.mxu0 0.0
    %12126 = vmatprep.subr.mxu0 0.0
    %12127 = vmatpush1.msra.mxu0 0.0
    %12128 = vmatprep.subr.mxu0 0.0
    %12129 = vmatpush1.msra.mxu0 0.0
    %12130 = vmatprep.subr.mxu0 0.0
    %12131 = vmatpush1.msra.mxu0 0.0
    %12132 = vmatprep.subr.mxu0 0.0
    %12133 = vmatpush1.msra.mxu0 0.0
    %12134 = vmatprep.subr.mxu0 0.0
    %12135 = vmatpush1.msra.mxu0 0.0
    %12136 = vmatprep.subr.mxu0 0.0
    %12137 = vmatpush1.msra.mxu0 0.0
    %12138 = vmatprep.subr.mxu0 0.0
    %12139 = vmatpush1.msra.mxu0 0.0
    %12140 = vmatprep.subr.mxu0 0.0
    %12141 = vmatpush1.msra.mxu0 0.0
    %12142 = vmatprep.subr.mxu0 0.0
    %12143 = vmatpush1.msra.mxu0 0.0
    %12144 = vmatprep.mubr.f32.mxu0 0.0
    %v12145 = vand.u32 %v11664, 4294901760
    %12146 = vmatmul.mubr.f32.gmra.mrb[0].mxu0 %v12145
    %v12147 = vpop.f32.mrb[0].mxu0
    %v12148 = vadd.f32 %v12073, %v12147
    %v12149 = vpop.f32.mrb[0].mxu0
    %12150 = vdwg.mxu0
    %v12151 = vadd.f32 %v10658, %v12148
    %v12152 = vld [vmem:[%s3 + $0x100] sm:$0x1]
    %v12153 = vlaneseq
    %v12154 = vshrl.u32 %v12153, 7
    %v12155 = vsub.s32 0, %v12154
    %v12156 = vrot.slane %v12152, %v12155
    %v12157 = vadd.f32 %v12151, %v12156
    %vm12158 = vcmask 392192
    %12159 = vst.msk [vmem:[#allocation2] sm:$0xff] %vm12158, %v12157
    // Predicated region
    $region18: #{tpu_custom_call.1} parent=1 // pred_check
      _
    $region19: #{tpu_custom_call.1} parent=1 // pred_check_branch
      %12161 = sbr.rel (0) target = $region21
    $region20: #{tpu_custom_call.1} parent=1 // pred_region
      %s12163 = ssub.s32 128, 128
      %12164 = vsyncadd [#allocation3], %s12163
      %s12166 = sshll.u32 [#allocation2], 4
      %s12167 = int_to_ptr.vmem [resolvable:$true] %s12166
      %12169 = dma.vmem_to_hbm [thread:$0]  %s12167, 128, %s4, [#allocation3]
    $region21: #{tpu_custom_call.1} parent=1 // pred_fallthru
      _
    // Predicated region
    $region22: #{tpu_custom_call.1} parent=1 // pred_check
      _
    $region23: #{tpu_custom_call.1} parent=1 // pred_check_branch
      %12171 = sbr.rel (0) target = $region25
    $region24: #{tpu_custom_call.1} parent=1 // pred_region
      %12172 = dma.done [#allocation3], 128
    $region25: #{tpu_custom_call.1} parent=1 // pred_fallthru
      _
    %12173 = vsyncpa [#allocation3], 1

</llo_original>
